<compile_context>
chip_gen: v5e
topology: v5e:2x2
jax: 0.10.0
libtpu: 0.0.40
codegen_flags: <defaults>
</compile_context>

<pallas_src>
import functools

import jax
import jax.numpy as jnp
from jax.experimental import pallas as pl
from jax.experimental.pallas import tpu as pltpu

ACT_DTYPE = jnp.bfloat16          # layer-to-layer activation / GEMM operand dtype


def _round_up(x, m):
    return (x + m - 1) // m * m


# ---------------------------------------------------------------------------
# Pallas GEMM kernel: bf16 operands, f32 accumulate, full-K blocks.
# ---------------------------------------------------------------------------
def _gemm_kernel(a_ref, b_ref, o_ref):
    o_ref[...] = jnp.dot(a_ref[...], b_ref[...],
                         preferred_element_type=jnp.float32).astype(o_ref.dtype)


def pallas_gemm(a, b, out_dtype=ACT_DTYPE, tm=256, tn=256):
    """(M,K) @ (K,N) -> (M,N).

    K is loaded as one full block (no reduction grid axis -> no accumulator
    revisits and no K padding); M/N grid axes are both 'parallel'.  Weights
    are expected lane-padded (N multiple of 128) by prepare_params; tiny
    fallback pads handle the remaining cases (e.g. M < tile).
    """
    M, K = a.shape
    K2, N = b.shape
    assert K == K2
    a = a.astype(ACT_DTYPE)
    b = b.astype(ACT_DTYPE)
    tm_e = min(tm, _round_up(M, 16))
    tn_e = min(tn, _round_up(N, 128))
    Mp = _round_up(M, tm_e)
    Np = _round_up(N, tn_e)
    if Mp != M:
        a = jnp.pad(a, ((0, Mp - M), (0, 0)))
    if Np != N:
        b = jnp.pad(b, ((0, 0), (0, Np - N)))
    out = pl.pallas_call(
        _gemm_kernel,
        out_shape=jax.ShapeDtypeStruct((Mp, Np), out_dtype),
        grid_spec=pltpu.PrefetchScalarGridSpec(
            num_scalar_prefetch=0,
            grid=(Mp // tm_e, Np // tn_e),
            in_specs=[pl.BlockSpec((tm_e, K), lambda i, j: (i, 0)),
                      pl.BlockSpec((K, tn_e), lambda i, j: (0, j))],
            out_specs=pl.BlockSpec((tm_e, tn_e), lambda i, j: (i, j))),
        compiler_params=pltpu.CompilerParams(
            dimension_semantics=("parallel", "parallel"),
            vmem_limit_bytes=32 * 1024 * 1024),
    )(a, b)
    return out[:M, :N]


# ---------------------------------------------------------------------------
# NN building blocks (PyTorch-equivalent semantics), NHWC activations in bf16.
# ---------------------------------------------------------------------------
def bn_relu_act(x_nhwc, bn, eps=1e-5):
    """BatchNorm2d (training mode: batch stats, biased var) + ReLU, in f32,
    output bf16.  This elementwise expression fuses into the consumer's
    tap-gather, so there is no separate activation pass through HBM."""
    gamma, beta = bn
    xf = x_nhwc.astype(jnp.float32)
    cnt = x_nhwc.shape[0] * x_nhwc.shape[1] * x_nhwc.shape[2]
    s1 = jnp.sum(xf, axis=(0, 1, 2))
    s2 = jnp.sum(xf * xf, axis=(0, 1, 2))
    mean = s1 / cnt
    var = jnp.maximum(s2 / cnt - mean * mean, 0.0)
    scale = gamma / jnp.sqrt(var + eps)
    shift = beta - mean * scale
    return jnp.maximum(xf * scale + shift, 0.0).astype(ACT_DTYPE)


def conv_gemm(y_nhwc, w2d, oc, kh, kw, stride, padding):
    """nn.Conv2d (bias=False) on an already-activated NHWC bf16 input.
    Taps are gathered directly in bf16 (fused with the producing BN+ReLU) and
    fed to one Pallas GEMM.  w2d: (kh*kw*C, round_up(oc,128)) bf16."""
    N, H, W, C = y_nhwc.shape
    OH = (H + 2 * padding - kh) // stride + 1
    OW = (W + 2 * padding - kw) // stride + 1
    if padding:
        y_nhwc = jnp.pad(y_nhwc, ((0, 0), (padding, padding),
                                  (padding, padding), (0, 0)))
    taps = []
    for ih in range(kh):
        for iw in range(kw):
            taps.append(y_nhwc[:, ih: ih + stride * (OH - 1) + 1: stride,
                               iw: iw + stride * (OW - 1) + 1: stride, :])
    a = jnp.concatenate(taps, axis=-1).reshape(N * OH * OW, kh * kw * C)
    out = pallas_gemm(a, w2d)[:, :oc]
    return out.reshape(N, OH, OW, oc)


def deconv_gemm(y_nhwc, w2d, oc):
    """nn.ConvTranspose2d(k=3, s=2, p=1, output_padding=1, bias=False) as a
    single phase-split GEMM: all 4 output phases come from the 2x2 input
    window taps (no zero-dilated input, no wasted MXU FLOPs on zeros).
    w2d: (4*C, round_up(4*oc,128)) bf16 built by prepare_params."""
    N, H, W, C = y_nhwc.shape
    yp = jnp.pad(y_nhwc, ((0, 0), (0, 1), (0, 1), (0, 0)))
    taps = [yp[:, dh: dh + H, dw: dw + W, :] for dh in (0, 1) for dw in (0, 1)]
    a = jnp.concatenate(taps, axis=-1).reshape(N * H * W, 4 * C)
    out = pallas_gemm(a, w2d)[:, :4 * oc]
    out = out.reshape(N, H, W, 2, 2, oc).transpose(0, 1, 3, 2, 4, 5)
    return out.reshape(N, 2 * H, 2 * W, oc)


def aeblock_forward(p, x, after):
    if isinstance(x, tuple):
        x1, x2, x3 = x
    else:
        x1, x2, x3 = x, None, None
    d = p["bn1"][0].shape[0]
    res1 = conv_gemm(bn_relu_act(x1, p["bn1"]), p["conv1"], d, 3, 3,
                     stride=2, padding=1)
    out = res1 if x2 is None else res1 + x2
    res2 = conv_gemm(bn_relu_act(out, p["bn2"]), p["conv2"], d, 3, 3,
                     stride=2, padding=1)
    out = res2 if x3 is None else res2 + x3
    res3 = deconv_gemm(bn_relu_act(out, p["bn3"]), p["deconv3"], d)
    res4 = deconv_gemm(bn_relu_act(res3 + res1, p["bn4"]), p["deconv4"], d)
    res4 = res4 + x1
    if after:
        return (res4, res3, res2)
    return res4


def downsample_forward(p, x, stride=2):
    oc = p["bn2"][0].shape[0]
    x = conv_gemm(bn_relu_act(x, p["bn1"]), p["conv1"], oc, 3, 3,
                  stride=1, padding=1)
    x = conv_gemm(bn_relu_act(x, p["bn2"]), p["conv2"], oc, 3, 3,
                  stride=stride, padding=1)
    return x


def aeresnet_forward(params, x_nchw, avgpool_k):
    x = jnp.transpose(x_nchw, (0, 2, 3, 1)).astype(ACT_DTYPE)     # NCHW -> NHWC
    oc1 = params["bn1"][0].shape[0]
    x = conv_gemm(x, params["conv1"], oc1, 7, 7, stride=2, padding=3)
    x = bn_relu_act(x, params["bn1"])
    # NOTE: AEResNet.__init__ builds nn.MaxPool2d but forward() never calls it,
    #       so (matching the reference forward) no max-pool is applied here.
    for li in range(4):
        blocks = params[f"layer{li + 1}"]
        n = len(blocks)
        for bi, bp in enumerate(blocks):
            x = aeblock_forward(bp, x, after=(bi < n - 1))
        x = downsample_forward(params[f"downsize{li + 1}"], x, stride=2)
    # AvgPool2d(avgpool_k) (stride == kernel), stats/pool in f32
    N, H, W, C = x.shape
    OH, OW = H // avgpool_k, W // avgpool_k
    x = x.astype(jnp.float32).reshape(N, OH, avgpool_k, OW, avgpool_k, C)
    x = x.mean(axis=(2, 4))
    x = jnp.transpose(x, (0, 3, 1, 2)).reshape(N, -1)              # NCHW flatten
    nclass = params["classifier_b"].shape[0]
    logits = pallas_gemm(x.astype(ACT_DTYPE), params["classifier_w"],
                         out_dtype=jnp.float32)[:, :nclass]
    return logits + params["classifier_b"]


# ---------------------------------------------------------------------------
# One-time weight preparation (GEMM layout, lane-padded, bf16) — outside jit.
# ---------------------------------------------------------------------------
def _prep_conv_w(w_oihw):
    oc, ic, kh, kw = w_oihw.shape
    w2d = jnp.transpose(w_oihw, (2, 3, 1, 0)).reshape(kh * kw * ic, oc)
    pad = _round_up(oc, 128) - oc
    if pad:
        w2d = jnp.pad(w2d, ((0, 0), (0, pad)))
    return w2d.astype(ACT_DTYPE)


def _prep_deconv_w(w_iohw):
    """Phase-split ConvTranspose2d(k=3,s=2,p=1,op=1) weight.
    Tap (dh,dw) of the 2x2 input window feeds output phase (ph,pw) through
    kernel index kh = SEL[(dh,ph)], kw = SEL[(dw,pw)] (unused combos are 0)."""
    ic, oc, _, _ = w_iohw.shape
    SEL = {(0, 0): 1, (0, 1): 2, (1, 1): 0}
    w2d = jnp.zeros((4 * ic, 4 * oc), jnp.float32)
    for dh in (0, 1):
        for dw in (0, 1):
            t = dh * 2 + dw
            for ph in (0, 1):
                for pw in (0, 1):
                    if (dh, ph) in SEL and (dw, pw) in SEL:
                        blk = w_iohw[:, :, SEL[(dh, ph)], SEL[(dw, pw)]]
                        q = ph * 2 + pw
                        w2d = w2d.at[t * ic:(t + 1) * ic,
                                     q * oc:(q + 1) * oc].set(blk)
    pad = _round_up(4 * oc, 128) - 4 * oc
    if pad:
        w2d = jnp.pad(w2d, ((0, 0), (0, pad)))
    return w2d.astype(ACT_DTYPE)


def prepare_params(params):
    p = {"conv1": _prep_conv_w(params["conv1"]),
         "bn1": params["bn1"],
         "classifier_b": params["classifier_b"]}
    wc = jnp.transpose(params["classifier_w"], (1, 0))             # (feat, classes)
    pad = _round_up(wc.shape[1], 128) - wc.shape[1]
    p["classifier_w"] = jnp.pad(wc, ((0, 0), (0, pad))).astype(ACT_DTYPE)
    for li in range(4):
        blocks = []
        for bp in params[f"layer{li + 1}"]:
            blocks.append({
                "bn1": bp["bn1"], "conv1": _prep_conv_w(bp["conv1"]),
                "bn2": bp["bn2"], "conv2": _prep_conv_w(bp["conv2"]),
                "bn3": bp["bn3"], "deconv3": _prep_deconv_w(bp["deconv3"]),
                "bn4": bp["bn4"], "deconv4": _prep_deconv_w(bp["deconv4"]),
            })
        p[f"layer{li + 1}"] = blocks
        dp = params[f"downsize{li + 1}"]
        p[f"downsize{li + 1}"] = {"bn1": dp["bn1"],
                                  "conv1": _prep_conv_w(dp["conv1"]),
                                  "bn2": dp["bn2"],
                                  "conv2": _prep_conv_w(dp["conv2"])}
    return p


# ---------------------------------------------------------------------------
# Deterministic parameter initialization (shapes follow the module's __init__).
# ---------------------------------------------------------------------------
def _conv_init(key, oc, ic, kh, kw):
    fan_in = ic * kh * kw
    return jax.random.normal(key, (oc, ic, kh, kw), jnp.float32) * (2.0 / fan_in) ** 0.5


def _deconv_init(key, ic, oc, kh, kw):
    fan_in = ic * kh * kw
    return jax.random.normal(key, (ic, oc, kh, kw), jnp.float32) * (2.0 / fan_in) ** 0.5


def _bn_init(key, c):
    k1, k2 = jax.random.split(key)
    gamma = 1.0 + 0.1 * jax.random.normal(k1, (c,), jnp.float32)
    beta = 0.1 * jax.random.normal(k2, (c,), jnp.float32)
    return (gamma, beta)


def init_aeblock(key, depth):
    ks = jax.random.split(key, 8)
    return {
        "bn1": _bn_init(ks[0], depth),
        "conv1": _conv_init(ks[1], depth, depth, 3, 3),
        "bn2": _bn_init(ks[2], depth),
        "conv2": _conv_init(ks[3], depth, depth, 3, 3),
        "bn3": _bn_init(ks[4], depth),
        "deconv3": _deconv_init(ks[5], depth, depth, 3, 3),
        "bn4": _bn_init(ks[6], depth),
        "deconv4": _deconv_init(ks[7], depth, depth, 3, 3),
    }


def init_downsample(key, indepth, outdepth):
    ks = jax.random.split(key, 4)
    return {
        "bn1": _bn_init(ks[0], indepth),
        "conv1": _conv_init(ks[1], outdepth, indepth, 3, 3),
        "bn2": _bn_init(ks[2], outdepth),
        "conv2": _conv_init(ks[3], outdepth, outdepth, 3, 3),
    }


def init_aeresnet(key, indepth=64, layers=(2, 3, 4, 5), num_classes=1000):
    params = {}
    key, k = jax.random.split(key)
    params["conv1"] = _conv_init(k, indepth, 3, 7, 7)
    key, k = jax.random.split(key)
    params["bn1"] = _bn_init(k, indepth)
    for li in range(4):
        d = indepth * (2 ** li)
        blocks = []
        for _ in range(layers[li]):
            key, k = jax.random.split(key)
            blocks.append(init_aeblock(k, d))
        params[f"layer{li + 1}"] = blocks
        key, k = jax.random.split(key)
        params[f"downsize{li + 1}"] = init_downsample(k, d, 2 * d)
    key, k1, k2 = jax.random.split(key, 3)
    feat = 16 * indepth
    params["classifier_w"] = (
        jax.random.normal(k1, (num_classes, feat), jnp.float32) * (1.0 / feat) ** 0.5)
    params["classifier_b"] = 0.01 * jax.random.normal(k2, (num_classes,), jnp.float32)
    return params


# ---------------------------------------------------------------------------
if __name__ == "__main__":
    # Scaled-down AEResNet: same architecture / forward graph as the PyTorch
    # module, with base width 8 (instead of 64), layers=(2,2,2,2), 10 classes
    # and a 64x64 input.  forward() (which never applies the max-pool) divides
    # the spatial size by 2 (conv1) and by 16 (the four DownSamples), so the
    # average-pool kernel H//32 leaves a 1x1 map and the classifier sees
    # exactly 16*indepth features, matching Linear(16*indepth, num_classes).
    INDEPTH = 8
    LAYERS = (2, 2, 2, 2)
    NUM_CLASSES = 10
    H = W = 64
    AVGPOOL_K = H // 32

    key = jax.random.PRNGKey(0)
    pkey, xkey = jax.random.split(key)
    raw_params = init_aeresnet(pkey, indepth=INDEPTH, layers=LAYERS,
                               num_classes=NUM_CLASSES)
    params = prepare_params(raw_params)          # GEMM-layout bf16 weights, once
    x = jax.random.normal(xkey, (2, 3, H, W), jnp.float32)   # NCHW, like PyTorch

    fwd = jax.jit(functools.partial(aeresnet_forward, avgpool_k=AVGPOOL_K))
    out = jax.block_until_ready(fwd(params, x))
    assert out.shape == (2, NUM_CLASSES), out.shape
    assert bool(jnp.all(jnp.isfinite(out)))
    print("KERNEL_OK")
</pallas_src>

<mosaic_0001>
module attributes {stable_mosaic.version = 11 : i64} {
  func.func @_gemm_kernel(%arg0: i32, %arg1: i32, %arg2: memref<256x147xbf16, #tpu.memory_space<vmem>>, %arg3: memref<147x128xbf16, #tpu.memory_space<vmem>>, %arg4: memref<256x128xbf16, #tpu.memory_space<vmem>>) attributes {dimension_semantics = [#tpu.dimension_semantics<parallel>, #tpu.dimension_semantics<parallel>], iteration_bounds = array<i64: 8, 1>, scalar_prefetch = 0 : i64, scratch_operands = 0 : i64, tpu.core_type = #tpu.core_type<tc>, window_params = [{transform_indices = @transform_0, window_bounds = array<i64: 256, 147>}, {transform_indices = @transform_1, window_bounds = array<i64: 147, 128>}, {transform_indices = @transform_2, window_bounds = array<i64: 256, 128>}]} {
    %c0 = arith.constant 0 : index
    %c0_0 = arith.constant 0 : index
    %0 = vector.load %arg2[%c0, %c0_0] : memref<256x147xbf16, #tpu.memory_space<vmem>>, vector<256x147xbf16>
    %c0_1 = arith.constant 0 : index
    %c0_2 = arith.constant 0 : index
    %1 = vector.load %arg3[%c0_1, %c0_2] : memref<147x128xbf16, #tpu.memory_space<vmem>>, vector<147x128xbf16>
    %cst = arith.constant dense<0.000000e+00> : vector<256x128xf32>
    %2 = tpu.matmul %0, %1, %cst {dimension_numbers = #tpu.dot_dimension_numbers<[1], [0], [0], [1], [0, 0, 1, 1], [], []>} : vector<256x147xbf16>, vector<147x128xbf16>, vector<256x128xf32> -> vector<256x128xf32>
    %3 = arith.truncf %2 : vector<256x128xf32> to vector<256x128xbf16>
    %c0_3 = arith.constant 0 : index
    %c0_4 = arith.constant 0 : index
    %4 = vector.load %arg4[%c0_3, %c0_4] : memref<256x128xbf16, #tpu.memory_space<vmem>>, vector<256x128xbf16>
    tpu.vector_store %arg4[%c0_3, %c0_4], %3 {strides = array<i32>} : memref<256x128xbf16, #tpu.memory_space<vmem>>, vector<256x128xbf16>,
    return
  }
  func.func @transform_0(%arg0: i32, %arg1: i32) -> (i32, i32) {
    %c0_i32 = arith.constant 0 : i32
    %c0_i32_0 = arith.constant 0 : i32
    return %arg0, %c0_i32 : i32, i32
  }
  func.func @transform_1(%arg0: i32, %arg1: i32) -> (i32, i32) {
    %c0_i32 = arith.constant 0 : i32
    %c0_i32_0 = arith.constant 0 : i32
    return %c0_i32, %arg1 : i32, i32
  }
  func.func @transform_2(%arg0: i32, %arg1: i32) -> (i32, i32) {
    %c0_i32 = arith.constant 0 : i32
    return %arg0, %arg1 : i32, i32
  }
}

module attributes {stable_mosaic.version = 11 : i64} {
  func.func @_gemm_kernel(%arg0: i32, %arg1: i32, %arg2: memref<256x72xbf16, #tpu.memory_space<vmem>>, %arg3: memref<72x128xbf16, #tpu.memory_space<vmem>>, %arg4: memref<256x128xbf16, #tpu.memory_space<vmem>>) attributes {dimension_semantics = [#tpu.dimension_semantics<parallel>, #tpu.dimension_semantics<parallel>], iteration_bounds = array<i64: 2, 1>, scalar_prefetch = 0 : i64, scratch_operands = 0 : i64, tpu.core_type = #tpu.core_type<tc>, window_params = [{transform_indices = @transform_0, window_bounds = array<i64: 256, 72>}, {transform_indices = @transform_1, window_bounds = array<i64: 72, 128>}, {transform_indices = @transform_2, window_bounds = array<i64: 256, 128>}]} {
    %c0 = arith.constant 0 : index
    %c0_0 = arith.constant 0 : index
    %0 = vector.load %arg2[%c0, %c0_0] : memref<256x72xbf16, #tpu.memory_space<vmem>>, vector<256x72xbf16>
    %c0_1 = arith.constant 0 : index
    %c0_2 = arith.constant 0 : index
    %1 = vector.load %arg3[%c0_1, %c0_2] : memref<72x128xbf16, #tpu.memory_space<vmem>>, vector<72x128xbf16>
    %cst = arith.constant dense<0.000000e+00> : vector<256x128xf32>
    %2 = tpu.matmul %0, %1, %cst {dimension_numbers = #tpu.dot_dimension_numbers<[1], [0], [0], [1], [0, 0, 1, 1], [], []>} : vector<256x72xbf16>, vector<72x128xbf16>, vector<256x128xf32> -> vector<256x128xf32>
    %3 = arith.truncf %2 : vector<256x128xf32> to vector<256x128xbf16>
    %c0_3 = arith.constant 0 : index
    %c0_4 = arith.constant 0 : index
    %4 = vector.load %arg4[%c0_3, %c0_4] : memref<256x128xbf16, #tpu.memory_space<vmem>>, vector<256x128xbf16>
    tpu.vector_store %arg4[%c0_3, %c0_4], %3 {strides = array<i32>} : memref<256x128xbf16, #tpu.memory_space<vmem>>, vector<256x128xbf16>,
    return
  }
  func.func @transform_0(%arg0: i32, %arg1: i32) -> (i32, i32) {
    %c0_i32 = arith.constant 0 : i32
    %c0_i32_0 = arith.constant 0 : i32
    return %arg0, %c0_i32 : i32, i32
  }
  func.func @transform_1(%arg0: i32, %arg1: i32) -> (i32, i32) {
    %c0_i32 = arith.constant 0 : i32
    %c0_i32_0 = arith.constant 0 : i32
    return %c0_i32, %arg1 : i32, i32
  }
  func.func @transform_2(%arg0: i32, %arg1: i32) -> (i32, i32) {
    %c0_i32 = arith.constant 0 : i32
    return %arg0, %arg1 : i32, i32
  }
}

module attributes {stable_mosaic.version = 11 : i64} {
  func.func @_gemm_kernel(%arg0: i32, %arg1: i32, %arg2: memref<128x72xbf16, #tpu.memory_space<vmem>>, %arg3: memref<72x128xbf16, #tpu.memory_space<vmem>>, %arg4: memref<128x128xbf16, #tpu.memory_space<vmem>>) attributes {dimension_semantics = [#tpu.dimension_semantics<parallel>, #tpu.dimension_semantics<parallel>], iteration_bounds = array<i64: 1, 1>, scalar_prefetch = 0 : i64, scratch_operands = 0 : i64, tpu.core_type = #tpu.core_type<tc>, window_params = [{transform_indices = @transform_0, window_bounds = array<i64: 128, 72>}, {transform_indices = @transform_1, window_bounds = array<i64: 72, 128>}, {transform_indices = @transform_2, window_bounds = array<i64: 128, 128>}]} {
    %c0 = arith.constant 0 : index
    %c0_0 = arith.constant 0 : index
    %0 = vector.load %arg2[%c0, %c0_0] : memref<128x72xbf16, #tpu.memory_space<vmem>>, vector<128x72xbf16>
    %c0_1 = arith.constant 0 : index
    %c0_2 = arith.constant 0 : index
    %1 = vector.load %arg3[%c0_1, %c0_2] : memref<72x128xbf16, #tpu.memory_space<vmem>>, vector<72x128xbf16>
    %cst = arith.constant dense<0.000000e+00> : vector<128x128xf32>
    %2 = tpu.matmul %0, %1, %cst {dimension_numbers = #tpu.dot_dimension_numbers<[1], [0], [0], [1], [0, 0, 1, 1], [], []>} : vector<128x72xbf16>, vector<72x128xbf16>, vector<128x128xf32> -> vector<128x128xf32>
    %3 = arith.truncf %2 : vector<128x128xf32> to vector<128x128xbf16>
    %c0_3 = arith.constant 0 : index
    %c0_4 = arith.constant 0 : index
    %4 = vector.load %arg4[%c0_3, %c0_4] : memref<128x128xbf16, #tpu.memory_space<vmem>>, vector<128x128xbf16>
    tpu.vector_store %arg4[%c0_3, %c0_4], %3 {strides = array<i32>} : memref<128x128xbf16, #tpu.memory_space<vmem>>, vector<128x128xbf16>,
    return
  }
  func.func @transform_0(%arg0: i32, %arg1: i32) -> (i32, i32) {
    %c0_i32 = arith.constant 0 : i32
    %c0_i32_0 = arith.constant 0 : i32
    return %arg0, %c0_i32 : i32, i32
  }
  func.func @transform_1(%arg0: i32, %arg1: i32) -> (i32, i32) {
    %c0_i32 = arith.constant 0 : i32
    %c0_i32_0 = arith.constant 0 : i32
    return %c0_i32, %arg1 : i32, i32
  }
  func.func @transform_2(%arg0: i32, %arg1: i32) -> (i32, i32) {
    %c0_i32 = arith.constant 0 : i32
    return %arg0, %arg1 : i32, i32
  }
}

module attributes {stable_mosaic.version = 11 : i64} {
  func.func @_gemm_kernel(%arg0: i32, %arg1: i32, %arg2: memref<128x32xbf16, #tpu.memory_space<vmem>>, %arg3: memref<32x128xbf16, #tpu.memory_space<vmem>>, %arg4: memref<128x128xbf16, #tpu.memory_space<vmem>>) attributes {dimension_semantics = [#tpu.dimension_semantics<parallel>, #tpu.dimension_semantics<parallel>], iteration_bounds = array<i64: 1, 1>, scalar_prefetch = 0 : i64, scratch_operands = 0 : i64, tpu.core_type = #tpu.core_type<tc>, window_params = [{transform_indices = @transform_0, window_bounds = array<i64: 128, 32>}, {transform_indices = @transform_1, window_bounds = array<i64: 32, 128>}, {transform_indices = @transform_2, window_bounds = array<i64: 128, 128>}]} {
    %c0 = arith.constant 0 : index
    %c0_0 = arith.constant 0 : index
    %0 = vector.load %arg2[%c0, %c0_0] : memref<128x32xbf16, #tpu.memory_space<vmem>>, vector<128x32xbf16>
    %c0_1 = arith.constant 0 : index
    %c0_2 = arith.constant 0 : index
    %1 = vector.load %arg3[%c0_1, %c0_2] : memref<32x128xbf16, #tpu.memory_space<vmem>>, vector<32x128xbf16>
    %cst = arith.constant dense<0.000000e+00> : vector<128x128xf32>
    %2 = tpu.matmul %0, %1, %cst {dimension_numbers = #tpu.dot_dimension_numbers<[1], [0], [0], [1], [0, 0, 1, 1], [], []>} : vector<128x32xbf16>, vector<32x128xbf16>, vector<128x128xf32> -> vector<128x128xf32>
    %3 = arith.truncf %2 : vector<128x128xf32> to vector<128x128xbf16>
    %c0_3 = arith.constant 0 : index
    %c0_4 = arith.constant 0 : index
    %4 = vector.load %arg4[%c0_3, %c0_4] : memref<128x128xbf16, #tpu.memory_space<vmem>>, vector<128x128xbf16>
    tpu.vector_store %arg4[%c0_3, %c0_4], %3 {strides = array<i32>} : memref<128x128xbf16, #tpu.memory_space<vmem>>, vector<128x128xbf16>,
    return
  }
  func.func @transform_0(%arg0: i32, %arg1: i32) -> (i32, i32) {
    %c0_i32 = arith.constant 0 : i32
    %c0_i32_0 = arith.constant 0 : i32
    return %arg0, %c0_i32 : i32, i32
  }
  func.func @transform_1(%arg0: i32, %arg1: i32) -> (i32, i32) {
    %c0_i32 = arith.constant 0 : i32
    %c0_i32_0 = arith.constant 0 : i32
    return %c0_i32, %arg1 : i32, i32
  }
  func.func @transform_2(%arg0: i32, %arg1: i32) -> (i32, i32) {
    %c0_i32 = arith.constant 0 : i32
    return %arg0, %arg1 : i32, i32
  }
}

module attributes {stable_mosaic.version = 11 : i64} {
  func.func @_gemm_kernel(%arg0: i32, %arg1: i32, %arg2: memref<256x32xbf16, #tpu.memory_space<vmem>>, %arg3: memref<32x128xbf16, #tpu.memory_space<vmem>>, %arg4: memref<256x128xbf16, #tpu.memory_space<vmem>>) attributes {dimension_semantics = [#tpu.dimension_semantics<parallel>, #tpu.dimension_semantics<parallel>], iteration_bounds = array<i64: 2, 1>, scalar_prefetch = 0 : i64, scratch_operands = 0 : i64, tpu.core_type = #tpu.core_type<tc>, window_params = [{transform_indices = @transform_0, window_bounds = array<i64: 256, 32>}, {transform_indices = @transform_1, window_bounds = array<i64: 32, 128>}, {transform_indices = @transform_2, window_bounds = array<i64: 256, 128>}]} {
    %c0 = arith.constant 0 : index
    %c0_0 = arith.constant 0 : index
    %0 = vector.load %arg2[%c0, %c0_0] : memref<256x32xbf16, #tpu.memory_space<vmem>>, vector<256x32xbf16>
    %c0_1 = arith.constant 0 : index
    %c0_2 = arith.constant 0 : index
    %1 = vector.load %arg3[%c0_1, %c0_2] : memref<32x128xbf16, #tpu.memory_space<vmem>>, vector<32x128xbf16>
    %cst = arith.constant dense<0.000000e+00> : vector<256x128xf32>
    %2 = tpu.matmul %0, %1, %cst {dimension_numbers = #tpu.dot_dimension_numbers<[1], [0], [0], [1], [0, 0, 1, 1], [], []>} : vector<256x32xbf16>, vector<32x128xbf16>, vector<256x128xf32> -> vector<256x128xf32>
    %3 = arith.truncf %2 : vector<256x128xf32> to vector<256x128xbf16>
    %c0_3 = arith.constant 0 : index
    %c0_4 = arith.constant 0 : index
    %4 = vector.load %arg4[%c0_3, %c0_4] : memref<256x128xbf16, #tpu.memory_space<vmem>>, vector<256x128xbf16>
    tpu.vector_store %arg4[%c0_3, %c0_4], %3 {strides = array<i32>} : memref<256x128xbf16, #tpu.memory_space<vmem>>, vector<256x128xbf16>,
    return
  }
  func.func @transform_0(%arg0: i32, %arg1: i32) -> (i32, i32) {
    %c0_i32 = arith.constant 0 : i32
    %c0_i32_0 = arith.constant 0 : i32
    return %arg0, %c0_i32 : i32, i32
  }
  func.func @transform_1(%arg0: i32, %arg1: i32) -> (i32, i32) {
    %c0_i32 = arith.constant 0 : i32
    %c0_i32_0 = arith.constant 0 : i32
    return %c0_i32, %arg1 : i32, i32
  }
  func.func @transform_2(%arg0: i32, %arg1: i32) -> (i32, i32) {
    %c0_i32 = arith.constant 0 : i32
    return %arg0, %arg1 : i32, i32
  }
}

module attributes {stable_mosaic.version = 11 : i64} {
  func.func @_gemm_kernel(%arg0: i32, %arg1: i32, %arg2: memref<256x72xbf16, #tpu.memory_space<vmem>>, %arg3: memref<72x128xbf16, #tpu.memory_space<vmem>>, %arg4: memref<256x128xbf16, #tpu.memory_space<vmem>>) attributes {dimension_semantics = [#tpu.dimension_semantics<parallel>, #tpu.dimension_semantics<parallel>], iteration_bounds = array<i64: 8, 1>, scalar_prefetch = 0 : i64, scratch_operands = 0 : i64, tpu.core_type = #tpu.core_type<tc>, window_params = [{transform_indices = @transform_0, window_bounds = array<i64: 256, 72>}, {transform_indices = @transform_1, window_bounds = array<i64: 72, 128>}, {transform_indices = @transform_2, window_bounds = array<i64: 256, 128>}]} {
    %c0 = arith.constant 0 : index
    %c0_0 = arith.constant 0 : index
    %0 = vector.load %arg2[%c0, %c0_0] : memref<256x72xbf16, #tpu.memory_space<vmem>>, vector<256x72xbf16>
    %c0_1 = arith.constant 0 : index
    %c0_2 = arith.constant 0 : index
    %1 = vector.load %arg3[%c0_1, %c0_2] : memref<72x128xbf16, #tpu.memory_space<vmem>>, vector<72x128xbf16>
    %cst = arith.constant dense<0.000000e+00> : vector<256x128xf32>
    %2 = tpu.matmul %0, %1, %cst {dimension_numbers = #tpu.dot_dimension_numbers<[1], [0], [0], [1], [0, 0, 1, 1], [], []>} : vector<256x72xbf16>, vector<72x128xbf16>, vector<256x128xf32> -> vector<256x128xf32>
    %3 = arith.truncf %2 : vector<256x128xf32> to vector<256x128xbf16>
    %c0_3 = arith.constant 0 : index
    %c0_4 = arith.constant 0 : index
    %4 = vector.load %arg4[%c0_3, %c0_4] : memref<256x128xbf16, #tpu.memory_space<vmem>>, vector<256x128xbf16>
    tpu.vector_store %arg4[%c0_3, %c0_4], %3 {strides = array<i32>} : memref<256x128xbf16, #tpu.memory_space<vmem>>, vector<256x128xbf16>,
    return
  }
  func.func @transform_0(%arg0: i32, %arg1: i32) -> (i32, i32) {
    %c0_i32 = arith.constant 0 : i32
    %c0_i32_0 = arith.constant 0 : i32
    return %arg0, %c0_i32 : i32, i32
  }
  func.func @transform_1(%arg0: i32, %arg1: i32) -> (i32, i32) {
    %c0_i32 = arith.constant 0 : i32
    %c0_i32_0 = arith.constant 0 : i32
    return %c0_i32, %arg1 : i32, i32
  }
  func.func @transform_2(%arg0: i32, %arg1: i32) -> (i32, i32) {
    %c0_i32 = arith.constant 0 : i32
    return %arg0, %arg1 : i32, i32
  }
}

module attributes {stable_mosaic.version = 11 : i64} {
  func.func @_gemm_kernel(%arg0: i32, %arg1: i32, %arg2: memref<256x144xbf16, #tpu.memory_space<vmem>>, %arg3: memref<144x128xbf16, #tpu.memory_space<vmem>>, %arg4: memref<256x128xbf16, #tpu.memory_space<vmem>>) attributes {dimension_semantics = [#tpu.dimension_semantics<parallel>, #tpu.dimension_semantics<parallel>], iteration_bounds = array<i64: 2, 1>, scalar_prefetch = 0 : i64, scratch_operands = 0 : i64, tpu.core_type = #tpu.core_type<tc>, window_params = [{transform_indices = @transform_0, window_bounds = array<i64: 256, 144>}, {transform_indices = @transform_1, window_bounds = array<i64: 144, 128>}, {transform_indices = @transform_2, window_bounds = array<i64: 256, 128>}]} {
    %c0 = arith.constant 0 : index
    %c0_0 = arith.constant 0 : index
    %0 = vector.load %arg2[%c0, %c0_0] : memref<256x144xbf16, #tpu.memory_space<vmem>>, vector<256x144xbf16>
    %c0_1 = arith.constant 0 : index
    %c0_2 = arith.constant 0 : index
    %1 = vector.load %arg3[%c0_1, %c0_2] : memref<144x128xbf16, #tpu.memory_space<vmem>>, vector<144x128xbf16>
    %cst = arith.constant dense<0.000000e+00> : vector<256x128xf32>
    %2 = tpu.matmul %0, %1, %cst {dimension_numbers = #tpu.dot_dimension_numbers<[1], [0], [0], [1], [0, 0, 1, 1], [], []>} : vector<256x144xbf16>, vector<144x128xbf16>, vector<256x128xf32> -> vector<256x128xf32>
    %3 = arith.truncf %2 : vector<256x128xf32> to vector<256x128xbf16>
    %c0_3 = arith.constant 0 : index
    %c0_4 = arith.constant 0 : index
    %4 = vector.load %arg4[%c0_3, %c0_4] : memref<256x128xbf16, #tpu.memory_space<vmem>>, vector<256x128xbf16>
    tpu.vector_store %arg4[%c0_3, %c0_4], %3 {strides = array<i32>} : memref<256x128xbf16, #tpu.memory_space<vmem>>, vector<256x128xbf16>,
    return
  }
  func.func @transform_0(%arg0: i32, %arg1: i32) -> (i32, i32) {
    %c0_i32 = arith.constant 0 : i32
    %c0_i32_0 = arith.constant 0 : i32
    return %arg0, %c0_i32 : i32, i32
  }
  func.func @transform_1(%arg0: i32, %arg1: i32) -> (i32, i32) {
    %c0_i32 = arith.constant 0 : i32
    %c0_i32_0 = arith.constant 0 : i32
    return %c0_i32, %arg1 : i32, i32
  }
  func.func @transform_2(%arg0: i32, %arg1: i32) -> (i32, i32) {
    %c0_i32 = arith.constant 0 : i32
    return %arg0, %arg1 : i32, i32
  }
}

module attributes {stable_mosaic.version = 11 : i64} {
  func.func @_gemm_kernel(%arg0: i32, %arg1: i32, %arg2: memref<128x144xbf16, #tpu.memory_space<vmem>>, %arg3: memref<144x128xbf16, #tpu.memory_space<vmem>>, %arg4: memref<128x128xbf16, #tpu.memory_space<vmem>>) attributes {dimension_semantics = [#tpu.dimension_semantics<parallel>, #tpu.dimension_semantics<parallel>], iteration_bounds = array<i64: 1, 1>, scalar_prefetch = 0 : i64, scratch_operands = 0 : i64, tpu.core_type = #tpu.core_type<tc>, window_params = [{transform_indices = @transform_0, window_bounds = array<i64: 128, 144>}, {transform_indices = @transform_1, window_bounds = array<i64: 144, 128>}, {transform_indices = @transform_2, window_bounds = array<i64: 128, 128>}]} {
    %c0 = arith.constant 0 : index
    %c0_0 = arith.constant 0 : index
    %0 = vector.load %arg2[%c0, %c0_0] : memref<128x144xbf16, #tpu.memory_space<vmem>>, vector<128x144xbf16>
    %c0_1 = arith.constant 0 : index
    %c0_2 = arith.constant 0 : index
    %1 = vector.load %arg3[%c0_1, %c0_2] : memref<144x128xbf16, #tpu.memory_space<vmem>>, vector<144x128xbf16>
    %cst = arith.constant dense<0.000000e+00> : vector<128x128xf32>
    %2 = tpu.matmul %0, %1, %cst {dimension_numbers = #tpu.dot_dimension_numbers<[1], [0], [0], [1], [0, 0, 1, 1], [], []>} : vector<128x144xbf16>, vector<144x128xbf16>, vector<128x128xf32> -> vector<128x128xf32>
    %3 = arith.truncf %2 : vector<128x128xf32> to vector<128x128xbf16>
    %c0_3 = arith.constant 0 : index
    %c0_4 = arith.constant 0 : index
    %4 = vector.load %arg4[%c0_3, %c0_4] : memref<128x128xbf16, #tpu.memory_space<vmem>>, vector<128x128xbf16>
    tpu.vector_store %arg4[%c0_3, %c0_4], %3 {strides = array<i32>} : memref<128x128xbf16, #tpu.memory_space<vmem>>, vector<128x128xbf16>,
    return
  }
  func.func @transform_0(%arg0: i32, %arg1: i32) -> (i32, i32) {
    %c0_i32 = arith.constant 0 : i32
    %c0_i32_0 = arith.constant 0 : i32
    return %arg0, %c0_i32 : i32, i32
  }
  func.func @transform_1(%arg0: i32, %arg1: i32) -> (i32, i32) {
    %c0_i32 = arith.constant 0 : i32
    %c0_i32_0 = arith.constant 0 : i32
    return %c0_i32, %arg1 : i32, i32
  }
  func.func @transform_2(%arg0: i32, %arg1: i32) -> (i32, i32) {
    %c0_i32 = arith.constant 0 : i32
    return %arg0, %arg1 : i32, i32
  }
}

module attributes {stable_mosaic.version = 11 : i64} {
  func.func @_gemm_kernel(%arg0: i32, %arg1: i32, %arg2: memref<32x144xbf16, #tpu.memory_space<vmem>>, %arg3: memref<144x128xbf16, #tpu.memory_space<vmem>>, %arg4: memref<32x128xbf16, #tpu.memory_space<vmem>>) attributes {dimension_semantics = [#tpu.dimension_semantics<parallel>, #tpu.dimension_semantics<parallel>], iteration_bounds = array<i64: 1, 1>, scalar_prefetch = 0 : i64, scratch_operands = 0 : i64, tpu.core_type = #tpu.core_type<tc>, window_params = [{transform_indices = @transform_0, window_bounds = array<i64: 32, 144>}, {transform_indices = @transform_1, window_bounds = array<i64: 144, 128>}, {transform_indices = @transform_2, window_bounds = array<i64: 32, 128>}]} {
    %c0 = arith.constant 0 : index
    %c0_0 = arith.constant 0 : index
    %0 = vector.load %arg2[%c0, %c0_0] : memref<32x144xbf16, #tpu.memory_space<vmem>>, vector<32x144xbf16>
    %c0_1 = arith.constant 0 : index
    %c0_2 = arith.constant 0 : index
    %1 = vector.load %arg3[%c0_1, %c0_2] : memref<144x128xbf16, #tpu.memory_space<vmem>>, vector<144x128xbf16>
    %cst = arith.constant dense<0.000000e+00> : vector<32x128xf32>
    %2 = tpu.matmul %0, %1, %cst {dimension_numbers = #tpu.dot_dimension_numbers<[1], [0], [0], [1], [0, 0, 1, 1], [], []>} : vector<32x144xbf16>, vector<144x128xbf16>, vector<32x128xf32> -> vector<32x128xf32>
    %3 = arith.truncf %2 : vector<32x128xf32> to vector<32x128xbf16>
    %c0_3 = arith.constant 0 : index
    %c0_4 = arith.constant 0 : index
    %4 = vector.load %arg4[%c0_3, %c0_4] : memref<32x128xbf16, #tpu.memory_space<vmem>>, vector<32x128xbf16>
    tpu.vector_store %arg4[%c0_3, %c0_4], %3 {strides = array<i32>} : memref<32x128xbf16, #tpu.memory_space<vmem>>, vector<32x128xbf16>,
    return
  }
  func.func @transform_0(%arg0: i32, %arg1: i32) -> (i32, i32) {
    %c0_i32 = arith.constant 0 : i32
    %c0_i32_0 = arith.constant 0 : i32
    return %arg0, %c0_i32 : i32, i32
  }
  func.func @transform_1(%arg0: i32, %arg1: i32) -> (i32, i32) {
    %c0_i32 = arith.constant 0 : i32
    %c0_i32_0 = arith.constant 0 : i32
    return %c0_i32, %arg1 : i32, i32
  }
  func.func @transform_2(%arg0: i32, %arg1: i32) -> (i32, i32) {
    %c0_i32 = arith.constant 0 : i32
    return %arg0, %arg1 : i32, i32
  }
}

module attributes {stable_mosaic.version = 11 : i64} {
  func.func @_gemm_kernel(%arg0: i32, %arg1: i32, %arg2: memref<32x64xbf16, #tpu.memory_space<vmem>>, %arg3: memref<64x128xbf16, #tpu.memory_space<vmem>>, %arg4: memref<32x128xbf16, #tpu.memory_space<vmem>>) attributes {dimension_semantics = [#tpu.dimension_semantics<parallel>, #tpu.dimension_semantics<parallel>], iteration_bounds = array<i64: 1, 1>, scalar_prefetch = 0 : i64, scratch_operands = 0 : i64, tpu.core_type = #tpu.core_type<tc>, window_params = [{transform_indices = @transform_0, window_bounds = array<i64: 32, 64>}, {transform_indices = @transform_1, window_bounds = array<i64: 64, 128>}, {transform_indices = @transform_2, window_bounds = array<i64: 32, 128>}]} {
    %c0 = arith.constant 0 : index
    %c0_0 = arith.constant 0 : index
    %0 = vector.load %arg2[%c0, %c0_0] : memref<32x64xbf16, #tpu.memory_space<vmem>>, vector<32x64xbf16>
    %c0_1 = arith.constant 0 : index
    %c0_2 = arith.constant 0 : index
    %1 = vector.load %arg3[%c0_1, %c0_2] : memref<64x128xbf16, #tpu.memory_space<vmem>>, vector<64x128xbf16>
    %cst = arith.constant dense<0.000000e+00> : vector<32x128xf32>
    %2 = tpu.matmul %0, %1, %cst {dimension_numbers = #tpu.dot_dimension_numbers<[1], [0], [0], [1], [0, 0, 1, 1], [], []>} : vector<32x64xbf16>, vector<64x128xbf16>, vector<32x128xf32> -> vector<32x128xf32>
    %3 = arith.truncf %2 : vector<32x128xf32> to vector<32x128xbf16>
    %c0_3 = arith.constant 0 : index
    %c0_4 = arith.constant 0 : index
    %4 = vector.load %arg4[%c0_3, %c0_4] : memref<32x128xbf16, #tpu.memory_space<vmem>>, vector<32x128xbf16>
    tpu.vector_store %arg4[%c0_3, %c0_4], %3 {strides = array<i32>} : memref<32x128xbf16, #tpu.memory_space<vmem>>, vector<32x128xbf16>,
    return
  }
  func.func @transform_0(%arg0: i32, %arg1: i32) -> (i32, i32) {
    %c0_i32 = arith.constant 0 : i32
    %c0_i32_0 = arith.constant 0 : i32
    return %arg0, %c0_i32 : i32, i32
  }
  func.func @transform_1(%arg0: i32, %arg1: i32) -> (i32, i32) {
    %c0_i32 = arith.constant 0 : i32
    %c0_i32_0 = arith.constant 0 : i32
    return %c0_i32, %arg1 : i32, i32
  }
  func.func @transform_2(%arg0: i32, %arg1: i32) -> (i32, i32) {
    %c0_i32 = arith.constant 0 : i32
    return %arg0, %arg1 : i32, i32
  }
}

module attributes {stable_mosaic.version = 11 : i64} {
  func.func @_gemm_kernel(%arg0: i32, %arg1: i32, %arg2: memref<128x64xbf16, #tpu.memory_space<vmem>>, %arg3: memref<64x128xbf16, #tpu.memory_space<vmem>>, %arg4: memref<128x128xbf16, #tpu.memory_space<vmem>>) attributes {dimension_semantics = [#tpu.dimension_semantics<parallel>, #tpu.dimension_semantics<parallel>], iteration_bounds = array<i64: 1, 1>, scalar_prefetch = 0 : i64, scratch_operands = 0 : i64, tpu.core_type = #tpu.core_type<tc>, window_params = [{transform_indices = @transform_0, window_bounds = array<i64: 128, 64>}, {transform_indices = @transform_1, window_bounds = array<i64: 64, 128>}, {transform_indices = @transform_2, window_bounds = array<i64: 128, 128>}]} {
    %c0 = arith.constant 0 : index
    %c0_0 = arith.constant 0 : index
    %0 = vector.load %arg2[%c0, %c0_0] : memref<128x64xbf16, #tpu.memory_space<vmem>>, vector<128x64xbf16>
    %c0_1 = arith.constant 0 : index
    %c0_2 = arith.constant 0 : index
    %1 = vector.load %arg3[%c0_1, %c0_2] : memref<64x128xbf16, #tpu.memory_space<vmem>>, vector<64x128xbf16>
    %cst = arith.constant dense<0.000000e+00> : vector<128x128xf32>
    %2 = tpu.matmul %0, %1, %cst {dimension_numbers = #tpu.dot_dimension_numbers<[1], [0], [0], [1], [0, 0, 1, 1], [], []>} : vector<128x64xbf16>, vector<64x128xbf16>, vector<128x128xf32> -> vector<128x128xf32>
    %3 = arith.truncf %2 : vector<128x128xf32> to vector<128x128xbf16>
    %c0_3 = arith.constant 0 : index
    %c0_4 = arith.constant 0 : index
    %4 = vector.load %arg4[%c0_3, %c0_4] : memref<128x128xbf16, #tpu.memory_space<vmem>>, vector<128x128xbf16>
    tpu.vector_store %arg4[%c0_3, %c0_4], %3 {strides = array<i32>} : memref<128x128xbf16, #tpu.memory_space<vmem>>, vector<128x128xbf16>,
    return
  }
  func.func @transform_0(%arg0: i32, %arg1: i32) -> (i32, i32) {
    %c0_i32 = arith.constant 0 : i32
    %c0_i32_0 = arith.constant 0 : i32
    return %arg0, %c0_i32 : i32, i32
  }
  func.func @transform_1(%arg0: i32, %arg1: i32) -> (i32, i32) {
    %c0_i32 = arith.constant 0 : i32
    %c0_i32_0 = arith.constant 0 : i32
    return %c0_i32, %arg1 : i32, i32
  }
  func.func @transform_2(%arg0: i32, %arg1: i32) -> (i32, i32) {
    %c0_i32 = arith.constant 0 : i32
    return %arg0, %arg1 : i32, i32
  }
}

module attributes {stable_mosaic.version = 11 : i64} {
  func.func @_gemm_kernel(%arg0: i32, %arg1: i32, %arg2: memref<128x288xbf16, #tpu.memory_space<vmem>>, %arg3: memref<288x128xbf16, #tpu.memory_space<vmem>>, %arg4: memref<128x128xbf16, #tpu.memory_space<vmem>>) attributes {dimension_semantics = [#tpu.dimension_semantics<parallel>, #tpu.dimension_semantics<parallel>], iteration_bounds = array<i64: 1, 1>, scalar_prefetch = 0 : i64, scratch_operands = 0 : i64, tpu.core_type = #tpu.core_type<tc>, window_params = [{transform_indices = @transform_0, window_bounds = array<i64: 128, 288>}, {transform_indices = @transform_1, window_bounds = array<i64: 288, 128>}, {transform_indices = @transform_2, window_bounds = array<i64: 128, 128>}]} {
    %c0 = arith.constant 0 : index
    %c0_0 = arith.constant 0 : index
    %0 = vector.load %arg2[%c0, %c0_0] : memref<128x288xbf16, #tpu.memory_space<vmem>>, vector<128x288xbf16>
    %c0_1 = arith.constant 0 : index
    %c0_2 = arith.constant 0 : index
    %1 = vector.load %arg3[%c0_1, %c0_2] : memref<288x128xbf16, #tpu.memory_space<vmem>>, vector<288x128xbf16>
    %cst = arith.constant dense<0.000000e+00> : vector<128x128xf32>
    %2 = tpu.matmul %0, %1, %cst {dimension_numbers = #tpu.dot_dimension_numbers<[1], [0], [0], [1], [0, 0, 1, 1], [], []>} : vector<128x288xbf16>, vector<288x128xbf16>, vector<128x128xf32> -> vector<128x128xf32>
    %3 = arith.truncf %2 : vector<128x128xf32> to vector<128x128xbf16>
    %c0_3 = arith.constant 0 : index
    %c0_4 = arith.constant 0 : index
    %4 = vector.load %arg4[%c0_3, %c0_4] : memref<128x128xbf16, #tpu.memory_space<vmem>>, vector<128x128xbf16>
    tpu.vector_store %arg4[%c0_3, %c0_4], %3 {strides = array<i32>} : memref<128x128xbf16, #tpu.memory_space<vmem>>, vector<128x128xbf16>,
    return
  }
  func.func @transform_0(%arg0: i32, %arg1: i32) -> (i32, i32) {
    %c0_i32 = arith.constant 0 : i32
    %c0_i32_0 = arith.constant 0 : i32
    return %arg0, %c0_i32 : i32, i32
  }
  func.func @transform_1(%arg0: i32, %arg1: i32) -> (i32, i32) {
    %c0_i32 = arith.constant 0 : i32
    %c0_i32_0 = arith.constant 0 : i32
    return %c0_i32, %arg1 : i32, i32
  }
  func.func @transform_2(%arg0: i32, %arg1: i32) -> (i32, i32) {
    %c0_i32 = arith.constant 0 : i32
    return %arg0, %arg1 : i32, i32
  }
}

module attributes {stable_mosaic.version = 11 : i64} {
  func.func @_gemm_kernel(%arg0: i32, %arg1: i32, %arg2: memref<32x288xbf16, #tpu.memory_space<vmem>>, %arg3: memref<288x128xbf16, #tpu.memory_space<vmem>>, %arg4: memref<32x128xbf16, #tpu.memory_space<vmem>>) attributes {dimension_semantics = [#tpu.dimension_semantics<parallel>, #tpu.dimension_semantics<parallel>], iteration_bounds = array<i64: 1, 1>, scalar_prefetch = 0 : i64, scratch_operands = 0 : i64, tpu.core_type = #tpu.core_type<tc>, window_params = [{transform_indices = @transform_0, window_bounds = array<i64: 32, 288>}, {transform_indices = @transform_1, window_bounds = array<i64: 288, 128>}, {transform_indices = @transform_2, window_bounds = array<i64: 32, 128>}]} {
    %c0 = arith.constant 0 : index
    %c0_0 = arith.constant 0 : index
    %0 = vector.load %arg2[%c0, %c0_0] : memref<32x288xbf16, #tpu.memory_space<vmem>>, vector<32x288xbf16>
    %c0_1 = arith.constant 0 : index
    %c0_2 = arith.constant 0 : index
    %1 = vector.load %arg3[%c0_1, %c0_2] : memref<288x128xbf16, #tpu.memory_space<vmem>>, vector<288x128xbf16>
    %cst = arith.constant dense<0.000000e+00> : vector<32x128xf32>
    %2 = tpu.matmul %0, %1, %cst {dimension_numbers = #tpu.dot_dimension_numbers<[1], [0], [0], [1], [0, 0, 1, 1], [], []>} : vector<32x288xbf16>, vector<288x128xbf16>, vector<32x128xf32> -> vector<32x128xf32>
    %3 = arith.truncf %2 : vector<32x128xf32> to vector<32x128xbf16>
    %c0_3 = arith.constant 0 : index
    %c0_4 = arith.constant 0 : index
    %4 = vector.load %arg4[%c0_3, %c0_4] : memref<32x128xbf16, #tpu.memory_space<vmem>>, vector<32x128xbf16>
    tpu.vector_store %arg4[%c0_3, %c0_4], %3 {strides = array<i32>} : memref<32x128xbf16, #tpu.memory_space<vmem>>, vector<32x128xbf16>,
    return
  }
  func.func @transform_0(%arg0: i32, %arg1: i32) -> (i32, i32) {
    %c0_i32 = arith.constant 0 : i32
    %c0_i32_0 = arith.constant 0 : i32
    return %arg0, %c0_i32 : i32, i32
  }
  func.func @transform_1(%arg0: i32, %arg1: i32) -> (i32, i32) {
    %c0_i32 = arith.constant 0 : i32
    %c0_i32_0 = arith.constant 0 : i32
    return %c0_i32, %arg1 : i32, i32
  }
  func.func @transform_2(%arg0: i32, %arg1: i32) -> (i32, i32) {
    %c0_i32 = arith.constant 0 : i32
    return %arg0, %arg1 : i32, i32
  }
}

module attributes {stable_mosaic.version = 11 : i64} {
  func.func @_gemm_kernel(%arg0: i32, %arg1: i32, %arg2: memref<16x288xbf16, #tpu.memory_space<vmem>>, %arg3: memref<288x128xbf16, #tpu.memory_space<vmem>>, %arg4: memref<16x128xbf16, #tpu.memory_space<vmem>>) attributes {dimension_semantics = [#tpu.dimension_semantics<parallel>, #tpu.dimension_semantics<parallel>], iteration_bounds = array<i64: 1, 1>, scalar_prefetch = 0 : i64, scratch_operands = 0 : i64, tpu.core_type = #tpu.core_type<tc>, window_params = [{transform_indices = @transform_0, window_bounds = array<i64: 16, 288>}, {transform_indices = @transform_1, window_bounds = array<i64: 288, 128>}, {transform_indices = @transform_2, window_bounds = array<i64: 16, 128>}]} {
    %c0 = arith.constant 0 : index
    %c0_0 = arith.constant 0 : index
    %0 = vector.load %arg2[%c0, %c0_0] : memref<16x288xbf16, #tpu.memory_space<vmem>>, vector<16x288xbf16>
    %c0_1 = arith.constant 0 : index
    %c0_2 = arith.constant 0 : index
    %1 = vector.load %arg3[%c0_1, %c0_2] : memref<288x128xbf16, #tpu.memory_space<vmem>>, vector<288x128xbf16>
    %cst = arith.constant dense<0.000000e+00> : vector<16x128xf32>
    %2 = tpu.matmul %0, %1, %cst {dimension_numbers = #tpu.dot_dimension_numbers<[1], [0], [0], [1], [0, 0, 1, 1], [], []>} : vector<16x288xbf16>, vector<288x128xbf16>, vector<16x128xf32> -> vector<16x128xf32>
    %3 = arith.truncf %2 : vector<16x128xf32> to vector<16x128xbf16>
    %c0_3 = arith.constant 0 : index
    %c0_4 = arith.constant 0 : index
    %4 = vector.load %arg4[%c0_3, %c0_4] : memref<16x128xbf16, #tpu.memory_space<vmem>>, vector<16x128xbf16>
    tpu.vector_store %arg4[%c0_3, %c0_4], %3 {strides = array<i32>} : memref<16x128xbf16, #tpu.memory_space<vmem>>, vector<16x128xbf16>,
    return
  }
  func.func @transform_0(%arg0: i32, %arg1: i32) -> (i32, i32) {
    %c0_i32 = arith.constant 0 : i32
    %c0_i32_0 = arith.constant 0 : i32
    return %arg0, %c0_i32 : i32, i32
  }
  func.func @transform_1(%arg0: i32, %arg1: i32) -> (i32, i32) {
    %c0_i32 = arith.constant 0 : i32
    %c0_i32_0 = arith.constant 0 : i32
    return %c0_i32, %arg1 : i32, i32
  }
  func.func @transform_2(%arg0: i32, %arg1: i32) -> (i32, i32) {
    %c0_i32 = arith.constant 0 : i32
    return %arg0, %arg1 : i32, i32
  }
}

module attributes {stable_mosaic.version = 11 : i64} {
  func.func @_gemm_kernel(%arg0: i32, %arg1: i32, %arg2: memref<16x128xbf16, #tpu.memory_space<vmem>>, %arg3: memref<128x128xbf16, #tpu.memory_space<vmem>>, %arg4: memref<16x128xbf16, #tpu.memory_space<vmem>>) attributes {dimension_semantics = [#tpu.dimension_semantics<parallel>, #tpu.dimension_semantics<parallel>], iteration_bounds = array<i64: 1, 1>, scalar_prefetch = 0 : i64, scratch_operands = 0 : i64, tpu.core_type = #tpu.core_type<tc>, window_params = [{transform_indices = @transform_0, window_bounds = array<i64: 16, 128>}, {transform_indices = @transform_1, window_bounds = array<i64: 128, 128>}, {transform_indices = @transform_2, window_bounds = array<i64: 16, 128>}]} {
    %c0 = arith.constant 0 : index
    %c0_0 = arith.constant 0 : index
    %0 = vector.load %arg2[%c0, %c0_0] : memref<16x128xbf16, #tpu.memory_space<vmem>>, vector<16x128xbf16>
    %c0_1 = arith.constant 0 : index
    %c0_2 = arith.constant 0 : index
    %1 = vector.load %arg3[%c0_1, %c0_2] : memref<128x128xbf16, #tpu.memory_space<vmem>>, vector<128x128xbf16>
    %cst = arith.constant dense<0.000000e+00> : vector<16x128xf32>
    %2 = tpu.matmul %0, %1, %cst {dimension_numbers = #tpu.dot_dimension_numbers<[1], [0], [0], [1], [0, 0, 1, 1], [], []>} : vector<16x128xbf16>, vector<128x128xbf16>, vector<16x128xf32> -> vector<16x128xf32>
    %3 = arith.truncf %2 : vector<16x128xf32> to vector<16x128xbf16>
    %c0_3 = arith.constant 0 : index
    %c0_4 = arith.constant 0 : index
    %4 = vector.load %arg4[%c0_3, %c0_4] : memref<16x128xbf16, #tpu.memory_space<vmem>>, vector<16x128xbf16>
    tpu.vector_store %arg4[%c0_3, %c0_4], %3 {strides = array<i32>} : memref<16x128xbf16, #tpu.memory_space<vmem>>, vector<16x128xbf16>,
    return
  }
  func.func @transform_0(%arg0: i32, %arg1: i32) -> (i32, i32) {
    %c0_i32 = arith.constant 0 : i32
    %c0_i32_0 = arith.constant 0 : i32
    return %arg0, %c0_i32 : i32, i32
  }
  func.func @transform_1(%arg0: i32, %arg1: i32) -> (i32, i32) {
    %c0_i32 = arith.constant 0 : i32
    %c0_i32_0 = arith.constant 0 : i32
    return %c0_i32, %arg1 : i32, i32
  }
  func.func @transform_2(%arg0: i32, %arg1: i32) -> (i32, i32) {
    %c0_i32 = arith.constant 0 : i32
    return %arg0, %arg1 : i32, i32
  }
}

module attributes {stable_mosaic.version = 11 : i64} {
  func.func @_gemm_kernel(%arg0: i32, %arg1: i32, %arg2: memref<32x128xbf16, #tpu.memory_space<vmem>>, %arg3: memref<128x128xbf16, #tpu.memory_space<vmem>>, %arg4: memref<32x128xbf16, #tpu.memory_space<vmem>>) attributes {dimension_semantics = [#tpu.dimension_semantics<parallel>, #tpu.dimension_semantics<parallel>], iteration_bounds = array<i64: 1, 1>, scalar_prefetch = 0 : i64, scratch_operands = 0 : i64, tpu.core_type = #tpu.core_type<tc>, window_params = [{transform_indices = @transform_0, window_bounds = array<i64: 32, 128>}, {transform_indices = @transform_1, window_bounds = array<i64: 128, 128>}, {transform_indices = @transform_2, window_bounds = array<i64: 32, 128>}]} {
    %c0 = arith.constant 0 : index
    %c0_0 = arith.constant 0 : index
    %0 = vector.load %arg2[%c0, %c0_0] : memref<32x128xbf16, #tpu.memory_space<vmem>>, vector<32x128xbf16>
    %c0_1 = arith.constant 0 : index
    %c0_2 = arith.constant 0 : index
    %1 = vector.load %arg3[%c0_1, %c0_2] : memref<128x128xbf16, #tpu.memory_space<vmem>>, vector<128x128xbf16>
    %cst = arith.constant dense<0.000000e+00> : vector<32x128xf32>
    %2 = tpu.matmul %0, %1, %cst {dimension_numbers = #tpu.dot_dimension_numbers<[1], [0], [0], [1], [0, 0, 1, 1], [], []>} : vector<32x128xbf16>, vector<128x128xbf16>, vector<32x128xf32> -> vector<32x128xf32>
    %3 = arith.truncf %2 : vector<32x128xf32> to vector<32x128xbf16>
    %c0_3 = arith.constant 0 : index
    %c0_4 = arith.constant 0 : index
    %4 = vector.load %arg4[%c0_3, %c0_4] : memref<32x128xbf16, #tpu.memory_space<vmem>>, vector<32x128xbf16>
    tpu.vector_store %arg4[%c0_3, %c0_4], %3 {strides = array<i32>} : memref<32x128xbf16, #tpu.memory_space<vmem>>, vector<32x128xbf16>,
    return
  }
  func.func @transform_0(%arg0: i32, %arg1: i32) -> (i32, i32) {
    %c0_i32 = arith.constant 0 : i32
    %c0_i32_0 = arith.constant 0 : i32
    return %arg0, %c0_i32 : i32, i32
  }
  func.func @transform_1(%arg0: i32, %arg1: i32) -> (i32, i32) {
    %c0_i32 = arith.constant 0 : i32
    %c0_i32_0 = arith.constant 0 : i32
    return %c0_i32, %arg1 : i32, i32
  }
  func.func @transform_2(%arg0: i32, %arg1: i32) -> (i32, i32) {
    %c0_i32 = arith.constant 0 : i32
    return %arg0, %arg1 : i32, i32
  }
}

module attributes {stable_mosaic.version = 11 : i64} {
  func.func @_gemm_kernel(%arg0: i32, %arg1: i32, %arg2: memref<32x576xbf16, #tpu.memory_space<vmem>>, %arg3: memref<576x128xbf16, #tpu.memory_space<vmem>>, %arg4: memref<32x128xbf16, #tpu.memory_space<vmem>>) attributes {dimension_semantics = [#tpu.dimension_semantics<parallel>, #tpu.dimension_semantics<parallel>], iteration_bounds = array<i64: 1, 1>, scalar_prefetch = 0 : i64, scratch_operands = 0 : i64, tpu.core_type = #tpu.core_type<tc>, window_params = [{transform_indices = @transform_0, window_bounds = array<i64: 32, 576>}, {transform_indices = @transform_1, window_bounds = array<i64: 576, 128>}, {transform_indices = @transform_2, window_bounds = array<i64: 32, 128>}]} {
    %c0 = arith.constant 0 : index
    %c0_0 = arith.constant 0 : index
    %0 = vector.load %arg2[%c0, %c0_0] : memref<32x576xbf16, #tpu.memory_space<vmem>>, vector<32x576xbf16>
    %c0_1 = arith.constant 0 : index
    %c0_2 = arith.constant 0 : index
    %1 = vector.load %arg3[%c0_1, %c0_2] : memref<576x128xbf16, #tpu.memory_space<vmem>>, vector<576x128xbf16>
    %cst = arith.constant dense<0.000000e+00> : vector<32x128xf32>
    %2 = tpu.matmul %0, %1, %cst {dimension_numbers = #tpu.dot_dimension_numbers<[1], [0], [0], [1], [0, 0, 1, 1], [], []>} : vector<32x576xbf16>, vector<576x128xbf16>, vector<32x128xf32> -> vector<32x128xf32>
    %3 = arith.truncf %2 : vector<32x128xf32> to vector<32x128xbf16>
    %c0_3 = arith.constant 0 : index
    %c0_4 = arith.constant 0 : index
    %4 = vector.load %arg4[%c0_3, %c0_4] : memref<32x128xbf16, #tpu.memory_space<vmem>>, vector<32x128xbf16>
    tpu.vector_store %arg4[%c0_3, %c0_4], %3 {strides = array<i32>} : memref<32x128xbf16, #tpu.memory_space<vmem>>, vector<32x128xbf16>,
    return
  }
  func.func @transform_0(%arg0: i32, %arg1: i32) -> (i32, i32) {
    %c0_i32 = arith.constant 0 : i32
    %c0_i32_0 = arith.constant 0 : i32
    return %arg0, %c0_i32 : i32, i32
  }
  func.func @transform_1(%arg0: i32, %arg1: i32) -> (i32, i32) {
    %c0_i32 = arith.constant 0 : i32
    %c0_i32_0 = arith.constant 0 : i32
    return %c0_i32, %arg1 : i32, i32
  }
  func.func @transform_2(%arg0: i32, %arg1: i32) -> (i32, i32) {
    %c0_i32 = arith.constant 0 : i32
    return %arg0, %arg1 : i32, i32
  }
}

module attributes {stable_mosaic.version = 11 : i64} {
  func.func @_gemm_kernel(%arg0: i32, %arg1: i32, %arg2: memref<16x576xbf16, #tpu.memory_space<vmem>>, %arg3: memref<576x128xbf16, #tpu.memory_space<vmem>>, %arg4: memref<16x128xbf16, #tpu.memory_space<vmem>>) attributes {dimension_semantics = [#tpu.dimension_semantics<parallel>, #tpu.dimension_semantics<parallel>], iteration_bounds = array<i64: 1, 1>, scalar_prefetch = 0 : i64, scratch_operands = 0 : i64, tpu.core_type = #tpu.core_type<tc>, window_params = [{transform_indices = @transform_0, window_bounds = array<i64: 16, 576>}, {transform_indices = @transform_1, window_bounds = array<i64: 576, 128>}, {transform_indices = @transform_2, window_bounds = array<i64: 16, 128>}]} {
    %c0 = arith.constant 0 : index
    %c0_0 = arith.constant 0 : index
    %0 = vector.load %arg2[%c0, %c0_0] : memref<16x576xbf16, #tpu.memory_space<vmem>>, vector<16x576xbf16>
    %c0_1 = arith.constant 0 : index
    %c0_2 = arith.constant 0 : index
    %1 = vector.load %arg3[%c0_1, %c0_2] : memref<576x128xbf16, #tpu.memory_space<vmem>>, vector<576x128xbf16>
    %cst = arith.constant dense<0.000000e+00> : vector<16x128xf32>
    %2 = tpu.matmul %0, %1, %cst {dimension_numbers = #tpu.dot_dimension_numbers<[1], [0], [0], [1], [0, 0, 1, 1], [], []>} : vector<16x576xbf16>, vector<576x128xbf16>, vector<16x128xf32> -> vector<16x128xf32>
    %3 = arith.truncf %2 : vector<16x128xf32> to vector<16x128xbf16>
    %c0_3 = arith.constant 0 : index
    %c0_4 = arith.constant 0 : index
    %4 = vector.load %arg4[%c0_3, %c0_4] : memref<16x128xbf16, #tpu.memory_space<vmem>>, vector<16x128xbf16>
    tpu.vector_store %arg4[%c0_3, %c0_4], %3 {strides = array<i32>} : memref<16x128xbf16, #tpu.memory_space<vmem>>, vector<16x128xbf16>,
    return
  }
  func.func @transform_0(%arg0: i32, %arg1: i32) -> (i32, i32) {
    %c0_i32 = arith.constant 0 : i32
    %c0_i32_0 = arith.constant 0 : i32
    return %arg0, %c0_i32 : i32, i32
  }
  func.func @transform_1(%arg0: i32, %arg1: i32) -> (i32, i32) {
    %c0_i32 = arith.constant 0 : i32
    %c0_i32_0 = arith.constant 0 : i32
    return %c0_i32, %arg1 : i32, i32
  }
  func.func @transform_2(%arg0: i32, %arg1: i32) -> (i32, i32) {
    %c0_i32 = arith.constant 0 : i32
    return %arg0, %arg1 : i32, i32
  }
}

module attributes {stable_mosaic.version = 11 : i64} {
  func.func @_gemm_kernel(%arg0: i32, %arg1: i32, %arg2: memref<16x256xbf16, #tpu.memory_space<vmem>>, %arg3: memref<256x256xbf16, #tpu.memory_space<vmem>>, %arg4: memref<16x256xbf16, #tpu.memory_space<vmem>>) attributes {dimension_semantics = [#tpu.dimension_semantics<parallel>, #tpu.dimension_semantics<parallel>], iteration_bounds = array<i64: 1, 1>, scalar_prefetch = 0 : i64, scratch_operands = 0 : i64, tpu.core_type = #tpu.core_type<tc>, window_params = [{transform_indices = @transform_0, window_bounds = array<i64: 16, 256>}, {transform_indices = @transform_1, window_bounds = array<i64: 256, 256>}, {transform_indices = @transform_2, window_bounds = array<i64: 16, 256>}]} {
    %c0 = arith.constant 0 : index
    %c0_0 = arith.constant 0 : index
    %0 = vector.load %arg2[%c0, %c0_0] : memref<16x256xbf16, #tpu.memory_space<vmem>>, vector<16x256xbf16>
    %c0_1 = arith.constant 0 : index
    %c0_2 = arith.constant 0 : index
    %1 = vector.load %arg3[%c0_1, %c0_2] : memref<256x256xbf16, #tpu.memory_space<vmem>>, vector<256x256xbf16>
    %cst = arith.constant dense<0.000000e+00> : vector<16x256xf32>
    %2 = tpu.matmul %0, %1, %cst {dimension_numbers = #tpu.dot_dimension_numbers<[1], [0], [0], [1], [0, 0, 1, 1], [], []>} : vector<16x256xbf16>, vector<256x256xbf16>, vector<16x256xf32> -> vector<16x256xf32>
    %3 = arith.truncf %2 : vector<16x256xf32> to vector<16x256xbf16>
    %c0_3 = arith.constant 0 : index
    %c0_4 = arith.constant 0 : index
    %4 = vector.load %arg4[%c0_3, %c0_4] : memref<16x256xbf16, #tpu.memory_space<vmem>>, vector<16x256xbf16>
    tpu.vector_store %arg4[%c0_3, %c0_4], %3 {strides = array<i32>} : memref<16x256xbf16, #tpu.memory_space<vmem>>, vector<16x256xbf16>,
    return
  }
  func.func @transform_0(%arg0: i32, %arg1: i32) -> (i32, i32) {
    %c0_i32 = arith.constant 0 : i32
    %c0_i32_0 = arith.constant 0 : i32
    return %arg0, %c0_i32 : i32, i32
  }
  func.func @transform_1(%arg0: i32, %arg1: i32) -> (i32, i32) {
    %c0_i32 = arith.constant 0 : i32
    %c0_i32_0 = arith.constant 0 : i32
    return %c0_i32, %arg1 : i32, i32
  }
  func.func @transform_2(%arg0: i32, %arg1: i32) -> (i32, i32) {
    %c0_i32 = arith.constant 0 : i32
    return %arg0, %arg1 : i32, i32
  }
}

module attributes {stable_mosaic.version = 11 : i64} {
  func.func @_gemm_kernel(%arg0: i32, %arg1: i32, %arg2: memref<16x1152xbf16, #tpu.memory_space<vmem>>, %arg3: memref<1152x128xbf16, #tpu.memory_space<vmem>>, %arg4: memref<16x128xbf16, #tpu.memory_space<vmem>>) attributes {dimension_semantics = [#tpu.dimension_semantics<parallel>, #tpu.dimension_semantics<parallel>], iteration_bounds = array<i64: 1, 1>, scalar_prefetch = 0 : i64, scratch_operands = 0 : i64, tpu.core_type = #tpu.core_type<tc>, window_params = [{transform_indices = @transform_0, window_bounds = array<i64: 16, 1152>}, {transform_indices = @transform_1, window_bounds = array<i64: 1152, 128>}, {transform_indices = @transform_2, window_bounds = array<i64: 16, 128>}]} {
    %c0 = arith.constant 0 : index
    %c0_0 = arith.constant 0 : index
    %0 = vector.load %arg2[%c0, %c0_0] : memref<16x1152xbf16, #tpu.memory_space<vmem>>, vector<16x1152xbf16>
    %c0_1 = arith.constant 0 : index
    %c0_2 = arith.constant 0 : index
    %1 = vector.load %arg3[%c0_1, %c0_2] : memref<1152x128xbf16, #tpu.memory_space<vmem>>, vector<1152x128xbf16>
    %cst = arith.constant dense<0.000000e+00> : vector<16x128xf32>
    %2 = tpu.matmul %0, %1, %cst {dimension_numbers = #tpu.dot_dimension_numbers<[1], [0], [0], [1], [0, 0, 1, 1], [], []>} : vector<16x1152xbf16>, vector<1152x128xbf16>, vector<16x128xf32> -> vector<16x128xf32>
    %3 = arith.truncf %2 : vector<16x128xf32> to vector<16x128xbf16>
    %c0_3 = arith.constant 0 : index
    %c0_4 = arith.constant 0 : index
    %4 = vector.load %arg4[%c0_3, %c0_4] : memref<16x128xbf16, #tpu.memory_space<vmem>>, vector<16x128xbf16>
    tpu.vector_store %arg4[%c0_3, %c0_4], %3 {strides = array<i32>} : memref<16x128xbf16, #tpu.memory_space<vmem>>, vector<16x128xbf16>,
    return
  }
  func.func @transform_0(%arg0: i32, %arg1: i32) -> (i32, i32) {
    %c0_i32 = arith.constant 0 : i32
    %c0_i32_0 = arith.constant 0 : i32
    return %arg0, %c0_i32 : i32, i32
  }
  func.func @transform_1(%arg0: i32, %arg1: i32) -> (i32, i32) {
    %c0_i32 = arith.constant 0 : i32
    %c0_i32_0 = arith.constant 0 : i32
    return %c0_i32, %arg1 : i32, i32
  }
  func.func @transform_2(%arg0: i32, %arg1: i32) -> (i32, i32) {
    %c0_i32 = arith.constant 0 : i32
    return %arg0, %arg1 : i32, i32
  }
}

module attributes {stable_mosaic.version = 11 : i64} {
  func.func @_gemm_kernel(%arg0: i32, %arg1: i32, %arg2: memref<16x128xbf16, #tpu.memory_space<vmem>>, %arg3: memref<128x128xbf16, #tpu.memory_space<vmem>>, %arg4: memref<16x128xf32, #tpu.memory_space<vmem>>) attributes {dimension_semantics = [#tpu.dimension_semantics<parallel>, #tpu.dimension_semantics<parallel>], iteration_bounds = array<i64: 1, 1>, scalar_prefetch = 0 : i64, scratch_operands = 0 : i64, tpu.core_type = #tpu.core_type<tc>, window_params = [{transform_indices = @transform_0, window_bounds = array<i64: 16, 128>}, {transform_indices = @transform_1, window_bounds = array<i64: 128, 128>}, {transform_indices = @transform_2, window_bounds = array<i64: 16, 128>}]} {
    %c0 = arith.constant 0 : index
    %c0_0 = arith.constant 0 : index
    %0 = vector.load %arg2[%c0, %c0_0] : memref<16x128xbf16, #tpu.memory_space<vmem>>, vector<16x128xbf16>
    %c0_1 = arith.constant 0 : index
    %c0_2 = arith.constant 0 : index
    %1 = vector.load %arg3[%c0_1, %c0_2] : memref<128x128xbf16, #tpu.memory_space<vmem>>, vector<128x128xbf16>
    %cst = arith.constant dense<0.000000e+00> : vector<16x128xf32>
    %2 = tpu.matmul %0, %1, %cst {dimension_numbers = #tpu.dot_dimension_numbers<[1], [0], [0], [1], [0, 0, 1, 1], [], []>} : vector<16x128xbf16>, vector<128x128xbf16>, vector<16x128xf32> -> vector<16x128xf32>
    %c0_3 = arith.constant 0 : index
    %c0_4 = arith.constant 0 : index
    %3 = vector.load %arg4[%c0_3, %c0_4] : memref<16x128xf32, #tpu.memory_space<vmem>>, vector<16x128xf32>
    tpu.vector_store %arg4[%c0_3, %c0_4], %2 {strides = array<i32>} : memref<16x128xf32, #tpu.memory_space<vmem>>, vector<16x128xf32>,
    return
  }
  func.func @transform_0(%arg0: i32, %arg1: i32) -> (i32, i32) {
    %c0_i32 = arith.constant 0 : i32
    %c0_i32_0 = arith.constant 0 : i32
    return %arg0, %c0_i32 : i32, i32
  }
  func.func @transform_1(%arg0: i32, %arg1: i32) -> (i32, i32) {
    %c0_i32 = arith.constant 0 : i32
    %c0_i32_0 = arith.constant 0 : i32
    return %c0_i32, %arg1 : i32, i32
  }
  func.func @transform_2(%arg0: i32, %arg1: i32) -> (i32, i32) {
    %c0_i32 = arith.constant 0 : i32
    return %arg0, %arg1 : i32, i32
  }
}

</mosaic_0001>

<llo_original>
// kernel: aeresnet_forward.42
$region0: #{aeresnet_forward.42}
  #allocation0 [shape = 'u32[]', space=smem, size = 0x4, offset = 0x4, fixed_abs, tag = 'smem constant byte address 0x4 - core index']
  #allocation1 [shape = 'u32[72,128]{1,0:T(1,128)}', space=vmem, size = 0x9000, scoped, tag = 'internal scratch']
  %s0 = inlined_call_operand.vmem [shape: bf16[2048,147], index: 0, kind: input, shape index: {}]
  %s1 = inlined_call_operand.vmem [shape: bf16[147,128], index: 1, kind: input, shape index: {}]
  %s2 = inlined_call_operand.vmem [shape: bf16[2048,128], index: 2, kind: output, shape index: {}]
  %s3 = sld [smem:[#allocation0]]
  $region41: #{aeresnet_forward.42} parent=0
    _
  %s5 = ssub.s32 1, %s3
  %s6 = scalar_select 0, %s5, %s3
  loop: start=0, step=1, limit=10
  $region2: #{aeresnet_forward.42} parent=0 // loop_pre_header
    _
  $region3: #{aeresnet_forward.42} parent=0 // loop_header
    %s8 = sphi 0, %s12
    %p9 = scmp.ge.s32.totalorder %s8, 10
    %s15 = sphi 0, %s27
    %s16 = sphi 0, %s23
    %s17 = sphi 0, %s15
    %s18 = sphi 0, %s16
    %s19 = sphi 0, %s17
    %s20 = sphi 0, %s18
    %s30 = sphi 0, %s32
    %s33 = sphi 0, %s30
    %s34 = sphi 0, %s33
    %s50 = sphi 0, %s34
    %s56 = sphi 0, %s58
    %s59 = sphi 0, %s56
    %s60 = sphi 0, %s59
    %s76 = sphi 0, %s60
    %s84 = sphi 0, %s86
    %s87 = sphi 0, %s84
    %s88 = sphi 0, %s87
    %s104 = sphi 0, %s88
  $region4: #{aeresnet_forward.42} parent=0 // loop_header_branch
    %11 = sbr.rel (%p9) target = $region8
  $region5: #{aeresnet_forward.42} parent=0 // loop_body
    %s13 = ssub.s32 %s8, 1
    %s14 = ssub.s32 %s8, 2
    %s21 = sadd.s32 1, %s16
    %p22 = scmp.ge.s32.totalorder %s21, 1
    %s23 = scalar_select %p22, 0, %s21
    %s24 = sadd.s32 1, %s15
    %s25 = scalar_select %p22, %s24, %s15
    %p26 = scmp.ge.s32.totalorder %s25, 8
    %s27 = scalar_select %p26, 0, %s25
    %s28 = ssub.s32 %s15, %s27
    %p29 = scmp.eq.s32.totalorder %s28, 0
    %s31 = sadd.s32 %s30, 1
    %s32 = scalar_select %p29, %s30, %s31
    %p35 = pneg %p29
    %p36 = scmp.eq.s32.totalorder %s8, 7
    %p37 = por %p35, %p36
    %p38 = scmp.ne.s32.totalorder %s30, %s33
    %p39 = scmp.eq.s32.totalorder %s8, 0
    %p40 = por %p38, %p39
    %p41 = scmp.ne.s32.totalorder %s30, %s33
    %p42 = scmp.eq.s32.totalorder %s13, 7
    %p43 = por %p41, %p42
    %p44 = scmp.ne.s32.totalorder %s33, %s34
    %p45 = scmp.eq.s32.totalorder %s13, 0
    %p46 = por %p44, %p45
    %p47 = scmp.ne.s32.totalorder %s33, %s34
    %p48 = scmp.eq.s32.totalorder %s14, 7
    %p49 = por %p47, %p48
    %p51 = scmp.ne.s32.totalorder %s34, %s50
    %p52 = scmp.eq.s32.totalorder %s14, 0
    %p53 = por %p51, %p52
    %s54 = ssub.s32 %s16, %s23
    %p55 = scmp.eq.s32.totalorder %s54, 0
    %s57 = sadd.s32 %s56, 1
    %s58 = scalar_select %p55, %s56, %s57
    %p61 = pneg %p55
    %p62 = scmp.eq.s32.totalorder %s8, 7
    %p63 = por %p61, %p62
    %p64 = scmp.ne.s32.totalorder %s56, %s59
    %p65 = scmp.eq.s32.totalorder %s8, 0
    %p66 = por %p64, %p65
    %p67 = scmp.ne.s32.totalorder %s56, %s59
    %p68 = scmp.eq.s32.totalorder %s13, 7
    %p69 = por %p67, %p68
    %p70 = scmp.ne.s32.totalorder %s59, %s60
    %p71 = scmp.eq.s32.totalorder %s13, 0
    %p72 = por %p70, %p71
    %p73 = scmp.ne.s32.totalorder %s59, %s60
    %p74 = scmp.eq.s32.totalorder %s14, 7
    %p75 = por %p73, %p74
    %p77 = scmp.ne.s32.totalorder %s60, %s76
    %p78 = scmp.eq.s32.totalorder %s14, 0
    %p79 = por %p77, %p78
    %s80 = ssub.s32 %s15, %s27
    %s81 = ssub.s32 %s16, %s23
    %s82 = sor.u32 %s80, %s81
    %p83 = scmp.eq.s32.totalorder %s82, 0
    %s85 = sadd.s32 %s84, 1
    %s86 = scalar_select %p83, %s84, %s85
    %p89 = pneg %p83
    %p90 = scmp.eq.s32.totalorder %s8, 7
    %p91 = por %p89, %p90
    %p92 = scmp.ne.s32.totalorder %s84, %s87
    %p93 = scmp.eq.s32.totalorder %s8, 0
    %p94 = por %p92, %p93
    %p95 = scmp.ne.s32.totalorder %s84, %s87
    %p96 = scmp.eq.s32.totalorder %s13, 7
    %p97 = por %p95, %p96
    %p98 = scmp.ne.s32.totalorder %s87, %s88
    %p99 = scmp.eq.s32.totalorder %s13, 0
    %p100 = por %p98, %p99
    %p101 = scmp.ne.s32.totalorder %s87, %s88
    %p102 = scmp.eq.s32.totalorder %s14, 7
    %p103 = por %p101, %p102
    %p105 = scmp.ne.s32.totalorder %s88, %s104
    %p106 = scmp.eq.s32.totalorder %s14, 0
    %p107 = por %p105, %p106
    %p108 = scmp.le.s32.totalorder 1, %s8
    %p109 = scmp.lt.s32.totalorder %s8, 9
    %p110 = pnand %p108, %p109
    %p111 = pneg %p110
    // Predicated region
    $region9: #{aeresnet_forward.42} parent=5 // pred_check
      _
    $region10: #{aeresnet_forward.42} parent=5 // pred_check_branch
      %113 = sbr.rel (%p110) target = $region12
    $region11: #{aeresnet_forward.42} parent=5 // pred_region
      %s114 = ssub.s32 %s8, 1
      // Predicated region
      $region13: #{aeresnet_forward.42} parent=11 // pred_check
        %p115 = pneg %p72
      $region14: #{aeresnet_forward.42} parent=11 // pred_check_branch
        %117 = sbr.rel (%p115) target = $region16
      $region15: #{aeresnet_forward.42} parent=11 // pred_region
        %p118 = scmp.lt.s32.totalorder %s18, 0
        %s119 = scalar_select %p118, %s18, 0
        %s120 = smul.addr %s119, 4
        %s121 = scalar_lea.vmem %s1, %s120
      $region16: #{aeresnet_forward.42} parent=11 // pred_fallthru
        _
    $region12: #{aeresnet_forward.42} parent=5 // pred_fallthru
      _
    %p122 = scmp.lt.s32.totalorder %s8, 8
    // Predicated region
    $region17: #{aeresnet_forward.42} parent=5 // pred_check
      %p123 = pneg %p122
    $region18: #{aeresnet_forward.42} parent=5 // pred_check_branch
      %125 = sbr.rel (%p123) target = $region20
    $region19: #{aeresnet_forward.42} parent=5 // pred_region
      // Predicated region
      $region21: #{aeresnet_forward.42} parent=19 // pred_check
        %p126 = pneg %p40
      $region22: #{aeresnet_forward.42} parent=19 // pred_check_branch
        %128 = sbr.rel (%p126) target = $region24
      $region23: #{aeresnet_forward.42} parent=19 // pred_region
        %s129 = smul.u32 32, %s15
        %p130 = scmp.lt.s32.totalorder %s129, 255
        %s131 = scalar_select %p130, %s129, 255
        %s132 = smul.addr %s131, 2
        %s133 = smul.addr %s132, 4
        %s134 = scalar_lea.vmem %s0, %s133
        %s135 = smul.u32 32, %s15
      $region24: #{aeresnet_forward.42} parent=19 // pred_fallthru
        _
    $region20: #{aeresnet_forward.42} parent=5 // pred_fallthru
      _
    %p136 = scmp.le.s32.totalorder 1, %s8
    %p137 = scmp.lt.s32.totalorder %s8, 9
    %p138 = pnand %p136, %p137
    %p139 = pneg %p138
    // Predicated region
    $region25: #{aeresnet_forward.42} parent=5 // pred_check
      _
    $region26: #{aeresnet_forward.42} parent=5 // pred_check_branch
      %141 = sbr.rel (%p138) target = $region28
    $region27: #{aeresnet_forward.42} parent=5 // pred_region
      %s142 = ssub.s32 %s8, 1
      %s143 = smul.u32 32, %s17
      %p144 = scmp.lt.s32.totalorder %s143, 255
      %s145 = scalar_select %p144, %s143, 255
      %s146 = smul.addr %s145, 2
      %s147 = smul.addr %s146, 4
      %s148 = scalar_lea.vmem %s0, %s147
      %p149 = pneg %p46
      %p150 = pneg %p43
      %p151 = scmp.lt.s32.totalorder %s18, 0
      %s152 = scalar_select %p151, %s18, 0
      %s153 = smul.addr %s152, 4
      %s154 = scalar_lea.vmem %s1, %s153
      %p155 = pneg %p72
      %p156 = pneg %p69
      %p157 = pneg %p100
      %p158 = pneg %p97
      %s159 = smul.u32 32, %s17
      %p160 = scmp.lt.s32.totalorder %s159, 255
      %s161 = scalar_select %p160, %s159, 255
      %p162 = scmp.lt.s32.totalorder %s18, 0
      %s163 = scalar_select %p162, %s18, 0
      %s164 = sadd.s32 %s163, %s161
      %s165 = smul.addr %s164, 4
      %s166 = scalar_lea.vmem %s2, %s165
      %s167 = smul.u32 32, %s17
      %p168 = scmp.lt.s32.totalorder %s167, 255
      %s169 = scalar_select %p168, %s167, 255
      %s170 = smul.addr %s169, 2
      %s171 = smul.addr %s170, 4
      %s172 = scalar_lea.vmem %s0, %s171
      %s173 = smul.u32 32, %s17
      %p174 = scmp.lt.s32.totalorder %s18, 0
      %s175 = scalar_select %p174, %s18, 0
      %s176 = smul.addr %s175, 4
      %s177 = scalar_lea.vmem %s1, %s176
      %s178 = smul.u32 32, %s17
      %p179 = scmp.lt.s32.totalorder %s178, 255
      %s180 = scalar_select %p179, %s178, 255
      %p181 = scmp.lt.s32.totalorder %s18, 0
      %s182 = scalar_select %p181, %s18, 0
      %s183 = sadd.s32 %s182, %s180
      %s184 = smul.addr %s183, 4
      %s185 = scalar_lea.vmem %s2, %s184
      %s186 = smul.u32 32, %s17
      %v188 = vld [vmem:[%s172] sm:$0xff]
      %v189 = vld [vmem:[%s172 + $0x8] sm:$0xff]
      %v190 = vld [vmem:[%s172 + $0x10] sm:$0xff]
      %v191 = vld [vmem:[%s172 + $0x18] sm:$0xff]
      %v192 = vld [vmem:[%s172 + $0x20] sm:$0xff]
      %v193 = vld [vmem:[%s172 + $0x28] sm:$0xff]
      %v194 = vld [vmem:[%s172 + $0x30] sm:$0xff]
      %v195 = vld [vmem:[%s172 + $0x38] sm:$0xff]
      %v196 = vld [vmem:[%s172 + $0x40] sm:$0xff]
      %v197 = vld [vmem:[%s172 + $0x48] sm:$0xff]
      %v198 = vld [vmem:[%s172 + $0x50] sm:$0xff]
      %v199 = vld [vmem:[%s172 + $0x58] sm:$0xff]
      %v200 = vld [vmem:[%s172 + $0x60] sm:$0xff]
      %v201 = vld [vmem:[%s172 + $0x68] sm:$0xff]
      %v202 = vld [vmem:[%s172 + $0x70] sm:$0xff]
      %v203 = vld [vmem:[%s172 + $0x78] sm:$0xff]
      %v204 = vld [vmem:[%s172 + $0x80] sm:$0xff]
      %v205 = vld [vmem:[%s172 + $0x88] sm:$0xff]
      %v206 = vld [vmem:[%s172 + $0x90] sm:$0xff]
      %v207 = vld [vmem:[%s172 + $0x98] sm:$0xff]
      %v208 = vld [vmem:[%s172 + $0xa0] sm:$0xff]
      %v209 = vld [vmem:[%s172 + $0xa8] sm:$0xff]
      %v210 = vld [vmem:[%s172 + $0xb0] sm:$0xff]
      %v211 = vld [vmem:[%s172 + $0xb8] sm:$0xff]
      %v212 = vld [vmem:[%s172 + $0xc0] sm:$0xff]
      %v213 = vld [vmem:[%s172 + $0xc8] sm:$0xff]
      %v214 = vld [vmem:[%s172 + $0xd0] sm:$0xff]
      %v215 = vld [vmem:[%s172 + $0xd8] sm:$0xff]
      %v216 = vld [vmem:[%s172 + $0xe0] sm:$0xff]
      %v217 = vld [vmem:[%s172 + $0xe8] sm:$0xff]
      %v218 = vld [vmem:[%s172 + $0xf0] sm:$0xff]
      %v219 = vld [vmem:[%s172 + $0xf8] sm:$0xff]
      %v220 = vld [vmem:[%s177] sm:$0xf]
      %v221 = vld [vmem:[%s177 + $0x4] sm:$0xf]
      %v222 = vld [vmem:[%s177 + $0x8] sm:$0xf]
      %v223 = vld [vmem:[%s177 + $0xc] sm:$0xf]
      %v224 = vld [vmem:[%s177 + $0x10] sm:$0xf]
      %v225 = vld [vmem:[%s177 + $0x14] sm:$0xf]
      %v226 = vld [vmem:[%s177 + $0x18] sm:$0xf]
      %v227 = vld [vmem:[%s177 + $0x1c] sm:$0xf]
      %v228 = vld [vmem:[%s177 + $0x20] sm:$0xf]
      %v229 = vld [vmem:[%s177 + $0x24] sm:$0xf]
      %v230 = vld [vmem:[%s177 + $0x28] sm:$0xf]
      %v231 = vld [vmem:[%s177 + $0x2c] sm:$0xf]
      %v232 = vld [vmem:[%s177 + $0x30] sm:$0xf]
      %v233 = vld [vmem:[%s177 + $0x34] sm:$0xf]
      %v234 = vld [vmem:[%s177 + $0x38] sm:$0xf]
      %v235 = vld [vmem:[%s177 + $0x3c] sm:$0xf]
      %v236 = vld [vmem:[%s177 + $0x40] sm:$0xf]
      %v237 = vld [vmem:[%s177 + $0x44] sm:$0xf]
      %v238 = vld [vmem:[%s177 + $0x48] sm:$0x3]
      %v271 = vunpack.c.l.b16 %v188
      %v272 = vunpack.c.h.b16 %v188
      %v273 = vunpack.c.l.b16 %v189
      %v274 = vunpack.c.h.b16 %v189
      %v275 = vunpack.c.l.b16 %v190
      %v276 = vunpack.c.h.b16 %v190
      %v277 = vunpack.c.l.b16 %v191
      %v278 = vunpack.c.h.b16 %v191
      %v279 = vunpack.c.l.b16 %v192
      %v280 = vunpack.c.h.b16 %v192
      %v281 = vunpack.c.l.b16 %v193
      %v282 = vunpack.c.h.b16 %v193
      %v283 = vunpack.c.l.b16 %v194
      %v284 = vunpack.c.h.b16 %v194
      %v285 = vunpack.c.l.b16 %v195
      %v286 = vunpack.c.h.b16 %v195
      %v287 = vunpack.c.l.b16 %v196
      %v288 = vunpack.c.h.b16 %v196
      %v289 = vunpack.c.l.b16 %v197
      %v290 = vunpack.c.h.b16 %v197
      %v291 = vunpack.c.l.b16 %v198
      %v292 = vunpack.c.h.b16 %v198
      %v293 = vunpack.c.l.b16 %v199
      %v294 = vunpack.c.h.b16 %v199
      %v295 = vunpack.c.l.b16 %v200
      %v296 = vunpack.c.h.b16 %v200
      %v297 = vunpack.c.l.b16 %v201
      %v298 = vunpack.c.h.b16 %v201
      %v299 = vunpack.c.l.b16 %v202
      %v300 = vunpack.c.h.b16 %v202
      %v301 = vunpack.c.l.b16 %v203
      %v302 = vunpack.c.h.b16 %v203
      %v303 = vunpack.c.l.b16 %v204
      %v304 = vunpack.c.h.b16 %v204
      %v305 = vunpack.c.l.b16 %v205
      %v306 = vunpack.c.h.b16 %v205
      %v307 = vunpack.c.l.b16 %v206
      %v308 = vunpack.c.h.b16 %v206
      %v309 = vunpack.c.l.b16 %v207
      %v310 = vunpack.c.h.b16 %v207
      %v311 = vunpack.c.l.b16 %v208
      %v312 = vunpack.c.h.b16 %v208
      %v313 = vunpack.c.l.b16 %v209
      %v314 = vunpack.c.h.b16 %v209
      %v315 = vunpack.c.l.b16 %v210
      %v316 = vunpack.c.h.b16 %v210
      %v317 = vunpack.c.l.b16 %v211
      %v318 = vunpack.c.h.b16 %v211
      %v319 = vunpack.c.l.b16 %v212
      %v320 = vunpack.c.h.b16 %v212
      %v321 = vunpack.c.l.b16 %v213
      %v322 = vunpack.c.h.b16 %v213
      %v323 = vunpack.c.l.b16 %v214
      %v324 = vunpack.c.h.b16 %v214
      %v325 = vunpack.c.l.b16 %v215
      %v326 = vunpack.c.h.b16 %v215
      %v327 = vunpack.c.l.b16 %v216
      %v328 = vunpack.c.h.b16 %v216
      %v329 = vunpack.c.l.b16 %v217
      %v330 = vunpack.c.h.b16 %v217
      %v331 = vunpack.c.l.b16 %v218
      %v332 = vunpack.c.h.b16 %v218
      %v333 = vunpack.c.l.b16 %v219
      %v334 = vunpack.c.h.b16 %v219
      %v335 = vpack.c.b16 %v273, %v271
      %v336 = vpack.c.b16 %v274, %v272
      %v337 = vpack.c.b16 %v277, %v275
      %v338 = vpack.c.b16 %v278, %v276
      %v339 = vpack.c.b16 %v281, %v279
      %v340 = vpack.c.b16 %v282, %v280
      %v341 = vpack.c.b16 %v285, %v283
      %v342 = vpack.c.b16 %v286, %v284
      %v343 = vpack.c.b16 %v289, %v287
      %v344 = vpack.c.b16 %v290, %v288
      %v345 = vpack.c.b16 %v293, %v291
      %v346 = vpack.c.b16 %v294, %v292
      %v347 = vpack.c.b16 %v297, %v295
      %v348 = vpack.c.b16 %v298, %v296
      %v349 = vpack.c.b16 %v301, %v299
      %v350 = vpack.c.b16 %v302, %v300
      %v351 = vpack.c.b16 %v305, %v303
      %v352 = vpack.c.b16 %v306, %v304
      %v353 = vpack.c.b16 %v309, %v307
      %v354 = vpack.c.b16 %v310, %v308
      %v355 = vpack.c.b16 %v313, %v311
      %v356 = vpack.c.b16 %v314, %v312
      %v357 = vpack.c.b16 %v317, %v315
      %v358 = vpack.c.b16 %v318, %v316
      %v359 = vpack.c.b16 %v321, %v319
      %v360 = vpack.c.b16 %v322, %v320
      %v361 = vpack.c.b16 %v325, %v323
      %v362 = vpack.c.b16 %v326, %v324
      %v363 = vpack.c.b16 %v329, %v327
      %v364 = vpack.c.b16 %v330, %v328
      %v365 = vpack.c.b16 %v333, %v331
      %v366 = vpack.c.b16 %v334, %v332
      %v402 = vunpack.c.l.b16 %v220
      %v403 = vunpack.c.l.b16 %v221
      %v404 = vunpack.c.l.b16 %v222
      %v405 = vunpack.c.l.b16 %v223
      %v406 = vunpack.c.l.b16 %v224
      %v407 = vunpack.c.l.b16 %v225
      %v408 = vunpack.c.l.b16 %v226
      %v409 = vunpack.c.l.b16 %v227
      %v410 = vunpack.c.l.b16 %v228
      %v411 = vunpack.c.l.b16 %v229
      %v412 = vunpack.c.l.b16 %v230
      %v413 = vunpack.c.l.b16 %v231
      %v414 = vunpack.c.l.b16 %v232
      %v415 = vunpack.c.l.b16 %v233
      %v416 = vunpack.c.l.b16 %v234
      %v417 = vunpack.c.l.b16 %v235
      %v418 = vunpack.c.l.b16 %v236
      %v419 = vunpack.c.l.b16 %v237
      %v420 = vunpack.c.l.b16 %v238
      %v421 = vpack.c.b16 %v403, %v402
      %v422 = vpack.c.b16 %v405, %v404
      %v423 = vpack.c.b16 %v407, %v406
      %v424 = vpack.c.b16 %v409, %v408
      %v425 = vpack.c.b16 %v411, %v410
      %v426 = vpack.c.b16 %v413, %v412
      %v427 = vpack.c.b16 %v415, %v414
      %v428 = vpack.c.b16 %v417, %v416
      %v429 = vpack.c.b16 %v419, %v418
      %v430 = vpack.c.b16 %v420, %v420
      %vm440 = vcmask 154624
      %v442 = vsel %vm440, %v336, 0
      %v445 = vsel %vm440, %v338, 0
      %v448 = vsel %vm440, %v340, 0
      %v451 = vsel %vm440, %v342, 0
      %v454 = vsel %vm440, %v344, 0
      %v457 = vsel %vm440, %v346, 0
      %v460 = vsel %vm440, %v348, 0
      %v463 = vsel %vm440, %v350, 0
      %v466 = vsel %vm440, %v352, 0
      %v469 = vsel %vm440, %v354, 0
      %v472 = vsel %vm440, %v356, 0
      %v475 = vsel %vm440, %v358, 0
      %v478 = vsel %vm440, %v360, 0
      %v481 = vsel %vm440, %v362, 0
      %v484 = vsel %vm440, %v364, 0
      %v487 = vsel %vm440, %v366, 0
      %vm489 = vcmask 1040384
      %vm490 = vcmask 1041408
      %v491 = vsel %vm489, 4294967295, 65535
      %v492 = vsel %vm490, %v491, 0
      %v494 = vand.u32 %v430, %v492
      %496 = vmatpush.bf16.msra.mxu0 %v428
      %497 = vmatpush.bf16.msra.mxu0 %v427
      %498 = vmatpush.bf16.msra.mxu0 %v426
      %499 = vmatpush.bf16.msra.mxu0 %v425
      %500 = vmatpush.bf16.msra.mxu0 %v424
      %501 = vmatpush.bf16.msra.mxu0 %v423
      %502 = vmatpush.bf16.msra.mxu0 %v422
      %503 = vmatpush.bf16.msra.mxu0 %v421
      %504 = vmatmul.bf16.gmra.mxu0 %v335
      %v505 = vpop.f32.mrf.mxu0
      %v506 = vadd.f32 0.0, %v505
      %v507 = vpop.f32.mrf.mxu0
      %v508 = vadd.f32 0.0, %v507
      %509 = vmatmul.bf16.gmra.mxu0 %v337
      %v510 = vpop.f32.mrf.mxu0
      %v511 = vadd.f32 0.0, %v510
      %v512 = vpop.f32.mrf.mxu0
      %v513 = vadd.f32 0.0, %v512
      %514 = vmatmul.bf16.gmra.mxu0 %v339
      %v515 = vpop.f32.mrf.mxu0
      %v516 = vadd.f32 0.0, %v515
      %v517 = vpop.f32.mrf.mxu0
      %v518 = vadd.f32 0.0, %v517
      %519 = vmatmul.bf16.gmra.mxu0 %v341
      %v520 = vpop.f32.mrf.mxu0
      %v521 = vadd.f32 0.0, %v520
      %v522 = vpop.f32.mrf.mxu0
      %v523 = vadd.f32 0.0, %v522
      %524 = vmatmul.bf16.gmra.mxu0 %v343
      %v525 = vpop.f32.mrf.mxu0
      %v526 = vadd.f32 0.0, %v525
      %v527 = vpop.f32.mrf.mxu0
      %v528 = vadd.f32 0.0, %v527
      %529 = vmatmul.bf16.gmra.mxu0 %v345
      %v530 = vpop.f32.mrf.mxu0
      %v531 = vadd.f32 0.0, %v530
      %v532 = vpop.f32.mrf.mxu0
      %v533 = vadd.f32 0.0, %v532
      %534 = vmatmul.bf16.gmra.mxu0 %v347
      %v535 = vpop.f32.mrf.mxu0
      %v536 = vadd.f32 0.0, %v535
      %v537 = vpop.f32.mrf.mxu0
      %v538 = vadd.f32 0.0, %v537
      %539 = vmatmul.bf16.gmra.mxu0 %v349
      %v540 = vpop.f32.mrf.mxu0
      %v541 = vadd.f32 0.0, %v540
      %v542 = vpop.f32.mrf.mxu0
      %v543 = vadd.f32 0.0, %v542
      %544 = vmatmul.bf16.gmra.mxu0 %v351
      %v545 = vpop.f32.mrf.mxu0
      %v546 = vadd.f32 0.0, %v545
      %v547 = vpop.f32.mrf.mxu0
      %v548 = vadd.f32 0.0, %v547
      %549 = vmatmul.bf16.gmra.mxu0 %v353
      %v550 = vpop.f32.mrf.mxu0
      %v551 = vadd.f32 0.0, %v550
      %v552 = vpop.f32.mrf.mxu0
      %v553 = vadd.f32 0.0, %v552
      %554 = vmatmul.bf16.gmra.mxu0 %v355
      %v555 = vpop.f32.mrf.mxu0
      %v556 = vadd.f32 0.0, %v555
      %v557 = vpop.f32.mrf.mxu0
      %v558 = vadd.f32 0.0, %v557
      %559 = vmatmul.bf16.gmra.mxu0 %v357
      %v560 = vpop.f32.mrf.mxu0
      %v561 = vadd.f32 0.0, %v560
      %v562 = vpop.f32.mrf.mxu0
      %v563 = vadd.f32 0.0, %v562
      %564 = vmatmul.bf16.gmra.mxu0 %v359
      %v565 = vpop.f32.mrf.mxu0
      %v566 = vadd.f32 0.0, %v565
      %v567 = vpop.f32.mrf.mxu0
      %v568 = vadd.f32 0.0, %v567
      %569 = vmatmul.bf16.gmra.mxu0 %v361
      %v570 = vpop.f32.mrf.mxu0
      %v571 = vadd.f32 0.0, %v570
      %v572 = vpop.f32.mrf.mxu0
      %v573 = vadd.f32 0.0, %v572
      %574 = vmatmul.bf16.gmra.mxu0 %v363
      %v575 = vpop.f32.mrf.mxu0
      %v576 = vadd.f32 0.0, %v575
      %v577 = vpop.f32.mrf.mxu0
      %v578 = vadd.f32 0.0, %v577
      %579 = vmatmul.bf16.gmra.mxu0 %v365
      %v580 = vpop.f32.mrf.mxu0
      %v581 = vadd.f32 0.0, %v580
      %v582 = vpop.f32.mrf.mxu0
      %v583 = vadd.f32 0.0, %v582
      %584 = vdwg.mxu0
      %585 = vmatpush.bf16.msra.mxu0 0
      %586 = vmatpush.bf16.msra.mxu0 0
      %587 = vmatpush.bf16.msra.mxu0 0
      %588 = vmatpush.bf16.msra.mxu0 0
      %589 = vmatpush.bf16.msra.mxu0 0
      %590 = vmatpush.bf16.msra.mxu0 0
      %591 = vmatpush.bf16.msra.mxu0 %v494
      %592 = vmatpush.bf16.msra.mxu0 %v429
      %593 = vmatmul.bf16.gmra.mxu0 %v442
      %v594 = vpop.f32.mrf.mxu0
      %v595 = vadd.f32 %v506, %v594
      %v596 = vpop.f32.mrf.mxu0
      %v597 = vadd.f32 %v508, %v596
      %598 = vmatmul.bf16.gmra.mxu0 %v445
      %v599 = vpop.f32.mrf.mxu0
      %v600 = vadd.f32 %v511, %v599
      %v601 = vpop.f32.mrf.mxu0
      %v602 = vadd.f32 %v513, %v601
      %603 = vmatmul.bf16.gmra.mxu0 %v448
      %v604 = vpop.f32.mrf.mxu0
      %v605 = vadd.f32 %v516, %v604
      %v606 = vpop.f32.mrf.mxu0
      %v607 = vadd.f32 %v518, %v606
      %608 = vmatmul.bf16.gmra.mxu0 %v451
      %v609 = vpop.f32.mrf.mxu0
      %v610 = vadd.f32 %v521, %v609
      %v611 = vpop.f32.mrf.mxu0
      %v612 = vadd.f32 %v523, %v611
      %613 = vmatmul.bf16.gmra.mxu0 %v454
      %v614 = vpop.f32.mrf.mxu0
      %v615 = vadd.f32 %v526, %v614
      %v616 = vpop.f32.mrf.mxu0
      %v617 = vadd.f32 %v528, %v616
      %618 = vmatmul.bf16.gmra.mxu0 %v457
      %v619 = vpop.f32.mrf.mxu0
      %v620 = vadd.f32 %v531, %v619
      %v621 = vpop.f32.mrf.mxu0
      %v622 = vadd.f32 %v533, %v621
      %623 = vmatmul.bf16.gmra.mxu0 %v460
      %v624 = vpop.f32.mrf.mxu0
      %v625 = vadd.f32 %v536, %v624
      %v626 = vpop.f32.mrf.mxu0
      %v627 = vadd.f32 %v538, %v626
      %628 = vmatmul.bf16.gmra.mxu0 %v463
      %v629 = vpop.f32.mrf.mxu0
      %v630 = vadd.f32 %v541, %v629
      %v631 = vpop.f32.mrf.mxu0
      %v632 = vadd.f32 %v543, %v631
      %633 = vmatmul.bf16.gmra.mxu0 %v466
      %v634 = vpop.f32.mrf.mxu0
      %v635 = vadd.f32 %v546, %v634
      %v636 = vpop.f32.mrf.mxu0
      %v637 = vadd.f32 %v548, %v636
      %638 = vmatmul.bf16.gmra.mxu0 %v469
      %v639 = vpop.f32.mrf.mxu0
      %v640 = vadd.f32 %v551, %v639
      %v641 = vpop.f32.mrf.mxu0
      %v642 = vadd.f32 %v553, %v641
      %643 = vmatmul.bf16.gmra.mxu0 %v472
      %v644 = vpop.f32.mrf.mxu0
      %v645 = vadd.f32 %v556, %v644
      %v646 = vpop.f32.mrf.mxu0
      %v647 = vadd.f32 %v558, %v646
      %648 = vmatmul.bf16.gmra.mxu0 %v475
      %v649 = vpop.f32.mrf.mxu0
      %v650 = vadd.f32 %v561, %v649
      %v651 = vpop.f32.mrf.mxu0
      %v652 = vadd.f32 %v563, %v651
      %653 = vmatmul.bf16.gmra.mxu0 %v478
      %v654 = vpop.f32.mrf.mxu0
      %v655 = vadd.f32 %v566, %v654
      %v656 = vpop.f32.mrf.mxu0
      %v657 = vadd.f32 %v568, %v656
      %658 = vmatmul.bf16.gmra.mxu0 %v481
      %v659 = vpop.f32.mrf.mxu0
      %v660 = vadd.f32 %v571, %v659
      %v661 = vpop.f32.mrf.mxu0
      %v662 = vadd.f32 %v573, %v661
      %663 = vmatmul.bf16.gmra.mxu0 %v484
      %v664 = vpop.f32.mrf.mxu0
      %v665 = vadd.f32 %v576, %v664
      %v666 = vpop.f32.mrf.mxu0
      %v667 = vadd.f32 %v578, %v666
      %668 = vmatmul.bf16.gmra.mxu0 %v487
      %v669 = vpop.f32.mrf.mxu0
      %v670 = vadd.f32 %v581, %v669
      %v671 = vpop.f32.mrf.mxu0
      %v672 = vadd.f32 %v583, %v671
      %673 = vdwg.mxu0
      %v674 = vpack.c.bf16 %v595, %v595
      %v675 = vpack.c.bf16 %v597, %v597
      %v676 = vpack.c.bf16 %v600, %v600
      %v677 = vpack.c.bf16 %v602, %v602
      %v678 = vpack.c.bf16 %v605, %v605
      %v679 = vpack.c.bf16 %v607, %v607
      %v680 = vpack.c.bf16 %v610, %v610
      %v681 = vpack.c.bf16 %v612, %v612
      %v682 = vpack.c.bf16 %v615, %v615
      %v683 = vpack.c.bf16 %v617, %v617
      %v684 = vpack.c.bf16 %v620, %v620
      %v685 = vpack.c.bf16 %v622, %v622
      %v686 = vpack.c.bf16 %v625, %v625
      %v687 = vpack.c.bf16 %v627, %v627
      %v688 = vpack.c.bf16 %v630, %v630
      %v689 = vpack.c.bf16 %v632, %v632
      %v690 = vpack.c.bf16 %v635, %v635
      %v691 = vpack.c.bf16 %v637, %v637
      %v692 = vpack.c.bf16 %v640, %v640
      %v693 = vpack.c.bf16 %v642, %v642
      %v694 = vpack.c.bf16 %v645, %v645
      %v695 = vpack.c.bf16 %v647, %v647
      %v696 = vpack.c.bf16 %v650, %v650
      %v697 = vpack.c.bf16 %v652, %v652
      %v698 = vpack.c.bf16 %v655, %v655
      %v699 = vpack.c.bf16 %v657, %v657
      %v700 = vpack.c.bf16 %v660, %v660
      %v701 = vpack.c.bf16 %v662, %v662
      %v702 = vpack.c.bf16 %v665, %v665
      %v703 = vpack.c.bf16 %v667, %v667
      %v704 = vpack.c.bf16 %v670, %v670
      %v705 = vpack.c.bf16 %v672, %v672
      %706 = vst [vmem:[%s185] sm:$0xf] %v674
      %707 = vst [vmem:[%s185 + $0x4] sm:$0xf] %v675
      %708 = vst [vmem:[%s185 + $0x8] sm:$0xf] %v676
      %709 = vst [vmem:[%s185 + $0xc] sm:$0xf] %v677
      %710 = vst [vmem:[%s185 + $0x10] sm:$0xf] %v678
      %711 = vst [vmem:[%s185 + $0x14] sm:$0xf] %v679
      %712 = vst [vmem:[%s185 + $0x18] sm:$0xf] %v680
      %713 = vst [vmem:[%s185 + $0x1c] sm:$0xf] %v681
      %714 = vst [vmem:[%s185 + $0x20] sm:$0xf] %v682
      %715 = vst [vmem:[%s185 + $0x24] sm:$0xf] %v683
      %716 = vst [vmem:[%s185 + $0x28] sm:$0xf] %v684
      %717 = vst [vmem:[%s185 + $0x2c] sm:$0xf] %v685
      %718 = vst [vmem:[%s185 + $0x30] sm:$0xf] %v686
      %719 = vst [vmem:[%s185 + $0x34] sm:$0xf] %v687
      %720 = vst [vmem:[%s185 + $0x38] sm:$0xf] %v688
      %721 = vst [vmem:[%s185 + $0x3c] sm:$0xf] %v689
      %722 = vst [vmem:[%s185 + $0x40] sm:$0xf] %v690
      %723 = vst [vmem:[%s185 + $0x44] sm:$0xf] %v691
      %724 = vst [vmem:[%s185 + $0x48] sm:$0xf] %v692
      %725 = vst [vmem:[%s185 + $0x4c] sm:$0xf] %v693
      %726 = vst [vmem:[%s185 + $0x50] sm:$0xf] %v694
      %727 = vst [vmem:[%s185 + $0x54] sm:$0xf] %v695
      %728 = vst [vmem:[%s185 + $0x58] sm:$0xf] %v696
      %729 = vst [vmem:[%s185 + $0x5c] sm:$0xf] %v697
      %730 = vst [vmem:[%s185 + $0x60] sm:$0xf] %v698
      %731 = vst [vmem:[%s185 + $0x64] sm:$0xf] %v699
      %732 = vst [vmem:[%s185 + $0x68] sm:$0xf] %v700
      %733 = vst [vmem:[%s185 + $0x6c] sm:$0xf] %v701
      %734 = vst [vmem:[%s185 + $0x70] sm:$0xf] %v702
      %735 = vst [vmem:[%s185 + $0x74] sm:$0xf] %v703
      %736 = vst [vmem:[%s185 + $0x78] sm:$0xf] %v704
      %737 = vst [vmem:[%s185 + $0x7c] sm:$0xf] %v705
      %s738 = smul.u32 32, %s17
      %p739 = scmp.lt.s32.totalorder %s738, 255
      %s740 = scalar_select %p739, %s738, 255
      %p741 = scmp.lt.s32.totalorder %s18, 0
      %s742 = scalar_select %p741, %s18, 0
      %s743 = sadd.s32 %s742, %s740
      %s744 = smul.addr %s743, 4
      %s745 = scalar_lea.vmem %s2, %s744
      // Predicated region
      $region29: #{aeresnet_forward.42} parent=27 // pred_check
        %p746 = pneg %p97
      $region30: #{aeresnet_forward.42} parent=27 // pred_check_branch
        %748 = sbr.rel (%p746) target = $region32
      $region31: #{aeresnet_forward.42} parent=27 // pred_region
        %s749 = smul.u32 32, %s17
      $region32: #{aeresnet_forward.42} parent=27 // pred_fallthru
        _
    $region28: #{aeresnet_forward.42} parent=5 // pred_fallthru
      _
    %p750 = scmp.le.s32.totalorder 2, %s8
    // Predicated region
    $region33: #{aeresnet_forward.42} parent=5 // pred_check
      %p751 = pneg %p750
    $region34: #{aeresnet_forward.42} parent=5 // pred_check_branch
      %753 = sbr.rel (%p751) target = $region36
    $region35: #{aeresnet_forward.42} parent=5 // pred_region
      %s754 = ssub.s32 %s8, 2
      // Predicated region
      $region37: #{aeresnet_forward.42} parent=35 // pred_check
        %p755 = pneg %p103
      $region38: #{aeresnet_forward.42} parent=35 // pred_check_branch
        %757 = sbr.rel (%p755) target = $region40
      $region39: #{aeresnet_forward.42} parent=35 // pred_region
        %s758 = smul.u32 32, %s19
        %p759 = scmp.lt.s32.totalorder %s758, 255
        %s760 = scalar_select %p759, %s758, 255
        %p761 = scmp.lt.s32.totalorder %s20, 0
        %s762 = scalar_select %p761, %s20, 0
        %s763 = sadd.s32 %s762, %s760
        %s764 = smul.addr %s763, 4
        %s765 = scalar_lea.vmem %s2, %s764
      $region40: #{aeresnet_forward.42} parent=35 // pred_fallthru
        _
    $region36: #{aeresnet_forward.42} parent=5 // pred_fallthru
      _
  $region6: #{aeresnet_forward.42} parent=0 // loop_footer
    %s12 = sadd.s32 1, %s8
  $region7: #{aeresnet_forward.42} parent=0 // loop_footer_branch
    %7 = sbr.rel target = $region3
  $region8: #{aeresnet_forward.42} parent=0 // loop_exit
    _

// kernel: aeresnet_forward.43
$region0: #{aeresnet_forward.43}
  #allocation0 [shape = 'u32[]', space=smem, size = 0x4, offset = 0x4, fixed_abs, tag = 'smem constant byte address 0x4 - core index']
  #allocation1 [shape = 'u32[72,128]{1,0:T(1,128)}', space=vmem, size = 0x9000, scoped, tag = 'internal scratch']
  %s0 = inlined_call_operand.vmem [shape: bf16[512,72], index: 0, kind: input, shape index: {}]
  %s1 = inlined_call_operand.vmem [shape: bf16[72,128], index: 1, kind: input, shape index: {}]
  %s2 = inlined_call_operand.vmem [shape: bf16[512,128], index: 2, kind: output, shape index: {}]
  %s3 = sld [smem:[#allocation0]]
  $region41: #{aeresnet_forward.43} parent=0
    _
  %s5 = ssub.s32 1, %s3
  %s6 = scalar_select 0, %s5, %s3
  loop: start=0, step=1, limit=4
  $region2: #{aeresnet_forward.43} parent=0 // loop_pre_header
    _
  $region3: #{aeresnet_forward.43} parent=0 // loop_header
    %s8 = sphi 0, %s12
    %p9 = scmp.ge.s32.totalorder %s8, 4
    %s15 = sphi 0, %s27
    %s16 = sphi 0, %s23
    %s17 = sphi 0, %s15
    %s18 = sphi 0, %s16
    %s19 = sphi 0, %s17
    %s20 = sphi 0, %s18
    %s30 = sphi 0, %s32
    %s33 = sphi 0, %s30
    %s34 = sphi 0, %s33
    %s50 = sphi 0, %s34
    %s56 = sphi 0, %s58
    %s59 = sphi 0, %s56
    %s60 = sphi 0, %s59
    %s76 = sphi 0, %s60
    %s84 = sphi 0, %s86
    %s87 = sphi 0, %s84
    %s88 = sphi 0, %s87
    %s104 = sphi 0, %s88
  $region4: #{aeresnet_forward.43} parent=0 // loop_header_branch
    %11 = sbr.rel (%p9) target = $region8
  $region5: #{aeresnet_forward.43} parent=0 // loop_body
    %s13 = ssub.s32 %s8, 1
    %s14 = ssub.s32 %s8, 2
    %s21 = sadd.s32 1, %s16
    %p22 = scmp.ge.s32.totalorder %s21, 1
    %s23 = scalar_select %p22, 0, %s21
    %s24 = sadd.s32 1, %s15
    %s25 = scalar_select %p22, %s24, %s15
    %p26 = scmp.ge.s32.totalorder %s25, 2
    %s27 = scalar_select %p26, 0, %s25
    %s28 = ssub.s32 %s15, %s27
    %p29 = scmp.eq.s32.totalorder %s28, 0
    %s31 = sadd.s32 %s30, 1
    %s32 = scalar_select %p29, %s30, %s31
    %p35 = pneg %p29
    %p36 = scmp.eq.s32.totalorder %s8, 1
    %p37 = por %p35, %p36
    %p38 = scmp.ne.s32.totalorder %s30, %s33
    %p39 = scmp.eq.s32.totalorder %s8, 0
    %p40 = por %p38, %p39
    %p41 = scmp.ne.s32.totalorder %s30, %s33
    %p42 = scmp.eq.s32.totalorder %s13, 1
    %p43 = por %p41, %p42
    %p44 = scmp.ne.s32.totalorder %s33, %s34
    %p45 = scmp.eq.s32.totalorder %s13, 0
    %p46 = por %p44, %p45
    %p47 = scmp.ne.s32.totalorder %s33, %s34
    %p48 = scmp.eq.s32.totalorder %s14, 1
    %p49 = por %p47, %p48
    %p51 = scmp.ne.s32.totalorder %s34, %s50
    %p52 = scmp.eq.s32.totalorder %s14, 0
    %p53 = por %p51, %p52
    %s54 = ssub.s32 %s16, %s23
    %p55 = scmp.eq.s32.totalorder %s54, 0
    %s57 = sadd.s32 %s56, 1
    %s58 = scalar_select %p55, %s56, %s57
    %p61 = pneg %p55
    %p62 = scmp.eq.s32.totalorder %s8, 1
    %p63 = por %p61, %p62
    %p64 = scmp.ne.s32.totalorder %s56, %s59
    %p65 = scmp.eq.s32.totalorder %s8, 0
    %p66 = por %p64, %p65
    %p67 = scmp.ne.s32.totalorder %s56, %s59
    %p68 = scmp.eq.s32.totalorder %s13, 1
    %p69 = por %p67, %p68
    %p70 = scmp.ne.s32.totalorder %s59, %s60
    %p71 = scmp.eq.s32.totalorder %s13, 0
    %p72 = por %p70, %p71
    %p73 = scmp.ne.s32.totalorder %s59, %s60
    %p74 = scmp.eq.s32.totalorder %s14, 1
    %p75 = por %p73, %p74
    %p77 = scmp.ne.s32.totalorder %s60, %s76
    %p78 = scmp.eq.s32.totalorder %s14, 0
    %p79 = por %p77, %p78
    %s80 = ssub.s32 %s15, %s27
    %s81 = ssub.s32 %s16, %s23
    %s82 = sor.u32 %s80, %s81
    %p83 = scmp.eq.s32.totalorder %s82, 0
    %s85 = sadd.s32 %s84, 1
    %s86 = scalar_select %p83, %s84, %s85
    %p89 = pneg %p83
    %p90 = scmp.eq.s32.totalorder %s8, 1
    %p91 = por %p89, %p90
    %p92 = scmp.ne.s32.totalorder %s84, %s87
    %p93 = scmp.eq.s32.totalorder %s8, 0
    %p94 = por %p92, %p93
    %p95 = scmp.ne.s32.totalorder %s84, %s87
    %p96 = scmp.eq.s32.totalorder %s13, 1
    %p97 = por %p95, %p96
    %p98 = scmp.ne.s32.totalorder %s87, %s88
    %p99 = scmp.eq.s32.totalorder %s13, 0
    %p100 = por %p98, %p99
    %p101 = scmp.ne.s32.totalorder %s87, %s88
    %p102 = scmp.eq.s32.totalorder %s14, 1
    %p103 = por %p101, %p102
    %p105 = scmp.ne.s32.totalorder %s88, %s104
    %p106 = scmp.eq.s32.totalorder %s14, 0
    %p107 = por %p105, %p106
    %p108 = scmp.le.s32.totalorder 1, %s8
    %p109 = scmp.lt.s32.totalorder %s8, 3
    %p110 = pnand %p108, %p109
    %p111 = pneg %p110
    // Predicated region
    $region9: #{aeresnet_forward.43} parent=5 // pred_check
      _
    $region10: #{aeresnet_forward.43} parent=5 // pred_check_branch
      %113 = sbr.rel (%p110) target = $region12
    $region11: #{aeresnet_forward.43} parent=5 // pred_region
      %s114 = ssub.s32 %s8, 1
      // Predicated region
      $region13: #{aeresnet_forward.43} parent=11 // pred_check
        %p115 = pneg %p72
      $region14: #{aeresnet_forward.43} parent=11 // pred_check_branch
        %117 = sbr.rel (%p115) target = $region16
      $region15: #{aeresnet_forward.43} parent=11 // pred_region
        %p118 = scmp.lt.s32.totalorder %s18, 0
        %s119 = scalar_select %p118, %s18, 0
        %s120 = smul.addr %s119, 4
        %s121 = scalar_lea.vmem %s1, %s120
      $region16: #{aeresnet_forward.43} parent=11 // pred_fallthru
        _
    $region12: #{aeresnet_forward.43} parent=5 // pred_fallthru
      _
    %p122 = scmp.lt.s32.totalorder %s8, 2
    // Predicated region
    $region17: #{aeresnet_forward.43} parent=5 // pred_check
      %p123 = pneg %p122
    $region18: #{aeresnet_forward.43} parent=5 // pred_check_branch
      %125 = sbr.rel (%p123) target = $region20
    $region19: #{aeresnet_forward.43} parent=5 // pred_region
      // Predicated region
      $region21: #{aeresnet_forward.43} parent=19 // pred_check
        %p126 = pneg %p40
      $region22: #{aeresnet_forward.43} parent=19 // pred_check_branch
        %128 = sbr.rel (%p126) target = $region24
      $region23: #{aeresnet_forward.43} parent=19 // pred_region
        %s129 = smul.u32 32, %s15
        %p130 = scmp.lt.s32.totalorder %s129, 63
        %s131 = scalar_select %p130, %s129, 63
        %s132 = smul.addr %s131, 4
        %s133 = scalar_lea.vmem %s0, %s132
        %s134 = smul.u32 32, %s15
      $region24: #{aeresnet_forward.43} parent=19 // pred_fallthru
        _
    $region20: #{aeresnet_forward.43} parent=5 // pred_fallthru
      _
    %p135 = scmp.le.s32.totalorder 1, %s8
    %p136 = scmp.lt.s32.totalorder %s8, 3
    %p137 = pnand %p135, %p136
    %p138 = pneg %p137
    // Predicated region
    $region25: #{aeresnet_forward.43} parent=5 // pred_check
      _
    $region26: #{aeresnet_forward.43} parent=5 // pred_check_branch
      %140 = sbr.rel (%p137) target = $region28
    $region27: #{aeresnet_forward.43} parent=5 // pred_region
      %s141 = ssub.s32 %s8, 1
      %s142 = smul.u32 32, %s17
      %p143 = scmp.lt.s32.totalorder %s142, 63
      %s144 = scalar_select %p143, %s142, 63
      %s145 = smul.addr %s144, 4
      %s146 = scalar_lea.vmem %s0, %s145
      %p147 = pneg %p46
      %p148 = pneg %p43
      %p149 = scmp.lt.s32.totalorder %s18, 0
      %s150 = scalar_select %p149, %s18, 0
      %s151 = smul.addr %s150, 4
      %s152 = scalar_lea.vmem %s1, %s151
      %p153 = pneg %p72
      %p154 = pneg %p69
      %p155 = pneg %p100
      %p156 = pneg %p97
      %s157 = smul.u32 32, %s17
      %p158 = scmp.lt.s32.totalorder %s157, 63
      %s159 = scalar_select %p158, %s157, 63
      %p160 = scmp.lt.s32.totalorder %s18, 0
      %s161 = scalar_select %p160, %s18, 0
      %s162 = sadd.s32 %s161, %s159
      %s163 = smul.addr %s162, 4
      %s164 = scalar_lea.vmem %s2, %s163
      %s165 = smul.u32 32, %s17
      %p166 = scmp.lt.s32.totalorder %s165, 63
      %s167 = scalar_select %p166, %s165, 63
      %s168 = smul.addr %s167, 4
      %s169 = scalar_lea.vmem %s0, %s168
      %s170 = smul.u32 32, %s17
      %p171 = scmp.lt.s32.totalorder %s18, 0
      %s172 = scalar_select %p171, %s18, 0
      %s173 = smul.addr %s172, 4
      %s174 = scalar_lea.vmem %s1, %s173
      %s175 = smul.u32 32, %s17
      %p176 = scmp.lt.s32.totalorder %s175, 63
      %s177 = scalar_select %p176, %s175, 63
      %p178 = scmp.lt.s32.totalorder %s18, 0
      %s179 = scalar_select %p178, %s18, 0
      %s180 = sadd.s32 %s179, %s177
      %s181 = smul.addr %s180, 4
      %s182 = scalar_lea.vmem %s2, %s181
      %s183 = smul.u32 32, %s17
      %v185 = vld [vmem:[%s169] sm:$0xf]
      %v186 = vld [vmem:[%s169 + $0x4] sm:$0xf]
      %v187 = vld [vmem:[%s169 + $0x8] sm:$0xf]
      %v188 = vld [vmem:[%s169 + $0xc] sm:$0xf]
      %v189 = vld [vmem:[%s169 + $0x10] sm:$0xf]
      %v190 = vld [vmem:[%s169 + $0x14] sm:$0xf]
      %v191 = vld [vmem:[%s169 + $0x18] sm:$0xf]
      %v192 = vld [vmem:[%s169 + $0x1c] sm:$0xf]
      %v193 = vld [vmem:[%s169 + $0x20] sm:$0xf]
      %v194 = vld [vmem:[%s169 + $0x24] sm:$0xf]
      %v195 = vld [vmem:[%s169 + $0x28] sm:$0xf]
      %v196 = vld [vmem:[%s169 + $0x2c] sm:$0xf]
      %v197 = vld [vmem:[%s169 + $0x30] sm:$0xf]
      %v198 = vld [vmem:[%s169 + $0x34] sm:$0xf]
      %v199 = vld [vmem:[%s169 + $0x38] sm:$0xf]
      %v200 = vld [vmem:[%s169 + $0x3c] sm:$0xf]
      %v201 = vld [vmem:[%s169 + $0x40] sm:$0xf]
      %v202 = vld [vmem:[%s169 + $0x44] sm:$0xf]
      %v203 = vld [vmem:[%s169 + $0x48] sm:$0xf]
      %v204 = vld [vmem:[%s169 + $0x4c] sm:$0xf]
      %v205 = vld [vmem:[%s169 + $0x50] sm:$0xf]
      %v206 = vld [vmem:[%s169 + $0x54] sm:$0xf]
      %v207 = vld [vmem:[%s169 + $0x58] sm:$0xf]
      %v208 = vld [vmem:[%s169 + $0x5c] sm:$0xf]
      %v209 = vld [vmem:[%s169 + $0x60] sm:$0xf]
      %v210 = vld [vmem:[%s169 + $0x64] sm:$0xf]
      %v211 = vld [vmem:[%s169 + $0x68] sm:$0xf]
      %v212 = vld [vmem:[%s169 + $0x6c] sm:$0xf]
      %v213 = vld [vmem:[%s169 + $0x70] sm:$0xf]
      %v214 = vld [vmem:[%s169 + $0x74] sm:$0xf]
      %v215 = vld [vmem:[%s169 + $0x78] sm:$0xf]
      %v216 = vld [vmem:[%s169 + $0x7c] sm:$0xf]
      %v217 = vld [vmem:[%s174] sm:$0xf]
      %v218 = vld [vmem:[%s174 + $0x4] sm:$0xf]
      %v219 = vld [vmem:[%s174 + $0x8] sm:$0xf]
      %v220 = vld [vmem:[%s174 + $0xc] sm:$0xf]
      %v221 = vld [vmem:[%s174 + $0x10] sm:$0xf]
      %v222 = vld [vmem:[%s174 + $0x14] sm:$0xf]
      %v223 = vld [vmem:[%s174 + $0x18] sm:$0xf]
      %v224 = vld [vmem:[%s174 + $0x1c] sm:$0xf]
      %v225 = vld [vmem:[%s174 + $0x20] sm:$0xf]
      %v258 = vunpack.c.l.b16 %v185
      %v259 = vunpack.c.l.b16 %v186
      %v260 = vunpack.c.l.b16 %v187
      %v261 = vunpack.c.l.b16 %v188
      %v262 = vunpack.c.l.b16 %v189
      %v263 = vunpack.c.l.b16 %v190
      %v264 = vunpack.c.l.b16 %v191
      %v265 = vunpack.c.l.b16 %v192
      %v266 = vunpack.c.l.b16 %v193
      %v267 = vunpack.c.l.b16 %v194
      %v268 = vunpack.c.l.b16 %v195
      %v269 = vunpack.c.l.b16 %v196
      %v270 = vunpack.c.l.b16 %v197
      %v271 = vunpack.c.l.b16 %v198
      %v272 = vunpack.c.l.b16 %v199
      %v273 = vunpack.c.l.b16 %v200
      %v274 = vunpack.c.l.b16 %v201
      %v275 = vunpack.c.l.b16 %v202
      %v276 = vunpack.c.l.b16 %v203
      %v277 = vunpack.c.l.b16 %v204
      %v278 = vunpack.c.l.b16 %v205
      %v279 = vunpack.c.l.b16 %v206
      %v280 = vunpack.c.l.b16 %v207
      %v281 = vunpack.c.l.b16 %v208
      %v282 = vunpack.c.l.b16 %v209
      %v283 = vunpack.c.l.b16 %v210
      %v284 = vunpack.c.l.b16 %v211
      %v285 = vunpack.c.l.b16 %v212
      %v286 = vunpack.c.l.b16 %v213
      %v287 = vunpack.c.l.b16 %v214
      %v288 = vunpack.c.l.b16 %v215
      %v289 = vunpack.c.l.b16 %v216
      %v290 = vpack.c.b16 %v259, %v258
      %v291 = vpack.c.b16 %v261, %v260
      %v292 = vpack.c.b16 %v263, %v262
      %v293 = vpack.c.b16 %v265, %v264
      %v294 = vpack.c.b16 %v267, %v266
      %v295 = vpack.c.b16 %v269, %v268
      %v296 = vpack.c.b16 %v271, %v270
      %v297 = vpack.c.b16 %v273, %v272
      %v298 = vpack.c.b16 %v275, %v274
      %v299 = vpack.c.b16 %v277, %v276
      %v300 = vpack.c.b16 %v279, %v278
      %v301 = vpack.c.b16 %v281, %v280
      %v302 = vpack.c.b16 %v283, %v282
      %v303 = vpack.c.b16 %v285, %v284
      %v304 = vpack.c.b16 %v287, %v286
      %v305 = vpack.c.b16 %v289, %v288
      %v315 = vunpack.c.l.b16 %v217
      %v316 = vunpack.c.l.b16 %v218
      %v317 = vunpack.c.l.b16 %v219
      %v318 = vunpack.c.l.b16 %v220
      %v319 = vunpack.c.l.b16 %v221
      %v320 = vunpack.c.l.b16 %v222
      %v321 = vunpack.c.l.b16 %v223
      %v322 = vunpack.c.l.b16 %v224
      %v323 = vunpack.c.l.b16 %v225
      %v324 = vpack.c.b16 %v316, %v315
      %v325 = vpack.c.b16 %v318, %v317
      %v326 = vpack.c.b16 %v320, %v319
      %v327 = vpack.c.b16 %v322, %v321
      %v328 = vpack.c.b16 %v323, %v323
      %vm333 = vcmask 588800
      %v335 = vsel %vm333, %v290, 0
      %v338 = vsel %vm333, %v291, 0
      %v341 = vsel %vm333, %v292, 0
      %v344 = vsel %vm333, %v293, 0
      %v347 = vsel %vm333, %v294, 0
      %v350 = vsel %vm333, %v295, 0
      %v353 = vsel %vm333, %v296, 0
      %v356 = vsel %vm333, %v297, 0
      %v359 = vsel %vm333, %v298, 0
      %v362 = vsel %vm333, %v299, 0
      %v365 = vsel %vm333, %v300, 0
      %v368 = vsel %vm333, %v301, 0
      %v371 = vsel %vm333, %v302, 0
      %v374 = vsel %vm333, %v303, 0
      %v377 = vsel %vm333, %v304, 0
      %v380 = vsel %vm333, %v305, 0
      %vm382 = vcmask 1043456
      %v384 = vsel %vm382, %v328, 0
      %386 = vmatpush.bf16.msra.mxu0 0
      %387 = vmatpush.bf16.msra.mxu0 0
      %388 = vmatpush.bf16.msra.mxu0 0
      %389 = vmatpush.bf16.msra.mxu0 %v384
      %390 = vmatpush.bf16.msra.mxu0 %v327
      %391 = vmatpush.bf16.msra.mxu0 %v326
      %392 = vmatpush.bf16.msra.mxu0 %v325
      %393 = vmatpush.bf16.msra.mxu0 %v324
      %394 = vmatmul.bf16.gmra.mxu0 %v335
      %v395 = vpop.f32.mrf.mxu0
      %v396 = vadd.f32 0.0, %v395
      %v397 = vpop.f32.mrf.mxu0
      %v398 = vadd.f32 0.0, %v397
      %399 = vmatmul.bf16.gmra.mxu0 %v338
      %v400 = vpop.f32.mrf.mxu0
      %v401 = vadd.f32 0.0, %v400
      %v402 = vpop.f32.mrf.mxu0
      %v403 = vadd.f32 0.0, %v402
      %404 = vmatmul.bf16.gmra.mxu0 %v341
      %v405 = vpop.f32.mrf.mxu0
      %v406 = vadd.f32 0.0, %v405
      %v407 = vpop.f32.mrf.mxu0
      %v408 = vadd.f32 0.0, %v407
      %409 = vmatmul.bf16.gmra.mxu0 %v344
      %v410 = vpop.f32.mrf.mxu0
      %v411 = vadd.f32 0.0, %v410
      %v412 = vpop.f32.mrf.mxu0
      %v413 = vadd.f32 0.0, %v412
      %414 = vmatmul.bf16.gmra.mxu0 %v347
      %v415 = vpop.f32.mrf.mxu0
      %v416 = vadd.f32 0.0, %v415
      %v417 = vpop.f32.mrf.mxu0
      %v418 = vadd.f32 0.0, %v417
      %419 = vmatmul.bf16.gmra.mxu0 %v350
      %v420 = vpop.f32.mrf.mxu0
      %v421 = vadd.f32 0.0, %v420
      %v422 = vpop.f32.mrf.mxu0
      %v423 = vadd.f32 0.0, %v422
      %424 = vmatmul.bf16.gmra.mxu0 %v353
      %v425 = vpop.f32.mrf.mxu0
      %v426 = vadd.f32 0.0, %v425
      %v427 = vpop.f32.mrf.mxu0
      %v428 = vadd.f32 0.0, %v427
      %429 = vmatmul.bf16.gmra.mxu0 %v356
      %v430 = vpop.f32.mrf.mxu0
      %v431 = vadd.f32 0.0, %v430
      %v432 = vpop.f32.mrf.mxu0
      %v433 = vadd.f32 0.0, %v432
      %434 = vmatmul.bf16.gmra.mxu0 %v359
      %v435 = vpop.f32.mrf.mxu0
      %v436 = vadd.f32 0.0, %v435
      %v437 = vpop.f32.mrf.mxu0
      %v438 = vadd.f32 0.0, %v437
      %439 = vmatmul.bf16.gmra.mxu0 %v362
      %v440 = vpop.f32.mrf.mxu0
      %v441 = vadd.f32 0.0, %v440
      %v442 = vpop.f32.mrf.mxu0
      %v443 = vadd.f32 0.0, %v442
      %444 = vmatmul.bf16.gmra.mxu0 %v365
      %v445 = vpop.f32.mrf.mxu0
      %v446 = vadd.f32 0.0, %v445
      %v447 = vpop.f32.mrf.mxu0
      %v448 = vadd.f32 0.0, %v447
      %449 = vmatmul.bf16.gmra.mxu0 %v368
      %v450 = vpop.f32.mrf.mxu0
      %v451 = vadd.f32 0.0, %v450
      %v452 = vpop.f32.mrf.mxu0
      %v453 = vadd.f32 0.0, %v452
      %454 = vmatmul.bf16.gmra.mxu0 %v371
      %v455 = vpop.f32.mrf.mxu0
      %v456 = vadd.f32 0.0, %v455
      %v457 = vpop.f32.mrf.mxu0
      %v458 = vadd.f32 0.0, %v457
      %459 = vmatmul.bf16.gmra.mxu0 %v374
      %v460 = vpop.f32.mrf.mxu0
      %v461 = vadd.f32 0.0, %v460
      %v462 = vpop.f32.mrf.mxu0
      %v463 = vadd.f32 0.0, %v462
      %464 = vmatmul.bf16.gmra.mxu0 %v377
      %v465 = vpop.f32.mrf.mxu0
      %v466 = vadd.f32 0.0, %v465
      %v467 = vpop.f32.mrf.mxu0
      %v468 = vadd.f32 0.0, %v467
      %469 = vmatmul.bf16.gmra.mxu0 %v380
      %v470 = vpop.f32.mrf.mxu0
      %v471 = vadd.f32 0.0, %v470
      %v472 = vpop.f32.mrf.mxu0
      %v473 = vadd.f32 0.0, %v472
      %474 = vdwg.mxu0
      %v475 = vpack.c.bf16 %v396, %v396
      %v476 = vpack.c.bf16 %v398, %v398
      %v477 = vpack.c.bf16 %v401, %v401
      %v478 = vpack.c.bf16 %v403, %v403
      %v479 = vpack.c.bf16 %v406, %v406
      %v480 = vpack.c.bf16 %v408, %v408
      %v481 = vpack.c.bf16 %v411, %v411
      %v482 = vpack.c.bf16 %v413, %v413
      %v483 = vpack.c.bf16 %v416, %v416
      %v484 = vpack.c.bf16 %v418, %v418
      %v485 = vpack.c.bf16 %v421, %v421
      %v486 = vpack.c.bf16 %v423, %v423
      %v487 = vpack.c.bf16 %v426, %v426
      %v488 = vpack.c.bf16 %v428, %v428
      %v489 = vpack.c.bf16 %v431, %v431
      %v490 = vpack.c.bf16 %v433, %v433
      %v491 = vpack.c.bf16 %v436, %v436
      %v492 = vpack.c.bf16 %v438, %v438
      %v493 = vpack.c.bf16 %v441, %v441
      %v494 = vpack.c.bf16 %v443, %v443
      %v495 = vpack.c.bf16 %v446, %v446
      %v496 = vpack.c.bf16 %v448, %v448
      %v497 = vpack.c.bf16 %v451, %v451
      %v498 = vpack.c.bf16 %v453, %v453
      %v499 = vpack.c.bf16 %v456, %v456
      %v500 = vpack.c.bf16 %v458, %v458
      %v501 = vpack.c.bf16 %v461, %v461
      %v502 = vpack.c.bf16 %v463, %v463
      %v503 = vpack.c.bf16 %v466, %v466
      %v504 = vpack.c.bf16 %v468, %v468
      %v505 = vpack.c.bf16 %v471, %v471
      %v506 = vpack.c.bf16 %v473, %v473
      %507 = vst [vmem:[%s182] sm:$0xf] %v475
      %508 = vst [vmem:[%s182 + $0x4] sm:$0xf] %v476
      %509 = vst [vmem:[%s182 + $0x8] sm:$0xf] %v477
      %510 = vst [vmem:[%s182 + $0xc] sm:$0xf] %v478
      %511 = vst [vmem:[%s182 + $0x10] sm:$0xf] %v479
      %512 = vst [vmem:[%s182 + $0x14] sm:$0xf] %v480
      %513 = vst [vmem:[%s182 + $0x18] sm:$0xf] %v481
      %514 = vst [vmem:[%s182 + $0x1c] sm:$0xf] %v482
      %515 = vst [vmem:[%s182 + $0x20] sm:$0xf] %v483
      %516 = vst [vmem:[%s182 + $0x24] sm:$0xf] %v484
      %517 = vst [vmem:[%s182 + $0x28] sm:$0xf] %v485
      %518 = vst [vmem:[%s182 + $0x2c] sm:$0xf] %v486
      %519 = vst [vmem:[%s182 + $0x30] sm:$0xf] %v487
      %520 = vst [vmem:[%s182 + $0x34] sm:$0xf] %v488
      %521 = vst [vmem:[%s182 + $0x38] sm:$0xf] %v489
      %522 = vst [vmem:[%s182 + $0x3c] sm:$0xf] %v490
      %523 = vst [vmem:[%s182 + $0x40] sm:$0xf] %v491
      %524 = vst [vmem:[%s182 + $0x44] sm:$0xf] %v492
      %525 = vst [vmem:[%s182 + $0x48] sm:$0xf] %v493
      %526 = vst [vmem:[%s182 + $0x4c] sm:$0xf] %v494
      %527 = vst [vmem:[%s182 + $0x50] sm:$0xf] %v495
      %528 = vst [vmem:[%s182 + $0x54] sm:$0xf] %v496
      %529 = vst [vmem:[%s182 + $0x58] sm:$0xf] %v497
      %530 = vst [vmem:[%s182 + $0x5c] sm:$0xf] %v498
      %531 = vst [vmem:[%s182 + $0x60] sm:$0xf] %v499
      %532 = vst [vmem:[%s182 + $0x64] sm:$0xf] %v500
      %533 = vst [vmem:[%s182 + $0x68] sm:$0xf] %v501
      %534 = vst [vmem:[%s182 + $0x6c] sm:$0xf] %v502
      %535 = vst [vmem:[%s182 + $0x70] sm:$0xf] %v503
      %536 = vst [vmem:[%s182 + $0x74] sm:$0xf] %v504
      %537 = vst [vmem:[%s182 + $0x78] sm:$0xf] %v505
      %538 = vst [vmem:[%s182 + $0x7c] sm:$0xf] %v506
      %s539 = smul.u32 32, %s17
      %p540 = scmp.lt.s32.totalorder %s539, 63
      %s541 = scalar_select %p540, %s539, 63
      %p542 = scmp.lt.s32.totalorder %s18, 0
      %s543 = scalar_select %p542, %s18, 0
      %s544 = sadd.s32 %s543, %s541
      %s545 = smul.addr %s544, 4
      %s546 = scalar_lea.vmem %s2, %s545
      // Predicated region
      $region29: #{aeresnet_forward.43} parent=27 // pred_check
        %p547 = pneg %p97
      $region30: #{aeresnet_forward.43} parent=27 // pred_check_branch
        %549 = sbr.rel (%p547) target = $region32
      $region31: #{aeresnet_forward.43} parent=27 // pred_region
        %s550 = smul.u32 32, %s17
      $region32: #{aeresnet_forward.43} parent=27 // pred_fallthru
        _
    $region28: #{aeresnet_forward.43} parent=5 // pred_fallthru
      _
    %p551 = scmp.le.s32.totalorder 2, %s8
    // Predicated region
    $region33: #{aeresnet_forward.43} parent=5 // pred_check
      %p552 = pneg %p551
    $region34: #{aeresnet_forward.43} parent=5 // pred_check_branch
      %554 = sbr.rel (%p552) target = $region36
    $region35: #{aeresnet_forward.43} parent=5 // pred_region
      %s555 = ssub.s32 %s8, 2
      // Predicated region
      $region37: #{aeresnet_forward.43} parent=35 // pred_check
        %p556 = pneg %p103
      $region38: #{aeresnet_forward.43} parent=35 // pred_check_branch
        %558 = sbr.rel (%p556) target = $region40
      $region39: #{aeresnet_forward.43} parent=35 // pred_region
        %s559 = smul.u32 32, %s19
        %p560 = scmp.lt.s32.totalorder %s559, 63
        %s561 = scalar_select %p560, %s559, 63
        %p562 = scmp.lt.s32.totalorder %s20, 0
        %s563 = scalar_select %p562, %s20, 0
        %s564 = sadd.s32 %s563, %s561
        %s565 = smul.addr %s564, 4
        %s566 = scalar_lea.vmem %s2, %s565
      $region40: #{aeresnet_forward.43} parent=35 // pred_fallthru
        _
    $region36: #{aeresnet_forward.43} parent=5 // pred_fallthru
      _
  $region6: #{aeresnet_forward.43} parent=0 // loop_footer
    %s12 = sadd.s32 1, %s8
  $region7: #{aeresnet_forward.43} parent=0 // loop_footer_branch
    %7 = sbr.rel target = $region3
  $region8: #{aeresnet_forward.43} parent=0 // loop_exit
    _

// kernel: aeresnet_forward.44
$region0: #{aeresnet_forward.44}
  #allocation0 [shape = 'u32[]', space=smem, size = 0x4, offset = 0x4, fixed_abs, tag = 'smem constant byte address 0x4 - core index']
  #allocation1 [shape = 'u32[72,128]{1,0:T(1,128)}', space=vmem, size = 0x9000, scoped, tag = 'internal scratch']
  %s0 = inlined_call_operand.vmem [shape: bf16[128,72], index: 0, kind: input, shape index: {}]
  %s1 = inlined_call_operand.vmem [shape: bf16[72,128], index: 1, kind: input, shape index: {}]
  %s2 = inlined_call_operand.vmem [shape: bf16[128,128], index: 2, kind: output, shape index: {}]
  %s3 = sld [smem:[#allocation0]]
  $region18: #{aeresnet_forward.44} parent=0
    _
  %s5 = ssub.s32 1, %s3
  %s6 = scalar_select 0, %s5, %s3
  // Predicated region
  $region2: #{aeresnet_forward.44} parent=0 // pred_check
    _
  $region3: #{aeresnet_forward.44} parent=0 // pred_check_branch
    %8 = sbr.rel (0) target = $region5
  $region4: #{aeresnet_forward.44} parent=0 // pred_region
    _
  $region5: #{aeresnet_forward.44} parent=0 // pred_fallthru
    _
  // Predicated region
  $region6: #{aeresnet_forward.44} parent=0 // pred_check
    _
  $region7: #{aeresnet_forward.44} parent=0 // pred_check_branch
    %10 = sbr.rel (0) target = $region9
  $region8: #{aeresnet_forward.44} parent=0 // pred_region
    _
  $region9: #{aeresnet_forward.44} parent=0 // pred_fallthru
    _
  %v12 = vld [vmem:[%s0] sm:$0xf]
  %v13 = vld [vmem:[%s0 + $0x4] sm:$0xf]
  %v14 = vld [vmem:[%s0 + $0x8] sm:$0xf]
  %v15 = vld [vmem:[%s0 + $0xc] sm:$0xf]
  %v16 = vld [vmem:[%s0 + $0x10] sm:$0xf]
  %v17 = vld [vmem:[%s0 + $0x14] sm:$0xf]
  %v18 = vld [vmem:[%s0 + $0x18] sm:$0xf]
  %v19 = vld [vmem:[%s0 + $0x1c] sm:$0xf]
  %v20 = vld [vmem:[%s0 + $0x20] sm:$0xf]
  %v21 = vld [vmem:[%s0 + $0x24] sm:$0xf]
  %v22 = vld [vmem:[%s0 + $0x28] sm:$0xf]
  %v23 = vld [vmem:[%s0 + $0x2c] sm:$0xf]
  %v24 = vld [vmem:[%s0 + $0x30] sm:$0xf]
  %v25 = vld [vmem:[%s0 + $0x34] sm:$0xf]
  %v26 = vld [vmem:[%s0 + $0x38] sm:$0xf]
  %v27 = vld [vmem:[%s0 + $0x3c] sm:$0xf]
  %v28 = vld [vmem:[%s1] sm:$0xf]
  %v29 = vld [vmem:[%s1 + $0x4] sm:$0xf]
  %v30 = vld [vmem:[%s1 + $0x8] sm:$0xf]
  %v31 = vld [vmem:[%s1 + $0xc] sm:$0xf]
  %v32 = vld [vmem:[%s1 + $0x10] sm:$0xf]
  %v33 = vld [vmem:[%s1 + $0x14] sm:$0xf]
  %v34 = vld [vmem:[%s1 + $0x18] sm:$0xf]
  %v35 = vld [vmem:[%s1 + $0x1c] sm:$0xf]
  %v36 = vld [vmem:[%s1 + $0x20] sm:$0xf]
  %v53 = vunpack.c.l.b16 %v12
  %v54 = vunpack.c.l.b16 %v13
  %v55 = vunpack.c.l.b16 %v14
  %v56 = vunpack.c.l.b16 %v15
  %v57 = vunpack.c.l.b16 %v16
  %v58 = vunpack.c.l.b16 %v17
  %v59 = vunpack.c.l.b16 %v18
  %v60 = vunpack.c.l.b16 %v19
  %v61 = vunpack.c.l.b16 %v20
  %v62 = vunpack.c.l.b16 %v21
  %v63 = vunpack.c.l.b16 %v22
  %v64 = vunpack.c.l.b16 %v23
  %v65 = vunpack.c.l.b16 %v24
  %v66 = vunpack.c.l.b16 %v25
  %v67 = vunpack.c.l.b16 %v26
  %v68 = vunpack.c.l.b16 %v27
  %v69 = vpack.c.b16 %v54, %v53
  %v70 = vpack.c.b16 %v56, %v55
  %v71 = vpack.c.b16 %v58, %v57
  %v72 = vpack.c.b16 %v60, %v59
  %v73 = vpack.c.b16 %v62, %v61
  %v74 = vpack.c.b16 %v64, %v63
  %v75 = vpack.c.b16 %v66, %v65
  %v76 = vpack.c.b16 %v68, %v67
  %v86 = vunpack.c.l.b16 %v28
  %v87 = vunpack.c.l.b16 %v29
  %v88 = vunpack.c.l.b16 %v30
  %v89 = vunpack.c.l.b16 %v31
  %v90 = vunpack.c.l.b16 %v32
  %v91 = vunpack.c.l.b16 %v33
  %v92 = vunpack.c.l.b16 %v34
  %v93 = vunpack.c.l.b16 %v35
  %v94 = vunpack.c.l.b16 %v36
  %v95 = vpack.c.b16 %v87, %v86
  %v96 = vpack.c.b16 %v89, %v88
  %v97 = vpack.c.b16 %v91, %v90
  %v98 = vpack.c.b16 %v93, %v92
  %v99 = vpack.c.b16 %v94, %v94
  %vm104 = vcmask 588800
  %v106 = vsel %vm104, %v69, 0
  %v109 = vsel %vm104, %v70, 0
  %v112 = vsel %vm104, %v71, 0
  %v115 = vsel %vm104, %v72, 0
  %v118 = vsel %vm104, %v73, 0
  %v121 = vsel %vm104, %v74, 0
  %v124 = vsel %vm104, %v75, 0
  %v127 = vsel %vm104, %v76, 0
  %vm129 = vcmask 1043456
  %v131 = vsel %vm129, %v99, 0
  %133 = vmatpush.bf16.msra.mxu0 0
  %134 = vmatpush.bf16.msra.mxu0 0
  %135 = vmatpush.bf16.msra.mxu0 0
  %136 = vmatpush.bf16.msra.mxu0 %v131
  %137 = vmatpush.bf16.msra.mxu0 %v98
  %138 = vmatpush.bf16.msra.mxu0 %v97
  %139 = vmatpush.bf16.msra.mxu0 %v96
  %140 = vmatpush.bf16.msra.mxu0 %v95
  %141 = vmatmul.bf16.gmra.mxu0 %v106
  %v142 = vpop.f32.mrf.mxu0
  %v143 = vadd.f32 0.0, %v142
  %v144 = vpop.f32.mrf.mxu0
  %v145 = vadd.f32 0.0, %v144
  %146 = vmatmul.bf16.gmra.mxu0 %v109
  %v147 = vpop.f32.mrf.mxu0
  %v148 = vadd.f32 0.0, %v147
  %v149 = vpop.f32.mrf.mxu0
  %v150 = vadd.f32 0.0, %v149
  %151 = vmatmul.bf16.gmra.mxu0 %v112
  %v152 = vpop.f32.mrf.mxu0
  %v153 = vadd.f32 0.0, %v152
  %v154 = vpop.f32.mrf.mxu0
  %v155 = vadd.f32 0.0, %v154
  %156 = vmatmul.bf16.gmra.mxu0 %v115
  %v157 = vpop.f32.mrf.mxu0
  %v158 = vadd.f32 0.0, %v157
  %v159 = vpop.f32.mrf.mxu0
  %v160 = vadd.f32 0.0, %v159
  %161 = vmatmul.bf16.gmra.mxu0 %v118
  %v162 = vpop.f32.mrf.mxu0
  %v163 = vadd.f32 0.0, %v162
  %v164 = vpop.f32.mrf.mxu0
  %v165 = vadd.f32 0.0, %v164
  %166 = vmatmul.bf16.gmra.mxu0 %v121
  %v167 = vpop.f32.mrf.mxu0
  %v168 = vadd.f32 0.0, %v167
  %v169 = vpop.f32.mrf.mxu0
  %v170 = vadd.f32 0.0, %v169
  %171 = vmatmul.bf16.gmra.mxu0 %v124
  %v172 = vpop.f32.mrf.mxu0
  %v173 = vadd.f32 0.0, %v172
  %v174 = vpop.f32.mrf.mxu0
  %v175 = vadd.f32 0.0, %v174
  %176 = vmatmul.bf16.gmra.mxu0 %v127
  %v177 = vpop.f32.mrf.mxu0
  %v178 = vadd.f32 0.0, %v177
  %v179 = vpop.f32.mrf.mxu0
  %v180 = vadd.f32 0.0, %v179
  %181 = vdwg.mxu0
  %v182 = vpack.c.bf16 %v143, %v143
  %v183 = vpack.c.bf16 %v145, %v145
  %v184 = vpack.c.bf16 %v148, %v148
  %v185 = vpack.c.bf16 %v150, %v150
  %v186 = vpack.c.bf16 %v153, %v153
  %v187 = vpack.c.bf16 %v155, %v155
  %v188 = vpack.c.bf16 %v158, %v158
  %v189 = vpack.c.bf16 %v160, %v160
  %v190 = vpack.c.bf16 %v163, %v163
  %v191 = vpack.c.bf16 %v165, %v165
  %v192 = vpack.c.bf16 %v168, %v168
  %v193 = vpack.c.bf16 %v170, %v170
  %v194 = vpack.c.bf16 %v173, %v173
  %v195 = vpack.c.bf16 %v175, %v175
  %v196 = vpack.c.bf16 %v178, %v178
  %v197 = vpack.c.bf16 %v180, %v180
  %198 = vst [vmem:[%s2] sm:$0xf] %v182
  %199 = vst [vmem:[%s2 + $0x4] sm:$0xf] %v183
  %200 = vst [vmem:[%s2 + $0x8] sm:$0xf] %v184
  %201 = vst [vmem:[%s2 + $0xc] sm:$0xf] %v185
  %202 = vst [vmem:[%s2 + $0x10] sm:$0xf] %v186
  %203 = vst [vmem:[%s2 + $0x14] sm:$0xf] %v187
  %204 = vst [vmem:[%s2 + $0x18] sm:$0xf] %v188
  %205 = vst [vmem:[%s2 + $0x1c] sm:$0xf] %v189
  %206 = vst [vmem:[%s2 + $0x20] sm:$0xf] %v190
  %207 = vst [vmem:[%s2 + $0x24] sm:$0xf] %v191
  %208 = vst [vmem:[%s2 + $0x28] sm:$0xf] %v192
  %209 = vst [vmem:[%s2 + $0x2c] sm:$0xf] %v193
  %210 = vst [vmem:[%s2 + $0x30] sm:$0xf] %v194
  %211 = vst [vmem:[%s2 + $0x34] sm:$0xf] %v195
  %212 = vst [vmem:[%s2 + $0x38] sm:$0xf] %v196
  %213 = vst [vmem:[%s2 + $0x3c] sm:$0xf] %v197
  // Predicated region
  $region10: #{aeresnet_forward.44} parent=0 // pred_check
    _
  $region11: #{aeresnet_forward.44} parent=0 // pred_check_branch
    %215 = sbr.rel (0) target = $region13
  $region12: #{aeresnet_forward.44} parent=0 // pred_region
    _
  $region13: #{aeresnet_forward.44} parent=0 // pred_fallthru
    _
  // Predicated region
  $region14: #{aeresnet_forward.44} parent=0 // pred_check
    _
  $region15: #{aeresnet_forward.44} parent=0 // pred_check_branch
    %217 = sbr.rel (0) target = $region17
  $region16: #{aeresnet_forward.44} parent=0 // pred_region
    _
  $region17: #{aeresnet_forward.44} parent=0 // pred_fallthru
    _

// kernel: aeresnet_forward.45
$region0: #{aeresnet_forward.45}
  #allocation0 [shape = 'u32[]', space=smem, size = 0x4, offset = 0x4, fixed_abs, tag = 'smem constant byte address 0x4 - core index']
  #allocation1 [shape = 'u32[72,128]{1,0:T(1,128)}', space=vmem, size = 0x9000, scoped, tag = 'internal scratch']
  %s0 = inlined_call_operand.vmem [shape: bf16[128,32], index: 0, kind: input, shape index: {}]
  %s1 = inlined_call_operand.vmem [shape: bf16[32,128], index: 1, kind: input, shape index: {}]
  %s2 = inlined_call_operand.vmem [shape: bf16[128,128], index: 2, kind: output, shape index: {}]
  %s3 = sld [smem:[#allocation0]]
  $region18: #{aeresnet_forward.45} parent=0
    _
  %s5 = ssub.s32 1, %s3
  %s6 = scalar_select 0, %s5, %s3
  // Predicated region
  $region2: #{aeresnet_forward.45} parent=0 // pred_check
    _
  $region3: #{aeresnet_forward.45} parent=0 // pred_check_branch
    %8 = sbr.rel (0) target = $region5
  $region4: #{aeresnet_forward.45} parent=0 // pred_region
    _
  $region5: #{aeresnet_forward.45} parent=0 // pred_fallthru
    _
  // Predicated region
  $region6: #{aeresnet_forward.45} parent=0 // pred_check
    _
  $region7: #{aeresnet_forward.45} parent=0 // pred_check_branch
    %10 = sbr.rel (0) target = $region9
  $region8: #{aeresnet_forward.45} parent=0 // pred_region
    _
  $region9: #{aeresnet_forward.45} parent=0 // pred_fallthru
    _
  %v12 = vld [vmem:[%s0] sm:$0xf]
  %v13 = vld [vmem:[%s0 + $0x4] sm:$0xf]
  %v14 = vld [vmem:[%s0 + $0x8] sm:$0xf]
  %v15 = vld [vmem:[%s0 + $0xc] sm:$0xf]
  %v16 = vld [vmem:[%s0 + $0x10] sm:$0xf]
  %v17 = vld [vmem:[%s0 + $0x14] sm:$0xf]
  %v18 = vld [vmem:[%s0 + $0x18] sm:$0xf]
  %v19 = vld [vmem:[%s0 + $0x1c] sm:$0xf]
  %v20 = vld [vmem:[%s0 + $0x20] sm:$0xf]
  %v21 = vld [vmem:[%s0 + $0x24] sm:$0xf]
  %v22 = vld [vmem:[%s0 + $0x28] sm:$0xf]
  %v23 = vld [vmem:[%s0 + $0x2c] sm:$0xf]
  %v24 = vld [vmem:[%s0 + $0x30] sm:$0xf]
  %v25 = vld [vmem:[%s0 + $0x34] sm:$0xf]
  %v26 = vld [vmem:[%s0 + $0x38] sm:$0xf]
  %v27 = vld [vmem:[%s0 + $0x3c] sm:$0xf]
  %v28 = vld [vmem:[%s1] sm:$0xf]
  %v29 = vld [vmem:[%s1 + $0x4] sm:$0xf]
  %v30 = vld [vmem:[%s1 + $0x8] sm:$0xf]
  %v31 = vld [vmem:[%s1 + $0xc] sm:$0xf]
  %v48 = vunpack.c.l.b16 %v12
  %v49 = vunpack.c.l.b16 %v13
  %v50 = vunpack.c.l.b16 %v14
  %v51 = vunpack.c.l.b16 %v15
  %v52 = vunpack.c.l.b16 %v16
  %v53 = vunpack.c.l.b16 %v17
  %v54 = vunpack.c.l.b16 %v18
  %v55 = vunpack.c.l.b16 %v19
  %v56 = vunpack.c.l.b16 %v20
  %v57 = vunpack.c.l.b16 %v21
  %v58 = vunpack.c.l.b16 %v22
  %v59 = vunpack.c.l.b16 %v23
  %v60 = vunpack.c.l.b16 %v24
  %v61 = vunpack.c.l.b16 %v25
  %v62 = vunpack.c.l.b16 %v26
  %v63 = vunpack.c.l.b16 %v27
  %v64 = vpack.c.b16 %v49, %v48
  %v65 = vpack.c.b16 %v51, %v50
  %v66 = vpack.c.b16 %v53, %v52
  %v67 = vpack.c.b16 %v55, %v54
  %v68 = vpack.c.b16 %v57, %v56
  %v69 = vpack.c.b16 %v59, %v58
  %v70 = vpack.c.b16 %v61, %v60
  %v71 = vpack.c.b16 %v63, %v62
  %v76 = vunpack.c.l.b16 %v28
  %v77 = vunpack.c.l.b16 %v29
  %v78 = vunpack.c.l.b16 %v30
  %v79 = vunpack.c.l.b16 %v31
  %v80 = vpack.c.b16 %v77, %v76
  %v81 = vpack.c.b16 %v79, %v78
  %vm84 = vcmask 261120
  %v86 = vsel %vm84, %v64, 0
  %v89 = vsel %vm84, %v65, 0
  %v92 = vsel %vm84, %v66, 0
  %v95 = vsel %vm84, %v67, 0
  %v98 = vsel %vm84, %v68, 0
  %v101 = vsel %vm84, %v69, 0
  %v104 = vsel %vm84, %v70, 0
  %v107 = vsel %vm84, %v71, 0
  %109 = vmatpush.bf16.msra.mxu0 0
  %110 = vmatpush.bf16.msra.mxu0 0
  %111 = vmatpush.bf16.msra.mxu0 0
  %112 = vmatpush.bf16.msra.mxu0 0
  %113 = vmatpush.bf16.msra.mxu0 0
  %114 = vmatpush.bf16.msra.mxu0 0
  %115 = vmatpush.bf16.msra.mxu0 %v81
  %116 = vmatpush.bf16.msra.mxu0 %v80
  %117 = vmatmul.bf16.gmra.mxu0 %v86
  %v118 = vpop.f32.mrf.mxu0
  %v119 = vadd.f32 0.0, %v118
  %v120 = vpop.f32.mrf.mxu0
  %v121 = vadd.f32 0.0, %v120
  %122 = vmatmul.bf16.gmra.mxu0 %v89
  %v123 = vpop.f32.mrf.mxu0
  %v124 = vadd.f32 0.0, %v123
  %v125 = vpop.f32.mrf.mxu0
  %v126 = vadd.f32 0.0, %v125
  %127 = vmatmul.bf16.gmra.mxu0 %v92
  %v128 = vpop.f32.mrf.mxu0
  %v129 = vadd.f32 0.0, %v128
  %v130 = vpop.f32.mrf.mxu0
  %v131 = vadd.f32 0.0, %v130
  %132 = vmatmul.bf16.gmra.mxu0 %v95
  %v133 = vpop.f32.mrf.mxu0
  %v134 = vadd.f32 0.0, %v133
  %v135 = vpop.f32.mrf.mxu0
  %v136 = vadd.f32 0.0, %v135
  %137 = vmatmul.bf16.gmra.mxu0 %v98
  %v138 = vpop.f32.mrf.mxu0
  %v139 = vadd.f32 0.0, %v138
  %v140 = vpop.f32.mrf.mxu0
  %v141 = vadd.f32 0.0, %v140
  %142 = vmatmul.bf16.gmra.mxu0 %v101
  %v143 = vpop.f32.mrf.mxu0
  %v144 = vadd.f32 0.0, %v143
  %v145 = vpop.f32.mrf.mxu0
  %v146 = vadd.f32 0.0, %v145
  %147 = vmatmul.bf16.gmra.mxu0 %v104
  %v148 = vpop.f32.mrf.mxu0
  %v149 = vadd.f32 0.0, %v148
  %v150 = vpop.f32.mrf.mxu0
  %v151 = vadd.f32 0.0, %v150
  %152 = vmatmul.bf16.gmra.mxu0 %v107
  %v153 = vpop.f32.mrf.mxu0
  %v154 = vadd.f32 0.0, %v153
  %v155 = vpop.f32.mrf.mxu0
  %v156 = vadd.f32 0.0, %v155
  %157 = vdwg.mxu0
  %v158 = vpack.c.bf16 %v119, %v119
  %v159 = vpack.c.bf16 %v121, %v121
  %v160 = vpack.c.bf16 %v124, %v124
  %v161 = vpack.c.bf16 %v126, %v126
  %v162 = vpack.c.bf16 %v129, %v129
  %v163 = vpack.c.bf16 %v131, %v131
  %v164 = vpack.c.bf16 %v134, %v134
  %v165 = vpack.c.bf16 %v136, %v136
  %v166 = vpack.c.bf16 %v139, %v139
  %v167 = vpack.c.bf16 %v141, %v141
  %v168 = vpack.c.bf16 %v144, %v144
  %v169 = vpack.c.bf16 %v146, %v146
  %v170 = vpack.c.bf16 %v149, %v149
  %v171 = vpack.c.bf16 %v151, %v151
  %v172 = vpack.c.bf16 %v154, %v154
  %v173 = vpack.c.bf16 %v156, %v156
  %174 = vst [vmem:[%s2] sm:$0xf] %v158
  %175 = vst [vmem:[%s2 + $0x4] sm:$0xf] %v159
  %176 = vst [vmem:[%s2 + $0x8] sm:$0xf] %v160
  %177 = vst [vmem:[%s2 + $0xc] sm:$0xf] %v161
  %178 = vst [vmem:[%s2 + $0x10] sm:$0xf] %v162
  %179 = vst [vmem:[%s2 + $0x14] sm:$0xf] %v163
  %180 = vst [vmem:[%s2 + $0x18] sm:$0xf] %v164
  %181 = vst [vmem:[%s2 + $0x1c] sm:$0xf] %v165
  %182 = vst [vmem:[%s2 + $0x20] sm:$0xf] %v166
  %183 = vst [vmem:[%s2 + $0x24] sm:$0xf] %v167
  %184 = vst [vmem:[%s2 + $0x28] sm:$0xf] %v168
  %185 = vst [vmem:[%s2 + $0x2c] sm:$0xf] %v169
  %186 = vst [vmem:[%s2 + $0x30] sm:$0xf] %v170
  %187 = vst [vmem:[%s2 + $0x34] sm:$0xf] %v171
  %188 = vst [vmem:[%s2 + $0x38] sm:$0xf] %v172
  %189 = vst [vmem:[%s2 + $0x3c] sm:$0xf] %v173
  // Predicated region
  $region10: #{aeresnet_forward.45} parent=0 // pred_check
    _
  $region11: #{aeresnet_forward.45} parent=0 // pred_check_branch
    %191 = sbr.rel (0) target = $region13
  $region12: #{aeresnet_forward.45} parent=0 // pred_region
    _
  $region13: #{aeresnet_forward.45} parent=0 // pred_fallthru
    _
  // Predicated region
  $region14: #{aeresnet_forward.45} parent=0 // pred_check
    _
  $region15: #{aeresnet_forward.45} parent=0 // pred_check_branch
    %193 = sbr.rel (0) target = $region17
  $region16: #{aeresnet_forward.45} parent=0 // pred_region
    _
  $region17: #{aeresnet_forward.45} parent=0 // pred_fallthru
    _

// kernel: aeresnet_forward.46
$region0: #{aeresnet_forward.46}
  #allocation0 [shape = 'u32[]', space=smem, size = 0x4, offset = 0x4, fixed_abs, tag = 'smem constant byte address 0x4 - core index']
  #allocation1 [shape = 'u32[72,128]{1,0:T(1,128)}', space=vmem, size = 0x9000, scoped, tag = 'internal scratch']
  %s0 = inlined_call_operand.vmem [shape: bf16[512,32], index: 0, kind: input, shape index: {}]
  %s1 = inlined_call_operand.vmem [shape: bf16[32,128], index: 1, kind: input, shape index: {}]
  %s2 = inlined_call_operand.vmem [shape: bf16[512,128], index: 2, kind: output, shape index: {}]
  %s3 = sld [smem:[#allocation0]]
  $region41: #{aeresnet_forward.46} parent=0
    _
  %s5 = ssub.s32 1, %s3
  %s6 = scalar_select 0, %s5, %s3
  loop: start=0, step=1, limit=4
  $region2: #{aeresnet_forward.46} parent=0 // loop_pre_header
    _
  $region3: #{aeresnet_forward.46} parent=0 // loop_header
    %s8 = sphi 0, %s12
    %p9 = scmp.ge.s32.totalorder %s8, 4
    %s15 = sphi 0, %s27
    %s16 = sphi 0, %s23
    %s17 = sphi 0, %s15
    %s18 = sphi 0, %s16
    %s19 = sphi 0, %s17
    %s20 = sphi 0, %s18
    %s30 = sphi 0, %s32
    %s33 = sphi 0, %s30
    %s34 = sphi 0, %s33
    %s50 = sphi 0, %s34
    %s56 = sphi 0, %s58
    %s59 = sphi 0, %s56
    %s60 = sphi 0, %s59
    %s76 = sphi 0, %s60
    %s84 = sphi 0, %s86
    %s87 = sphi 0, %s84
    %s88 = sphi 0, %s87
    %s104 = sphi 0, %s88
  $region4: #{aeresnet_forward.46} parent=0 // loop_header_branch
    %11 = sbr.rel (%p9) target = $region8
  $region5: #{aeresnet_forward.46} parent=0 // loop_body
    %s13 = ssub.s32 %s8, 1
    %s14 = ssub.s32 %s8, 2
    %s21 = sadd.s32 1, %s16
    %p22 = scmp.ge.s32.totalorder %s21, 1
    %s23 = scalar_select %p22, 0, %s21
    %s24 = sadd.s32 1, %s15
    %s25 = scalar_select %p22, %s24, %s15
    %p26 = scmp.ge.s32.totalorder %s25, 2
    %s27 = scalar_select %p26, 0, %s25
    %s28 = ssub.s32 %s15, %s27
    %p29 = scmp.eq.s32.totalorder %s28, 0
    %s31 = sadd.s32 %s30, 1
    %s32 = scalar_select %p29, %s30, %s31
    %p35 = pneg %p29
    %p36 = scmp.eq.s32.totalorder %s8, 1
    %p37 = por %p35, %p36
    %p38 = scmp.ne.s32.totalorder %s30, %s33
    %p39 = scmp.eq.s32.totalorder %s8, 0
    %p40 = por %p38, %p39
    %p41 = scmp.ne.s32.totalorder %s30, %s33
    %p42 = scmp.eq.s32.totalorder %s13, 1
    %p43 = por %p41, %p42
    %p44 = scmp.ne.s32.totalorder %s33, %s34
    %p45 = scmp.eq.s32.totalorder %s13, 0
    %p46 = por %p44, %p45
    %p47 = scmp.ne.s32.totalorder %s33, %s34
    %p48 = scmp.eq.s32.totalorder %s14, 1
    %p49 = por %p47, %p48
    %p51 = scmp.ne.s32.totalorder %s34, %s50
    %p52 = scmp.eq.s32.totalorder %s14, 0
    %p53 = por %p51, %p52
    %s54 = ssub.s32 %s16, %s23
    %p55 = scmp.eq.s32.totalorder %s54, 0
    %s57 = sadd.s32 %s56, 1
    %s58 = scalar_select %p55, %s56, %s57
    %p61 = pneg %p55
    %p62 = scmp.eq.s32.totalorder %s8, 1
    %p63 = por %p61, %p62
    %p64 = scmp.ne.s32.totalorder %s56, %s59
    %p65 = scmp.eq.s32.totalorder %s8, 0
    %p66 = por %p64, %p65
    %p67 = scmp.ne.s32.totalorder %s56, %s59
    %p68 = scmp.eq.s32.totalorder %s13, 1
    %p69 = por %p67, %p68
    %p70 = scmp.ne.s32.totalorder %s59, %s60
    %p71 = scmp.eq.s32.totalorder %s13, 0
    %p72 = por %p70, %p71
    %p73 = scmp.ne.s32.totalorder %s59, %s60
    %p74 = scmp.eq.s32.totalorder %s14, 1
    %p75 = por %p73, %p74
    %p77 = scmp.ne.s32.totalorder %s60, %s76
    %p78 = scmp.eq.s32.totalorder %s14, 0
    %p79 = por %p77, %p78
    %s80 = ssub.s32 %s15, %s27
    %s81 = ssub.s32 %s16, %s23
    %s82 = sor.u32 %s80, %s81
    %p83 = scmp.eq.s32.totalorder %s82, 0
    %s85 = sadd.s32 %s84, 1
    %s86 = scalar_select %p83, %s84, %s85
    %p89 = pneg %p83
    %p90 = scmp.eq.s32.totalorder %s8, 1
    %p91 = por %p89, %p90
    %p92 = scmp.ne.s32.totalorder %s84, %s87
    %p93 = scmp.eq.s32.totalorder %s8, 0
    %p94 = por %p92, %p93
    %p95 = scmp.ne.s32.totalorder %s84, %s87
    %p96 = scmp.eq.s32.totalorder %s13, 1
    %p97 = por %p95, %p96
    %p98 = scmp.ne.s32.totalorder %s87, %s88
    %p99 = scmp.eq.s32.totalorder %s13, 0
    %p100 = por %p98, %p99
    %p101 = scmp.ne.s32.totalorder %s87, %s88
    %p102 = scmp.eq.s32.totalorder %s14, 1
    %p103 = por %p101, %p102
    %p105 = scmp.ne.s32.totalorder %s88, %s104
    %p106 = scmp.eq.s32.totalorder %s14, 0
    %p107 = por %p105, %p106
    %p108 = scmp.le.s32.totalorder 1, %s8
    %p109 = scmp.lt.s32.totalorder %s8, 3
    %p110 = pnand %p108, %p109
    %p111 = pneg %p110
    // Predicated region
    $region9: #{aeresnet_forward.46} parent=5 // pred_check
      _
    $region10: #{aeresnet_forward.46} parent=5 // pred_check_branch
      %113 = sbr.rel (%p110) target = $region12
    $region11: #{aeresnet_forward.46} parent=5 // pred_region
      %s114 = ssub.s32 %s8, 1
      // Predicated region
      $region13: #{aeresnet_forward.46} parent=11 // pred_check
        %p115 = pneg %p72
      $region14: #{aeresnet_forward.46} parent=11 // pred_check_branch
        %117 = sbr.rel (%p115) target = $region16
      $region15: #{aeresnet_forward.46} parent=11 // pred_region
        %p118 = scmp.lt.s32.totalorder %s18, 0
        %s119 = scalar_select %p118, %s18, 0
        %s120 = smul.addr %s119, 4
        %s121 = scalar_lea.vmem %s1, %s120
      $region16: #{aeresnet_forward.46} parent=11 // pred_fallthru
        _
    $region12: #{aeresnet_forward.46} parent=5 // pred_fallthru
      _
    %p122 = scmp.lt.s32.totalorder %s8, 2
    // Predicated region
    $region17: #{aeresnet_forward.46} parent=5 // pred_check
      %p123 = pneg %p122
    $region18: #{aeresnet_forward.46} parent=5 // pred_check_branch
      %125 = sbr.rel (%p123) target = $region20
    $region19: #{aeresnet_forward.46} parent=5 // pred_region
      // Predicated region
      $region21: #{aeresnet_forward.46} parent=19 // pred_check
        %p126 = pneg %p40
      $region22: #{aeresnet_forward.46} parent=19 // pred_check_branch
        %128 = sbr.rel (%p126) target = $region24
      $region23: #{aeresnet_forward.46} parent=19 // pred_region
        %s129 = smul.u32 32, %s15
        %p130 = scmp.lt.s32.totalorder %s129, 63
        %s131 = scalar_select %p130, %s129, 63
        %s132 = smul.addr %s131, 4
        %s133 = scalar_lea.vmem %s0, %s132
        %s134 = smul.u32 32, %s15
      $region24: #{aeresnet_forward.46} parent=19 // pred_fallthru
        _
    $region20: #{aeresnet_forward.46} parent=5 // pred_fallthru
      _
    %p135 = scmp.le.s32.totalorder 1, %s8
    %p136 = scmp.lt.s32.totalorder %s8, 3
    %p137 = pnand %p135, %p136
    %p138 = pneg %p137
    // Predicated region
    $region25: #{aeresnet_forward.46} parent=5 // pred_check
      _
    $region26: #{aeresnet_forward.46} parent=5 // pred_check_branch
      %140 = sbr.rel (%p137) target = $region28
    $region27: #{aeresnet_forward.46} parent=5 // pred_region
      %s141 = ssub.s32 %s8, 1
      %s142 = smul.u32 32, %s17
      %p143 = scmp.lt.s32.totalorder %s142, 63
      %s144 = scalar_select %p143, %s142, 63
      %s145 = smul.addr %s144, 4
      %s146 = scalar_lea.vmem %s0, %s145
      %p147 = pneg %p46
      %p148 = pneg %p43
      %p149 = scmp.lt.s32.totalorder %s18, 0
      %s150 = scalar_select %p149, %s18, 0
      %s151 = smul.addr %s150, 4
      %s152 = scalar_lea.vmem %s1, %s151
      %p153 = pneg %p72
      %p154 = pneg %p69
      %p155 = pneg %p100
      %p156 = pneg %p97
      %s157 = smul.u32 32, %s17
      %p158 = scmp.lt.s32.totalorder %s157, 63
      %s159 = scalar_select %p158, %s157, 63
      %p160 = scmp.lt.s32.totalorder %s18, 0
      %s161 = scalar_select %p160, %s18, 0
      %s162 = sadd.s32 %s161, %s159
      %s163 = smul.addr %s162, 4
      %s164 = scalar_lea.vmem %s2, %s163
      %s165 = smul.u32 32, %s17
      %p166 = scmp.lt.s32.totalorder %s165, 63
      %s167 = scalar_select %p166, %s165, 63
      %s168 = smul.addr %s167, 4
      %s169 = scalar_lea.vmem %s0, %s168
      %s170 = smul.u32 32, %s17
      %p171 = scmp.lt.s32.totalorder %s18, 0
      %s172 = scalar_select %p171, %s18, 0
      %s173 = smul.addr %s172, 4
      %s174 = scalar_lea.vmem %s1, %s173
      %s175 = smul.u32 32, %s17
      %p176 = scmp.lt.s32.totalorder %s175, 63
      %s177 = scalar_select %p176, %s175, 63
      %p178 = scmp.lt.s32.totalorder %s18, 0
      %s179 = scalar_select %p178, %s18, 0
      %s180 = sadd.s32 %s179, %s177
      %s181 = smul.addr %s180, 4
      %s182 = scalar_lea.vmem %s2, %s181
      %s183 = smul.u32 32, %s17
      %v185 = vld [vmem:[%s169] sm:$0xf]
      %v186 = vld [vmem:[%s169 + $0x4] sm:$0xf]
      %v187 = vld [vmem:[%s169 + $0x8] sm:$0xf]
      %v188 = vld [vmem:[%s169 + $0xc] sm:$0xf]
      %v189 = vld [vmem:[%s169 + $0x10] sm:$0xf]
      %v190 = vld [vmem:[%s169 + $0x14] sm:$0xf]
      %v191 = vld [vmem:[%s169 + $0x18] sm:$0xf]
      %v192 = vld [vmem:[%s169 + $0x1c] sm:$0xf]
      %v193 = vld [vmem:[%s169 + $0x20] sm:$0xf]
      %v194 = vld [vmem:[%s169 + $0x24] sm:$0xf]
      %v195 = vld [vmem:[%s169 + $0x28] sm:$0xf]
      %v196 = vld [vmem:[%s169 + $0x2c] sm:$0xf]
      %v197 = vld [vmem:[%s169 + $0x30] sm:$0xf]
      %v198 = vld [vmem:[%s169 + $0x34] sm:$0xf]
      %v199 = vld [vmem:[%s169 + $0x38] sm:$0xf]
      %v200 = vld [vmem:[%s169 + $0x3c] sm:$0xf]
      %v201 = vld [vmem:[%s169 + $0x40] sm:$0xf]
      %v202 = vld [vmem:[%s169 + $0x44] sm:$0xf]
      %v203 = vld [vmem:[%s169 + $0x48] sm:$0xf]
      %v204 = vld [vmem:[%s169 + $0x4c] sm:$0xf]
      %v205 = vld [vmem:[%s169 + $0x50] sm:$0xf]
      %v206 = vld [vmem:[%s169 + $0x54] sm:$0xf]
      %v207 = vld [vmem:[%s169 + $0x58] sm:$0xf]
      %v208 = vld [vmem:[%s169 + $0x5c] sm:$0xf]
      %v209 = vld [vmem:[%s169 + $0x60] sm:$0xf]
      %v210 = vld [vmem:[%s169 + $0x64] sm:$0xf]
      %v211 = vld [vmem:[%s169 + $0x68] sm:$0xf]
      %v212 = vld [vmem:[%s169 + $0x6c] sm:$0xf]
      %v213 = vld [vmem:[%s169 + $0x70] sm:$0xf]
      %v214 = vld [vmem:[%s169 + $0x74] sm:$0xf]
      %v215 = vld [vmem:[%s169 + $0x78] sm:$0xf]
      %v216 = vld [vmem:[%s169 + $0x7c] sm:$0xf]
      %v217 = vld [vmem:[%s174] sm:$0xf]
      %v218 = vld [vmem:[%s174 + $0x4] sm:$0xf]
      %v219 = vld [vmem:[%s174 + $0x8] sm:$0xf]
      %v220 = vld [vmem:[%s174 + $0xc] sm:$0xf]
      %v253 = vunpack.c.l.b16 %v185
      %v254 = vunpack.c.l.b16 %v186
      %v255 = vunpack.c.l.b16 %v187
      %v256 = vunpack.c.l.b16 %v188
      %v257 = vunpack.c.l.b16 %v189
      %v258 = vunpack.c.l.b16 %v190
      %v259 = vunpack.c.l.b16 %v191
      %v260 = vunpack.c.l.b16 %v192
      %v261 = vunpack.c.l.b16 %v193
      %v262 = vunpack.c.l.b16 %v194
      %v263 = vunpack.c.l.b16 %v195
      %v264 = vunpack.c.l.b16 %v196
      %v265 = vunpack.c.l.b16 %v197
      %v266 = vunpack.c.l.b16 %v198
      %v267 = vunpack.c.l.b16 %v199
      %v268 = vunpack.c.l.b16 %v200
      %v269 = vunpack.c.l.b16 %v201
      %v270 = vunpack.c.l.b16 %v202
      %v271 = vunpack.c.l.b16 %v203
      %v272 = vunpack.c.l.b16 %v204
      %v273 = vunpack.c.l.b16 %v205
      %v274 = vunpack.c.l.b16 %v206
      %v275 = vunpack.c.l.b16 %v207
      %v276 = vunpack.c.l.b16 %v208
      %v277 = vunpack.c.l.b16 %v209
      %v278 = vunpack.c.l.b16 %v210
      %v279 = vunpack.c.l.b16 %v211
      %v280 = vunpack.c.l.b16 %v212
      %v281 = vunpack.c.l.b16 %v213
      %v282 = vunpack.c.l.b16 %v214
      %v283 = vunpack.c.l.b16 %v215
      %v284 = vunpack.c.l.b16 %v216
      %v285 = vpack.c.b16 %v254, %v253
      %v286 = vpack.c.b16 %v256, %v255
      %v287 = vpack.c.b16 %v258, %v257
      %v288 = vpack.c.b16 %v260, %v259
      %v289 = vpack.c.b16 %v262, %v261
      %v290 = vpack.c.b16 %v264, %v263
      %v291 = vpack.c.b16 %v266, %v265
      %v292 = vpack.c.b16 %v268, %v267
      %v293 = vpack.c.b16 %v270, %v269
      %v294 = vpack.c.b16 %v272, %v271
      %v295 = vpack.c.b16 %v274, %v273
      %v296 = vpack.c.b16 %v276, %v275
      %v297 = vpack.c.b16 %v278, %v277
      %v298 = vpack.c.b16 %v280, %v279
      %v299 = vpack.c.b16 %v282, %v281
      %v300 = vpack.c.b16 %v284, %v283
      %v305 = vunpack.c.l.b16 %v217
      %v306 = vunpack.c.l.b16 %v218
      %v307 = vunpack.c.l.b16 %v219
      %v308 = vunpack.c.l.b16 %v220
      %v309 = vpack.c.b16 %v306, %v305
      %v310 = vpack.c.b16 %v308, %v307
      %vm313 = vcmask 261120
      %v315 = vsel %vm313, %v285, 0
      %v318 = vsel %vm313, %v286, 0
      %v321 = vsel %vm313, %v287, 0
      %v324 = vsel %vm313, %v288, 0
      %v327 = vsel %vm313, %v289, 0
      %v330 = vsel %vm313, %v290, 0
      %v333 = vsel %vm313, %v291, 0
      %v336 = vsel %vm313, %v292, 0
      %v339 = vsel %vm313, %v293, 0
      %v342 = vsel %vm313, %v294, 0
      %v345 = vsel %vm313, %v295, 0
      %v348 = vsel %vm313, %v296, 0
      %v351 = vsel %vm313, %v297, 0
      %v354 = vsel %vm313, %v298, 0
      %v357 = vsel %vm313, %v299, 0
      %v360 = vsel %vm313, %v300, 0
      %362 = vmatpush.bf16.msra.mxu0 0
      %363 = vmatpush.bf16.msra.mxu0 0
      %364 = vmatpush.bf16.msra.mxu0 0
      %365 = vmatpush.bf16.msra.mxu0 0
      %366 = vmatpush.bf16.msra.mxu0 0
      %367 = vmatpush.bf16.msra.mxu0 0
      %368 = vmatpush.bf16.msra.mxu0 %v310
      %369 = vmatpush.bf16.msra.mxu0 %v309
      %370 = vmatmul.bf16.gmra.mxu0 %v315
      %v371 = vpop.f32.mrf.mxu0
      %v372 = vadd.f32 0.0, %v371
      %v373 = vpop.f32.mrf.mxu0
      %v374 = vadd.f32 0.0, %v373
      %375 = vmatmul.bf16.gmra.mxu0 %v318
      %v376 = vpop.f32.mrf.mxu0
      %v377 = vadd.f32 0.0, %v376
      %v378 = vpop.f32.mrf.mxu0
      %v379 = vadd.f32 0.0, %v378
      %380 = vmatmul.bf16.gmra.mxu0 %v321
      %v381 = vpop.f32.mrf.mxu0
      %v382 = vadd.f32 0.0, %v381
      %v383 = vpop.f32.mrf.mxu0
      %v384 = vadd.f32 0.0, %v383
      %385 = vmatmul.bf16.gmra.mxu0 %v324
      %v386 = vpop.f32.mrf.mxu0
      %v387 = vadd.f32 0.0, %v386
      %v388 = vpop.f32.mrf.mxu0
      %v389 = vadd.f32 0.0, %v388
      %390 = vmatmul.bf16.gmra.mxu0 %v327
      %v391 = vpop.f32.mrf.mxu0
      %v392 = vadd.f32 0.0, %v391
      %v393 = vpop.f32.mrf.mxu0
      %v394 = vadd.f32 0.0, %v393
      %395 = vmatmul.bf16.gmra.mxu0 %v330
      %v396 = vpop.f32.mrf.mxu0
      %v397 = vadd.f32 0.0, %v396
      %v398 = vpop.f32.mrf.mxu0
      %v399 = vadd.f32 0.0, %v398
      %400 = vmatmul.bf16.gmra.mxu0 %v333
      %v401 = vpop.f32.mrf.mxu0
      %v402 = vadd.f32 0.0, %v401
      %v403 = vpop.f32.mrf.mxu0
      %v404 = vadd.f32 0.0, %v403
      %405 = vmatmul.bf16.gmra.mxu0 %v336
      %v406 = vpop.f32.mrf.mxu0
      %v407 = vadd.f32 0.0, %v406
      %v408 = vpop.f32.mrf.mxu0
      %v409 = vadd.f32 0.0, %v408
      %410 = vmatmul.bf16.gmra.mxu0 %v339
      %v411 = vpop.f32.mrf.mxu0
      %v412 = vadd.f32 0.0, %v411
      %v413 = vpop.f32.mrf.mxu0
      %v414 = vadd.f32 0.0, %v413
      %415 = vmatmul.bf16.gmra.mxu0 %v342
      %v416 = vpop.f32.mrf.mxu0
      %v417 = vadd.f32 0.0, %v416
      %v418 = vpop.f32.mrf.mxu0
      %v419 = vadd.f32 0.0, %v418
      %420 = vmatmul.bf16.gmra.mxu0 %v345
      %v421 = vpop.f32.mrf.mxu0
      %v422 = vadd.f32 0.0, %v421
      %v423 = vpop.f32.mrf.mxu0
      %v424 = vadd.f32 0.0, %v423
      %425 = vmatmul.bf16.gmra.mxu0 %v348
      %v426 = vpop.f32.mrf.mxu0
      %v427 = vadd.f32 0.0, %v426
      %v428 = vpop.f32.mrf.mxu0
      %v429 = vadd.f32 0.0, %v428
      %430 = vmatmul.bf16.gmra.mxu0 %v351
      %v431 = vpop.f32.mrf.mxu0
      %v432 = vadd.f32 0.0, %v431
      %v433 = vpop.f32.mrf.mxu0
      %v434 = vadd.f32 0.0, %v433
      %435 = vmatmul.bf16.gmra.mxu0 %v354
      %v436 = vpop.f32.mrf.mxu0
      %v437 = vadd.f32 0.0, %v436
      %v438 = vpop.f32.mrf.mxu0
      %v439 = vadd.f32 0.0, %v438
      %440 = vmatmul.bf16.gmra.mxu0 %v357
      %v441 = vpop.f32.mrf.mxu0
      %v442 = vadd.f32 0.0, %v441
      %v443 = vpop.f32.mrf.mxu0
      %v444 = vadd.f32 0.0, %v443
      %445 = vmatmul.bf16.gmra.mxu0 %v360
      %v446 = vpop.f32.mrf.mxu0
      %v447 = vadd.f32 0.0, %v446
      %v448 = vpop.f32.mrf.mxu0
      %v449 = vadd.f32 0.0, %v448
      %450 = vdwg.mxu0
      %v451 = vpack.c.bf16 %v372, %v372
      %v452 = vpack.c.bf16 %v374, %v374
      %v453 = vpack.c.bf16 %v377, %v377
      %v454 = vpack.c.bf16 %v379, %v379
      %v455 = vpack.c.bf16 %v382, %v382
      %v456 = vpack.c.bf16 %v384, %v384
      %v457 = vpack.c.bf16 %v387, %v387
      %v458 = vpack.c.bf16 %v389, %v389
      %v459 = vpack.c.bf16 %v392, %v392
      %v460 = vpack.c.bf16 %v394, %v394
      %v461 = vpack.c.bf16 %v397, %v397
      %v462 = vpack.c.bf16 %v399, %v399
      %v463 = vpack.c.bf16 %v402, %v402
      %v464 = vpack.c.bf16 %v404, %v404
      %v465 = vpack.c.bf16 %v407, %v407
      %v466 = vpack.c.bf16 %v409, %v409
      %v467 = vpack.c.bf16 %v412, %v412
      %v468 = vpack.c.bf16 %v414, %v414
      %v469 = vpack.c.bf16 %v417, %v417
      %v470 = vpack.c.bf16 %v419, %v419
      %v471 = vpack.c.bf16 %v422, %v422
      %v472 = vpack.c.bf16 %v424, %v424
      %v473 = vpack.c.bf16 %v427, %v427
      %v474 = vpack.c.bf16 %v429, %v429
      %v475 = vpack.c.bf16 %v432, %v432
      %v476 = vpack.c.bf16 %v434, %v434
      %v477 = vpack.c.bf16 %v437, %v437
      %v478 = vpack.c.bf16 %v439, %v439
      %v479 = vpack.c.bf16 %v442, %v442
      %v480 = vpack.c.bf16 %v444, %v444
      %v481 = vpack.c.bf16 %v447, %v447
      %v482 = vpack.c.bf16 %v449, %v449
      %483 = vst [vmem:[%s182] sm:$0xf] %v451
      %484 = vst [vmem:[%s182 + $0x4] sm:$0xf] %v452
      %485 = vst [vmem:[%s182 + $0x8] sm:$0xf] %v453
      %486 = vst [vmem:[%s182 + $0xc] sm:$0xf] %v454
      %487 = vst [vmem:[%s182 + $0x10] sm:$0xf] %v455
      %488 = vst [vmem:[%s182 + $0x14] sm:$0xf] %v456
      %489 = vst [vmem:[%s182 + $0x18] sm:$0xf] %v457
      %490 = vst [vmem:[%s182 + $0x1c] sm:$0xf] %v458
      %491 = vst [vmem:[%s182 + $0x20] sm:$0xf] %v459
      %492 = vst [vmem:[%s182 + $0x24] sm:$0xf] %v460
      %493 = vst [vmem:[%s182 + $0x28] sm:$0xf] %v461
      %494 = vst [vmem:[%s182 + $0x2c] sm:$0xf] %v462
      %495 = vst [vmem:[%s182 + $0x30] sm:$0xf] %v463
      %496 = vst [vmem:[%s182 + $0x34] sm:$0xf] %v464
      %497 = vst [vmem:[%s182 + $0x38] sm:$0xf] %v465
      %498 = vst [vmem:[%s182 + $0x3c] sm:$0xf] %v466
      %499 = vst [vmem:[%s182 + $0x40] sm:$0xf] %v467
      %500 = vst [vmem:[%s182 + $0x44] sm:$0xf] %v468
      %501 = vst [vmem:[%s182 + $0x48] sm:$0xf] %v469
      %502 = vst [vmem:[%s182 + $0x4c] sm:$0xf] %v470
      %503 = vst [vmem:[%s182 + $0x50] sm:$0xf] %v471
      %504 = vst [vmem:[%s182 + $0x54] sm:$0xf] %v472
      %505 = vst [vmem:[%s182 + $0x58] sm:$0xf] %v473
      %506 = vst [vmem:[%s182 + $0x5c] sm:$0xf] %v474
      %507 = vst [vmem:[%s182 + $0x60] sm:$0xf] %v475
      %508 = vst [vmem:[%s182 + $0x64] sm:$0xf] %v476
      %509 = vst [vmem:[%s182 + $0x68] sm:$0xf] %v477
      %510 = vst [vmem:[%s182 + $0x6c] sm:$0xf] %v478
      %511 = vst [vmem:[%s182 + $0x70] sm:$0xf] %v479
      %512 = vst [vmem:[%s182 + $0x74] sm:$0xf] %v480
      %513 = vst [vmem:[%s182 + $0x78] sm:$0xf] %v481
      %514 = vst [vmem:[%s182 + $0x7c] sm:$0xf] %v482
      %s515 = smul.u32 32, %s17
      %p516 = scmp.lt.s32.totalorder %s515, 63
      %s517 = scalar_select %p516, %s515, 63
      %p518 = scmp.lt.s32.totalorder %s18, 0
      %s519 = scalar_select %p518, %s18, 0
      %s520 = sadd.s32 %s519, %s517
      %s521 = smul.addr %s520, 4
      %s522 = scalar_lea.vmem %s2, %s521
      // Predicated region
      $region29: #{aeresnet_forward.46} parent=27 // pred_check
        %p523 = pneg %p97
      $region30: #{aeresnet_forward.46} parent=27 // pred_check_branch
        %525 = sbr.rel (%p523) target = $region32
      $region31: #{aeresnet_forward.46} parent=27 // pred_region
        %s526 = smul.u32 32, %s17
      $region32: #{aeresnet_forward.46} parent=27 // pred_fallthru
        _
    $region28: #{aeresnet_forward.46} parent=5 // pred_fallthru
      _
    %p527 = scmp.le.s32.totalorder 2, %s8
    // Predicated region
    $region33: #{aeresnet_forward.46} parent=5 // pred_check
      %p528 = pneg %p527
    $region34: #{aeresnet_forward.46} parent=5 // pred_check_branch
      %530 = sbr.rel (%p528) target = $region36
    $region35: #{aeresnet_forward.46} parent=5 // pred_region
      %s531 = ssub.s32 %s8, 2
      // Predicated region
      $region37: #{aeresnet_forward.46} parent=35 // pred_check
        %p532 = pneg %p103
      $region38: #{aeresnet_forward.46} parent=35 // pred_check_branch
        %534 = sbr.rel (%p532) target = $region40
      $region39: #{aeresnet_forward.46} parent=35 // pred_region
        %s535 = smul.u32 32, %s19
        %p536 = scmp.lt.s32.totalorder %s535, 63
        %s537 = scalar_select %p536, %s535, 63
        %p538 = scmp.lt.s32.totalorder %s20, 0
        %s539 = scalar_select %p538, %s20, 0
        %s540 = sadd.s32 %s539, %s537
        %s541 = smul.addr %s540, 4
        %s542 = scalar_lea.vmem %s2, %s541
      $region40: #{aeresnet_forward.46} parent=35 // pred_fallthru
        _
    $region36: #{aeresnet_forward.46} parent=5 // pred_fallthru
      _
  $region6: #{aeresnet_forward.46} parent=0 // loop_footer
    %s12 = sadd.s32 1, %s8
  $region7: #{aeresnet_forward.46} parent=0 // loop_footer_branch
    %7 = sbr.rel target = $region3
  $region8: #{aeresnet_forward.46} parent=0 // loop_exit
    _

// kernel: aeresnet_forward.51
$region0: #{aeresnet_forward.51}
  #allocation0 [shape = 'u32[]', space=smem, size = 0x4, offset = 0x4, fixed_abs, tag = 'smem constant byte address 0x4 - core index']
  #allocation1 [shape = 'u32[72,128]{1,0:T(1,128)}', space=vmem, size = 0x9000, scoped, tag = 'internal scratch']
  %s0 = inlined_call_operand.vmem [shape: bf16[2048,72], index: 0, kind: input, shape index: {}]
  %s1 = inlined_call_operand.vmem [shape: bf16[72,128], index: 1, kind: input, shape index: {}]
  %s2 = inlined_call_operand.vmem [shape: bf16[2048,128], index: 2, kind: output, shape index: {}]
  %s3 = sld [smem:[#allocation0]]
  $region41: #{aeresnet_forward.51} parent=0
    _
  %s5 = ssub.s32 1, %s3
  %s6 = scalar_select 0, %s5, %s3
  loop: start=0, step=1, limit=10
  $region2: #{aeresnet_forward.51} parent=0 // loop_pre_header
    _
  $region3: #{aeresnet_forward.51} parent=0 // loop_header
    %s8 = sphi 0, %s12
    %p9 = scmp.ge.s32.totalorder %s8, 10
    %s15 = sphi 0, %s27
    %s16 = sphi 0, %s23
    %s17 = sphi 0, %s15
    %s18 = sphi 0, %s16
    %s19 = sphi 0, %s17
    %s20 = sphi 0, %s18
    %s30 = sphi 0, %s32
    %s33 = sphi 0, %s30
    %s34 = sphi 0, %s33
    %s50 = sphi 0, %s34
    %s56 = sphi 0, %s58
    %s59 = sphi 0, %s56
    %s60 = sphi 0, %s59
    %s76 = sphi 0, %s60
    %s84 = sphi 0, %s86
    %s87 = sphi 0, %s84
    %s88 = sphi 0, %s87
    %s104 = sphi 0, %s88
  $region4: #{aeresnet_forward.51} parent=0 // loop_header_branch
    %11 = sbr.rel (%p9) target = $region8
  $region5: #{aeresnet_forward.51} parent=0 // loop_body
    %s13 = ssub.s32 %s8, 1
    %s14 = ssub.s32 %s8, 2
    %s21 = sadd.s32 1, %s16
    %p22 = scmp.ge.s32.totalorder %s21, 1
    %s23 = scalar_select %p22, 0, %s21
    %s24 = sadd.s32 1, %s15
    %s25 = scalar_select %p22, %s24, %s15
    %p26 = scmp.ge.s32.totalorder %s25, 8
    %s27 = scalar_select %p26, 0, %s25
    %s28 = ssub.s32 %s15, %s27
    %p29 = scmp.eq.s32.totalorder %s28, 0
    %s31 = sadd.s32 %s30, 1
    %s32 = scalar_select %p29, %s30, %s31
    %p35 = pneg %p29
    %p36 = scmp.eq.s32.totalorder %s8, 7
    %p37 = por %p35, %p36
    %p38 = scmp.ne.s32.totalorder %s30, %s33
    %p39 = scmp.eq.s32.totalorder %s8, 0
    %p40 = por %p38, %p39
    %p41 = scmp.ne.s32.totalorder %s30, %s33
    %p42 = scmp.eq.s32.totalorder %s13, 7
    %p43 = por %p41, %p42
    %p44 = scmp.ne.s32.totalorder %s33, %s34
    %p45 = scmp.eq.s32.totalorder %s13, 0
    %p46 = por %p44, %p45
    %p47 = scmp.ne.s32.totalorder %s33, %s34
    %p48 = scmp.eq.s32.totalorder %s14, 7
    %p49 = por %p47, %p48
    %p51 = scmp.ne.s32.totalorder %s34, %s50
    %p52 = scmp.eq.s32.totalorder %s14, 0
    %p53 = por %p51, %p52
    %s54 = ssub.s32 %s16, %s23
    %p55 = scmp.eq.s32.totalorder %s54, 0
    %s57 = sadd.s32 %s56, 1
    %s58 = scalar_select %p55, %s56, %s57
    %p61 = pneg %p55
    %p62 = scmp.eq.s32.totalorder %s8, 7
    %p63 = por %p61, %p62
    %p64 = scmp.ne.s32.totalorder %s56, %s59
    %p65 = scmp.eq.s32.totalorder %s8, 0
    %p66 = por %p64, %p65
    %p67 = scmp.ne.s32.totalorder %s56, %s59
    %p68 = scmp.eq.s32.totalorder %s13, 7
    %p69 = por %p67, %p68
    %p70 = scmp.ne.s32.totalorder %s59, %s60
    %p71 = scmp.eq.s32.totalorder %s13, 0
    %p72 = por %p70, %p71
    %p73 = scmp.ne.s32.totalorder %s59, %s60
    %p74 = scmp.eq.s32.totalorder %s14, 7
    %p75 = por %p73, %p74
    %p77 = scmp.ne.s32.totalorder %s60, %s76
    %p78 = scmp.eq.s32.totalorder %s14, 0
    %p79 = por %p77, %p78
    %s80 = ssub.s32 %s15, %s27
    %s81 = ssub.s32 %s16, %s23
    %s82 = sor.u32 %s80, %s81
    %p83 = scmp.eq.s32.totalorder %s82, 0
    %s85 = sadd.s32 %s84, 1
    %s86 = scalar_select %p83, %s84, %s85
    %p89 = pneg %p83
    %p90 = scmp.eq.s32.totalorder %s8, 7
    %p91 = por %p89, %p90
    %p92 = scmp.ne.s32.totalorder %s84, %s87
    %p93 = scmp.eq.s32.totalorder %s8, 0
    %p94 = por %p92, %p93
    %p95 = scmp.ne.s32.totalorder %s84, %s87
    %p96 = scmp.eq.s32.totalorder %s13, 7
    %p97 = por %p95, %p96
    %p98 = scmp.ne.s32.totalorder %s87, %s88
    %p99 = scmp.eq.s32.totalorder %s13, 0
    %p100 = por %p98, %p99
    %p101 = scmp.ne.s32.totalorder %s87, %s88
    %p102 = scmp.eq.s32.totalorder %s14, 7
    %p103 = por %p101, %p102
    %p105 = scmp.ne.s32.totalorder %s88, %s104
    %p106 = scmp.eq.s32.totalorder %s14, 0
    %p107 = por %p105, %p106
    %p108 = scmp.le.s32.totalorder 1, %s8
    %p109 = scmp.lt.s32.totalorder %s8, 9
    %p110 = pnand %p108, %p109
    %p111 = pneg %p110
    // Predicated region
    $region9: #{aeresnet_forward.51} parent=5 // pred_check
      _
    $region10: #{aeresnet_forward.51} parent=5 // pred_check_branch
      %113 = sbr.rel (%p110) target = $region12
    $region11: #{aeresnet_forward.51} parent=5 // pred_region
      %s114 = ssub.s32 %s8, 1
      // Predicated region
      $region13: #{aeresnet_forward.51} parent=11 // pred_check
        %p115 = pneg %p72
      $region14: #{aeresnet_forward.51} parent=11 // pred_check_branch
        %117 = sbr.rel (%p115) target = $region16
      $region15: #{aeresnet_forward.51} parent=11 // pred_region
        %p118 = scmp.lt.s32.totalorder %s18, 0
        %s119 = scalar_select %p118, %s18, 0
        %s120 = smul.addr %s119, 4
        %s121 = scalar_lea.vmem %s1, %s120
      $region16: #{aeresnet_forward.51} parent=11 // pred_fallthru
        _
    $region12: #{aeresnet_forward.51} parent=5 // pred_fallthru
      _
    %p122 = scmp.lt.s32.totalorder %s8, 8
    // Predicated region
    $region17: #{aeresnet_forward.51} parent=5 // pred_check
      %p123 = pneg %p122
    $region18: #{aeresnet_forward.51} parent=5 // pred_check_branch
      %125 = sbr.rel (%p123) target = $region20
    $region19: #{aeresnet_forward.51} parent=5 // pred_region
      // Predicated region
      $region21: #{aeresnet_forward.51} parent=19 // pred_check
        %p126 = pneg %p40
      $region22: #{aeresnet_forward.51} parent=19 // pred_check_branch
        %128 = sbr.rel (%p126) target = $region24
      $region23: #{aeresnet_forward.51} parent=19 // pred_region
        %s129 = smul.u32 32, %s15
        %p130 = scmp.lt.s32.totalorder %s129, 255
        %s131 = scalar_select %p130, %s129, 255
        %s132 = smul.addr %s131, 4
        %s133 = scalar_lea.vmem %s0, %s132
        %s134 = smul.u32 32, %s15
      $region24: #{aeresnet_forward.51} parent=19 // pred_fallthru
        _
    $region20: #{aeresnet_forward.51} parent=5 // pred_fallthru
      _
    %p135 = scmp.le.s32.totalorder 1, %s8
    %p136 = scmp.lt.s32.totalorder %s8, 9
    %p137 = pnand %p135, %p136
    %p138 = pneg %p137
    // Predicated region
    $region25: #{aeresnet_forward.51} parent=5 // pred_check
      _
    $region26: #{aeresnet_forward.51} parent=5 // pred_check_branch
      %140 = sbr.rel (%p137) target = $region28
    $region27: #{aeresnet_forward.51} parent=5 // pred_region
      %s141 = ssub.s32 %s8, 1
      %s142 = smul.u32 32, %s17
      %p143 = scmp.lt.s32.totalorder %s142, 255
      %s144 = scalar_select %p143, %s142, 255
      %s145 = smul.addr %s144, 4
      %s146 = scalar_lea.vmem %s0, %s145
      %p147 = pneg %p46
      %p148 = pneg %p43
      %p149 = scmp.lt.s32.totalorder %s18, 0
      %s150 = scalar_select %p149, %s18, 0
      %s151 = smul.addr %s150, 4
      %s152 = scalar_lea.vmem %s1, %s151
      %p153 = pneg %p72
      %p154 = pneg %p69
      %p155 = pneg %p100
      %p156 = pneg %p97
      %s157 = smul.u32 32, %s17
      %p158 = scmp.lt.s32.totalorder %s157, 255
      %s159 = scalar_select %p158, %s157, 255
      %p160 = scmp.lt.s32.totalorder %s18, 0
      %s161 = scalar_select %p160, %s18, 0
      %s162 = sadd.s32 %s161, %s159
      %s163 = smul.addr %s162, 4
      %s164 = scalar_lea.vmem %s2, %s163
      %s165 = smul.u32 32, %s17
      %p166 = scmp.lt.s32.totalorder %s165, 255
      %s167 = scalar_select %p166, %s165, 255
      %s168 = smul.addr %s167, 4
      %s169 = scalar_lea.vmem %s0, %s168
      %s170 = smul.u32 32, %s17
      %p171 = scmp.lt.s32.totalorder %s18, 0
      %s172 = scalar_select %p171, %s18, 0
      %s173 = smul.addr %s172, 4
      %s174 = scalar_lea.vmem %s1, %s173
      %s175 = smul.u32 32, %s17
      %p176 = scmp.lt.s32.totalorder %s175, 255
      %s177 = scalar_select %p176, %s175, 255
      %p178 = scmp.lt.s32.totalorder %s18, 0
      %s179 = scalar_select %p178, %s18, 0
      %s180 = sadd.s32 %s179, %s177
      %s181 = smul.addr %s180, 4
      %s182 = scalar_lea.vmem %s2, %s181
      %s183 = smul.u32 32, %s17
      %v185 = vld [vmem:[%s169] sm:$0xf]
      %v186 = vld [vmem:[%s169 + $0x4] sm:$0xf]
      %v187 = vld [vmem:[%s169 + $0x8] sm:$0xf]
      %v188 = vld [vmem:[%s169 + $0xc] sm:$0xf]
      %v189 = vld [vmem:[%s169 + $0x10] sm:$0xf]
      %v190 = vld [vmem:[%s169 + $0x14] sm:$0xf]
      %v191 = vld [vmem:[%s169 + $0x18] sm:$0xf]
      %v192 = vld [vmem:[%s169 + $0x1c] sm:$0xf]
      %v193 = vld [vmem:[%s169 + $0x20] sm:$0xf]
      %v194 = vld [vmem:[%s169 + $0x24] sm:$0xf]
      %v195 = vld [vmem:[%s169 + $0x28] sm:$0xf]
      %v196 = vld [vmem:[%s169 + $0x2c] sm:$0xf]
      %v197 = vld [vmem:[%s169 + $0x30] sm:$0xf]
      %v198 = vld [vmem:[%s169 + $0x34] sm:$0xf]
      %v199 = vld [vmem:[%s169 + $0x38] sm:$0xf]
      %v200 = vld [vmem:[%s169 + $0x3c] sm:$0xf]
      %v201 = vld [vmem:[%s169 + $0x40] sm:$0xf]
      %v202 = vld [vmem:[%s169 + $0x44] sm:$0xf]
      %v203 = vld [vmem:[%s169 + $0x48] sm:$0xf]
      %v204 = vld [vmem:[%s169 + $0x4c] sm:$0xf]
      %v205 = vld [vmem:[%s169 + $0x50] sm:$0xf]
      %v206 = vld [vmem:[%s169 + $0x54] sm:$0xf]
      %v207 = vld [vmem:[%s169 + $0x58] sm:$0xf]
      %v208 = vld [vmem:[%s169 + $0x5c] sm:$0xf]
      %v209 = vld [vmem:[%s169 + $0x60] sm:$0xf]
      %v210 = vld [vmem:[%s169 + $0x64] sm:$0xf]
      %v211 = vld [vmem:[%s169 + $0x68] sm:$0xf]
      %v212 = vld [vmem:[%s169 + $0x6c] sm:$0xf]
      %v213 = vld [vmem:[%s169 + $0x70] sm:$0xf]
      %v214 = vld [vmem:[%s169 + $0x74] sm:$0xf]
      %v215 = vld [vmem:[%s169 + $0x78] sm:$0xf]
      %v216 = vld [vmem:[%s169 + $0x7c] sm:$0xf]
      %v217 = vld [vmem:[%s174] sm:$0xf]
      %v218 = vld [vmem:[%s174 + $0x4] sm:$0xf]
      %v219 = vld [vmem:[%s174 + $0x8] sm:$0xf]
      %v220 = vld [vmem:[%s174 + $0xc] sm:$0xf]
      %v221 = vld [vmem:[%s174 + $0x10] sm:$0xf]
      %v222 = vld [vmem:[%s174 + $0x14] sm:$0xf]
      %v223 = vld [vmem:[%s174 + $0x18] sm:$0xf]
      %v224 = vld [vmem:[%s174 + $0x1c] sm:$0xf]
      %v225 = vld [vmem:[%s174 + $0x20] sm:$0xf]
      %v258 = vunpack.c.l.b16 %v185
      %v259 = vunpack.c.l.b16 %v186
      %v260 = vunpack.c.l.b16 %v187
      %v261 = vunpack.c.l.b16 %v188
      %v262 = vunpack.c.l.b16 %v189
      %v263 = vunpack.c.l.b16 %v190
      %v264 = vunpack.c.l.b16 %v191
      %v265 = vunpack.c.l.b16 %v192
      %v266 = vunpack.c.l.b16 %v193
      %v267 = vunpack.c.l.b16 %v194
      %v268 = vunpack.c.l.b16 %v195
      %v269 = vunpack.c.l.b16 %v196
      %v270 = vunpack.c.l.b16 %v197
      %v271 = vunpack.c.l.b16 %v198
      %v272 = vunpack.c.l.b16 %v199
      %v273 = vunpack.c.l.b16 %v200
      %v274 = vunpack.c.l.b16 %v201
      %v275 = vunpack.c.l.b16 %v202
      %v276 = vunpack.c.l.b16 %v203
      %v277 = vunpack.c.l.b16 %v204
      %v278 = vunpack.c.l.b16 %v205
      %v279 = vunpack.c.l.b16 %v206
      %v280 = vunpack.c.l.b16 %v207
      %v281 = vunpack.c.l.b16 %v208
      %v282 = vunpack.c.l.b16 %v209
      %v283 = vunpack.c.l.b16 %v210
      %v284 = vunpack.c.l.b16 %v211
      %v285 = vunpack.c.l.b16 %v212
      %v286 = vunpack.c.l.b16 %v213
      %v287 = vunpack.c.l.b16 %v214
      %v288 = vunpack.c.l.b16 %v215
      %v289 = vunpack.c.l.b16 %v216
      %v290 = vpack.c.b16 %v259, %v258
      %v291 = vpack.c.b16 %v261, %v260
      %v292 = vpack.c.b16 %v263, %v262
      %v293 = vpack.c.b16 %v265, %v264
      %v294 = vpack.c.b16 %v267, %v266
      %v295 = vpack.c.b16 %v269, %v268
      %v296 = vpack.c.b16 %v271, %v270
      %v297 = vpack.c.b16 %v273, %v272
      %v298 = vpack.c.b16 %v275, %v274
      %v299 = vpack.c.b16 %v277, %v276
      %v300 = vpack.c.b16 %v279, %v278
      %v301 = vpack.c.b16 %v281, %v280
      %v302 = vpack.c.b16 %v283, %v282
      %v303 = vpack.c.b16 %v285, %v284
      %v304 = vpack.c.b16 %v287, %v286
      %v305 = vpack.c.b16 %v289, %v288
      %v315 = vunpack.c.l.b16 %v217
      %v316 = vunpack.c.l.b16 %v218
      %v317 = vunpack.c.l.b16 %v219
      %v318 = vunpack.c.l.b16 %v220
      %v319 = vunpack.c.l.b16 %v221
      %v320 = vunpack.c.l.b16 %v222
      %v321 = vunpack.c.l.b16 %v223
      %v322 = vunpack.c.l.b16 %v224
      %v323 = vunpack.c.l.b16 %v225
      %v324 = vpack.c.b16 %v316, %v315
      %v325 = vpack.c.b16 %v318, %v317
      %v326 = vpack.c.b16 %v320, %v319
      %v327 = vpack.c.b16 %v322, %v321
      %v328 = vpack.c.b16 %v323, %v323
      %vm333 = vcmask 588800
      %v335 = vsel %vm333, %v290, 0
      %v338 = vsel %vm333, %v291, 0
      %v341 = vsel %vm333, %v292, 0
      %v344 = vsel %vm333, %v293, 0
      %v347 = vsel %vm333, %v294, 0
      %v350 = vsel %vm333, %v295, 0
      %v353 = vsel %vm333, %v296, 0
      %v356 = vsel %vm333, %v297, 0
      %v359 = vsel %vm333, %v298, 0
      %v362 = vsel %vm333, %v299, 0
      %v365 = vsel %vm333, %v300, 0
      %v368 = vsel %vm333, %v301, 0
      %v371 = vsel %vm333, %v302, 0
      %v374 = vsel %vm333, %v303, 0
      %v377 = vsel %vm333, %v304, 0
      %v380 = vsel %vm333, %v305, 0
      %vm382 = vcmask 1043456
      %v384 = vsel %vm382, %v328, 0
      %386 = vmatpush.bf16.msra.mxu0 0
      %387 = vmatpush.bf16.msra.mxu0 0
      %388 = vmatpush.bf16.msra.mxu0 0
      %389 = vmatpush.bf16.msra.mxu0 %v384
      %390 = vmatpush.bf16.msra.mxu0 %v327
      %391 = vmatpush.bf16.msra.mxu0 %v326
      %392 = vmatpush.bf16.msra.mxu0 %v325
      %393 = vmatpush.bf16.msra.mxu0 %v324
      %394 = vmatmul.bf16.gmra.mxu0 %v335
      %v395 = vpop.f32.mrf.mxu0
      %v396 = vadd.f32 0.0, %v395
      %v397 = vpop.f32.mrf.mxu0
      %v398 = vadd.f32 0.0, %v397
      %399 = vmatmul.bf16.gmra.mxu0 %v338
      %v400 = vpop.f32.mrf.mxu0
      %v401 = vadd.f32 0.0, %v400
      %v402 = vpop.f32.mrf.mxu0
      %v403 = vadd.f32 0.0, %v402
      %404 = vmatmul.bf16.gmra.mxu0 %v341
      %v405 = vpop.f32.mrf.mxu0
      %v406 = vadd.f32 0.0, %v405
      %v407 = vpop.f32.mrf.mxu0
      %v408 = vadd.f32 0.0, %v407
      %409 = vmatmul.bf16.gmra.mxu0 %v344
      %v410 = vpop.f32.mrf.mxu0
      %v411 = vadd.f32 0.0, %v410
      %v412 = vpop.f32.mrf.mxu0
      %v413 = vadd.f32 0.0, %v412
      %414 = vmatmul.bf16.gmra.mxu0 %v347
      %v415 = vpop.f32.mrf.mxu0
      %v416 = vadd.f32 0.0, %v415
      %v417 = vpop.f32.mrf.mxu0
      %v418 = vadd.f32 0.0, %v417
      %419 = vmatmul.bf16.gmra.mxu0 %v350
      %v420 = vpop.f32.mrf.mxu0
      %v421 = vadd.f32 0.0, %v420
      %v422 = vpop.f32.mrf.mxu0
      %v423 = vadd.f32 0.0, %v422
      %424 = vmatmul.bf16.gmra.mxu0 %v353
      %v425 = vpop.f32.mrf.mxu0
      %v426 = vadd.f32 0.0, %v425
      %v427 = vpop.f32.mrf.mxu0
      %v428 = vadd.f32 0.0, %v427
      %429 = vmatmul.bf16.gmra.mxu0 %v356
      %v430 = vpop.f32.mrf.mxu0
      %v431 = vadd.f32 0.0, %v430
      %v432 = vpop.f32.mrf.mxu0
      %v433 = vadd.f32 0.0, %v432
      %434 = vmatmul.bf16.gmra.mxu0 %v359
      %v435 = vpop.f32.mrf.mxu0
      %v436 = vadd.f32 0.0, %v435
      %v437 = vpop.f32.mrf.mxu0
      %v438 = vadd.f32 0.0, %v437
      %439 = vmatmul.bf16.gmra.mxu0 %v362
      %v440 = vpop.f32.mrf.mxu0
      %v441 = vadd.f32 0.0, %v440
      %v442 = vpop.f32.mrf.mxu0
      %v443 = vadd.f32 0.0, %v442
      %444 = vmatmul.bf16.gmra.mxu0 %v365
      %v445 = vpop.f32.mrf.mxu0
      %v446 = vadd.f32 0.0, %v445
      %v447 = vpop.f32.mrf.mxu0
      %v448 = vadd.f32 0.0, %v447
      %449 = vmatmul.bf16.gmra.mxu0 %v368
      %v450 = vpop.f32.mrf.mxu0
      %v451 = vadd.f32 0.0, %v450
      %v452 = vpop.f32.mrf.mxu0
      %v453 = vadd.f32 0.0, %v452
      %454 = vmatmul.bf16.gmra.mxu0 %v371
      %v455 = vpop.f32.mrf.mxu0
      %v456 = vadd.f32 0.0, %v455
      %v457 = vpop.f32.mrf.mxu0
      %v458 = vadd.f32 0.0, %v457
      %459 = vmatmul.bf16.gmra.mxu0 %v374
      %v460 = vpop.f32.mrf.mxu0
      %v461 = vadd.f32 0.0, %v460
      %v462 = vpop.f32.mrf.mxu0
      %v463 = vadd.f32 0.0, %v462
      %464 = vmatmul.bf16.gmra.mxu0 %v377
      %v465 = vpop.f32.mrf.mxu0
      %v466 = vadd.f32 0.0, %v465
      %v467 = vpop.f32.mrf.mxu0
      %v468 = vadd.f32 0.0, %v467
      %469 = vmatmul.bf16.gmra.mxu0 %v380
      %v470 = vpop.f32.mrf.mxu0
      %v471 = vadd.f32 0.0, %v470
      %v472 = vpop.f32.mrf.mxu0
      %v473 = vadd.f32 0.0, %v472
      %474 = vdwg.mxu0
      %v475 = vpack.c.bf16 %v396, %v396
      %v476 = vpack.c.bf16 %v398, %v398
      %v477 = vpack.c.bf16 %v401, %v401
      %v478 = vpack.c.bf16 %v403, %v403
      %v479 = vpack.c.bf16 %v406, %v406
      %v480 = vpack.c.bf16 %v408, %v408
      %v481 = vpack.c.bf16 %v411, %v411
      %v482 = vpack.c.bf16 %v413, %v413
      %v483 = vpack.c.bf16 %v416, %v416
      %v484 = vpack.c.bf16 %v418, %v418
      %v485 = vpack.c.bf16 %v421, %v421
      %v486 = vpack.c.bf16 %v423, %v423
      %v487 = vpack.c.bf16 %v426, %v426
      %v488 = vpack.c.bf16 %v428, %v428
      %v489 = vpack.c.bf16 %v431, %v431
      %v490 = vpack.c.bf16 %v433, %v433
      %v491 = vpack.c.bf16 %v436, %v436
      %v492 = vpack.c.bf16 %v438, %v438
      %v493 = vpack.c.bf16 %v441, %v441
      %v494 = vpack.c.bf16 %v443, %v443
      %v495 = vpack.c.bf16 %v446, %v446
      %v496 = vpack.c.bf16 %v448, %v448
      %v497 = vpack.c.bf16 %v451, %v451
      %v498 = vpack.c.bf16 %v453, %v453
      %v499 = vpack.c.bf16 %v456, %v456
      %v500 = vpack.c.bf16 %v458, %v458
      %v501 = vpack.c.bf16 %v461, %v461
      %v502 = vpack.c.bf16 %v463, %v463
      %v503 = vpack.c.bf16 %v466, %v466
      %v504 = vpack.c.bf16 %v468, %v468
      %v505 = vpack.c.bf16 %v471, %v471
      %v506 = vpack.c.bf16 %v473, %v473
      %507 = vst [vmem:[%s182] sm:$0xf] %v475
      %508 = vst [vmem:[%s182 + $0x4] sm:$0xf] %v476
      %509 = vst [vmem:[%s182 + $0x8] sm:$0xf] %v477
      %510 = vst [vmem:[%s182 + $0xc] sm:$0xf] %v478
      %511 = vst [vmem:[%s182 + $0x10] sm:$0xf] %v479
      %512 = vst [vmem:[%s182 + $0x14] sm:$0xf] %v480
      %513 = vst [vmem:[%s182 + $0x18] sm:$0xf] %v481
      %514 = vst [vmem:[%s182 + $0x1c] sm:$0xf] %v482
      %515 = vst [vmem:[%s182 + $0x20] sm:$0xf] %v483
      %516 = vst [vmem:[%s182 + $0x24] sm:$0xf] %v484
      %517 = vst [vmem:[%s182 + $0x28] sm:$0xf] %v485
      %518 = vst [vmem:[%s182 + $0x2c] sm:$0xf] %v486
      %519 = vst [vmem:[%s182 + $0x30] sm:$0xf] %v487
      %520 = vst [vmem:[%s182 + $0x34] sm:$0xf] %v488
      %521 = vst [vmem:[%s182 + $0x38] sm:$0xf] %v489
      %522 = vst [vmem:[%s182 + $0x3c] sm:$0xf] %v490
      %523 = vst [vmem:[%s182 + $0x40] sm:$0xf] %v491
      %524 = vst [vmem:[%s182 + $0x44] sm:$0xf] %v492
      %525 = vst [vmem:[%s182 + $0x48] sm:$0xf] %v493
      %526 = vst [vmem:[%s182 + $0x4c] sm:$0xf] %v494
      %527 = vst [vmem:[%s182 + $0x50] sm:$0xf] %v495
      %528 = vst [vmem:[%s182 + $0x54] sm:$0xf] %v496
      %529 = vst [vmem:[%s182 + $0x58] sm:$0xf] %v497
      %530 = vst [vmem:[%s182 + $0x5c] sm:$0xf] %v498
      %531 = vst [vmem:[%s182 + $0x60] sm:$0xf] %v499
      %532 = vst [vmem:[%s182 + $0x64] sm:$0xf] %v500
      %533 = vst [vmem:[%s182 + $0x68] sm:$0xf] %v501
      %534 = vst [vmem:[%s182 + $0x6c] sm:$0xf] %v502
      %535 = vst [vmem:[%s182 + $0x70] sm:$0xf] %v503
      %536 = vst [vmem:[%s182 + $0x74] sm:$0xf] %v504
      %537 = vst [vmem:[%s182 + $0x78] sm:$0xf] %v505
      %538 = vst [vmem:[%s182 + $0x7c] sm:$0xf] %v506
      %s539 = smul.u32 32, %s17
      %p540 = scmp.lt.s32.totalorder %s539, 255
      %s541 = scalar_select %p540, %s539, 255
      %p542 = scmp.lt.s32.totalorder %s18, 0
      %s543 = scalar_select %p542, %s18, 0
      %s544 = sadd.s32 %s543, %s541
      %s545 = smul.addr %s544, 4
      %s546 = scalar_lea.vmem %s2, %s545
      // Predicated region
      $region29: #{aeresnet_forward.51} parent=27 // pred_check
        %p547 = pneg %p97
      $region30: #{aeresnet_forward.51} parent=27 // pred_check_branch
        %549 = sbr.rel (%p547) target = $region32
      $region31: #{aeresnet_forward.51} parent=27 // pred_region
        %s550 = smul.u32 32, %s17
      $region32: #{aeresnet_forward.51} parent=27 // pred_fallthru
        _
    $region28: #{aeresnet_forward.51} parent=5 // pred_fallthru
      _
    %p551 = scmp.le.s32.totalorder 2, %s8
    // Predicated region
    $region33: #{aeresnet_forward.51} parent=5 // pred_check
      %p552 = pneg %p551
    $region34: #{aeresnet_forward.51} parent=5 // pred_check_branch
      %554 = sbr.rel (%p552) target = $region36
    $region35: #{aeresnet_forward.51} parent=5 // pred_region
      %s555 = ssub.s32 %s8, 2
      // Predicated region
      $region37: #{aeresnet_forward.51} parent=35 // pred_check
        %p556 = pneg %p103
      $region38: #{aeresnet_forward.51} parent=35 // pred_check_branch
        %558 = sbr.rel (%p556) target = $region40
      $region39: #{aeresnet_forward.51} parent=35 // pred_region
        %s559 = smul.u32 32, %s19
        %p560 = scmp.lt.s32.totalorder %s559, 255
        %s561 = scalar_select %p560, %s559, 255
        %p562 = scmp.lt.s32.totalorder %s20, 0
        %s563 = scalar_select %p562, %s20, 0
        %s564 = sadd.s32 %s563, %s561
        %s565 = smul.addr %s564, 4
        %s566 = scalar_lea.vmem %s2, %s565
      $region40: #{aeresnet_forward.51} parent=35 // pred_fallthru
        _
    $region36: #{aeresnet_forward.51} parent=5 // pred_fallthru
      _
  $region6: #{aeresnet_forward.51} parent=0 // loop_footer
    %s12 = sadd.s32 1, %s8
  $region7: #{aeresnet_forward.51} parent=0 // loop_footer_branch
    %7 = sbr.rel target = $region3
  $region8: #{aeresnet_forward.51} parent=0 // loop_exit
    _

// kernel: aeresnet_forward.52
$region0: #{aeresnet_forward.52}
  #allocation0 [shape = 'u32[]', space=smem, size = 0x4, offset = 0x4, fixed_abs, tag = 'smem constant byte address 0x4 - core index']
  #allocation1 [shape = 'u32[72,128]{1,0:T(1,128)}', space=vmem, size = 0x9000, scoped, tag = 'internal scratch']
  %s0 = inlined_call_operand.vmem [shape: bf16[512,144], index: 0, kind: input, shape index: {}]
  %s1 = inlined_call_operand.vmem [shape: bf16[144,128], index: 1, kind: input, shape index: {}]
  %s2 = inlined_call_operand.vmem [shape: bf16[512,128], index: 2, kind: output, shape index: {}]
  %s3 = sld [smem:[#allocation0]]
  $region41: #{aeresnet_forward.52} parent=0
    _
  %s5 = ssub.s32 1, %s3
  %s6 = scalar_select 0, %s5, %s3
  loop: start=0, step=1, limit=4
  $region2: #{aeresnet_forward.52} parent=0 // loop_pre_header
    _
  $region3: #{aeresnet_forward.52} parent=0 // loop_header
    %s8 = sphi 0, %s12
    %p9 = scmp.ge.s32.totalorder %s8, 4
    %s15 = sphi 0, %s27
    %s16 = sphi 0, %s23
    %s17 = sphi 0, %s15
    %s18 = sphi 0, %s16
    %s19 = sphi 0, %s17
    %s20 = sphi 0, %s18
    %s30 = sphi 0, %s32
    %s33 = sphi 0, %s30
    %s34 = sphi 0, %s33
    %s50 = sphi 0, %s34
    %s56 = sphi 0, %s58
    %s59 = sphi 0, %s56
    %s60 = sphi 0, %s59
    %s76 = sphi 0, %s60
    %s84 = sphi 0, %s86
    %s87 = sphi 0, %s84
    %s88 = sphi 0, %s87
    %s104 = sphi 0, %s88
  $region4: #{aeresnet_forward.52} parent=0 // loop_header_branch
    %11 = sbr.rel (%p9) target = $region8
  $region5: #{aeresnet_forward.52} parent=0 // loop_body
    %s13 = ssub.s32 %s8, 1
    %s14 = ssub.s32 %s8, 2
    %s21 = sadd.s32 1, %s16
    %p22 = scmp.ge.s32.totalorder %s21, 1
    %s23 = scalar_select %p22, 0, %s21
    %s24 = sadd.s32 1, %s15
    %s25 = scalar_select %p22, %s24, %s15
    %p26 = scmp.ge.s32.totalorder %s25, 2
    %s27 = scalar_select %p26, 0, %s25
    %s28 = ssub.s32 %s15, %s27
    %p29 = scmp.eq.s32.totalorder %s28, 0
    %s31 = sadd.s32 %s30, 1
    %s32 = scalar_select %p29, %s30, %s31
    %p35 = pneg %p29
    %p36 = scmp.eq.s32.totalorder %s8, 1
    %p37 = por %p35, %p36
    %p38 = scmp.ne.s32.totalorder %s30, %s33
    %p39 = scmp.eq.s32.totalorder %s8, 0
    %p40 = por %p38, %p39
    %p41 = scmp.ne.s32.totalorder %s30, %s33
    %p42 = scmp.eq.s32.totalorder %s13, 1
    %p43 = por %p41, %p42
    %p44 = scmp.ne.s32.totalorder %s33, %s34
    %p45 = scmp.eq.s32.totalorder %s13, 0
    %p46 = por %p44, %p45
    %p47 = scmp.ne.s32.totalorder %s33, %s34
    %p48 = scmp.eq.s32.totalorder %s14, 1
    %p49 = por %p47, %p48
    %p51 = scmp.ne.s32.totalorder %s34, %s50
    %p52 = scmp.eq.s32.totalorder %s14, 0
    %p53 = por %p51, %p52
    %s54 = ssub.s32 %s16, %s23
    %p55 = scmp.eq.s32.totalorder %s54, 0
    %s57 = sadd.s32 %s56, 1
    %s58 = scalar_select %p55, %s56, %s57
    %p61 = pneg %p55
    %p62 = scmp.eq.s32.totalorder %s8, 1
    %p63 = por %p61, %p62
    %p64 = scmp.ne.s32.totalorder %s56, %s59
    %p65 = scmp.eq.s32.totalorder %s8, 0
    %p66 = por %p64, %p65
    %p67 = scmp.ne.s32.totalorder %s56, %s59
    %p68 = scmp.eq.s32.totalorder %s13, 1
    %p69 = por %p67, %p68
    %p70 = scmp.ne.s32.totalorder %s59, %s60
    %p71 = scmp.eq.s32.totalorder %s13, 0
    %p72 = por %p70, %p71
    %p73 = scmp.ne.s32.totalorder %s59, %s60
    %p74 = scmp.eq.s32.totalorder %s14, 1
    %p75 = por %p73, %p74
    %p77 = scmp.ne.s32.totalorder %s60, %s76
    %p78 = scmp.eq.s32.totalorder %s14, 0
    %p79 = por %p77, %p78
    %s80 = ssub.s32 %s15, %s27
    %s81 = ssub.s32 %s16, %s23
    %s82 = sor.u32 %s80, %s81
    %p83 = scmp.eq.s32.totalorder %s82, 0
    %s85 = sadd.s32 %s84, 1
    %s86 = scalar_select %p83, %s84, %s85
    %p89 = pneg %p83
    %p90 = scmp.eq.s32.totalorder %s8, 1
    %p91 = por %p89, %p90
    %p92 = scmp.ne.s32.totalorder %s84, %s87
    %p93 = scmp.eq.s32.totalorder %s8, 0
    %p94 = por %p92, %p93
    %p95 = scmp.ne.s32.totalorder %s84, %s87
    %p96 = scmp.eq.s32.totalorder %s13, 1
    %p97 = por %p95, %p96
    %p98 = scmp.ne.s32.totalorder %s87, %s88
    %p99 = scmp.eq.s32.totalorder %s13, 0
    %p100 = por %p98, %p99
    %p101 = scmp.ne.s32.totalorder %s87, %s88
    %p102 = scmp.eq.s32.totalorder %s14, 1
    %p103 = por %p101, %p102
    %p105 = scmp.ne.s32.totalorder %s88, %s104
    %p106 = scmp.eq.s32.totalorder %s14, 0
    %p107 = por %p105, %p106
    %p108 = scmp.le.s32.totalorder 1, %s8
    %p109 = scmp.lt.s32.totalorder %s8, 3
    %p110 = pnand %p108, %p109
    %p111 = pneg %p110
    // Predicated region
    $region9: #{aeresnet_forward.52} parent=5 // pred_check
      _
    $region10: #{aeresnet_forward.52} parent=5 // pred_check_branch
      %113 = sbr.rel (%p110) target = $region12
    $region11: #{aeresnet_forward.52} parent=5 // pred_region
      %s114 = ssub.s32 %s8, 1
      // Predicated region
      $region13: #{aeresnet_forward.52} parent=11 // pred_check
        %p115 = pneg %p72
      $region14: #{aeresnet_forward.52} parent=11 // pred_check_branch
        %117 = sbr.rel (%p115) target = $region16
      $region15: #{aeresnet_forward.52} parent=11 // pred_region
        %p118 = scmp.lt.s32.totalorder %s18, 0
        %s119 = scalar_select %p118, %s18, 0
        %s120 = smul.addr %s119, 4
        %s121 = scalar_lea.vmem %s1, %s120
      $region16: #{aeresnet_forward.52} parent=11 // pred_fallthru
        _
    $region12: #{aeresnet_forward.52} parent=5 // pred_fallthru
      _
    %p122 = scmp.lt.s32.totalorder %s8, 2
    // Predicated region
    $region17: #{aeresnet_forward.52} parent=5 // pred_check
      %p123 = pneg %p122
    $region18: #{aeresnet_forward.52} parent=5 // pred_check_branch
      %125 = sbr.rel (%p123) target = $region20
    $region19: #{aeresnet_forward.52} parent=5 // pred_region
      // Predicated region
      $region21: #{aeresnet_forward.52} parent=19 // pred_check
        %p126 = pneg %p40
      $region22: #{aeresnet_forward.52} parent=19 // pred_check_branch
        %128 = sbr.rel (%p126) target = $region24
      $region23: #{aeresnet_forward.52} parent=19 // pred_region
        %s129 = smul.u32 32, %s15
        %p130 = scmp.lt.s32.totalorder %s129, 63
        %s131 = scalar_select %p130, %s129, 63
        %s132 = smul.addr %s131, 2
        %s133 = smul.addr %s132, 4
        %s134 = scalar_lea.vmem %s0, %s133
        %s135 = smul.u32 32, %s15
      $region24: #{aeresnet_forward.52} parent=19 // pred_fallthru
        _
    $region20: #{aeresnet_forward.52} parent=5 // pred_fallthru
      _
    %p136 = scmp.le.s32.totalorder 1, %s8
    %p137 = scmp.lt.s32.totalorder %s8, 3
    %p138 = pnand %p136, %p137
    %p139 = pneg %p138
    // Predicated region
    $region25: #{aeresnet_forward.52} parent=5 // pred_check
      _
    $region26: #{aeresnet_forward.52} parent=5 // pred_check_branch
      %141 = sbr.rel (%p138) target = $region28
    $region27: #{aeresnet_forward.52} parent=5 // pred_region
      %s142 = ssub.s32 %s8, 1
      %s143 = smul.u32 32, %s17
      %p144 = scmp.lt.s32.totalorder %s143, 63
      %s145 = scalar_select %p144, %s143, 63
      %s146 = smul.addr %s145, 2
      %s147 = smul.addr %s146, 4
      %s148 = scalar_lea.vmem %s0, %s147
      %p149 = pneg %p46
      %p150 = pneg %p43
      %p151 = scmp.lt.s32.totalorder %s18, 0
      %s152 = scalar_select %p151, %s18, 0
      %s153 = smul.addr %s152, 4
      %s154 = scalar_lea.vmem %s1, %s153
      %p155 = pneg %p72
      %p156 = pneg %p69
      %p157 = pneg %p100
      %p158 = pneg %p97
      %s159 = smul.u32 32, %s17
      %p160 = scmp.lt.s32.totalorder %s159, 63
      %s161 = scalar_select %p160, %s159, 63
      %p162 = scmp.lt.s32.totalorder %s18, 0
      %s163 = scalar_select %p162, %s18, 0
      %s164 = sadd.s32 %s163, %s161
      %s165 = smul.addr %s164, 4
      %s166 = scalar_lea.vmem %s2, %s165
      %s167 = smul.u32 32, %s17
      %p168 = scmp.lt.s32.totalorder %s167, 63
      %s169 = scalar_select %p168, %s167, 63
      %s170 = smul.addr %s169, 2
      %s171 = smul.addr %s170, 4
      %s172 = scalar_lea.vmem %s0, %s171
      %s173 = smul.u32 32, %s17
      %p174 = scmp.lt.s32.totalorder %s18, 0
      %s175 = scalar_select %p174, %s18, 0
      %s176 = smul.addr %s175, 4
      %s177 = scalar_lea.vmem %s1, %s176
      %s178 = smul.u32 32, %s17
      %p179 = scmp.lt.s32.totalorder %s178, 63
      %s180 = scalar_select %p179, %s178, 63
      %p181 = scmp.lt.s32.totalorder %s18, 0
      %s182 = scalar_select %p181, %s18, 0
      %s183 = sadd.s32 %s182, %s180
      %s184 = smul.addr %s183, 4
      %s185 = scalar_lea.vmem %s2, %s184
      %s186 = smul.u32 32, %s17
      %v188 = vld [vmem:[%s172] sm:$0xff]
      %v189 = vld [vmem:[%s172 + $0x8] sm:$0xff]
      %v190 = vld [vmem:[%s172 + $0x10] sm:$0xff]
      %v191 = vld [vmem:[%s172 + $0x18] sm:$0xff]
      %v192 = vld [vmem:[%s172 + $0x20] sm:$0xff]
      %v193 = vld [vmem:[%s172 + $0x28] sm:$0xff]
      %v194 = vld [vmem:[%s172 + $0x30] sm:$0xff]
      %v195 = vld [vmem:[%s172 + $0x38] sm:$0xff]
      %v196 = vld [vmem:[%s172 + $0x40] sm:$0xff]
      %v197 = vld [vmem:[%s172 + $0x48] sm:$0xff]
      %v198 = vld [vmem:[%s172 + $0x50] sm:$0xff]
      %v199 = vld [vmem:[%s172 + $0x58] sm:$0xff]
      %v200 = vld [vmem:[%s172 + $0x60] sm:$0xff]
      %v201 = vld [vmem:[%s172 + $0x68] sm:$0xff]
      %v202 = vld [vmem:[%s172 + $0x70] sm:$0xff]
      %v203 = vld [vmem:[%s172 + $0x78] sm:$0xff]
      %v204 = vld [vmem:[%s172 + $0x80] sm:$0xff]
      %v205 = vld [vmem:[%s172 + $0x88] sm:$0xff]
      %v206 = vld [vmem:[%s172 + $0x90] sm:$0xff]
      %v207 = vld [vmem:[%s172 + $0x98] sm:$0xff]
      %v208 = vld [vmem:[%s172 + $0xa0] sm:$0xff]
      %v209 = vld [vmem:[%s172 + $0xa8] sm:$0xff]
      %v210 = vld [vmem:[%s172 + $0xb0] sm:$0xff]
      %v211 = vld [vmem:[%s172 + $0xb8] sm:$0xff]
      %v212 = vld [vmem:[%s172 + $0xc0] sm:$0xff]
      %v213 = vld [vmem:[%s172 + $0xc8] sm:$0xff]
      %v214 = vld [vmem:[%s172 + $0xd0] sm:$0xff]
      %v215 = vld [vmem:[%s172 + $0xd8] sm:$0xff]
      %v216 = vld [vmem:[%s172 + $0xe0] sm:$0xff]
      %v217 = vld [vmem:[%s172 + $0xe8] sm:$0xff]
      %v218 = vld [vmem:[%s172 + $0xf0] sm:$0xff]
      %v219 = vld [vmem:[%s172 + $0xf8] sm:$0xff]
      %v220 = vld [vmem:[%s177] sm:$0xf]
      %v221 = vld [vmem:[%s177 + $0x4] sm:$0xf]
      %v222 = vld [vmem:[%s177 + $0x8] sm:$0xf]
      %v223 = vld [vmem:[%s177 + $0xc] sm:$0xf]
      %v224 = vld [vmem:[%s177 + $0x10] sm:$0xf]
      %v225 = vld [vmem:[%s177 + $0x14] sm:$0xf]
      %v226 = vld [vmem:[%s177 + $0x18] sm:$0xf]
      %v227 = vld [vmem:[%s177 + $0x1c] sm:$0xf]
      %v228 = vld [vmem:[%s177 + $0x20] sm:$0xf]
      %v229 = vld [vmem:[%s177 + $0x24] sm:$0xf]
      %v230 = vld [vmem:[%s177 + $0x28] sm:$0xf]
      %v231 = vld [vmem:[%s177 + $0x2c] sm:$0xf]
      %v232 = vld [vmem:[%s177 + $0x30] sm:$0xf]
      %v233 = vld [vmem:[%s177 + $0x34] sm:$0xf]
      %v234 = vld [vmem:[%s177 + $0x38] sm:$0xf]
      %v235 = vld [vmem:[%s177 + $0x3c] sm:$0xf]
      %v236 = vld [vmem:[%s177 + $0x40] sm:$0xf]
      %v237 = vld [vmem:[%s177 + $0x44] sm:$0xf]
      %v270 = vunpack.c.l.b16 %v188
      %v271 = vunpack.c.h.b16 %v188
      %v272 = vunpack.c.l.b16 %v189
      %v273 = vunpack.c.h.b16 %v189
      %v274 = vunpack.c.l.b16 %v190
      %v275 = vunpack.c.h.b16 %v190
      %v276 = vunpack.c.l.b16 %v191
      %v277 = vunpack.c.h.b16 %v191
      %v278 = vunpack.c.l.b16 %v192
      %v279 = vunpack.c.h.b16 %v192
      %v280 = vunpack.c.l.b16 %v193
      %v281 = vunpack.c.h.b16 %v193
      %v282 = vunpack.c.l.b16 %v194
      %v283 = vunpack.c.h.b16 %v194
      %v284 = vunpack.c.l.b16 %v195
      %v285 = vunpack.c.h.b16 %v195
      %v286 = vunpack.c.l.b16 %v196
      %v287 = vunpack.c.h.b16 %v196
      %v288 = vunpack.c.l.b16 %v197
      %v289 = vunpack.c.h.b16 %v197
      %v290 = vunpack.c.l.b16 %v198
      %v291 = vunpack.c.h.b16 %v198
      %v292 = vunpack.c.l.b16 %v199
      %v293 = vunpack.c.h.b16 %v199
      %v294 = vunpack.c.l.b16 %v200
      %v295 = vunpack.c.h.b16 %v200
      %v296 = vunpack.c.l.b16 %v201
      %v297 = vunpack.c.h.b16 %v201
      %v298 = vunpack.c.l.b16 %v202
      %v299 = vunpack.c.h.b16 %v202
      %v300 = vunpack.c.l.b16 %v203
      %v301 = vunpack.c.h.b16 %v203
      %v302 = vunpack.c.l.b16 %v204
      %v303 = vunpack.c.h.b16 %v204
      %v304 = vunpack.c.l.b16 %v205
      %v305 = vunpack.c.h.b16 %v205
      %v306 = vunpack.c.l.b16 %v206
      %v307 = vunpack.c.h.b16 %v206
      %v308 = vunpack.c.l.b16 %v207
      %v309 = vunpack.c.h.b16 %v207
      %v310 = vunpack.c.l.b16 %v208
      %v311 = vunpack.c.h.b16 %v208
      %v312 = vunpack.c.l.b16 %v209
      %v313 = vunpack.c.h.b16 %v209
      %v314 = vunpack.c.l.b16 %v210
      %v315 = vunpack.c.h.b16 %v210
      %v316 = vunpack.c.l.b16 %v211
      %v317 = vunpack.c.h.b16 %v211
      %v318 = vunpack.c.l.b16 %v212
      %v319 = vunpack.c.h.b16 %v212
      %v320 = vunpack.c.l.b16 %v213
      %v321 = vunpack.c.h.b16 %v213
      %v322 = vunpack.c.l.b16 %v214
      %v323 = vunpack.c.h.b16 %v214
      %v324 = vunpack.c.l.b16 %v215
      %v325 = vunpack.c.h.b16 %v215
      %v326 = vunpack.c.l.b16 %v216
      %v327 = vunpack.c.h.b16 %v216
      %v328 = vunpack.c.l.b16 %v217
      %v329 = vunpack.c.h.b16 %v217
      %v330 = vunpack.c.l.b16 %v218
      %v331 = vunpack.c.h.b16 %v218
      %v332 = vunpack.c.l.b16 %v219
      %v333 = vunpack.c.h.b16 %v219
      %v334 = vpack.c.b16 %v272, %v270
      %v335 = vpack.c.b16 %v273, %v271
      %v336 = vpack.c.b16 %v276, %v274
      %v337 = vpack.c.b16 %v277, %v275
      %v338 = vpack.c.b16 %v280, %v278
      %v339 = vpack.c.b16 %v281, %v279
      %v340 = vpack.c.b16 %v284, %v282
      %v341 = vpack.c.b16 %v285, %v283
      %v342 = vpack.c.b16 %v288, %v286
      %v343 = vpack.c.b16 %v289, %v287
      %v344 = vpack.c.b16 %v292, %v290
      %v345 = vpack.c.b16 %v293, %v291
      %v346 = vpack.c.b16 %v296, %v294
      %v347 = vpack.c.b16 %v297, %v295
      %v348 = vpack.c.b16 %v300, %v298
      %v349 = vpack.c.b16 %v301, %v299
      %v350 = vpack.c.b16 %v304, %v302
      %v351 = vpack.c.b16 %v305, %v303
      %v352 = vpack.c.b16 %v308, %v306
      %v353 = vpack.c.b16 %v309, %v307
      %v354 = vpack.c.b16 %v312, %v310
      %v355 = vpack.c.b16 %v313, %v311
      %v356 = vpack.c.b16 %v316, %v314
      %v357 = vpack.c.b16 %v317, %v315
      %v358 = vpack.c.b16 %v320, %v318
      %v359 = vpack.c.b16 %v321, %v319
      %v360 = vpack.c.b16 %v324, %v322
      %v361 = vpack.c.b16 %v325, %v323
      %v362 = vpack.c.b16 %v328, %v326
      %v363 = vpack.c.b16 %v329, %v327
      %v364 = vpack.c.b16 %v332, %v330
      %v365 = vpack.c.b16 %v333, %v331
      %v400 = vunpack.c.l.b16 %v220
      %v401 = vunpack.c.l.b16 %v221
      %v402 = vunpack.c.l.b16 %v222
      %v403 = vunpack.c.l.b16 %v223
      %v404 = vunpack.c.l.b16 %v224
      %v405 = vunpack.c.l.b16 %v225
      %v406 = vunpack.c.l.b16 %v226
      %v407 = vunpack.c.l.b16 %v227
      %v408 = vunpack.c.l.b16 %v228
      %v409 = vunpack.c.l.b16 %v229
      %v410 = vunpack.c.l.b16 %v230
      %v411 = vunpack.c.l.b16 %v231
      %v412 = vunpack.c.l.b16 %v232
      %v413 = vunpack.c.l.b16 %v233
      %v414 = vunpack.c.l.b16 %v234
      %v415 = vunpack.c.l.b16 %v235
      %v416 = vunpack.c.l.b16 %v236
      %v417 = vunpack.c.l.b16 %v237
      %v418 = vpack.c.b16 %v401, %v400
      %v419 = vpack.c.b16 %v403, %v402
      %v420 = vpack.c.b16 %v405, %v404
      %v421 = vpack.c.b16 %v407, %v406
      %v422 = vpack.c.b16 %v409, %v408
      %v423 = vpack.c.b16 %v411, %v410
      %v424 = vpack.c.b16 %v413, %v412
      %v425 = vpack.c.b16 %v415, %v414
      %v426 = vpack.c.b16 %v417, %v416
      %vm436 = vcmask 130048
      %v438 = vsel %vm436, %v335, 0
      %v441 = vsel %vm436, %v337, 0
      %v444 = vsel %vm436, %v339, 0
      %v447 = vsel %vm436, %v341, 0
      %v450 = vsel %vm436, %v343, 0
      %v453 = vsel %vm436, %v345, 0
      %v456 = vsel %vm436, %v347, 0
      %v459 = vsel %vm436, %v349, 0
      %v462 = vsel %vm436, %v351, 0
      %v465 = vsel %vm436, %v353, 0
      %v468 = vsel %vm436, %v355, 0
      %v471 = vsel %vm436, %v357, 0
      %v474 = vsel %vm436, %v359, 0
      %v477 = vsel %vm436, %v361, 0
      %v480 = vsel %vm436, %v363, 0
      %v483 = vsel %vm436, %v365, 0
      %485 = vmatpush.bf16.msra.mxu0 %v425
      %486 = vmatpush.bf16.msra.mxu0 %v424
      %487 = vmatpush.bf16.msra.mxu0 %v423
      %488 = vmatpush.bf16.msra.mxu0 %v422
      %489 = vmatpush.bf16.msra.mxu0 %v421
      %490 = vmatpush.bf16.msra.mxu0 %v420
      %491 = vmatpush.bf16.msra.mxu0 %v419
      %492 = vmatpush.bf16.msra.mxu0 %v418
      %493 = vmatmul.bf16.gmra.mxu0 %v334
      %v494 = vpop.f32.mrf.mxu0
      %v495 = vadd.f32 0.0, %v494
      %v496 = vpop.f32.mrf.mxu0
      %v497 = vadd.f32 0.0, %v496
      %498 = vmatmul.bf16.gmra.mxu0 %v336
      %v499 = vpop.f32.mrf.mxu0
      %v500 = vadd.f32 0.0, %v499
      %v501 = vpop.f32.mrf.mxu0
      %v502 = vadd.f32 0.0, %v501
      %503 = vmatmul.bf16.gmra.mxu0 %v338
      %v504 = vpop.f32.mrf.mxu0
      %v505 = vadd.f32 0.0, %v504
      %v506 = vpop.f32.mrf.mxu0
      %v507 = vadd.f32 0.0, %v506
      %508 = vmatmul.bf16.gmra.mxu0 %v340
      %v509 = vpop.f32.mrf.mxu0
      %v510 = vadd.f32 0.0, %v509
      %v511 = vpop.f32.mrf.mxu0
      %v512 = vadd.f32 0.0, %v511
      %513 = vmatmul.bf16.gmra.mxu0 %v342
      %v514 = vpop.f32.mrf.mxu0
      %v515 = vadd.f32 0.0, %v514
      %v516 = vpop.f32.mrf.mxu0
      %v517 = vadd.f32 0.0, %v516
      %518 = vmatmul.bf16.gmra.mxu0 %v344
      %v519 = vpop.f32.mrf.mxu0
      %v520 = vadd.f32 0.0, %v519
      %v521 = vpop.f32.mrf.mxu0
      %v522 = vadd.f32 0.0, %v521
      %523 = vmatmul.bf16.gmra.mxu0 %v346
      %v524 = vpop.f32.mrf.mxu0
      %v525 = vadd.f32 0.0, %v524
      %v526 = vpop.f32.mrf.mxu0
      %v527 = vadd.f32 0.0, %v526
      %528 = vmatmul.bf16.gmra.mxu0 %v348
      %v529 = vpop.f32.mrf.mxu0
      %v530 = vadd.f32 0.0, %v529
      %v531 = vpop.f32.mrf.mxu0
      %v532 = vadd.f32 0.0, %v531
      %533 = vmatmul.bf16.gmra.mxu0 %v350
      %v534 = vpop.f32.mrf.mxu0
      %v535 = vadd.f32 0.0, %v534
      %v536 = vpop.f32.mrf.mxu0
      %v537 = vadd.f32 0.0, %v536
      %538 = vmatmul.bf16.gmra.mxu0 %v352
      %v539 = vpop.f32.mrf.mxu0
      %v540 = vadd.f32 0.0, %v539
      %v541 = vpop.f32.mrf.mxu0
      %v542 = vadd.f32 0.0, %v541
      %543 = vmatmul.bf16.gmra.mxu0 %v354
      %v544 = vpop.f32.mrf.mxu0
      %v545 = vadd.f32 0.0, %v544
      %v546 = vpop.f32.mrf.mxu0
      %v547 = vadd.f32 0.0, %v546
      %548 = vmatmul.bf16.gmra.mxu0 %v356
      %v549 = vpop.f32.mrf.mxu0
      %v550 = vadd.f32 0.0, %v549
      %v551 = vpop.f32.mrf.mxu0
      %v552 = vadd.f32 0.0, %v551
      %553 = vmatmul.bf16.gmra.mxu0 %v358
      %v554 = vpop.f32.mrf.mxu0
      %v555 = vadd.f32 0.0, %v554
      %v556 = vpop.f32.mrf.mxu0
      %v557 = vadd.f32 0.0, %v556
      %558 = vmatmul.bf16.gmra.mxu0 %v360
      %v559 = vpop.f32.mrf.mxu0
      %v560 = vadd.f32 0.0, %v559
      %v561 = vpop.f32.mrf.mxu0
      %v562 = vadd.f32 0.0, %v561
      %563 = vmatmul.bf16.gmra.mxu0 %v362
      %v564 = vpop.f32.mrf.mxu0
      %v565 = vadd.f32 0.0, %v564
      %v566 = vpop.f32.mrf.mxu0
      %v567 = vadd.f32 0.0, %v566
      %568 = vmatmul.bf16.gmra.mxu0 %v364
      %v569 = vpop.f32.mrf.mxu0
      %v570 = vadd.f32 0.0, %v569
      %v571 = vpop.f32.mrf.mxu0
      %v572 = vadd.f32 0.0, %v571
      %573 = vdwg.mxu0
      %574 = vmatpush.bf16.msra.mxu0 0
      %575 = vmatpush.bf16.msra.mxu0 0
      %576 = vmatpush.bf16.msra.mxu0 0
      %577 = vmatpush.bf16.msra.mxu0 0
      %578 = vmatpush.bf16.msra.mxu0 0
      %579 = vmatpush.bf16.msra.mxu0 0
      %580 = vmatpush.bf16.msra.mxu0 0
      %581 = vmatpush.bf16.msra.mxu0 %v426
      %582 = vmatmul.bf16.gmra.mxu0 %v438
      %v583 = vpop.f32.mrf.mxu0
      %v584 = vadd.f32 %v495, %v583
      %v585 = vpop.f32.mrf.mxu0
      %v586 = vadd.f32 %v497, %v585
      %587 = vmatmul.bf16.gmra.mxu0 %v441
      %v588 = vpop.f32.mrf.mxu0
      %v589 = vadd.f32 %v500, %v588
      %v590 = vpop.f32.mrf.mxu0
      %v591 = vadd.f32 %v502, %v590
      %592 = vmatmul.bf16.gmra.mxu0 %v444
      %v593 = vpop.f32.mrf.mxu0
      %v594 = vadd.f32 %v505, %v593
      %v595 = vpop.f32.mrf.mxu0
      %v596 = vadd.f32 %v507, %v595
      %597 = vmatmul.bf16.gmra.mxu0 %v447
      %v598 = vpop.f32.mrf.mxu0
      %v599 = vadd.f32 %v510, %v598
      %v600 = vpop.f32.mrf.mxu0
      %v601 = vadd.f32 %v512, %v600
      %602 = vmatmul.bf16.gmra.mxu0 %v450
      %v603 = vpop.f32.mrf.mxu0
      %v604 = vadd.f32 %v515, %v603
      %v605 = vpop.f32.mrf.mxu0
      %v606 = vadd.f32 %v517, %v605
      %607 = vmatmul.bf16.gmra.mxu0 %v453
      %v608 = vpop.f32.mrf.mxu0
      %v609 = vadd.f32 %v520, %v608
      %v610 = vpop.f32.mrf.mxu0
      %v611 = vadd.f32 %v522, %v610
      %612 = vmatmul.bf16.gmra.mxu0 %v456
      %v613 = vpop.f32.mrf.mxu0
      %v614 = vadd.f32 %v525, %v613
      %v615 = vpop.f32.mrf.mxu0
      %v616 = vadd.f32 %v527, %v615
      %617 = vmatmul.bf16.gmra.mxu0 %v459
      %v618 = vpop.f32.mrf.mxu0
      %v619 = vadd.f32 %v530, %v618
      %v620 = vpop.f32.mrf.mxu0
      %v621 = vadd.f32 %v532, %v620
      %622 = vmatmul.bf16.gmra.mxu0 %v462
      %v623 = vpop.f32.mrf.mxu0
      %v624 = vadd.f32 %v535, %v623
      %v625 = vpop.f32.mrf.mxu0
      %v626 = vadd.f32 %v537, %v625
      %627 = vmatmul.bf16.gmra.mxu0 %v465
      %v628 = vpop.f32.mrf.mxu0
      %v629 = vadd.f32 %v540, %v628
      %v630 = vpop.f32.mrf.mxu0
      %v631 = vadd.f32 %v542, %v630
      %632 = vmatmul.bf16.gmra.mxu0 %v468
      %v633 = vpop.f32.mrf.mxu0
      %v634 = vadd.f32 %v545, %v633
      %v635 = vpop.f32.mrf.mxu0
      %v636 = vadd.f32 %v547, %v635
      %637 = vmatmul.bf16.gmra.mxu0 %v471
      %v638 = vpop.f32.mrf.mxu0
      %v639 = vadd.f32 %v550, %v638
      %v640 = vpop.f32.mrf.mxu0
      %v641 = vadd.f32 %v552, %v640
      %642 = vmatmul.bf16.gmra.mxu0 %v474
      %v643 = vpop.f32.mrf.mxu0
      %v644 = vadd.f32 %v555, %v643
      %v645 = vpop.f32.mrf.mxu0
      %v646 = vadd.f32 %v557, %v645
      %647 = vmatmul.bf16.gmra.mxu0 %v477
      %v648 = vpop.f32.mrf.mxu0
      %v649 = vadd.f32 %v560, %v648
      %v650 = vpop.f32.mrf.mxu0
      %v651 = vadd.f32 %v562, %v650
      %652 = vmatmul.bf16.gmra.mxu0 %v480
      %v653 = vpop.f32.mrf.mxu0
      %v654 = vadd.f32 %v565, %v653
      %v655 = vpop.f32.mrf.mxu0
      %v656 = vadd.f32 %v567, %v655
      %657 = vmatmul.bf16.gmra.mxu0 %v483
      %v658 = vpop.f32.mrf.mxu0
      %v659 = vadd.f32 %v570, %v658
      %v660 = vpop.f32.mrf.mxu0
      %v661 = vadd.f32 %v572, %v660
      %662 = vdwg.mxu0
      %v663 = vpack.c.bf16 %v584, %v584
      %v664 = vpack.c.bf16 %v586, %v586
      %v665 = vpack.c.bf16 %v589, %v589
      %v666 = vpack.c.bf16 %v591, %v591
      %v667 = vpack.c.bf16 %v594, %v594
      %v668 = vpack.c.bf16 %v596, %v596
      %v669 = vpack.c.bf16 %v599, %v599
      %v670 = vpack.c.bf16 %v601, %v601
      %v671 = vpack.c.bf16 %v604, %v604
      %v672 = vpack.c.bf16 %v606, %v606
      %v673 = vpack.c.bf16 %v609, %v609
      %v674 = vpack.c.bf16 %v611, %v611
      %v675 = vpack.c.bf16 %v614, %v614
      %v676 = vpack.c.bf16 %v616, %v616
      %v677 = vpack.c.bf16 %v619, %v619
      %v678 = vpack.c.bf16 %v621, %v621
      %v679 = vpack.c.bf16 %v624, %v624
      %v680 = vpack.c.bf16 %v626, %v626
      %v681 = vpack.c.bf16 %v629, %v629
      %v682 = vpack.c.bf16 %v631, %v631
      %v683 = vpack.c.bf16 %v634, %v634
      %v684 = vpack.c.bf16 %v636, %v636
      %v685 = vpack.c.bf16 %v639, %v639
      %v686 = vpack.c.bf16 %v641, %v641
      %v687 = vpack.c.bf16 %v644, %v644
      %v688 = vpack.c.bf16 %v646, %v646
      %v689 = vpack.c.bf16 %v649, %v649
      %v690 = vpack.c.bf16 %v651, %v651
      %v691 = vpack.c.bf16 %v654, %v654
      %v692 = vpack.c.bf16 %v656, %v656
      %v693 = vpack.c.bf16 %v659, %v659
      %v694 = vpack.c.bf16 %v661, %v661
      %695 = vst [vmem:[%s185] sm:$0xf] %v663
      %696 = vst [vmem:[%s185 + $0x4] sm:$0xf] %v664
      %697 = vst [vmem:[%s185 + $0x8] sm:$0xf] %v665
      %698 = vst [vmem:[%s185 + $0xc] sm:$0xf] %v666
      %699 = vst [vmem:[%s185 + $0x10] sm:$0xf] %v667
      %700 = vst [vmem:[%s185 + $0x14] sm:$0xf] %v668
      %701 = vst [vmem:[%s185 + $0x18] sm:$0xf] %v669
      %702 = vst [vmem:[%s185 + $0x1c] sm:$0xf] %v670
      %703 = vst [vmem:[%s185 + $0x20] sm:$0xf] %v671
      %704 = vst [vmem:[%s185 + $0x24] sm:$0xf] %v672
      %705 = vst [vmem:[%s185 + $0x28] sm:$0xf] %v673
      %706 = vst [vmem:[%s185 + $0x2c] sm:$0xf] %v674
      %707 = vst [vmem:[%s185 + $0x30] sm:$0xf] %v675
      %708 = vst [vmem:[%s185 + $0x34] sm:$0xf] %v676
      %709 = vst [vmem:[%s185 + $0x38] sm:$0xf] %v677
      %710 = vst [vmem:[%s185 + $0x3c] sm:$0xf] %v678
      %711 = vst [vmem:[%s185 + $0x40] sm:$0xf] %v679
      %712 = vst [vmem:[%s185 + $0x44] sm:$0xf] %v680
      %713 = vst [vmem:[%s185 + $0x48] sm:$0xf] %v681
      %714 = vst [vmem:[%s185 + $0x4c] sm:$0xf] %v682
      %715 = vst [vmem:[%s185 + $0x50] sm:$0xf] %v683
      %716 = vst [vmem:[%s185 + $0x54] sm:$0xf] %v684
      %717 = vst [vmem:[%s185 + $0x58] sm:$0xf] %v685
      %718 = vst [vmem:[%s185 + $0x5c] sm:$0xf] %v686
      %719 = vst [vmem:[%s185 + $0x60] sm:$0xf] %v687
      %720 = vst [vmem:[%s185 + $0x64] sm:$0xf] %v688
      %721 = vst [vmem:[%s185 + $0x68] sm:$0xf] %v689
      %722 = vst [vmem:[%s185 + $0x6c] sm:$0xf] %v690
      %723 = vst [vmem:[%s185 + $0x70] sm:$0xf] %v691
      %724 = vst [vmem:[%s185 + $0x74] sm:$0xf] %v692
      %725 = vst [vmem:[%s185 + $0x78] sm:$0xf] %v693
      %726 = vst [vmem:[%s185 + $0x7c] sm:$0xf] %v694
      %s727 = smul.u32 32, %s17
      %p728 = scmp.lt.s32.totalorder %s727, 63
      %s729 = scalar_select %p728, %s727, 63
      %p730 = scmp.lt.s32.totalorder %s18, 0
      %s731 = scalar_select %p730, %s18, 0
      %s732 = sadd.s32 %s731, %s729
      %s733 = smul.addr %s732, 4
      %s734 = scalar_lea.vmem %s2, %s733
      // Predicated region
      $region29: #{aeresnet_forward.52} parent=27 // pred_check
        %p735 = pneg %p97
      $region30: #{aeresnet_forward.52} parent=27 // pred_check_branch
        %737 = sbr.rel (%p735) target = $region32
      $region31: #{aeresnet_forward.52} parent=27 // pred_region
        %s738 = smul.u32 32, %s17
      $region32: #{aeresnet_forward.52} parent=27 // pred_fallthru
        _
    $region28: #{aeresnet_forward.52} parent=5 // pred_fallthru
      _
    %p739 = scmp.le.s32.totalorder 2, %s8
    // Predicated region
    $region33: #{aeresnet_forward.52} parent=5 // pred_check
      %p740 = pneg %p739
    $region34: #{aeresnet_forward.52} parent=5 // pred_check_branch
      %742 = sbr.rel (%p740) target = $region36
    $region35: #{aeresnet_forward.52} parent=5 // pred_region
      %s743 = ssub.s32 %s8, 2
      // Predicated region
      $region37: #{aeresnet_forward.52} parent=35 // pred_check
        %p744 = pneg %p103
      $region38: #{aeresnet_forward.52} parent=35 // pred_check_branch
        %746 = sbr.rel (%p744) target = $region40
      $region39: #{aeresnet_forward.52} parent=35 // pred_region
        %s747 = smul.u32 32, %s19
        %p748 = scmp.lt.s32.totalorder %s747, 63
        %s749 = scalar_select %p748, %s747, 63
        %p750 = scmp.lt.s32.totalorder %s20, 0
        %s751 = scalar_select %p750, %s20, 0
        %s752 = sadd.s32 %s751, %s749
        %s753 = smul.addr %s752, 4
        %s754 = scalar_lea.vmem %s2, %s753
      $region40: #{aeresnet_forward.52} parent=35 // pred_fallthru
        _
    $region36: #{aeresnet_forward.52} parent=5 // pred_fallthru
      _
  $region6: #{aeresnet_forward.52} parent=0 // loop_footer
    %s12 = sadd.s32 1, %s8
  $region7: #{aeresnet_forward.52} parent=0 // loop_footer_branch
    %7 = sbr.rel target = $region3
  $region8: #{aeresnet_forward.52} parent=0 // loop_exit
    _

// kernel: aeresnet_forward.53
$region0: #{aeresnet_forward.53}
  #allocation0 [shape = 'u32[]', space=smem, size = 0x4, offset = 0x4, fixed_abs, tag = 'smem constant byte address 0x4 - core index']
  #allocation1 [shape = 'u32[72,128]{1,0:T(1,128)}', space=vmem, size = 0x9000, scoped, tag = 'internal scratch']
  %s0 = inlined_call_operand.vmem [shape: bf16[128,144], index: 0, kind: input, shape index: {}]
  %s1 = inlined_call_operand.vmem [shape: bf16[144,128], index: 1, kind: input, shape index: {}]
  %s2 = inlined_call_operand.vmem [shape: bf16[128,128], index: 2, kind: output, shape index: {}]
  %s3 = sld [smem:[#allocation0]]
  $region18: #{aeresnet_forward.53} parent=0
    _
  %s5 = ssub.s32 1, %s3
  %s6 = scalar_select 0, %s5, %s3
  // Predicated region
  $region2: #{aeresnet_forward.53} parent=0 // pred_check
    _
  $region3: #{aeresnet_forward.53} parent=0 // pred_check_branch
    %8 = sbr.rel (0) target = $region5
  $region4: #{aeresnet_forward.53} parent=0 // pred_region
    _
  $region5: #{aeresnet_forward.53} parent=0 // pred_fallthru
    _
  // Predicated region
  $region6: #{aeresnet_forward.53} parent=0 // pred_check
    _
  $region7: #{aeresnet_forward.53} parent=0 // pred_check_branch
    %10 = sbr.rel (0) target = $region9
  $region8: #{aeresnet_forward.53} parent=0 // pred_region
    _
  $region9: #{aeresnet_forward.53} parent=0 // pred_fallthru
    _
  %v12 = vld [vmem:[%s0] sm:$0xff]
  %v13 = vld [vmem:[%s0 + $0x8] sm:$0xff]
  %v14 = vld [vmem:[%s0 + $0x10] sm:$0xff]
  %v15 = vld [vmem:[%s0 + $0x18] sm:$0xff]
  %v16 = vld [vmem:[%s0 + $0x20] sm:$0xff]
  %v17 = vld [vmem:[%s0 + $0x28] sm:$0xff]
  %v18 = vld [vmem:[%s0 + $0x30] sm:$0xff]
  %v19 = vld [vmem:[%s0 + $0x38] sm:$0xff]
  %v20 = vld [vmem:[%s0 + $0x40] sm:$0xff]
  %v21 = vld [vmem:[%s0 + $0x48] sm:$0xff]
  %v22 = vld [vmem:[%s0 + $0x50] sm:$0xff]
  %v23 = vld [vmem:[%s0 + $0x58] sm:$0xff]
  %v24 = vld [vmem:[%s0 + $0x60] sm:$0xff]
  %v25 = vld [vmem:[%s0 + $0x68] sm:$0xff]
  %v26 = vld [vmem:[%s0 + $0x70] sm:$0xff]
  %v27 = vld [vmem:[%s0 + $0x78] sm:$0xff]
  %v28 = vld [vmem:[%s1] sm:$0xf]
  %v29 = vld [vmem:[%s1 + $0x4] sm:$0xf]
  %v30 = vld [vmem:[%s1 + $0x8] sm:$0xf]
  %v31 = vld [vmem:[%s1 + $0xc] sm:$0xf]
  %v32 = vld [vmem:[%s1 + $0x10] sm:$0xf]
  %v33 = vld [vmem:[%s1 + $0x14] sm:$0xf]
  %v34 = vld [vmem:[%s1 + $0x18] sm:$0xf]
  %v35 = vld [vmem:[%s1 + $0x1c] sm:$0xf]
  %v36 = vld [vmem:[%s1 + $0x20] sm:$0xf]
  %v37 = vld [vmem:[%s1 + $0x24] sm:$0xf]
  %v38 = vld [vmem:[%s1 + $0x28] sm:$0xf]
  %v39 = vld [vmem:[%s1 + $0x2c] sm:$0xf]
  %v40 = vld [vmem:[%s1 + $0x30] sm:$0xf]
  %v41 = vld [vmem:[%s1 + $0x34] sm:$0xf]
  %v42 = vld [vmem:[%s1 + $0x38] sm:$0xf]
  %v43 = vld [vmem:[%s1 + $0x3c] sm:$0xf]
  %v44 = vld [vmem:[%s1 + $0x40] sm:$0xf]
  %v45 = vld [vmem:[%s1 + $0x44] sm:$0xf]
  %v62 = vunpack.c.l.b16 %v12
  %v63 = vunpack.c.h.b16 %v12
  %v64 = vunpack.c.l.b16 %v13
  %v65 = vunpack.c.h.b16 %v13
  %v66 = vunpack.c.l.b16 %v14
  %v67 = vunpack.c.h.b16 %v14
  %v68 = vunpack.c.l.b16 %v15
  %v69 = vunpack.c.h.b16 %v15
  %v70 = vunpack.c.l.b16 %v16
  %v71 = vunpack.c.h.b16 %v16
  %v72 = vunpack.c.l.b16 %v17
  %v73 = vunpack.c.h.b16 %v17
  %v74 = vunpack.c.l.b16 %v18
  %v75 = vunpack.c.h.b16 %v18
  %v76 = vunpack.c.l.b16 %v19
  %v77 = vunpack.c.h.b16 %v19
  %v78 = vunpack.c.l.b16 %v20
  %v79 = vunpack.c.h.b16 %v20
  %v80 = vunpack.c.l.b16 %v21
  %v81 = vunpack.c.h.b16 %v21
  %v82 = vunpack.c.l.b16 %v22
  %v83 = vunpack.c.h.b16 %v22
  %v84 = vunpack.c.l.b16 %v23
  %v85 = vunpack.c.h.b16 %v23
  %v86 = vunpack.c.l.b16 %v24
  %v87 = vunpack.c.h.b16 %v24
  %v88 = vunpack.c.l.b16 %v25
  %v89 = vunpack.c.h.b16 %v25
  %v90 = vunpack.c.l.b16 %v26
  %v91 = vunpack.c.h.b16 %v26
  %v92 = vunpack.c.l.b16 %v27
  %v93 = vunpack.c.h.b16 %v27
  %v94 = vpack.c.b16 %v64, %v62
  %v95 = vpack.c.b16 %v65, %v63
  %v96 = vpack.c.b16 %v68, %v66
  %v97 = vpack.c.b16 %v69, %v67
  %v98 = vpack.c.b16 %v72, %v70
  %v99 = vpack.c.b16 %v73, %v71
  %v100 = vpack.c.b16 %v76, %v74
  %v101 = vpack.c.b16 %v77, %v75
  %v102 = vpack.c.b16 %v80, %v78
  %v103 = vpack.c.b16 %v81, %v79
  %v104 = vpack.c.b16 %v84, %v82
  %v105 = vpack.c.b16 %v85, %v83
  %v106 = vpack.c.b16 %v88, %v86
  %v107 = vpack.c.b16 %v89, %v87
  %v108 = vpack.c.b16 %v92, %v90
  %v109 = vpack.c.b16 %v93, %v91
  %v136 = vunpack.c.l.b16 %v28
  %v137 = vunpack.c.l.b16 %v29
  %v138 = vunpack.c.l.b16 %v30
  %v139 = vunpack.c.l.b16 %v31
  %v140 = vunpack.c.l.b16 %v32
  %v141 = vunpack.c.l.b16 %v33
  %v142 = vunpack.c.l.b16 %v34
  %v143 = vunpack.c.l.b16 %v35
  %v144 = vunpack.c.l.b16 %v36
  %v145 = vunpack.c.l.b16 %v37
  %v146 = vunpack.c.l.b16 %v38
  %v147 = vunpack.c.l.b16 %v39
  %v148 = vunpack.c.l.b16 %v40
  %v149 = vunpack.c.l.b16 %v41
  %v150 = vunpack.c.l.b16 %v42
  %v151 = vunpack.c.l.b16 %v43
  %v152 = vunpack.c.l.b16 %v44
  %v153 = vunpack.c.l.b16 %v45
  %v154 = vpack.c.b16 %v137, %v136
  %v155 = vpack.c.b16 %v139, %v138
  %v156 = vpack.c.b16 %v141, %v140
  %v157 = vpack.c.b16 %v143, %v142
  %v158 = vpack.c.b16 %v145, %v144
  %v159 = vpack.c.b16 %v147, %v146
  %v160 = vpack.c.b16 %v149, %v148
  %v161 = vpack.c.b16 %v151, %v150
  %v162 = vpack.c.b16 %v153, %v152
  %vm172 = vcmask 130048
  %v174 = vsel %vm172, %v95, 0
  %v177 = vsel %vm172, %v97, 0
  %v180 = vsel %vm172, %v99, 0
  %v183 = vsel %vm172, %v101, 0
  %v186 = vsel %vm172, %v103, 0
  %v189 = vsel %vm172, %v105, 0
  %v192 = vsel %vm172, %v107, 0
  %v195 = vsel %vm172, %v109, 0
  %197 = vmatpush.bf16.msra.mxu0 %v161
  %198 = vmatpush.bf16.msra.mxu0 %v160
  %199 = vmatpush.bf16.msra.mxu0 %v159
  %200 = vmatpush.bf16.msra.mxu0 %v158
  %201 = vmatpush.bf16.msra.mxu0 %v157
  %202 = vmatpush.bf16.msra.mxu0 %v156
  %203 = vmatpush.bf16.msra.mxu0 %v155
  %204 = vmatpush.bf16.msra.mxu0 %v154
  %205 = vmatmul.bf16.gmra.mxu0 %v94
  %v206 = vpop.f32.mrf.mxu0
  %v207 = vadd.f32 0.0, %v206
  %v208 = vpop.f32.mrf.mxu0
  %v209 = vadd.f32 0.0, %v208
  %210 = vmatmul.bf16.gmra.mxu0 %v96
  %v211 = vpop.f32.mrf.mxu0
  %v212 = vadd.f32 0.0, %v211
  %v213 = vpop.f32.mrf.mxu0
  %v214 = vadd.f32 0.0, %v213
  %215 = vmatmul.bf16.gmra.mxu0 %v98
  %v216 = vpop.f32.mrf.mxu0
  %v217 = vadd.f32 0.0, %v216
  %v218 = vpop.f32.mrf.mxu0
  %v219 = vadd.f32 0.0, %v218
  %220 = vmatmul.bf16.gmra.mxu0 %v100
  %v221 = vpop.f32.mrf.mxu0
  %v222 = vadd.f32 0.0, %v221
  %v223 = vpop.f32.mrf.mxu0
  %v224 = vadd.f32 0.0, %v223
  %225 = vmatmul.bf16.gmra.mxu0 %v102
  %v226 = vpop.f32.mrf.mxu0
  %v227 = vadd.f32 0.0, %v226
  %v228 = vpop.f32.mrf.mxu0
  %v229 = vadd.f32 0.0, %v228
  %230 = vmatmul.bf16.gmra.mxu0 %v104
  %v231 = vpop.f32.mrf.mxu0
  %v232 = vadd.f32 0.0, %v231
  %v233 = vpop.f32.mrf.mxu0
  %v234 = vadd.f32 0.0, %v233
  %235 = vmatmul.bf16.gmra.mxu0 %v106
  %v236 = vpop.f32.mrf.mxu0
  %v237 = vadd.f32 0.0, %v236
  %v238 = vpop.f32.mrf.mxu0
  %v239 = vadd.f32 0.0, %v238
  %240 = vmatmul.bf16.gmra.mxu0 %v108
  %v241 = vpop.f32.mrf.mxu0
  %v242 = vadd.f32 0.0, %v241
  %v243 = vpop.f32.mrf.mxu0
  %v244 = vadd.f32 0.0, %v243
  %245 = vdwg.mxu0
  %246 = vmatpush.bf16.msra.mxu0 0
  %247 = vmatpush.bf16.msra.mxu0 0
  %248 = vmatpush.bf16.msra.mxu0 0
  %249 = vmatpush.bf16.msra.mxu0 0
  %250 = vmatpush.bf16.msra.mxu0 0
  %251 = vmatpush.bf16.msra.mxu0 0
  %252 = vmatpush.bf16.msra.mxu0 0
  %253 = vmatpush.bf16.msra.mxu0 %v162
  %254 = vmatmul.bf16.gmra.mxu0 %v174
  %v255 = vpop.f32.mrf.mxu0
  %v256 = vadd.f32 %v207, %v255
  %v257 = vpop.f32.mrf.mxu0
  %v258 = vadd.f32 %v209, %v257
  %259 = vmatmul.bf16.gmra.mxu0 %v177
  %v260 = vpop.f32.mrf.mxu0
  %v261 = vadd.f32 %v212, %v260
  %v262 = vpop.f32.mrf.mxu0
  %v263 = vadd.f32 %v214, %v262
  %264 = vmatmul.bf16.gmra.mxu0 %v180
  %v265 = vpop.f32.mrf.mxu0
  %v266 = vadd.f32 %v217, %v265
  %v267 = vpop.f32.mrf.mxu0
  %v268 = vadd.f32 %v219, %v267
  %269 = vmatmul.bf16.gmra.mxu0 %v183
  %v270 = vpop.f32.mrf.mxu0
  %v271 = vadd.f32 %v222, %v270
  %v272 = vpop.f32.mrf.mxu0
  %v273 = vadd.f32 %v224, %v272
  %274 = vmatmul.bf16.gmra.mxu0 %v186
  %v275 = vpop.f32.mrf.mxu0
  %v276 = vadd.f32 %v227, %v275
  %v277 = vpop.f32.mrf.mxu0
  %v278 = vadd.f32 %v229, %v277
  %279 = vmatmul.bf16.gmra.mxu0 %v189
  %v280 = vpop.f32.mrf.mxu0
  %v281 = vadd.f32 %v232, %v280
  %v282 = vpop.f32.mrf.mxu0
  %v283 = vadd.f32 %v234, %v282
  %284 = vmatmul.bf16.gmra.mxu0 %v192
  %v285 = vpop.f32.mrf.mxu0
  %v286 = vadd.f32 %v237, %v285
  %v287 = vpop.f32.mrf.mxu0
  %v288 = vadd.f32 %v239, %v287
  %289 = vmatmul.bf16.gmra.mxu0 %v195
  %v290 = vpop.f32.mrf.mxu0
  %v291 = vadd.f32 %v242, %v290
  %v292 = vpop.f32.mrf.mxu0
  %v293 = vadd.f32 %v244, %v292
  %294 = vdwg.mxu0
  %v295 = vpack.c.bf16 %v256, %v256
  %v296 = vpack.c.bf16 %v258, %v258
  %v297 = vpack.c.bf16 %v261, %v261
  %v298 = vpack.c.bf16 %v263, %v263
  %v299 = vpack.c.bf16 %v266, %v266
  %v300 = vpack.c.bf16 %v268, %v268
  %v301 = vpack.c.bf16 %v271, %v271
  %v302 = vpack.c.bf16 %v273, %v273
  %v303 = vpack.c.bf16 %v276, %v276
  %v304 = vpack.c.bf16 %v278, %v278
  %v305 = vpack.c.bf16 %v281, %v281
  %v306 = vpack.c.bf16 %v283, %v283
  %v307 = vpack.c.bf16 %v286, %v286
  %v308 = vpack.c.bf16 %v288, %v288
  %v309 = vpack.c.bf16 %v291, %v291
  %v310 = vpack.c.bf16 %v293, %v293
  %311 = vst [vmem:[%s2] sm:$0xf] %v295
  %312 = vst [vmem:[%s2 + $0x4] sm:$0xf] %v296
  %313 = vst [vmem:[%s2 + $0x8] sm:$0xf] %v297
  %314 = vst [vmem:[%s2 + $0xc] sm:$0xf] %v298
  %315 = vst [vmem:[%s2 + $0x10] sm:$0xf] %v299
  %316 = vst [vmem:[%s2 + $0x14] sm:$0xf] %v300
  %317 = vst [vmem:[%s2 + $0x18] sm:$0xf] %v301
  %318 = vst [vmem:[%s2 + $0x1c] sm:$0xf] %v302
  %319 = vst [vmem:[%s2 + $0x20] sm:$0xf] %v303
  %320 = vst [vmem:[%s2 + $0x24] sm:$0xf] %v304
  %321 = vst [vmem:[%s2 + $0x28] sm:$0xf] %v305
  %322 = vst [vmem:[%s2 + $0x2c] sm:$0xf] %v306
  %323 = vst [vmem:[%s2 + $0x30] sm:$0xf] %v307
  %324 = vst [vmem:[%s2 + $0x34] sm:$0xf] %v308
  %325 = vst [vmem:[%s2 + $0x38] sm:$0xf] %v309
  %326 = vst [vmem:[%s2 + $0x3c] sm:$0xf] %v310
  // Predicated region
  $region10: #{aeresnet_forward.53} parent=0 // pred_check
    _
  $region11: #{aeresnet_forward.53} parent=0 // pred_check_branch
    %328 = sbr.rel (0) target = $region13
  $region12: #{aeresnet_forward.53} parent=0 // pred_region
    _
  $region13: #{aeresnet_forward.53} parent=0 // pred_fallthru
    _
  // Predicated region
  $region14: #{aeresnet_forward.53} parent=0 // pred_check
    _
  $region15: #{aeresnet_forward.53} parent=0 // pred_check_branch
    %330 = sbr.rel (0) target = $region17
  $region16: #{aeresnet_forward.53} parent=0 // pred_region
    _
  $region17: #{aeresnet_forward.53} parent=0 // pred_fallthru
    _

// kernel: aeresnet_forward.54
$region0: #{aeresnet_forward.54}
  #allocation0 [shape = 'u32[]', space=smem, size = 0x4, offset = 0x4, fixed_abs, tag = 'smem constant byte address 0x4 - core index']
  #allocation1 [shape = 'u32[72,128]{1,0:T(1,128)}', space=vmem, size = 0x9000, scoped, tag = 'internal scratch']
  %s0 = inlined_call_operand.vmem [shape: bf16[32,144], index: 0, kind: input, shape index: {}]
  %s1 = inlined_call_operand.vmem [shape: bf16[144,128], index: 1, kind: input, shape index: {}]
  %s2 = inlined_call_operand.vmem [shape: bf16[32,128], index: 2, kind: output, shape index: {}]
  %s3 = sld [smem:[#allocation0]]
  $region18: #{aeresnet_forward.54} parent=0
    _
  %s5 = ssub.s32 1, %s3
  %s6 = scalar_select 0, %s5, %s3
  // Predicated region
  $region2: #{aeresnet_forward.54} parent=0 // pred_check
    _
  $region3: #{aeresnet_forward.54} parent=0 // pred_check_branch
    %8 = sbr.rel (0) target = $region5
  $region4: #{aeresnet_forward.54} parent=0 // pred_region
    _
  $region5: #{aeresnet_forward.54} parent=0 // pred_fallthru
    _
  // Predicated region
  $region6: #{aeresnet_forward.54} parent=0 // pred_check
    _
  $region7: #{aeresnet_forward.54} parent=0 // pred_check_branch
    %10 = sbr.rel (0) target = $region9
  $region8: #{aeresnet_forward.54} parent=0 // pred_region
    _
  $region9: #{aeresnet_forward.54} parent=0 // pred_fallthru
    _
  %v12 = vld [vmem:[%s0] sm:$0xff]
  %v13 = vld [vmem:[%s0 + $0x8] sm:$0xff]
  %v14 = vld [vmem:[%s0 + $0x10] sm:$0xff]
  %v15 = vld [vmem:[%s0 + $0x18] sm:$0xff]
  %v16 = vld [vmem:[%s1] sm:$0xf]
  %v17 = vld [vmem:[%s1 + $0x4] sm:$0xf]
  %v18 = vld [vmem:[%s1 + $0x8] sm:$0xf]
  %v19 = vld [vmem:[%s1 + $0xc] sm:$0xf]
  %v20 = vld [vmem:[%s1 + $0x10] sm:$0xf]
  %v21 = vld [vmem:[%s1 + $0x14] sm:$0xf]
  %v22 = vld [vmem:[%s1 + $0x18] sm:$0xf]
  %v23 = vld [vmem:[%s1 + $0x1c] sm:$0xf]
  %v24 = vld [vmem:[%s1 + $0x20] sm:$0xf]
  %v25 = vld [vmem:[%s1 + $0x24] sm:$0xf]
  %v26 = vld [vmem:[%s1 + $0x28] sm:$0xf]
  %v27 = vld [vmem:[%s1 + $0x2c] sm:$0xf]
  %v28 = vld [vmem:[%s1 + $0x30] sm:$0xf]
  %v29 = vld [vmem:[%s1 + $0x34] sm:$0xf]
  %v30 = vld [vmem:[%s1 + $0x38] sm:$0xf]
  %v31 = vld [vmem:[%s1 + $0x3c] sm:$0xf]
  %v32 = vld [vmem:[%s1 + $0x40] sm:$0xf]
  %v33 = vld [vmem:[%s1 + $0x44] sm:$0xf]
  %v38 = vunpack.c.l.b16 %v12
  %v39 = vunpack.c.h.b16 %v12
  %v40 = vunpack.c.l.b16 %v13
  %v41 = vunpack.c.h.b16 %v13
  %v42 = vunpack.c.l.b16 %v14
  %v43 = vunpack.c.h.b16 %v14
  %v44 = vunpack.c.l.b16 %v15
  %v45 = vunpack.c.h.b16 %v15
  %v46 = vpack.c.b16 %v40, %v38
  %v47 = vpack.c.b16 %v41, %v39
  %v48 = vpack.c.b16 %v44, %v42
  %v49 = vpack.c.b16 %v45, %v43
  %v70 = vunpack.c.l.b16 %v16
  %v71 = vunpack.c.l.b16 %v17
  %v72 = vunpack.c.l.b16 %v18
  %v73 = vunpack.c.l.b16 %v19
  %v74 = vunpack.c.l.b16 %v20
  %v75 = vunpack.c.l.b16 %v21
  %v76 = vunpack.c.l.b16 %v22
  %v77 = vunpack.c.l.b16 %v23
  %v78 = vunpack.c.l.b16 %v24
  %v79 = vunpack.c.l.b16 %v25
  %v80 = vunpack.c.l.b16 %v26
  %v81 = vunpack.c.l.b16 %v27
  %v82 = vunpack.c.l.b16 %v28
  %v83 = vunpack.c.l.b16 %v29
  %v84 = vunpack.c.l.b16 %v30
  %v85 = vunpack.c.l.b16 %v31
  %v86 = vunpack.c.l.b16 %v32
  %v87 = vunpack.c.l.b16 %v33
  %v88 = vpack.c.b16 %v71, %v70
  %v89 = vpack.c.b16 %v73, %v72
  %v90 = vpack.c.b16 %v75, %v74
  %v91 = vpack.c.b16 %v77, %v76
  %v92 = vpack.c.b16 %v79, %v78
  %v93 = vpack.c.b16 %v81, %v80
  %v94 = vpack.c.b16 %v83, %v82
  %v95 = vpack.c.b16 %v85, %v84
  %v96 = vpack.c.b16 %v87, %v86
  %vm106 = vcmask 130048
  %v108 = vsel %vm106, %v47, 0
  %v111 = vsel %vm106, %v49, 0
  %113 = vmatpush.bf16.msra.mxu0 %v95
  %114 = vmatpush.bf16.msra.mxu0 %v94
  %115 = vmatpush.bf16.msra.mxu0 %v93
  %116 = vmatpush.bf16.msra.mxu0 %v92
  %117 = vmatpush.bf16.msra.mxu0 %v91
  %118 = vmatpush.bf16.msra.mxu0 %v90
  %119 = vmatpush.bf16.msra.mxu0 %v89
  %120 = vmatpush.bf16.msra.mxu0 %v88
  %121 = vmatmul.bf16.gmra.mxu0 %v46
  %v122 = vpop.f32.mrf.mxu0
  %v123 = vadd.f32 0.0, %v122
  %v124 = vpop.f32.mrf.mxu0
  %v125 = vadd.f32 0.0, %v124
  %126 = vmatmul.bf16.gmra.mxu0 %v48
  %v127 = vpop.f32.mrf.mxu0
  %v128 = vadd.f32 0.0, %v127
  %v129 = vpop.f32.mrf.mxu0
  %v130 = vadd.f32 0.0, %v129
  %131 = vdwg.mxu0
  %132 = vmatpush.bf16.msra.mxu0 0
  %133 = vmatpush.bf16.msra.mxu0 0
  %134 = vmatpush.bf16.msra.mxu0 0
  %135 = vmatpush.bf16.msra.mxu0 0
  %136 = vmatpush.bf16.msra.mxu0 0
  %137 = vmatpush.bf16.msra.mxu0 0
  %138 = vmatpush.bf16.msra.mxu0 0
  %139 = vmatpush.bf16.msra.mxu0 %v96
  %140 = vmatmul.bf16.gmra.mxu0 %v108
  %v141 = vpop.f32.mrf.mxu0
  %v142 = vadd.f32 %v123, %v141
  %v143 = vpop.f32.mrf.mxu0
  %v144 = vadd.f32 %v125, %v143
  %145 = vmatmul.bf16.gmra.mxu0 %v111
  %v146 = vpop.f32.mrf.mxu0
  %v147 = vadd.f32 %v128, %v146
  %v148 = vpop.f32.mrf.mxu0
  %v149 = vadd.f32 %v130, %v148
  %150 = vdwg.mxu0
  %v151 = vpack.c.bf16 %v142, %v142
  %v152 = vpack.c.bf16 %v144, %v144
  %v153 = vpack.c.bf16 %v147, %v147
  %v154 = vpack.c.bf16 %v149, %v149
  %155 = vst [vmem:[%s2] sm:$0xf] %v151
  %156 = vst [vmem:[%s2 + $0x4] sm:$0xf] %v152
  %157 = vst [vmem:[%s2 + $0x8] sm:$0xf] %v153
  %158 = vst [vmem:[%s2 + $0xc] sm:$0xf] %v154
  // Predicated region
  $region10: #{aeresnet_forward.54} parent=0 // pred_check
    _
  $region11: #{aeresnet_forward.54} parent=0 // pred_check_branch
    %160 = sbr.rel (0) target = $region13
  $region12: #{aeresnet_forward.54} parent=0 // pred_region
    _
  $region13: #{aeresnet_forward.54} parent=0 // pred_fallthru
    _
  // Predicated region
  $region14: #{aeresnet_forward.54} parent=0 // pred_check
    _
  $region15: #{aeresnet_forward.54} parent=0 // pred_check_branch
    %162 = sbr.rel (0) target = $region17
  $region16: #{aeresnet_forward.54} parent=0 // pred_region
    _
  $region17: #{aeresnet_forward.54} parent=0 // pred_fallthru
    _

// kernel: aeresnet_forward.55
$region0: #{aeresnet_forward.55}
  #allocation0 [shape = 'u32[]', space=smem, size = 0x4, offset = 0x4, fixed_abs, tag = 'smem constant byte address 0x4 - core index']
  #allocation1 [shape = 'u32[72,128]{1,0:T(1,128)}', space=vmem, size = 0x9000, scoped, tag = 'internal scratch']
  %s0 = inlined_call_operand.vmem [shape: bf16[32,64], index: 0, kind: input, shape index: {}]
  %s1 = inlined_call_operand.vmem [shape: bf16[64,128], index: 1, kind: input, shape index: {}]
  %s2 = inlined_call_operand.vmem [shape: bf16[32,128], index: 2, kind: output, shape index: {}]
  %s3 = sld [smem:[#allocation0]]
  $region18: #{aeresnet_forward.55} parent=0
    _
  %s5 = ssub.s32 1, %s3
  %s6 = scalar_select 0, %s5, %s3
  // Predicated region
  $region2: #{aeresnet_forward.55} parent=0 // pred_check
    _
  $region3: #{aeresnet_forward.55} parent=0 // pred_check_branch
    %8 = sbr.rel (0) target = $region5
  $region4: #{aeresnet_forward.55} parent=0 // pred_region
    _
  $region5: #{aeresnet_forward.55} parent=0 // pred_fallthru
    _
  // Predicated region
  $region6: #{aeresnet_forward.55} parent=0 // pred_check
    _
  $region7: #{aeresnet_forward.55} parent=0 // pred_check_branch
    %10 = sbr.rel (0) target = $region9
  $region8: #{aeresnet_forward.55} parent=0 // pred_region
    _
  $region9: #{aeresnet_forward.55} parent=0 // pred_fallthru
    _
  %v12 = vld [vmem:[%s0] sm:$0xf]
  %v13 = vld [vmem:[%s0 + $0x4] sm:$0xf]
  %v14 = vld [vmem:[%s0 + $0x8] sm:$0xf]
  %v15 = vld [vmem:[%s0 + $0xc] sm:$0xf]
  %v16 = vld [vmem:[%s1] sm:$0xf]
  %v17 = vld [vmem:[%s1 + $0x4] sm:$0xf]
  %v18 = vld [vmem:[%s1 + $0x8] sm:$0xf]
  %v19 = vld [vmem:[%s1 + $0xc] sm:$0xf]
  %v20 = vld [vmem:[%s1 + $0x10] sm:$0xf]
  %v21 = vld [vmem:[%s1 + $0x14] sm:$0xf]
  %v22 = vld [vmem:[%s1 + $0x18] sm:$0xf]
  %v23 = vld [vmem:[%s1 + $0x1c] sm:$0xf]
  %v28 = vunpack.c.l.b16 %v12
  %v29 = vunpack.c.l.b16 %v13
  %v30 = vunpack.c.l.b16 %v14
  %v31 = vunpack.c.l.b16 %v15
  %v32 = vpack.c.b16 %v29, %v28
  %v33 = vpack.c.b16 %v31, %v30
  %v42 = vunpack.c.l.b16 %v16
  %v43 = vunpack.c.l.b16 %v17
  %v44 = vunpack.c.l.b16 %v18
  %v45 = vunpack.c.l.b16 %v19
  %v46 = vunpack.c.l.b16 %v20
  %v47 = vunpack.c.l.b16 %v21
  %v48 = vunpack.c.l.b16 %v22
  %v49 = vunpack.c.l.b16 %v23
  %v50 = vpack.c.b16 %v43, %v42
  %v51 = vpack.c.b16 %v45, %v44
  %v52 = vpack.c.b16 %v47, %v46
  %v53 = vpack.c.b16 %v49, %v48
  %vm58 = vcmask 523264
  %v60 = vsel %vm58, %v32, 0
  %v63 = vsel %vm58, %v33, 0
  %65 = vmatpush.bf16.msra.mxu0 0
  %66 = vmatpush.bf16.msra.mxu0 0
  %67 = vmatpush.bf16.msra.mxu0 0
  %68 = vmatpush.bf16.msra.mxu0 0
  %69 = vmatpush.bf16.msra.mxu0 %v53
  %70 = vmatpush.bf16.msra.mxu0 %v52
  %71 = vmatpush.bf16.msra.mxu0 %v51
  %72 = vmatpush.bf16.msra.mxu0 %v50
  %73 = vmatmul.bf16.gmra.mxu0 %v60
  %v74 = vpop.f32.mrf.mxu0
  %v75 = vadd.f32 0.0, %v74
  %v76 = vpop.f32.mrf.mxu0
  %v77 = vadd.f32 0.0, %v76
  %78 = vmatmul.bf16.gmra.mxu0 %v63
  %v79 = vpop.f32.mrf.mxu0
  %v80 = vadd.f32 0.0, %v79
  %v81 = vpop.f32.mrf.mxu0
  %v82 = vadd.f32 0.0, %v81
  %83 = vdwg.mxu0
  %v84 = vpack.c.bf16 %v75, %v75
  %v85 = vpack.c.bf16 %v77, %v77
  %v86 = vpack.c.bf16 %v80, %v80
  %v87 = vpack.c.bf16 %v82, %v82
  %88 = vst [vmem:[%s2] sm:$0xf] %v84
  %89 = vst [vmem:[%s2 + $0x4] sm:$0xf] %v85
  %90 = vst [vmem:[%s2 + $0x8] sm:$0xf] %v86
  %91 = vst [vmem:[%s2 + $0xc] sm:$0xf] %v87
  // Predicated region
  $region10: #{aeresnet_forward.55} parent=0 // pred_check
    _
  $region11: #{aeresnet_forward.55} parent=0 // pred_check_branch
    %93 = sbr.rel (0) target = $region13
  $region12: #{aeresnet_forward.55} parent=0 // pred_region
    _
  $region13: #{aeresnet_forward.55} parent=0 // pred_fallthru
    _
  // Predicated region
  $region14: #{aeresnet_forward.55} parent=0 // pred_check
    _
  $region15: #{aeresnet_forward.55} parent=0 // pred_check_branch
    %95 = sbr.rel (0) target = $region17
  $region16: #{aeresnet_forward.55} parent=0 // pred_region
    _
  $region17: #{aeresnet_forward.55} parent=0 // pred_fallthru
    _

// kernel: aeresnet_forward.56
$region0: #{aeresnet_forward.56}
  #allocation0 [shape = 'u32[]', space=smem, size = 0x4, offset = 0x4, fixed_abs, tag = 'smem constant byte address 0x4 - core index']
  #allocation1 [shape = 'u32[72,128]{1,0:T(1,128)}', space=vmem, size = 0x9000, scoped, tag = 'internal scratch']
  %s0 = inlined_call_operand.vmem [shape: bf16[128,64], index: 0, kind: input, shape index: {}]
  %s1 = inlined_call_operand.vmem [shape: bf16[64,128], index: 1, kind: input, shape index: {}]
  %s2 = inlined_call_operand.vmem [shape: bf16[128,128], index: 2, kind: output, shape index: {}]
  %s3 = sld [smem:[#allocation0]]
  $region18: #{aeresnet_forward.56} parent=0
    _
  %s5 = ssub.s32 1, %s3
  %s6 = scalar_select 0, %s5, %s3
  // Predicated region
  $region2: #{aeresnet_forward.56} parent=0 // pred_check
    _
  $region3: #{aeresnet_forward.56} parent=0 // pred_check_branch
    %8 = sbr.rel (0) target = $region5
  $region4: #{aeresnet_forward.56} parent=0 // pred_region
    _
  $region5: #{aeresnet_forward.56} parent=0 // pred_fallthru
    _
  // Predicated region
  $region6: #{aeresnet_forward.56} parent=0 // pred_check
    _
  $region7: #{aeresnet_forward.56} parent=0 // pred_check_branch
    %10 = sbr.rel (0) target = $region9
  $region8: #{aeresnet_forward.56} parent=0 // pred_region
    _
  $region9: #{aeresnet_forward.56} parent=0 // pred_fallthru
    _
  %v12 = vld [vmem:[%s0] sm:$0xf]
  %v13 = vld [vmem:[%s0 + $0x4] sm:$0xf]
  %v14 = vld [vmem:[%s0 + $0x8] sm:$0xf]
  %v15 = vld [vmem:[%s0 + $0xc] sm:$0xf]
  %v16 = vld [vmem:[%s0 + $0x10] sm:$0xf]
  %v17 = vld [vmem:[%s0 + $0x14] sm:$0xf]
  %v18 = vld [vmem:[%s0 + $0x18] sm:$0xf]
  %v19 = vld [vmem:[%s0 + $0x1c] sm:$0xf]
  %v20 = vld [vmem:[%s0 + $0x20] sm:$0xf]
  %v21 = vld [vmem:[%s0 + $0x24] sm:$0xf]
  %v22 = vld [vmem:[%s0 + $0x28] sm:$0xf]
  %v23 = vld [vmem:[%s0 + $0x2c] sm:$0xf]
  %v24 = vld [vmem:[%s0 + $0x30] sm:$0xf]
  %v25 = vld [vmem:[%s0 + $0x34] sm:$0xf]
  %v26 = vld [vmem:[%s0 + $0x38] sm:$0xf]
  %v27 = vld [vmem:[%s0 + $0x3c] sm:$0xf]
  %v28 = vld [vmem:[%s1] sm:$0xf]
  %v29 = vld [vmem:[%s1 + $0x4] sm:$0xf]
  %v30 = vld [vmem:[%s1 + $0x8] sm:$0xf]
  %v31 = vld [vmem:[%s1 + $0xc] sm:$0xf]
  %v32 = vld [vmem:[%s1 + $0x10] sm:$0xf]
  %v33 = vld [vmem:[%s1 + $0x14] sm:$0xf]
  %v34 = vld [vmem:[%s1 + $0x18] sm:$0xf]
  %v35 = vld [vmem:[%s1 + $0x1c] sm:$0xf]
  %v52 = vunpack.c.l.b16 %v12
  %v53 = vunpack.c.l.b16 %v13
  %v54 = vunpack.c.l.b16 %v14
  %v55 = vunpack.c.l.b16 %v15
  %v56 = vunpack.c.l.b16 %v16
  %v57 = vunpack.c.l.b16 %v17
  %v58 = vunpack.c.l.b16 %v18
  %v59 = vunpack.c.l.b16 %v19
  %v60 = vunpack.c.l.b16 %v20
  %v61 = vunpack.c.l.b16 %v21
  %v62 = vunpack.c.l.b16 %v22
  %v63 = vunpack.c.l.b16 %v23
  %v64 = vunpack.c.l.b16 %v24
  %v65 = vunpack.c.l.b16 %v25
  %v66 = vunpack.c.l.b16 %v26
  %v67 = vunpack.c.l.b16 %v27
  %v68 = vpack.c.b16 %v53, %v52
  %v69 = vpack.c.b16 %v55, %v54
  %v70 = vpack.c.b16 %v57, %v56
  %v71 = vpack.c.b16 %v59, %v58
  %v72 = vpack.c.b16 %v61, %v60
  %v73 = vpack.c.b16 %v63, %v62
  %v74 = vpack.c.b16 %v65, %v64
  %v75 = vpack.c.b16 %v67, %v66
  %v84 = vunpack.c.l.b16 %v28
  %v85 = vunpack.c.l.b16 %v29
  %v86 = vunpack.c.l.b16 %v30
  %v87 = vunpack.c.l.b16 %v31
  %v88 = vunpack.c.l.b16 %v32
  %v89 = vunpack.c.l.b16 %v33
  %v90 = vunpack.c.l.b16 %v34
  %v91 = vunpack.c.l.b16 %v35
  %v92 = vpack.c.b16 %v85, %v84
  %v93 = vpack.c.b16 %v87, %v86
  %v94 = vpack.c.b16 %v89, %v88
  %v95 = vpack.c.b16 %v91, %v90
  %vm100 = vcmask 523264
  %v102 = vsel %vm100, %v68, 0
  %v105 = vsel %vm100, %v69, 0
  %v108 = vsel %vm100, %v70, 0
  %v111 = vsel %vm100, %v71, 0
  %v114 = vsel %vm100, %v72, 0
  %v117 = vsel %vm100, %v73, 0
  %v120 = vsel %vm100, %v74, 0
  %v123 = vsel %vm100, %v75, 0
  %125 = vmatpush.bf16.msra.mxu0 0
  %126 = vmatpush.bf16.msra.mxu0 0
  %127 = vmatpush.bf16.msra.mxu0 0
  %128 = vmatpush.bf16.msra.mxu0 0
  %129 = vmatpush.bf16.msra.mxu0 %v95
  %130 = vmatpush.bf16.msra.mxu0 %v94
  %131 = vmatpush.bf16.msra.mxu0 %v93
  %132 = vmatpush.bf16.msra.mxu0 %v92
  %133 = vmatmul.bf16.gmra.mxu0 %v102
  %v134 = vpop.f32.mrf.mxu0
  %v135 = vadd.f32 0.0, %v134
  %v136 = vpop.f32.mrf.mxu0
  %v137 = vadd.f32 0.0, %v136
  %138 = vmatmul.bf16.gmra.mxu0 %v105
  %v139 = vpop.f32.mrf.mxu0
  %v140 = vadd.f32 0.0, %v139
  %v141 = vpop.f32.mrf.mxu0
  %v142 = vadd.f32 0.0, %v141
  %143 = vmatmul.bf16.gmra.mxu0 %v108
  %v144 = vpop.f32.mrf.mxu0
  %v145 = vadd.f32 0.0, %v144
  %v146 = vpop.f32.mrf.mxu0
  %v147 = vadd.f32 0.0, %v146
  %148 = vmatmul.bf16.gmra.mxu0 %v111
  %v149 = vpop.f32.mrf.mxu0
  %v150 = vadd.f32 0.0, %v149
  %v151 = vpop.f32.mrf.mxu0
  %v152 = vadd.f32 0.0, %v151
  %153 = vmatmul.bf16.gmra.mxu0 %v114
  %v154 = vpop.f32.mrf.mxu0
  %v155 = vadd.f32 0.0, %v154
  %v156 = vpop.f32.mrf.mxu0
  %v157 = vadd.f32 0.0, %v156
  %158 = vmatmul.bf16.gmra.mxu0 %v117
  %v159 = vpop.f32.mrf.mxu0
  %v160 = vadd.f32 0.0, %v159
  %v161 = vpop.f32.mrf.mxu0
  %v162 = vadd.f32 0.0, %v161
  %163 = vmatmul.bf16.gmra.mxu0 %v120
  %v164 = vpop.f32.mrf.mxu0
  %v165 = vadd.f32 0.0, %v164
  %v166 = vpop.f32.mrf.mxu0
  %v167 = vadd.f32 0.0, %v166
  %168 = vmatmul.bf16.gmra.mxu0 %v123
  %v169 = vpop.f32.mrf.mxu0
  %v170 = vadd.f32 0.0, %v169
  %v171 = vpop.f32.mrf.mxu0
  %v172 = vadd.f32 0.0, %v171
  %173 = vdwg.mxu0
  %v174 = vpack.c.bf16 %v135, %v135
  %v175 = vpack.c.bf16 %v137, %v137
  %v176 = vpack.c.bf16 %v140, %v140
  %v177 = vpack.c.bf16 %v142, %v142
  %v178 = vpack.c.bf16 %v145, %v145
  %v179 = vpack.c.bf16 %v147, %v147
  %v180 = vpack.c.bf16 %v150, %v150
  %v181 = vpack.c.bf16 %v152, %v152
  %v182 = vpack.c.bf16 %v155, %v155
  %v183 = vpack.c.bf16 %v157, %v157
  %v184 = vpack.c.bf16 %v160, %v160
  %v185 = vpack.c.bf16 %v162, %v162
  %v186 = vpack.c.bf16 %v165, %v165
  %v187 = vpack.c.bf16 %v167, %v167
  %v188 = vpack.c.bf16 %v170, %v170
  %v189 = vpack.c.bf16 %v172, %v172
  %190 = vst [vmem:[%s2] sm:$0xf] %v174
  %191 = vst [vmem:[%s2 + $0x4] sm:$0xf] %v175
  %192 = vst [vmem:[%s2 + $0x8] sm:$0xf] %v176
  %193 = vst [vmem:[%s2 + $0xc] sm:$0xf] %v177
  %194 = vst [vmem:[%s2 + $0x10] sm:$0xf] %v178
  %195 = vst [vmem:[%s2 + $0x14] sm:$0xf] %v179
  %196 = vst [vmem:[%s2 + $0x18] sm:$0xf] %v180
  %197 = vst [vmem:[%s2 + $0x1c] sm:$0xf] %v181
  %198 = vst [vmem:[%s2 + $0x20] sm:$0xf] %v182
  %199 = vst [vmem:[%s2 + $0x24] sm:$0xf] %v183
  %200 = vst [vmem:[%s2 + $0x28] sm:$0xf] %v184
  %201 = vst [vmem:[%s2 + $0x2c] sm:$0xf] %v185
  %202 = vst [vmem:[%s2 + $0x30] sm:$0xf] %v186
  %203 = vst [vmem:[%s2 + $0x34] sm:$0xf] %v187
  %204 = vst [vmem:[%s2 + $0x38] sm:$0xf] %v188
  %205 = vst [vmem:[%s2 + $0x3c] sm:$0xf] %v189
  // Predicated region
  $region10: #{aeresnet_forward.56} parent=0 // pred_check
    _
  $region11: #{aeresnet_forward.56} parent=0 // pred_check_branch
    %207 = sbr.rel (0) target = $region13
  $region12: #{aeresnet_forward.56} parent=0 // pred_region
    _
  $region13: #{aeresnet_forward.56} parent=0 // pred_fallthru
    _
  // Predicated region
  $region14: #{aeresnet_forward.56} parent=0 // pred_check
    _
  $region15: #{aeresnet_forward.56} parent=0 // pred_check_branch
    %209 = sbr.rel (0) target = $region17
  $region16: #{aeresnet_forward.56} parent=0 // pred_region
    _
  $region17: #{aeresnet_forward.56} parent=0 // pred_fallthru
    _

// kernel: aeresnet_forward.62
$region0: #{aeresnet_forward.62}
  #allocation0 [shape = 'u32[]', space=smem, size = 0x4, offset = 0x4, fixed_abs, tag = 'smem constant byte address 0x4 - core index']
  #allocation1 [shape = 'u32[72,128]{1,0:T(1,128)}', space=vmem, size = 0x9000, scoped, tag = 'internal scratch']
  %s0 = inlined_call_operand.vmem [shape: bf16[128,288], index: 0, kind: input, shape index: {}]
  %s1 = inlined_call_operand.hbm [shape: bf16[288,128], index: 1, kind: input, shape index: {}]
  %s2 = inlined_call_operand.vmem [shape: bf16[128,128], index: 2, kind: output, shape index: {}]
  %s3 = sld [smem:[#allocation0]]
  $region22: #{aeresnet_forward.62} parent=0
    _
  %s5 = ssub.s32 1, %s3
  %s6 = scalar_select 0, %s5, %s3
  $region1: #{aeresnet_forward.62} parent=0
    #allocation2 [shape = 'u8[73728]{0}', space=vmem, size = 0x12000, scoped, tag = 'input window, operand 1, single buffered']
    #allocation3 [shape = 's32[1]{0}', space=sflag, size = 0x4, scoped, tag = 'scoped memory for aeresnet_forward.62']
    %7 = vsyncpa [#allocation3], 0
    // Predicated region
    $region2: #{aeresnet_forward.62} parent=1 // pred_check
      _
    $region3: #{aeresnet_forward.62} parent=1 // pred_check_branch
      %9 = sbr.rel (0) target = $region5
    $region4: #{aeresnet_forward.62} parent=1 // pred_region
      _
    $region5: #{aeresnet_forward.62} parent=1 // pred_fallthru
      _
    // Predicated region
    $region6: #{aeresnet_forward.62} parent=1 // pred_check
      _
    $region7: #{aeresnet_forward.62} parent=1 // pred_check_branch
      %11 = sbr.rel (0) target = $region9
    $region8: #{aeresnet_forward.62} parent=1 // pred_region
      %13 = vsyncadd [#allocation3], 0
      %s14 = sshll.u32 %s1, 4
      %s15 = int_to_ptr.hbm [resolvable:$true] %s14
      %s16 = sshll.u32 [#allocation2], 4
      %s17 = int_to_ptr.vmem [resolvable:$true] %s16
      %22 = dma.hbm_to_vmem [thread:$0]  %s15, 2304, %s17, [#allocation3], 64, 64, 4
    $region9: #{aeresnet_forward.62} parent=1 // pred_fallthru
      _
    // Predicated region
    $region10: #{aeresnet_forward.62} parent=1 // pred_check
      _
    $region11: #{aeresnet_forward.62} parent=1 // pred_check_branch
      %24 = sbr.rel (0) target = $region13
    $region12: #{aeresnet_forward.62} parent=1 // pred_region
      %26 = dma.done [#allocation3], 2304
    $region13: #{aeresnet_forward.62} parent=1 // pred_fallthru
      _
    %v28 = vld [vmem:[%s0] sm:$0xff]
    %v29 = vld [vmem:[%s0 + $0x8] sm:$0xf]
    %v30 = vld [vmem:[%s0 + $0xc] sm:$0xff]
    %v31 = vld [vmem:[%s0 + $0x14] sm:$0xf]
    %v32 = vld [vmem:[%s0 + $0x18] sm:$0xff]
    %v33 = vld [vmem:[%s0 + $0x20] sm:$0xf]
    %v34 = vld [vmem:[%s0 + $0x24] sm:$0xff]
    %v35 = vld [vmem:[%s0 + $0x2c] sm:$0xf]
    %v36 = vld [vmem:[%s0 + $0x30] sm:$0xff]
    %v37 = vld [vmem:[%s0 + $0x38] sm:$0xf]
    %v38 = vld [vmem:[%s0 + $0x3c] sm:$0xff]
    %v39 = vld [vmem:[%s0 + $0x44] sm:$0xf]
    %v40 = vld [vmem:[%s0 + $0x48] sm:$0xff]
    %v41 = vld [vmem:[%s0 + $0x50] sm:$0xf]
    %v42 = vld [vmem:[%s0 + $0x54] sm:$0xff]
    %v43 = vld [vmem:[%s0 + $0x5c] sm:$0xf]
    %v44 = vld [vmem:[%s0 + $0x60] sm:$0xff]
    %v45 = vld [vmem:[%s0 + $0x68] sm:$0xf]
    %v46 = vld [vmem:[%s0 + $0x6c] sm:$0xff]
    %v47 = vld [vmem:[%s0 + $0x74] sm:$0xf]
    %v48 = vld [vmem:[%s0 + $0x78] sm:$0xff]
    %v49 = vld [vmem:[%s0 + $0x80] sm:$0xf]
    %v50 = vld [vmem:[%s0 + $0x84] sm:$0xff]
    %v51 = vld [vmem:[%s0 + $0x8c] sm:$0xf]
    %v52 = vld [vmem:[%s0 + $0x90] sm:$0xff]
    %v53 = vld [vmem:[%s0 + $0x98] sm:$0xf]
    %v54 = vld [vmem:[%s0 + $0x9c] sm:$0xff]
    %v55 = vld [vmem:[%s0 + $0xa4] sm:$0xf]
    %v56 = vld [vmem:[%s0 + $0xa8] sm:$0xff]
    %v57 = vld [vmem:[%s0 + $0xb0] sm:$0xf]
    %v58 = vld [vmem:[%s0 + $0xb4] sm:$0xff]
    %v59 = vld [vmem:[%s0 + $0xbc] sm:$0xf]
    %v60 = vld [vmem:[#allocation2] sm:$0xf]
    %v61 = vld [vmem:[#allocation2 + $0x4] sm:$0xf]
    %v62 = vld [vmem:[#allocation2 + $0x8] sm:$0xf]
    %v63 = vld [vmem:[#allocation2 + $0xc] sm:$0xf]
    %v64 = vld [vmem:[#allocation2 + $0x10] sm:$0xf]
    %v65 = vld [vmem:[#allocation2 + $0x14] sm:$0xf]
    %v66 = vld [vmem:[#allocation2 + $0x18] sm:$0xf]
    %v67 = vld [vmem:[#allocation2 + $0x1c] sm:$0xf]
    %v68 = vld [vmem:[#allocation2 + $0x20] sm:$0xf]
    %v69 = vld [vmem:[#allocation2 + $0x24] sm:$0xf]
    %v70 = vld [vmem:[#allocation2 + $0x28] sm:$0xf]
    %v71 = vld [vmem:[#allocation2 + $0x2c] sm:$0xf]
    %v72 = vld [vmem:[#allocation2 + $0x30] sm:$0xf]
    %v73 = vld [vmem:[#allocation2 + $0x34] sm:$0xf]
    %v74 = vld [vmem:[#allocation2 + $0x38] sm:$0xf]
    %v75 = vld [vmem:[#allocation2 + $0x3c] sm:$0xf]
    %v76 = vld [vmem:[#allocation2 + $0x40] sm:$0xf]
    %v77 = vld [vmem:[#allocation2 + $0x44] sm:$0xf]
    %v78 = vld [vmem:[#allocation2 + $0x48] sm:$0xf]
    %v79 = vld [vmem:[#allocation2 + $0x4c] sm:$0xf]
    %v80 = vld [vmem:[#allocation2 + $0x50] sm:$0xf]
    %v81 = vld [vmem:[#allocation2 + $0x54] sm:$0xf]
    %v82 = vld [vmem:[#allocation2 + $0x58] sm:$0xf]
    %v83 = vld [vmem:[#allocation2 + $0x5c] sm:$0xf]
    %v84 = vld [vmem:[#allocation2 + $0x60] sm:$0xf]
    %v85 = vld [vmem:[#allocation2 + $0x64] sm:$0xf]
    %v86 = vld [vmem:[#allocation2 + $0x68] sm:$0xf]
    %v87 = vld [vmem:[#allocation2 + $0x6c] sm:$0xf]
    %v88 = vld [vmem:[#allocation2 + $0x70] sm:$0xf]
    %v89 = vld [vmem:[#allocation2 + $0x74] sm:$0xf]
    %v90 = vld [vmem:[#allocation2 + $0x78] sm:$0xf]
    %v91 = vld [vmem:[#allocation2 + $0x7c] sm:$0xf]
    %v92 = vld [vmem:[#allocation2 + $0x80] sm:$0xf]
    %v93 = vld [vmem:[#allocation2 + $0x84] sm:$0xf]
    %v94 = vld [vmem:[#allocation2 + $0x88] sm:$0xf]
    %v95 = vld [vmem:[#allocation2 + $0x8c] sm:$0xf]
    %v128 = vunpack.c.l.b16 %v28
    %v129 = vunpack.c.h.b16 %v28
    %v130 = vunpack.c.l.b16 %v29
    %v131 = vunpack.c.l.b16 %v30
    %v132 = vunpack.c.h.b16 %v30
    %v133 = vunpack.c.l.b16 %v31
    %v134 = vunpack.c.l.b16 %v32
    %v135 = vunpack.c.h.b16 %v32
    %v136 = vunpack.c.l.b16 %v33
    %v137 = vunpack.c.l.b16 %v34
    %v138 = vunpack.c.h.b16 %v34
    %v139 = vunpack.c.l.b16 %v35
    %v140 = vunpack.c.l.b16 %v36
    %v141 = vunpack.c.h.b16 %v36
    %v142 = vunpack.c.l.b16 %v37
    %v143 = vunpack.c.l.b16 %v38
    %v144 = vunpack.c.h.b16 %v38
    %v145 = vunpack.c.l.b16 %v39
    %v146 = vunpack.c.l.b16 %v40
    %v147 = vunpack.c.h.b16 %v40
    %v148 = vunpack.c.l.b16 %v41
    %v149 = vunpack.c.l.b16 %v42
    %v150 = vunpack.c.h.b16 %v42
    %v151 = vunpack.c.l.b16 %v43
    %v152 = vunpack.c.l.b16 %v44
    %v153 = vunpack.c.h.b16 %v44
    %v154 = vunpack.c.l.b16 %v45
    %v155 = vunpack.c.l.b16 %v46
    %v156 = vunpack.c.h.b16 %v46
    %v157 = vunpack.c.l.b16 %v47
    %v158 = vunpack.c.l.b16 %v48
    %v159 = vunpack.c.h.b16 %v48
    %v160 = vunpack.c.l.b16 %v49
    %v161 = vunpack.c.l.b16 %v50
    %v162 = vunpack.c.h.b16 %v50
    %v163 = vunpack.c.l.b16 %v51
    %v164 = vunpack.c.l.b16 %v52
    %v165 = vunpack.c.h.b16 %v52
    %v166 = vunpack.c.l.b16 %v53
    %v167 = vunpack.c.l.b16 %v54
    %v168 = vunpack.c.h.b16 %v54
    %v169 = vunpack.c.l.b16 %v55
    %v170 = vunpack.c.l.b16 %v56
    %v171 = vunpack.c.h.b16 %v56
    %v172 = vunpack.c.l.b16 %v57
    %v173 = vunpack.c.l.b16 %v58
    %v174 = vunpack.c.h.b16 %v58
    %v175 = vunpack.c.l.b16 %v59
    %v176 = vpack.c.b16 %v131, %v128
    %v177 = vpack.c.b16 %v132, %v129
    %v178 = vpack.c.b16 %v133, %v130
    %v179 = vpack.c.b16 %v137, %v134
    %v180 = vpack.c.b16 %v138, %v135
    %v181 = vpack.c.b16 %v139, %v136
    %v182 = vpack.c.b16 %v143, %v140
    %v183 = vpack.c.b16 %v144, %v141
    %v184 = vpack.c.b16 %v145, %v142
    %v185 = vpack.c.b16 %v149, %v146
    %v186 = vpack.c.b16 %v150, %v147
    %v187 = vpack.c.b16 %v151, %v148
    %v188 = vpack.c.b16 %v155, %v152
    %v189 = vpack.c.b16 %v156, %v153
    %v190 = vpack.c.b16 %v157, %v154
    %v191 = vpack.c.b16 %v161, %v158
    %v192 = vpack.c.b16 %v162, %v159
    %v193 = vpack.c.b16 %v163, %v160
    %v194 = vpack.c.b16 %v167, %v164
    %v195 = vpack.c.b16 %v168, %v165
    %v196 = vpack.c.b16 %v169, %v166
    %v197 = vpack.c.b16 %v173, %v170
    %v198 = vpack.c.b16 %v174, %v171
    %v199 = vpack.c.b16 %v175, %v172
    %v252 = vunpack.c.l.b16 %v60
    %v253 = vunpack.c.l.b16 %v61
    %v254 = vunpack.c.l.b16 %v62
    %v255 = vunpack.c.l.b16 %v63
    %v256 = vunpack.c.l.b16 %v64
    %v257 = vunpack.c.l.b16 %v65
    %v258 = vunpack.c.l.b16 %v66
    %v259 = vunpack.c.l.b16 %v67
    %v260 = vunpack.c.l.b16 %v68
    %v261 = vunpack.c.l.b16 %v69
    %v262 = vunpack.c.l.b16 %v70
    %v263 = vunpack.c.l.b16 %v71
    %v264 = vunpack.c.l.b16 %v72
    %v265 = vunpack.c.l.b16 %v73
    %v266 = vunpack.c.l.b16 %v74
    %v267 = vunpack.c.l.b16 %v75
    %v268 = vunpack.c.l.b16 %v76
    %v269 = vunpack.c.l.b16 %v77
    %v270 = vunpack.c.l.b16 %v78
    %v271 = vunpack.c.l.b16 %v79
    %v272 = vunpack.c.l.b16 %v80
    %v273 = vunpack.c.l.b16 %v81
    %v274 = vunpack.c.l.b16 %v82
    %v275 = vunpack.c.l.b16 %v83
    %v276 = vunpack.c.l.b16 %v84
    %v277 = vunpack.c.l.b16 %v85
    %v278 = vunpack.c.l.b16 %v86
    %v279 = vunpack.c.l.b16 %v87
    %v280 = vunpack.c.l.b16 %v88
    %v281 = vunpack.c.l.b16 %v89
    %v282 = vunpack.c.l.b16 %v90
    %v283 = vunpack.c.l.b16 %v91
    %v284 = vunpack.c.l.b16 %v92
    %v285 = vunpack.c.l.b16 %v93
    %v286 = vunpack.c.l.b16 %v94
    %v287 = vunpack.c.l.b16 %v95
    %v288 = vpack.c.b16 %v253, %v252
    %v289 = vpack.c.b16 %v255, %v254
    %v290 = vpack.c.b16 %v257, %v256
    %v291 = vpack.c.b16 %v259, %v258
    %v292 = vpack.c.b16 %v261, %v260
    %v293 = vpack.c.b16 %v263, %v262
    %v294 = vpack.c.b16 %v265, %v264
    %v295 = vpack.c.b16 %v267, %v266
    %v296 = vpack.c.b16 %v269, %v268
    %v297 = vpack.c.b16 %v271, %v270
    %v298 = vpack.c.b16 %v273, %v272
    %v299 = vpack.c.b16 %v275, %v274
    %v300 = vpack.c.b16 %v277, %v276
    %v301 = vpack.c.b16 %v279, %v278
    %v302 = vpack.c.b16 %v281, %v280
    %v303 = vpack.c.b16 %v283, %v282
    %v304 = vpack.c.b16 %v285, %v284
    %v305 = vpack.c.b16 %v287, %v286
    %vm324 = vcmask 261120
    %v326 = vsel %vm324, %v178, 0
    %v329 = vsel %vm324, %v181, 0
    %v332 = vsel %vm324, %v184, 0
    %v335 = vsel %vm324, %v187, 0
    %v338 = vsel %vm324, %v190, 0
    %v341 = vsel %vm324, %v193, 0
    %v344 = vsel %vm324, %v196, 0
    %v347 = vsel %vm324, %v199, 0
    %349 = vmatpush.bf16.msra.mxu0 %v295
    %350 = vmatpush.bf16.msra.mxu0 %v294
    %351 = vmatpush.bf16.msra.mxu0 %v293
    %352 = vmatpush.bf16.msra.mxu0 %v292
    %353 = vmatpush.bf16.msra.mxu0 %v291
    %354 = vmatpush.bf16.msra.mxu0 %v290
    %355 = vmatpush.bf16.msra.mxu0 %v289
    %356 = vmatpush.bf16.msra.mxu0 %v288
    %357 = vmatmul.bf16.gmra.mxu0 %v176
    %v358 = vpop.f32.mrf.mxu0
    %v359 = vadd.f32 0.0, %v358
    %v360 = vpop.f32.mrf.mxu0
    %v361 = vadd.f32 0.0, %v360
    %362 = vmatmul.bf16.gmra.mxu0 %v179
    %v363 = vpop.f32.mrf.mxu0
    %v364 = vadd.f32 0.0, %v363
    %v365 = vpop.f32.mrf.mxu0
    %v366 = vadd.f32 0.0, %v365
    %367 = vmatmul.bf16.gmra.mxu0 %v182
    %v368 = vpop.f32.mrf.mxu0
    %v369 = vadd.f32 0.0, %v368
    %v370 = vpop.f32.mrf.mxu0
    %v371 = vadd.f32 0.0, %v370
    %372 = vmatmul.bf16.gmra.mxu0 %v185
    %v373 = vpop.f32.mrf.mxu0
    %v374 = vadd.f32 0.0, %v373
    %v375 = vpop.f32.mrf.mxu0
    %v376 = vadd.f32 0.0, %v375
    %377 = vmatmul.bf16.gmra.mxu0 %v188
    %v378 = vpop.f32.mrf.mxu0
    %v379 = vadd.f32 0.0, %v378
    %v380 = vpop.f32.mrf.mxu0
    %v381 = vadd.f32 0.0, %v380
    %382 = vmatmul.bf16.gmra.mxu0 %v191
    %v383 = vpop.f32.mrf.mxu0
    %v384 = vadd.f32 0.0, %v383
    %v385 = vpop.f32.mrf.mxu0
    %v386 = vadd.f32 0.0, %v385
    %387 = vmatmul.bf16.gmra.mxu0 %v194
    %v388 = vpop.f32.mrf.mxu0
    %v389 = vadd.f32 0.0, %v388
    %v390 = vpop.f32.mrf.mxu0
    %v391 = vadd.f32 0.0, %v390
    %392 = vmatmul.bf16.gmra.mxu0 %v197
    %v393 = vpop.f32.mrf.mxu0
    %v394 = vadd.f32 0.0, %v393
    %v395 = vpop.f32.mrf.mxu0
    %v396 = vadd.f32 0.0, %v395
    %397 = vdwg.mxu0
    %398 = vmatpush.bf16.msra.mxu0 %v303
    %399 = vmatpush.bf16.msra.mxu0 %v302
    %400 = vmatpush.bf16.msra.mxu0 %v301
    %401 = vmatpush.bf16.msra.mxu0 %v300
    %402 = vmatpush.bf16.msra.mxu0 %v299
    %403 = vmatpush.bf16.msra.mxu0 %v298
    %404 = vmatpush.bf16.msra.mxu0 %v297
    %405 = vmatpush.bf16.msra.mxu0 %v296
    %406 = vmatmul.bf16.gmra.mxu0 %v177
    %v407 = vpop.f32.mrf.mxu0
    %v408 = vadd.f32 %v359, %v407
    %v409 = vpop.f32.mrf.mxu0
    %v410 = vadd.f32 %v361, %v409
    %411 = vmatmul.bf16.gmra.mxu0 %v180
    %v412 = vpop.f32.mrf.mxu0
    %v413 = vadd.f32 %v364, %v412
    %v414 = vpop.f32.mrf.mxu0
    %v415 = vadd.f32 %v366, %v414
    %416 = vmatmul.bf16.gmra.mxu0 %v183
    %v417 = vpop.f32.mrf.mxu0
    %v418 = vadd.f32 %v369, %v417
    %v419 = vpop.f32.mrf.mxu0
    %v420 = vadd.f32 %v371, %v419
    %421 = vmatmul.bf16.gmra.mxu0 %v186
    %v422 = vpop.f32.mrf.mxu0
    %v423 = vadd.f32 %v374, %v422
    %v424 = vpop.f32.mrf.mxu0
    %v425 = vadd.f32 %v376, %v424
    %426 = vmatmul.bf16.gmra.mxu0 %v189
    %v427 = vpop.f32.mrf.mxu0
    %v428 = vadd.f32 %v379, %v427
    %v429 = vpop.f32.mrf.mxu0
    %v430 = vadd.f32 %v381, %v429
    %431 = vmatmul.bf16.gmra.mxu0 %v192
    %v432 = vpop.f32.mrf.mxu0
    %v433 = vadd.f32 %v384, %v432
    %v434 = vpop.f32.mrf.mxu0
    %v435 = vadd.f32 %v386, %v434
    %436 = vmatmul.bf16.gmra.mxu0 %v195
    %v437 = vpop.f32.mrf.mxu0
    %v438 = vadd.f32 %v389, %v437
    %v439 = vpop.f32.mrf.mxu0
    %v440 = vadd.f32 %v391, %v439
    %441 = vmatmul.bf16.gmra.mxu0 %v198
    %v442 = vpop.f32.mrf.mxu0
    %v443 = vadd.f32 %v394, %v442
    %v444 = vpop.f32.mrf.mxu0
    %v445 = vadd.f32 %v396, %v444
    %446 = vdwg.mxu0
    %447 = vmatpush.bf16.msra.mxu0 0
    %448 = vmatpush.bf16.msra.mxu0 0
    %449 = vmatpush.bf16.msra.mxu0 0
    %450 = vmatpush.bf16.msra.mxu0 0
    %451 = vmatpush.bf16.msra.mxu0 0
    %452 = vmatpush.bf16.msra.mxu0 0
    %453 = vmatpush.bf16.msra.mxu0 %v305
    %454 = vmatpush.bf16.msra.mxu0 %v304
    %455 = vmatmul.bf16.gmra.mxu0 %v326
    %v456 = vpop.f32.mrf.mxu0
    %v457 = vadd.f32 %v408, %v456
    %v458 = vpop.f32.mrf.mxu0
    %v459 = vadd.f32 %v410, %v458
    %460 = vmatmul.bf16.gmra.mxu0 %v329
    %v461 = vpop.f32.mrf.mxu0
    %v462 = vadd.f32 %v413, %v461
    %v463 = vpop.f32.mrf.mxu0
    %v464 = vadd.f32 %v415, %v463
    %465 = vmatmul.bf16.gmra.mxu0 %v332
    %v466 = vpop.f32.mrf.mxu0
    %v467 = vadd.f32 %v418, %v466
    %v468 = vpop.f32.mrf.mxu0
    %v469 = vadd.f32 %v420, %v468
    %470 = vmatmul.bf16.gmra.mxu0 %v335
    %v471 = vpop.f32.mrf.mxu0
    %v472 = vadd.f32 %v423, %v471
    %v473 = vpop.f32.mrf.mxu0
    %v474 = vadd.f32 %v425, %v473
    %475 = vmatmul.bf16.gmra.mxu0 %v338
    %v476 = vpop.f32.mrf.mxu0
    %v477 = vadd.f32 %v428, %v476
    %v478 = vpop.f32.mrf.mxu0
    %v479 = vadd.f32 %v430, %v478
    %480 = vmatmul.bf16.gmra.mxu0 %v341
    %v481 = vpop.f32.mrf.mxu0
    %v482 = vadd.f32 %v433, %v481
    %v483 = vpop.f32.mrf.mxu0
    %v484 = vadd.f32 %v435, %v483
    %485 = vmatmul.bf16.gmra.mxu0 %v344
    %v486 = vpop.f32.mrf.mxu0
    %v487 = vadd.f32 %v438, %v486
    %v488 = vpop.f32.mrf.mxu0
    %v489 = vadd.f32 %v440, %v488
    %490 = vmatmul.bf16.gmra.mxu0 %v347
    %v491 = vpop.f32.mrf.mxu0
    %v492 = vadd.f32 %v443, %v491
    %v493 = vpop.f32.mrf.mxu0
    %v494 = vadd.f32 %v445, %v493
    %495 = vdwg.mxu0
    %v496 = vpack.c.bf16 %v457, %v457
    %v497 = vpack.c.bf16 %v459, %v459
    %v498 = vpack.c.bf16 %v462, %v462
    %v499 = vpack.c.bf16 %v464, %v464
    %v500 = vpack.c.bf16 %v467, %v467
    %v501 = vpack.c.bf16 %v469, %v469
    %v502 = vpack.c.bf16 %v472, %v472
    %v503 = vpack.c.bf16 %v474, %v474
    %v504 = vpack.c.bf16 %v477, %v477
    %v505 = vpack.c.bf16 %v479, %v479
    %v506 = vpack.c.bf16 %v482, %v482
    %v507 = vpack.c.bf16 %v484, %v484
    %v508 = vpack.c.bf16 %v487, %v487
    %v509 = vpack.c.bf16 %v489, %v489
    %v510 = vpack.c.bf16 %v492, %v492
    %v511 = vpack.c.bf16 %v494, %v494
    %512 = vst [vmem:[%s2] sm:$0xf] %v496
    %513 = vst [vmem:[%s2 + $0x4] sm:$0xf] %v497
    %514 = vst [vmem:[%s2 + $0x8] sm:$0xf] %v498
    %515 = vst [vmem:[%s2 + $0xc] sm:$0xf] %v499
    %516 = vst [vmem:[%s2 + $0x10] sm:$0xf] %v500
    %517 = vst [vmem:[%s2 + $0x14] sm:$0xf] %v501
    %518 = vst [vmem:[%s2 + $0x18] sm:$0xf] %v502
    %519 = vst [vmem:[%s2 + $0x1c] sm:$0xf] %v503
    %520 = vst [vmem:[%s2 + $0x20] sm:$0xf] %v504
    %521 = vst [vmem:[%s2 + $0x24] sm:$0xf] %v505
    %522 = vst [vmem:[%s2 + $0x28] sm:$0xf] %v506
    %523 = vst [vmem:[%s2 + $0x2c] sm:$0xf] %v507
    %524 = vst [vmem:[%s2 + $0x30] sm:$0xf] %v508
    %525 = vst [vmem:[%s2 + $0x34] sm:$0xf] %v509
    %526 = vst [vmem:[%s2 + $0x38] sm:$0xf] %v510
    %527 = vst [vmem:[%s2 + $0x3c] sm:$0xf] %v511
    // Predicated region
    $region14: #{aeresnet_forward.62} parent=1 // pred_check
      _
    $region15: #{aeresnet_forward.62} parent=1 // pred_check_branch
      %529 = sbr.rel (0) target = $region17
    $region16: #{aeresnet_forward.62} parent=1 // pred_region
      _
    $region17: #{aeresnet_forward.62} parent=1 // pred_fallthru
      _
    // Predicated region
    $region18: #{aeresnet_forward.62} parent=1 // pred_check
      _
    $region19: #{aeresnet_forward.62} parent=1 // pred_check_branch
      %531 = sbr.rel (0) target = $region21
    $region20: #{aeresnet_forward.62} parent=1 // pred_region
      _
    $region21: #{aeresnet_forward.62} parent=1 // pred_fallthru
      _
    %532 = vsyncpa [#allocation3], 1

// kernel: aeresnet_forward.63
$region0: #{aeresnet_forward.63}
  #allocation0 [shape = 'u32[]', space=smem, size = 0x4, offset = 0x4, fixed_abs, tag = 'smem constant byte address 0x4 - core index']
  #allocation1 [shape = 'u32[72,128]{1,0:T(1,128)}', space=vmem, size = 0x9000, scoped, tag = 'internal scratch']
  %s0 = inlined_call_operand.vmem [shape: bf16[32,288], index: 0, kind: input, shape index: {}]
  %s1 = inlined_call_operand.hbm [shape: bf16[288,128], index: 1, kind: input, shape index: {}]
  %s2 = inlined_call_operand.vmem [shape: bf16[32,128], index: 2, kind: output, shape index: {}]
  %s3 = sld [smem:[#allocation0]]
  $region22: #{aeresnet_forward.63} parent=0
    _
  %s5 = ssub.s32 1, %s3
  %s6 = scalar_select 0, %s5, %s3
  $region1: #{aeresnet_forward.63} parent=0
    #allocation2 [shape = 'u8[73728]{0}', space=vmem, size = 0x12000, scoped, tag = 'input window, operand 1, single buffered']
    #allocation3 [shape = 's32[1]{0}', space=sflag, size = 0x4, scoped, tag = 'scoped memory for aeresnet_forward.63']
    %7 = vsyncpa [#allocation3], 0
    // Predicated region
    $region2: #{aeresnet_forward.63} parent=1 // pred_check
      _
    $region3: #{aeresnet_forward.63} parent=1 // pred_check_branch
      %9 = sbr.rel (0) target = $region5
    $region4: #{aeresnet_forward.63} parent=1 // pred_region
      _
    $region5: #{aeresnet_forward.63} parent=1 // pred_fallthru
      _
    // Predicated region
    $region6: #{aeresnet_forward.63} parent=1 // pred_check
      _
    $region7: #{aeresnet_forward.63} parent=1 // pred_check_branch
      %11 = sbr.rel (0) target = $region9
    $region8: #{aeresnet_forward.63} parent=1 // pred_region
      %13 = vsyncadd [#allocation3], 0
      %s14 = sshll.u32 %s1, 4
      %s15 = int_to_ptr.hbm [resolvable:$true] %s14
      %s16 = sshll.u32 [#allocation2], 4
      %s17 = int_to_ptr.vmem [resolvable:$true] %s16
      %22 = dma.hbm_to_vmem [thread:$0]  %s15, 2304, %s17, [#allocation3], 64, 64, 4
    $region9: #{aeresnet_forward.63} parent=1 // pred_fallthru
      _
    // Predicated region
    $region10: #{aeresnet_forward.63} parent=1 // pred_check
      _
    $region11: #{aeresnet_forward.63} parent=1 // pred_check_branch
      %24 = sbr.rel (0) target = $region13
    $region12: #{aeresnet_forward.63} parent=1 // pred_region
      %26 = dma.done [#allocation3], 2304
    $region13: #{aeresnet_forward.63} parent=1 // pred_fallthru
      _
    %v28 = vld [vmem:[%s0] sm:$0xff]
    %v29 = vld [vmem:[%s0 + $0x8] sm:$0xf]
    %v30 = vld [vmem:[%s0 + $0xc] sm:$0xff]
    %v31 = vld [vmem:[%s0 + $0x14] sm:$0xf]
    %v32 = vld [vmem:[%s0 + $0x18] sm:$0xff]
    %v33 = vld [vmem:[%s0 + $0x20] sm:$0xf]
    %v34 = vld [vmem:[%s0 + $0x24] sm:$0xff]
    %v35 = vld [vmem:[%s0 + $0x2c] sm:$0xf]
    %v36 = vld [vmem:[#allocation2] sm:$0xf]
    %v37 = vld [vmem:[#allocation2 + $0x4] sm:$0xf]
    %v38 = vld [vmem:[#allocation2 + $0x8] sm:$0xf]
    %v39 = vld [vmem:[#allocation2 + $0xc] sm:$0xf]
    %v40 = vld [vmem:[#allocation2 + $0x10] sm:$0xf]
    %v41 = vld [vmem:[#allocation2 + $0x14] sm:$0xf]
    %v42 = vld [vmem:[#allocation2 + $0x18] sm:$0xf]
    %v43 = vld [vmem:[#allocation2 + $0x1c] sm:$0xf]
    %v44 = vld [vmem:[#allocation2 + $0x20] sm:$0xf]
    %v45 = vld [vmem:[#allocation2 + $0x24] sm:$0xf]
    %v46 = vld [vmem:[#allocation2 + $0x28] sm:$0xf]
    %v47 = vld [vmem:[#allocation2 + $0x2c] sm:$0xf]
    %v48 = vld [vmem:[#allocation2 + $0x30] sm:$0xf]
    %v49 = vld [vmem:[#allocation2 + $0x34] sm:$0xf]
    %v50 = vld [vmem:[#allocation2 + $0x38] sm:$0xf]
    %v51 = vld [vmem:[#allocation2 + $0x3c] sm:$0xf]
    %v52 = vld [vmem:[#allocation2 + $0x40] sm:$0xf]
    %v53 = vld [vmem:[#allocation2 + $0x44] sm:$0xf]
    %v54 = vld [vmem:[#allocation2 + $0x48] sm:$0xf]
    %v55 = vld [vmem:[#allocation2 + $0x4c] sm:$0xf]
    %v56 = vld [vmem:[#allocation2 + $0x50] sm:$0xf]
    %v57 = vld [vmem:[#allocation2 + $0x54] sm:$0xf]
    %v58 = vld [vmem:[#allocation2 + $0x58] sm:$0xf]
    %v59 = vld [vmem:[#allocation2 + $0x5c] sm:$0xf]
    %v60 = vld [vmem:[#allocation2 + $0x60] sm:$0xf]
    %v61 = vld [vmem:[#allocation2 + $0x64] sm:$0xf]
    %v62 = vld [vmem:[#allocation2 + $0x68] sm:$0xf]
    %v63 = vld [vmem:[#allocation2 + $0x6c] sm:$0xf]
    %v64 = vld [vmem:[#allocation2 + $0x70] sm:$0xf]
    %v65 = vld [vmem:[#allocation2 + $0x74] sm:$0xf]
    %v66 = vld [vmem:[#allocation2 + $0x78] sm:$0xf]
    %v67 = vld [vmem:[#allocation2 + $0x7c] sm:$0xf]
    %v68 = vld [vmem:[#allocation2 + $0x80] sm:$0xf]
    %v69 = vld [vmem:[#allocation2 + $0x84] sm:$0xf]
    %v70 = vld [vmem:[#allocation2 + $0x88] sm:$0xf]
    %v71 = vld [vmem:[#allocation2 + $0x8c] sm:$0xf]
    %v80 = vunpack.c.l.b16 %v28
    %v81 = vunpack.c.h.b16 %v28
    %v82 = vunpack.c.l.b16 %v29
    %v83 = vunpack.c.l.b16 %v30
    %v84 = vunpack.c.h.b16 %v30
    %v85 = vunpack.c.l.b16 %v31
    %v86 = vunpack.c.l.b16 %v32
    %v87 = vunpack.c.h.b16 %v32
    %v88 = vunpack.c.l.b16 %v33
    %v89 = vunpack.c.l.b16 %v34
    %v90 = vunpack.c.h.b16 %v34
    %v91 = vunpack.c.l.b16 %v35
    %v92 = vpack.c.b16 %v83, %v80
    %v93 = vpack.c.b16 %v84, %v81
    %v94 = vpack.c.b16 %v85, %v82
    %v95 = vpack.c.b16 %v89, %v86
    %v96 = vpack.c.b16 %v90, %v87
    %v97 = vpack.c.b16 %v91, %v88
    %v138 = vunpack.c.l.b16 %v36
    %v139 = vunpack.c.l.b16 %v37
    %v140 = vunpack.c.l.b16 %v38
    %v141 = vunpack.c.l.b16 %v39
    %v142 = vunpack.c.l.b16 %v40
    %v143 = vunpack.c.l.b16 %v41
    %v144 = vunpack.c.l.b16 %v42
    %v145 = vunpack.c.l.b16 %v43
    %v146 = vunpack.c.l.b16 %v44
    %v147 = vunpack.c.l.b16 %v45
    %v148 = vunpack.c.l.b16 %v46
    %v149 = vunpack.c.l.b16 %v47
    %v150 = vunpack.c.l.b16 %v48
    %v151 = vunpack.c.l.b16 %v49
    %v152 = vunpack.c.l.b16 %v50
    %v153 = vunpack.c.l.b16 %v51
    %v154 = vunpack.c.l.b16 %v52
    %v155 = vunpack.c.l.b16 %v53
    %v156 = vunpack.c.l.b16 %v54
    %v157 = vunpack.c.l.b16 %v55
    %v158 = vunpack.c.l.b16 %v56
    %v159 = vunpack.c.l.b16 %v57
    %v160 = vunpack.c.l.b16 %v58
    %v161 = vunpack.c.l.b16 %v59
    %v162 = vunpack.c.l.b16 %v60
    %v163 = vunpack.c.l.b16 %v61
    %v164 = vunpack.c.l.b16 %v62
    %v165 = vunpack.c.l.b16 %v63
    %v166 = vunpack.c.l.b16 %v64
    %v167 = vunpack.c.l.b16 %v65
    %v168 = vunpack.c.l.b16 %v66
    %v169 = vunpack.c.l.b16 %v67
    %v170 = vunpack.c.l.b16 %v68
    %v171 = vunpack.c.l.b16 %v69
    %v172 = vunpack.c.l.b16 %v70
    %v173 = vunpack.c.l.b16 %v71
    %v174 = vpack.c.b16 %v139, %v138
    %v175 = vpack.c.b16 %v141, %v140
    %v176 = vpack.c.b16 %v143, %v142
    %v177 = vpack.c.b16 %v145, %v144
    %v178 = vpack.c.b16 %v147, %v146
    %v179 = vpack.c.b16 %v149, %v148
    %v180 = vpack.c.b16 %v151, %v150
    %v181 = vpack.c.b16 %v153, %v152
    %v182 = vpack.c.b16 %v155, %v154
    %v183 = vpack.c.b16 %v157, %v156
    %v184 = vpack.c.b16 %v159, %v158
    %v185 = vpack.c.b16 %v161, %v160
    %v186 = vpack.c.b16 %v163, %v162
    %v187 = vpack.c.b16 %v165, %v164
    %v188 = vpack.c.b16 %v167, %v166
    %v189 = vpack.c.b16 %v169, %v168
    %v190 = vpack.c.b16 %v171, %v170
    %v191 = vpack.c.b16 %v173, %v172
    %vm210 = vcmask 261120
    %v212 = vsel %vm210, %v94, 0
    %v215 = vsel %vm210, %v97, 0
    %217 = vmatpush.bf16.msra.mxu0 %v181
    %218 = vmatpush.bf16.msra.mxu0 %v180
    %219 = vmatpush.bf16.msra.mxu0 %v179
    %220 = vmatpush.bf16.msra.mxu0 %v178
    %221 = vmatpush.bf16.msra.mxu0 %v177
    %222 = vmatpush.bf16.msra.mxu0 %v176
    %223 = vmatpush.bf16.msra.mxu0 %v175
    %224 = vmatpush.bf16.msra.mxu0 %v174
    %225 = vmatmul.bf16.gmra.mxu0 %v92
    %v226 = vpop.f32.mrf.mxu0
    %v227 = vadd.f32 0.0, %v226
    %v228 = vpop.f32.mrf.mxu0
    %v229 = vadd.f32 0.0, %v228
    %230 = vmatmul.bf16.gmra.mxu0 %v95
    %v231 = vpop.f32.mrf.mxu0
    %v232 = vadd.f32 0.0, %v231
    %v233 = vpop.f32.mrf.mxu0
    %v234 = vadd.f32 0.0, %v233
    %235 = vdwg.mxu0
    %236 = vmatpush.bf16.msra.mxu0 %v189
    %237 = vmatpush.bf16.msra.mxu0 %v188
    %238 = vmatpush.bf16.msra.mxu0 %v187
    %239 = vmatpush.bf16.msra.mxu0 %v186
    %240 = vmatpush.bf16.msra.mxu0 %v185
    %241 = vmatpush.bf16.msra.mxu0 %v184
    %242 = vmatpush.bf16.msra.mxu0 %v183
    %243 = vmatpush.bf16.msra.mxu0 %v182
    %244 = vmatmul.bf16.gmra.mxu0 %v93
    %v245 = vpop.f32.mrf.mxu0
    %v246 = vadd.f32 %v227, %v245
    %v247 = vpop.f32.mrf.mxu0
    %v248 = vadd.f32 %v229, %v247
    %249 = vmatmul.bf16.gmra.mxu0 %v96
    %v250 = vpop.f32.mrf.mxu0
    %v251 = vadd.f32 %v232, %v250
    %v252 = vpop.f32.mrf.mxu0
    %v253 = vadd.f32 %v234, %v252
    %254 = vdwg.mxu0
    %255 = vmatpush.bf16.msra.mxu0 0
    %256 = vmatpush.bf16.msra.mxu0 0
    %257 = vmatpush.bf16.msra.mxu0 0
    %258 = vmatpush.bf16.msra.mxu0 0
    %259 = vmatpush.bf16.msra.mxu0 0
    %260 = vmatpush.bf16.msra.mxu0 0
    %261 = vmatpush.bf16.msra.mxu0 %v191
    %262 = vmatpush.bf16.msra.mxu0 %v190
    %263 = vmatmul.bf16.gmra.mxu0 %v212
    %v264 = vpop.f32.mrf.mxu0
    %v265 = vadd.f32 %v246, %v264
    %v266 = vpop.f32.mrf.mxu0
    %v267 = vadd.f32 %v248, %v266
    %268 = vmatmul.bf16.gmra.mxu0 %v215
    %v269 = vpop.f32.mrf.mxu0
    %v270 = vadd.f32 %v251, %v269
    %v271 = vpop.f32.mrf.mxu0
    %v272 = vadd.f32 %v253, %v271
    %273 = vdwg.mxu0
    %v274 = vpack.c.bf16 %v265, %v265
    %v275 = vpack.c.bf16 %v267, %v267
    %v276 = vpack.c.bf16 %v270, %v270
    %v277 = vpack.c.bf16 %v272, %v272
    %278 = vst [vmem:[%s2] sm:$0xf] %v274
    %279 = vst [vmem:[%s2 + $0x4] sm:$0xf] %v275
    %280 = vst [vmem:[%s2 + $0x8] sm:$0xf] %v276
    %281 = vst [vmem:[%s2 + $0xc] sm:$0xf] %v277
    // Predicated region
    $region14: #{aeresnet_forward.63} parent=1 // pred_check
      _
    $region15: #{aeresnet_forward.63} parent=1 // pred_check_branch
      %283 = sbr.rel (0) target = $region17
    $region16: #{aeresnet_forward.63} parent=1 // pred_region
      _
    $region17: #{aeresnet_forward.63} parent=1 // pred_fallthru
      _
    // Predicated region
    $region18: #{aeresnet_forward.63} parent=1 // pred_check
      _
    $region19: #{aeresnet_forward.63} parent=1 // pred_check_branch
      %285 = sbr.rel (0) target = $region21
    $region20: #{aeresnet_forward.63} parent=1 // pred_region
      _
    $region21: #{aeresnet_forward.63} parent=1 // pred_fallthru
      _
    %286 = vsyncpa [#allocation3], 1

// kernel: aeresnet_forward.64
$region0: #{aeresnet_forward.64}
  #allocation0 [shape = 'u32[]', space=smem, size = 0x4, offset = 0x4, fixed_abs, tag = 'smem constant byte address 0x4 - core index']
  #allocation1 [shape = 'u32[72,128]{1,0:T(1,128)}', space=vmem, size = 0x9000, scoped, tag = 'internal scratch']
  %s0 = inlined_call_operand.vmem [shape: bf16[16,288], index: 0, kind: input, shape index: {}]
  %s1 = inlined_call_operand.hbm [shape: bf16[288,128], index: 1, kind: input, shape index: {}]
  %s2 = inlined_call_operand.vmem [shape: bf16[16,128], index: 2, kind: output, shape index: {}]
  %s3 = sld [smem:[#allocation0]]
  $region22: #{aeresnet_forward.64} parent=0
    _
  %s5 = ssub.s32 1, %s3
  %s6 = scalar_select 0, %s5, %s3
  $region1: #{aeresnet_forward.64} parent=0
    #allocation2 [shape = 'u8[73728]{0}', space=vmem, size = 0x12000, scoped, tag = 'input window, operand 1, single buffered']
    #allocation3 [shape = 's32[1]{0}', space=sflag, size = 0x4, scoped, tag = 'scoped memory for aeresnet_forward.64']
    %7 = vsyncpa [#allocation3], 0
    // Predicated region
    $region2: #{aeresnet_forward.64} parent=1 // pred_check
      _
    $region3: #{aeresnet_forward.64} parent=1 // pred_check_branch
      %9 = sbr.rel (0) target = $region5
    $region4: #{aeresnet_forward.64} parent=1 // pred_region
      _
    $region5: #{aeresnet_forward.64} parent=1 // pred_fallthru
      _
    // Predicated region
    $region6: #{aeresnet_forward.64} parent=1 // pred_check
      _
    $region7: #{aeresnet_forward.64} parent=1 // pred_check_branch
      %11 = sbr.rel (0) target = $region9
    $region8: #{aeresnet_forward.64} parent=1 // pred_region
      %13 = vsyncadd [#allocation3], 0
      %s14 = sshll.u32 %s1, 4
      %s15 = int_to_ptr.hbm [resolvable:$true] %s14
      %s16 = sshll.u32 [#allocation2], 4
      %s17 = int_to_ptr.vmem [resolvable:$true] %s16
      %22 = dma.hbm_to_vmem [thread:$0]  %s15, 2304, %s17, [#allocation3], 64, 64, 4
    $region9: #{aeresnet_forward.64} parent=1 // pred_fallthru
      _
    // Predicated region
    $region10: #{aeresnet_forward.64} parent=1 // pred_check
      _
    $region11: #{aeresnet_forward.64} parent=1 // pred_check_branch
      %24 = sbr.rel (0) target = $region13
    $region12: #{aeresnet_forward.64} parent=1 // pred_region
      %26 = dma.done [#allocation3], 2304
    $region13: #{aeresnet_forward.64} parent=1 // pred_fallthru
      _
    %v28 = vld [vmem:[%s0] sm:$0xff]
    %v29 = vld [vmem:[%s0 + $0x8] sm:$0xf]
    %v30 = vld [vmem:[%s0 + $0xc] sm:$0xff]
    %v31 = vld [vmem:[%s0 + $0x14] sm:$0xf]
    %v32 = vld [vmem:[#allocation2] sm:$0xf]
    %v33 = vld [vmem:[#allocation2 + $0x4] sm:$0xf]
    %v34 = vld [vmem:[#allocation2 + $0x8] sm:$0xf]
    %v35 = vld [vmem:[#allocation2 + $0xc] sm:$0xf]
    %v36 = vld [vmem:[#allocation2 + $0x10] sm:$0xf]
    %v37 = vld [vmem:[#allocation2 + $0x14] sm:$0xf]
    %v38 = vld [vmem:[#allocation2 + $0x18] sm:$0xf]
    %v39 = vld [vmem:[#allocation2 + $0x1c] sm:$0xf]
    %v40 = vld [vmem:[#allocation2 + $0x20] sm:$0xf]
    %v41 = vld [vmem:[#allocation2 + $0x24] sm:$0xf]
    %v42 = vld [vmem:[#allocation2 + $0x28] sm:$0xf]
    %v43 = vld [vmem:[#allocation2 + $0x2c] sm:$0xf]
    %v44 = vld [vmem:[#allocation2 + $0x30] sm:$0xf]
    %v45 = vld [vmem:[#allocation2 + $0x34] sm:$0xf]
    %v46 = vld [vmem:[#allocation2 + $0x38] sm:$0xf]
    %v47 = vld [vmem:[#allocation2 + $0x3c] sm:$0xf]
    %v48 = vld [vmem:[#allocation2 + $0x40] sm:$0xf]
    %v49 = vld [vmem:[#allocation2 + $0x44] sm:$0xf]
    %v50 = vld [vmem:[#allocation2 + $0x48] sm:$0xf]
    %v51 = vld [vmem:[#allocation2 + $0x4c] sm:$0xf]
    %v52 = vld [vmem:[#allocation2 + $0x50] sm:$0xf]
    %v53 = vld [vmem:[#allocation2 + $0x54] sm:$0xf]
    %v54 = vld [vmem:[#allocation2 + $0x58] sm:$0xf]
    %v55 = vld [vmem:[#allocation2 + $0x5c] sm:$0xf]
    %v56 = vld [vmem:[#allocation2 + $0x60] sm:$0xf]
    %v57 = vld [vmem:[#allocation2 + $0x64] sm:$0xf]
    %v58 = vld [vmem:[#allocation2 + $0x68] sm:$0xf]
    %v59 = vld [vmem:[#allocation2 + $0x6c] sm:$0xf]
    %v60 = vld [vmem:[#allocation2 + $0x70] sm:$0xf]
    %v61 = vld [vmem:[#allocation2 + $0x74] sm:$0xf]
    %v62 = vld [vmem:[#allocation2 + $0x78] sm:$0xf]
    %v63 = vld [vmem:[#allocation2 + $0x7c] sm:$0xf]
    %v64 = vld [vmem:[#allocation2 + $0x80] sm:$0xf]
    %v65 = vld [vmem:[#allocation2 + $0x84] sm:$0xf]
    %v66 = vld [vmem:[#allocation2 + $0x88] sm:$0xf]
    %v67 = vld [vmem:[#allocation2 + $0x8c] sm:$0xf]
    %v72 = vunpack.c.l.b16 %v28
    %v73 = vunpack.c.h.b16 %v28
    %v74 = vunpack.c.l.b16 %v29
    %v75 = vunpack.c.l.b16 %v30
    %v76 = vunpack.c.h.b16 %v30
    %v77 = vunpack.c.l.b16 %v31
    %v78 = vpack.c.b16 %v75, %v72
    %v79 = vpack.c.b16 %v76, %v73
    %v80 = vpack.c.b16 %v77, %v74
    %v119 = vunpack.c.l.b16 %v32
    %v120 = vunpack.c.l.b16 %v33
    %v121 = vunpack.c.l.b16 %v34
    %v122 = vunpack.c.l.b16 %v35
    %v123 = vunpack.c.l.b16 %v36
    %v124 = vunpack.c.l.b16 %v37
    %v125 = vunpack.c.l.b16 %v38
    %v126 = vunpack.c.l.b16 %v39
    %v127 = vunpack.c.l.b16 %v40
    %v128 = vunpack.c.l.b16 %v41
    %v129 = vunpack.c.l.b16 %v42
    %v130 = vunpack.c.l.b16 %v43
    %v131 = vunpack.c.l.b16 %v44
    %v132 = vunpack.c.l.b16 %v45
    %v133 = vunpack.c.l.b16 %v46
    %v134 = vunpack.c.l.b16 %v47
    %v135 = vunpack.c.l.b16 %v48
    %v136 = vunpack.c.l.b16 %v49
    %v137 = vunpack.c.l.b16 %v50
    %v138 = vunpack.c.l.b16 %v51
    %v139 = vunpack.c.l.b16 %v52
    %v140 = vunpack.c.l.b16 %v53
    %v141 = vunpack.c.l.b16 %v54
    %v142 = vunpack.c.l.b16 %v55
    %v143 = vunpack.c.l.b16 %v56
    %v144 = vunpack.c.l.b16 %v57
    %v145 = vunpack.c.l.b16 %v58
    %v146 = vunpack.c.l.b16 %v59
    %v147 = vunpack.c.l.b16 %v60
    %v148 = vunpack.c.l.b16 %v61
    %v149 = vunpack.c.l.b16 %v62
    %v150 = vunpack.c.l.b16 %v63
    %v151 = vunpack.c.l.b16 %v64
    %v152 = vunpack.c.l.b16 %v65
    %v153 = vunpack.c.l.b16 %v66
    %v154 = vunpack.c.l.b16 %v67
    %v155 = vpack.c.b16 %v120, %v119
    %v156 = vpack.c.b16 %v122, %v121
    %v157 = vpack.c.b16 %v124, %v123
    %v158 = vpack.c.b16 %v126, %v125
    %v159 = vpack.c.b16 %v128, %v127
    %v160 = vpack.c.b16 %v130, %v129
    %v161 = vpack.c.b16 %v132, %v131
    %v162 = vpack.c.b16 %v134, %v133
    %v163 = vpack.c.b16 %v136, %v135
    %v164 = vpack.c.b16 %v138, %v137
    %v165 = vpack.c.b16 %v140, %v139
    %v166 = vpack.c.b16 %v142, %v141
    %v167 = vpack.c.b16 %v144, %v143
    %v168 = vpack.c.b16 %v146, %v145
    %v169 = vpack.c.b16 %v148, %v147
    %v170 = vpack.c.b16 %v150, %v149
    %v171 = vpack.c.b16 %v152, %v151
    %v172 = vpack.c.b16 %v154, %v153
    %vm191 = vcmask 261120
    %v193 = vsel %vm191, %v80, 0
    %195 = vmatpush.bf16.msra.mxu0 %v162
    %196 = vmatpush.bf16.msra.mxu0 %v161
    %197 = vmatpush.bf16.msra.mxu0 %v160
    %198 = vmatpush.bf16.msra.mxu0 %v159
    %199 = vmatpush.bf16.msra.mxu0 %v158
    %200 = vmatpush.bf16.msra.mxu0 %v157
    %201 = vmatpush.bf16.msra.mxu0 %v156
    %202 = vmatpush.bf16.msra.mxu0 %v155
    %203 = vmatmul.bf16.gmra.mxu0 %v78
    %v204 = vpop.f32.mrf.mxu0
    %v205 = vadd.f32 0.0, %v204
    %v206 = vpop.f32.mrf.mxu0
    %v207 = vadd.f32 0.0, %v206
    %208 = vdwg.mxu0
    %209 = vmatpush.bf16.msra.mxu0 %v170
    %210 = vmatpush.bf16.msra.mxu0 %v169
    %211 = vmatpush.bf16.msra.mxu0 %v168
    %212 = vmatpush.bf16.msra.mxu0 %v167
    %213 = vmatpush.bf16.msra.mxu0 %v166
    %214 = vmatpush.bf16.msra.mxu0 %v165
    %215 = vmatpush.bf16.msra.mxu0 %v164
    %216 = vmatpush.bf16.msra.mxu0 %v163
    %217 = vmatmul.bf16.gmra.mxu0 %v79
    %v218 = vpop.f32.mrf.mxu0
    %v219 = vadd.f32 %v205, %v218
    %v220 = vpop.f32.mrf.mxu0
    %v221 = vadd.f32 %v207, %v220
    %222 = vdwg.mxu0
    %223 = vmatpush.bf16.msra.mxu0 0
    %224 = vmatpush.bf16.msra.mxu0 0
    %225 = vmatpush.bf16.msra.mxu0 0
    %226 = vmatpush.bf16.msra.mxu0 0
    %227 = vmatpush.bf16.msra.mxu0 0
    %228 = vmatpush.bf16.msra.mxu0 0
    %229 = vmatpush.bf16.msra.mxu0 %v172
    %230 = vmatpush.bf16.msra.mxu0 %v171
    %231 = vmatmul.bf16.gmra.mxu0 %v193
    %v232 = vpop.f32.mrf.mxu0
    %v233 = vadd.f32 %v219, %v232
    %v234 = vpop.f32.mrf.mxu0
    %v235 = vadd.f32 %v221, %v234
    %236 = vdwg.mxu0
    %v237 = vpack.c.bf16 %v233, %v233
    %v238 = vpack.c.bf16 %v235, %v235
    %239 = vst [vmem:[%s2] sm:$0xf] %v237
    %240 = vst [vmem:[%s2 + $0x4] sm:$0xf] %v238
    // Predicated region
    $region14: #{aeresnet_forward.64} parent=1 // pred_check
      _
    $region15: #{aeresnet_forward.64} parent=1 // pred_check_branch
      %242 = sbr.rel (0) target = $region17
    $region16: #{aeresnet_forward.64} parent=1 // pred_region
      _
    $region17: #{aeresnet_forward.64} parent=1 // pred_fallthru
      _
    // Predicated region
    $region18: #{aeresnet_forward.64} parent=1 // pred_check
      _
    $region19: #{aeresnet_forward.64} parent=1 // pred_check_branch
      %244 = sbr.rel (0) target = $region21
    $region20: #{aeresnet_forward.64} parent=1 // pred_region
      _
    $region21: #{aeresnet_forward.64} parent=1 // pred_fallthru
      _
    %245 = vsyncpa [#allocation3], 1

// kernel: aeresnet_forward.65
$region0: #{aeresnet_forward.65}
  #allocation0 [shape = 'u32[]', space=smem, size = 0x4, offset = 0x4, fixed_abs, tag = 'smem constant byte address 0x4 - core index']
  #allocation1 [shape = 'u32[72,128]{1,0:T(1,128)}', space=vmem, size = 0x9000, scoped, tag = 'internal scratch']
  %s0 = inlined_call_operand.vmem [shape: bf16[16,128], index: 0, kind: input, shape index: {}]
  %s1 = inlined_call_operand.hbm [shape: bf16[128,128], index: 1, kind: input, shape index: {}]
  %s2 = inlined_call_operand.vmem [shape: bf16[16,128], index: 2, kind: output, shape index: {}]
  %s3 = sld [smem:[#allocation0]]
  $region22: #{aeresnet_forward.65} parent=0
    _
  %s5 = ssub.s32 1, %s3
  %s6 = scalar_select 0, %s5, %s3
  $region1: #{aeresnet_forward.65} parent=0
    #allocation2 [shape = 'u8[32768]{0}', space=vmem, size = 0x8000, scoped, tag = 'input window, operand 1, single buffered']
    #allocation3 [shape = 's32[1]{0}', space=sflag, size = 0x4, scoped, tag = 'scoped memory for aeresnet_forward.65']
    %7 = vsyncpa [#allocation3], 0
    // Predicated region
    $region2: #{aeresnet_forward.65} parent=1 // pred_check
      _
    $region3: #{aeresnet_forward.65} parent=1 // pred_check_branch
      %9 = sbr.rel (0) target = $region5
    $region4: #{aeresnet_forward.65} parent=1 // pred_region
      _
    $region5: #{aeresnet_forward.65} parent=1 // pred_fallthru
      _
    // Predicated region
    $region6: #{aeresnet_forward.65} parent=1 // pred_check
      _
    $region7: #{aeresnet_forward.65} parent=1 // pred_check_branch
      %11 = sbr.rel (0) target = $region9
    $region8: #{aeresnet_forward.65} parent=1 // pred_region
      %13 = vsyncadd [#allocation3], 0
      %s14 = sshll.u32 %s1, 4
      %s15 = int_to_ptr.hbm [resolvable:$true] %s14
      %s16 = sshll.u32 [#allocation2], 4
      %s17 = int_to_ptr.vmem [resolvable:$true] %s16
      %22 = dma.hbm_to_vmem [thread:$0]  %s15, 1024, %s17, [#allocation3], 64, 64, 4
    $region9: #{aeresnet_forward.65} parent=1 // pred_fallthru
      _
    // Predicated region
    $region10: #{aeresnet_forward.65} parent=1 // pred_check
      _
    $region11: #{aeresnet_forward.65} parent=1 // pred_check_branch
      %24 = sbr.rel (0) target = $region13
    $region12: #{aeresnet_forward.65} parent=1 // pred_region
      %26 = dma.done [#allocation3], 1024
    $region13: #{aeresnet_forward.65} parent=1 // pred_fallthru
      _
    %v27 = vld [vmem:[%s0] sm:$0xf]
    %v28 = vld [vmem:[%s0 + $0x4] sm:$0xf]
    %v29 = vld [vmem:[#allocation2] sm:$0xf]
    %v30 = vld [vmem:[#allocation2 + $0x4] sm:$0xf]
    %v31 = vld [vmem:[#allocation2 + $0x8] sm:$0xf]
    %v32 = vld [vmem:[#allocation2 + $0xc] sm:$0xf]
    %v33 = vld [vmem:[#allocation2 + $0x10] sm:$0xf]
    %v34 = vld [vmem:[#allocation2 + $0x14] sm:$0xf]
    %v35 = vld [vmem:[#allocation2 + $0x18] sm:$0xf]
    %v36 = vld [vmem:[#allocation2 + $0x1c] sm:$0xf]
    %v37 = vld [vmem:[#allocation2 + $0x20] sm:$0xf]
    %v38 = vld [vmem:[#allocation2 + $0x24] sm:$0xf]
    %v39 = vld [vmem:[#allocation2 + $0x28] sm:$0xf]
    %v40 = vld [vmem:[#allocation2 + $0x2c] sm:$0xf]
    %v41 = vld [vmem:[#allocation2 + $0x30] sm:$0xf]
    %v42 = vld [vmem:[#allocation2 + $0x34] sm:$0xf]
    %v43 = vld [vmem:[#allocation2 + $0x38] sm:$0xf]
    %v44 = vld [vmem:[#allocation2 + $0x3c] sm:$0xf]
    %v47 = vunpack.c.l.b16 %v27
    %v48 = vunpack.c.l.b16 %v28
    %v49 = vpack.c.b16 %v48, %v47
    %v67 = vunpack.c.l.b16 %v29
    %v68 = vunpack.c.l.b16 %v30
    %v69 = vunpack.c.l.b16 %v31
    %v70 = vunpack.c.l.b16 %v32
    %v71 = vunpack.c.l.b16 %v33
    %v72 = vunpack.c.l.b16 %v34
    %v73 = vunpack.c.l.b16 %v35
    %v74 = vunpack.c.l.b16 %v36
    %v75 = vunpack.c.l.b16 %v37
    %v76 = vunpack.c.l.b16 %v38
    %v77 = vunpack.c.l.b16 %v39
    %v78 = vunpack.c.l.b16 %v40
    %v79 = vunpack.c.l.b16 %v41
    %v80 = vunpack.c.l.b16 %v42
    %v81 = vunpack.c.l.b16 %v43
    %v82 = vunpack.c.l.b16 %v44
    %v83 = vpack.c.b16 %v68, %v67
    %v84 = vpack.c.b16 %v70, %v69
    %v85 = vpack.c.b16 %v72, %v71
    %v86 = vpack.c.b16 %v74, %v73
    %v87 = vpack.c.b16 %v76, %v75
    %v88 = vpack.c.b16 %v78, %v77
    %v89 = vpack.c.b16 %v80, %v79
    %v90 = vpack.c.b16 %v82, %v81
    %99 = vmatpush.bf16.msra.mxu0 %v90
    %100 = vmatpush.bf16.msra.mxu0 %v89
    %101 = vmatpush.bf16.msra.mxu0 %v88
    %102 = vmatpush.bf16.msra.mxu0 %v87
    %103 = vmatpush.bf16.msra.mxu0 %v86
    %104 = vmatpush.bf16.msra.mxu0 %v85
    %105 = vmatpush.bf16.msra.mxu0 %v84
    %106 = vmatpush.bf16.msra.mxu0 %v83
    %107 = vmatmul.bf16.gmra.mxu0 %v49
    %v108 = vpop.f32.mrf.mxu0
    %v109 = vadd.f32 0.0, %v108
    %v110 = vpop.f32.mrf.mxu0
    %v111 = vadd.f32 0.0, %v110
    %112 = vdwg.mxu0
    %v113 = vpack.c.bf16 %v109, %v109
    %v114 = vpack.c.bf16 %v111, %v111
    %115 = vst [vmem:[%s2] sm:$0xf] %v113
    %116 = vst [vmem:[%s2 + $0x4] sm:$0xf] %v114
    // Predicated region
    $region14: #{aeresnet_forward.65} parent=1 // pred_check
      _
    $region15: #{aeresnet_forward.65} parent=1 // pred_check_branch
      %118 = sbr.rel (0) target = $region17
    $region16: #{aeresnet_forward.65} parent=1 // pred_region
      _
    $region17: #{aeresnet_forward.65} parent=1 // pred_fallthru
      _
    // Predicated region
    $region18: #{aeresnet_forward.65} parent=1 // pred_check
      _
    $region19: #{aeresnet_forward.65} parent=1 // pred_check_branch
      %120 = sbr.rel (0) target = $region21
    $region20: #{aeresnet_forward.65} parent=1 // pred_region
      _
    $region21: #{aeresnet_forward.65} parent=1 // pred_fallthru
      _
    %121 = vsyncpa [#allocation3], 1

// kernel: aeresnet_forward.66
$region0: #{aeresnet_forward.66}
  #allocation0 [shape = 'u32[]', space=smem, size = 0x4, offset = 0x4, fixed_abs, tag = 'smem constant byte address 0x4 - core index']
  #allocation1 [shape = 'u32[72,128]{1,0:T(1,128)}', space=vmem, size = 0x9000, scoped, tag = 'internal scratch']
  %s0 = inlined_call_operand.vmem [shape: bf16[32,128], index: 0, kind: input, shape index: {}]
  %s1 = inlined_call_operand.hbm [shape: bf16[128,128], index: 1, kind: input, shape index: {}]
  %s2 = inlined_call_operand.vmem [shape: bf16[32,128], index: 2, kind: output, shape index: {}]
  %s3 = sld [smem:[#allocation0]]
  $region22: #{aeresnet_forward.66} parent=0
    _
  %s5 = ssub.s32 1, %s3
  %s6 = scalar_select 0, %s5, %s3
  $region1: #{aeresnet_forward.66} parent=0
    #allocation2 [shape = 'u8[32768]{0}', space=vmem, size = 0x8000, scoped, tag = 'input window, operand 1, single buffered']
    #allocation3 [shape = 's32[1]{0}', space=sflag, size = 0x4, scoped, tag = 'scoped memory for aeresnet_forward.66']
    %7 = vsyncpa [#allocation3], 0
    // Predicated region
    $region2: #{aeresnet_forward.66} parent=1 // pred_check
      _
    $region3: #{aeresnet_forward.66} parent=1 // pred_check_branch
      %9 = sbr.rel (0) target = $region5
    $region4: #{aeresnet_forward.66} parent=1 // pred_region
      _
    $region5: #{aeresnet_forward.66} parent=1 // pred_fallthru
      _
    // Predicated region
    $region6: #{aeresnet_forward.66} parent=1 // pred_check
      _
    $region7: #{aeresnet_forward.66} parent=1 // pred_check_branch
      %11 = sbr.rel (0) target = $region9
    $region8: #{aeresnet_forward.66} parent=1 // pred_region
      %13 = vsyncadd [#allocation3], 0
      %s14 = sshll.u32 %s1, 4
      %s15 = int_to_ptr.hbm [resolvable:$true] %s14
      %s16 = sshll.u32 [#allocation2], 4
      %s17 = int_to_ptr.vmem [resolvable:$true] %s16
      %22 = dma.hbm_to_vmem [thread:$0]  %s15, 1024, %s17, [#allocation3], 64, 64, 4
    $region9: #{aeresnet_forward.66} parent=1 // pred_fallthru
      _
    // Predicated region
    $region10: #{aeresnet_forward.66} parent=1 // pred_check
      _
    $region11: #{aeresnet_forward.66} parent=1 // pred_check_branch
      %24 = sbr.rel (0) target = $region13
    $region12: #{aeresnet_forward.66} parent=1 // pred_region
      %26 = dma.done [#allocation3], 1024
    $region13: #{aeresnet_forward.66} parent=1 // pred_fallthru
      _
    %v27 = vld [vmem:[%s0] sm:$0xf]
    %v28 = vld [vmem:[%s0 + $0x4] sm:$0xf]
    %v29 = vld [vmem:[%s0 + $0x8] sm:$0xf]
    %v30 = vld [vmem:[%s0 + $0xc] sm:$0xf]
    %v31 = vld [vmem:[#allocation2] sm:$0xf]
    %v32 = vld [vmem:[#allocation2 + $0x4] sm:$0xf]
    %v33 = vld [vmem:[#allocation2 + $0x8] sm:$0xf]
    %v34 = vld [vmem:[#allocation2 + $0xc] sm:$0xf]
    %v35 = vld [vmem:[#allocation2 + $0x10] sm:$0xf]
    %v36 = vld [vmem:[#allocation2 + $0x14] sm:$0xf]
    %v37 = vld [vmem:[#allocation2 + $0x18] sm:$0xf]
    %v38 = vld [vmem:[#allocation2 + $0x1c] sm:$0xf]
    %v39 = vld [vmem:[#allocation2 + $0x20] sm:$0xf]
    %v40 = vld [vmem:[#allocation2 + $0x24] sm:$0xf]
    %v41 = vld [vmem:[#allocation2 + $0x28] sm:$0xf]
    %v42 = vld [vmem:[#allocation2 + $0x2c] sm:$0xf]
    %v43 = vld [vmem:[#allocation2 + $0x30] sm:$0xf]
    %v44 = vld [vmem:[#allocation2 + $0x34] sm:$0xf]
    %v45 = vld [vmem:[#allocation2 + $0x38] sm:$0xf]
    %v46 = vld [vmem:[#allocation2 + $0x3c] sm:$0xf]
    %v51 = vunpack.c.l.b16 %v27
    %v52 = vunpack.c.l.b16 %v28
    %v53 = vunpack.c.l.b16 %v29
    %v54 = vunpack.c.l.b16 %v30
    %v55 = vpack.c.b16 %v52, %v51
    %v56 = vpack.c.b16 %v54, %v53
    %v75 = vunpack.c.l.b16 %v31
    %v76 = vunpack.c.l.b16 %v32
    %v77 = vunpack.c.l.b16 %v33
    %v78 = vunpack.c.l.b16 %v34
    %v79 = vunpack.c.l.b16 %v35
    %v80 = vunpack.c.l.b16 %v36
    %v81 = vunpack.c.l.b16 %v37
    %v82 = vunpack.c.l.b16 %v38
    %v83 = vunpack.c.l.b16 %v39
    %v84 = vunpack.c.l.b16 %v40
    %v85 = vunpack.c.l.b16 %v41
    %v86 = vunpack.c.l.b16 %v42
    %v87 = vunpack.c.l.b16 %v43
    %v88 = vunpack.c.l.b16 %v44
    %v89 = vunpack.c.l.b16 %v45
    %v90 = vunpack.c.l.b16 %v46
    %v91 = vpack.c.b16 %v76, %v75
    %v92 = vpack.c.b16 %v78, %v77
    %v93 = vpack.c.b16 %v80, %v79
    %v94 = vpack.c.b16 %v82, %v81
    %v95 = vpack.c.b16 %v84, %v83
    %v96 = vpack.c.b16 %v86, %v85
    %v97 = vpack.c.b16 %v88, %v87
    %v98 = vpack.c.b16 %v90, %v89
    %107 = vmatpush.bf16.msra.mxu0 %v98
    %108 = vmatpush.bf16.msra.mxu0 %v97
    %109 = vmatpush.bf16.msra.mxu0 %v96
    %110 = vmatpush.bf16.msra.mxu0 %v95
    %111 = vmatpush.bf16.msra.mxu0 %v94
    %112 = vmatpush.bf16.msra.mxu0 %v93
    %113 = vmatpush.bf16.msra.mxu0 %v92
    %114 = vmatpush.bf16.msra.mxu0 %v91
    %115 = vmatmul.bf16.gmra.mxu0 %v55
    %v116 = vpop.f32.mrf.mxu0
    %v117 = vadd.f32 0.0, %v116
    %v118 = vpop.f32.mrf.mxu0
    %v119 = vadd.f32 0.0, %v118
    %120 = vmatmul.bf16.gmra.mxu0 %v56
    %v121 = vpop.f32.mrf.mxu0
    %v122 = vadd.f32 0.0, %v121
    %v123 = vpop.f32.mrf.mxu0
    %v124 = vadd.f32 0.0, %v123
    %125 = vdwg.mxu0
    %v126 = vpack.c.bf16 %v117, %v117
    %v127 = vpack.c.bf16 %v119, %v119
    %v128 = vpack.c.bf16 %v122, %v122
    %v129 = vpack.c.bf16 %v124, %v124
    %130 = vst [vmem:[%s2] sm:$0xf] %v126
    %131 = vst [vmem:[%s2 + $0x4] sm:$0xf] %v127
    %132 = vst [vmem:[%s2 + $0x8] sm:$0xf] %v128
    %133 = vst [vmem:[%s2 + $0xc] sm:$0xf] %v129
    // Predicated region
    $region14: #{aeresnet_forward.66} parent=1 // pred_check
      _
    $region15: #{aeresnet_forward.66} parent=1 // pred_check_branch
      %135 = sbr.rel (0) target = $region17
    $region16: #{aeresnet_forward.66} parent=1 // pred_region
      _
    $region17: #{aeresnet_forward.66} parent=1 // pred_fallthru
      _
    // Predicated region
    $region18: #{aeresnet_forward.66} parent=1 // pred_check
      _
    $region19: #{aeresnet_forward.66} parent=1 // pred_check_branch
      %137 = sbr.rel (0) target = $region21
    $region20: #{aeresnet_forward.66} parent=1 // pred_region
      _
    $region21: #{aeresnet_forward.66} parent=1 // pred_fallthru
      _
    %138 = vsyncpa [#allocation3], 1

// kernel: aeresnet_forward.72
$region0: #{aeresnet_forward.72}
  #allocation0 [shape = 'u32[]', space=smem, size = 0x4, offset = 0x4, fixed_abs, tag = 'smem constant byte address 0x4 - core index']
  #allocation1 [shape = 'u32[72,128]{1,0:T(1,128)}', space=vmem, size = 0x9000, scoped, tag = 'internal scratch']
  %s0 = inlined_call_operand.vmem [shape: bf16[32,576], index: 0, kind: input, shape index: {}]
  %s1 = inlined_call_operand.vmem [shape: bf16[576,128], index: 1, kind: input, shape index: {}]
  %s2 = inlined_call_operand.vmem [shape: bf16[32,128], index: 2, kind: output, shape index: {}]
  %s3 = sld [smem:[#allocation0]]
  $region18: #{aeresnet_forward.72} parent=0
    _
  %s5 = ssub.s32 1, %s3
  %s6 = scalar_select 0, %s5, %s3
  // Predicated region
  $region2: #{aeresnet_forward.72} parent=0 // pred_check
    _
  $region3: #{aeresnet_forward.72} parent=0 // pred_check_branch
    %8 = sbr.rel (0) target = $region5
  $region4: #{aeresnet_forward.72} parent=0 // pred_region
    _
  $region5: #{aeresnet_forward.72} parent=0 // pred_fallthru
    _
  // Predicated region
  $region6: #{aeresnet_forward.72} parent=0 // pred_check
    _
  $region7: #{aeresnet_forward.72} parent=0 // pred_check_branch
    %10 = sbr.rel (0) target = $region9
  $region8: #{aeresnet_forward.72} parent=0 // pred_region
    _
  $region9: #{aeresnet_forward.72} parent=0 // pred_fallthru
    _
  %v12 = vld [vmem:[%s0] sm:$0xff]
  %v13 = vld [vmem:[%s0 + $0x8] sm:$0xff]
  %v14 = vld [vmem:[%s0 + $0x10] sm:$0xf]
  %v15 = vld [vmem:[%s0 + $0x14] sm:$0xff]
  %v16 = vld [vmem:[%s0 + $0x1c] sm:$0xff]
  %v17 = vld [vmem:[%s0 + $0x24] sm:$0xf]
  %v18 = vld [vmem:[%s0 + $0x28] sm:$0xff]
  %v19 = vld [vmem:[%s0 + $0x30] sm:$0xff]
  %v20 = vld [vmem:[%s0 + $0x38] sm:$0xf]
  %v21 = vld [vmem:[%s0 + $0x3c] sm:$0xff]
  %v22 = vld [vmem:[%s0 + $0x44] sm:$0xff]
  %v23 = vld [vmem:[%s0 + $0x4c] sm:$0xf]
  %v24 = vld [vmem:[%s1] sm:$0xf]
  %v25 = vld [vmem:[%s1 + $0x4] sm:$0xf]
  %v26 = vld [vmem:[%s1 + $0x8] sm:$0xf]
  %v27 = vld [vmem:[%s1 + $0xc] sm:$0xf]
  %v28 = vld [vmem:[%s1 + $0x10] sm:$0xf]
  %v29 = vld [vmem:[%s1 + $0x14] sm:$0xf]
  %v30 = vld [vmem:[%s1 + $0x18] sm:$0xf]
  %v31 = vld [vmem:[%s1 + $0x1c] sm:$0xf]
  %v32 = vld [vmem:[%s1 + $0x20] sm:$0xf]
  %v33 = vld [vmem:[%s1 + $0x24] sm:$0xf]
  %v34 = vld [vmem:[%s1 + $0x28] sm:$0xf]
  %v35 = vld [vmem:[%s1 + $0x2c] sm:$0xf]
  %v36 = vld [vmem:[%s1 + $0x30] sm:$0xf]
  %v37 = vld [vmem:[%s1 + $0x34] sm:$0xf]
  %v38 = vld [vmem:[%s1 + $0x38] sm:$0xf]
  %v39 = vld [vmem:[%s1 + $0x3c] sm:$0xf]
  %v40 = vld [vmem:[%s1 + $0x40] sm:$0xf]
  %v41 = vld [vmem:[%s1 + $0x44] sm:$0xf]
  %v42 = vld [vmem:[%s1 + $0x48] sm:$0xf]
  %v43 = vld [vmem:[%s1 + $0x4c] sm:$0xf]
  %v44 = vld [vmem:[%s1 + $0x50] sm:$0xf]
  %v45 = vld [vmem:[%s1 + $0x54] sm:$0xf]
  %v46 = vld [vmem:[%s1 + $0x58] sm:$0xf]
  %v47 = vld [vmem:[%s1 + $0x5c] sm:$0xf]
  %v48 = vld [vmem:[%s1 + $0x60] sm:$0xf]
  %v49 = vld [vmem:[%s1 + $0x64] sm:$0xf]
  %v50 = vld [vmem:[%s1 + $0x68] sm:$0xf]
  %v51 = vld [vmem:[%s1 + $0x6c] sm:$0xf]
  %v52 = vld [vmem:[%s1 + $0x70] sm:$0xf]
  %v53 = vld [vmem:[%s1 + $0x74] sm:$0xf]
  %v54 = vld [vmem:[%s1 + $0x78] sm:$0xf]
  %v55 = vld [vmem:[%s1 + $0x7c] sm:$0xf]
  %v56 = vld [vmem:[%s1 + $0x80] sm:$0xf]
  %v57 = vld [vmem:[%s1 + $0x84] sm:$0xf]
  %v58 = vld [vmem:[%s1 + $0x88] sm:$0xf]
  %v59 = vld [vmem:[%s1 + $0x8c] sm:$0xf]
  %v60 = vld [vmem:[%s1 + $0x90] sm:$0xf]
  %v61 = vld [vmem:[%s1 + $0x94] sm:$0xf]
  %v62 = vld [vmem:[%s1 + $0x98] sm:$0xf]
  %v63 = vld [vmem:[%s1 + $0x9c] sm:$0xf]
  %v64 = vld [vmem:[%s1 + $0xa0] sm:$0xf]
  %v65 = vld [vmem:[%s1 + $0xa4] sm:$0xf]
  %v66 = vld [vmem:[%s1 + $0xa8] sm:$0xf]
  %v67 = vld [vmem:[%s1 + $0xac] sm:$0xf]
  %v68 = vld [vmem:[%s1 + $0xb0] sm:$0xf]
  %v69 = vld [vmem:[%s1 + $0xb4] sm:$0xf]
  %v70 = vld [vmem:[%s1 + $0xb8] sm:$0xf]
  %v71 = vld [vmem:[%s1 + $0xbc] sm:$0xf]
  %v72 = vld [vmem:[%s1 + $0xc0] sm:$0xf]
  %v73 = vld [vmem:[%s1 + $0xc4] sm:$0xf]
  %v74 = vld [vmem:[%s1 + $0xc8] sm:$0xf]
  %v75 = vld [vmem:[%s1 + $0xcc] sm:$0xf]
  %v76 = vld [vmem:[%s1 + $0xd0] sm:$0xf]
  %v77 = vld [vmem:[%s1 + $0xd4] sm:$0xf]
  %v78 = vld [vmem:[%s1 + $0xd8] sm:$0xf]
  %v79 = vld [vmem:[%s1 + $0xdc] sm:$0xf]
  %v80 = vld [vmem:[%s1 + $0xe0] sm:$0xf]
  %v81 = vld [vmem:[%s1 + $0xe4] sm:$0xf]
  %v82 = vld [vmem:[%s1 + $0xe8] sm:$0xf]
  %v83 = vld [vmem:[%s1 + $0xec] sm:$0xf]
  %v84 = vld [vmem:[%s1 + $0xf0] sm:$0xf]
  %v85 = vld [vmem:[%s1 + $0xf4] sm:$0xf]
  %v86 = vld [vmem:[%s1 + $0xf8] sm:$0xf]
  %v87 = vld [vmem:[%s1 + $0xfc] sm:$0xf]
  %v88 = vld [vmem:[%s1 + $0x100] sm:$0xf]
  %v89 = vld [vmem:[%s1 + $0x104] sm:$0xf]
  %v90 = vld [vmem:[%s1 + $0x108] sm:$0xf]
  %v91 = vld [vmem:[%s1 + $0x10c] sm:$0xf]
  %v92 = vld [vmem:[%s1 + $0x110] sm:$0xf]
  %v93 = vld [vmem:[%s1 + $0x114] sm:$0xf]
  %v94 = vld [vmem:[%s1 + $0x118] sm:$0xf]
  %v95 = vld [vmem:[%s1 + $0x11c] sm:$0xf]
  %v108 = vunpack.c.l.b16 %v12
  %v109 = vunpack.c.h.b16 %v12
  %v110 = vunpack.c.l.b16 %v13
  %v111 = vunpack.c.h.b16 %v13
  %v112 = vunpack.c.l.b16 %v14
  %v113 = vunpack.c.l.b16 %v15
  %v114 = vunpack.c.h.b16 %v15
  %v115 = vunpack.c.l.b16 %v16
  %v116 = vunpack.c.h.b16 %v16
  %v117 = vunpack.c.l.b16 %v17
  %v118 = vunpack.c.l.b16 %v18
  %v119 = vunpack.c.h.b16 %v18
  %v120 = vunpack.c.l.b16 %v19
  %v121 = vunpack.c.h.b16 %v19
  %v122 = vunpack.c.l.b16 %v20
  %v123 = vunpack.c.l.b16 %v21
  %v124 = vunpack.c.h.b16 %v21
  %v125 = vunpack.c.l.b16 %v22
  %v126 = vunpack.c.h.b16 %v22
  %v127 = vunpack.c.l.b16 %v23
  %v128 = vpack.c.b16 %v113, %v108
  %v129 = vpack.c.b16 %v114, %v109
  %v130 = vpack.c.b16 %v115, %v110
  %v131 = vpack.c.b16 %v116, %v111
  %v132 = vpack.c.b16 %v117, %v112
  %v133 = vpack.c.b16 %v123, %v118
  %v134 = vpack.c.b16 %v124, %v119
  %v135 = vpack.c.b16 %v125, %v120
  %v136 = vpack.c.b16 %v126, %v121
  %v137 = vpack.c.b16 %v127, %v122
  %v218 = vunpack.c.l.b16 %v24
  %v219 = vunpack.c.l.b16 %v25
  %v220 = vunpack.c.l.b16 %v26
  %v221 = vunpack.c.l.b16 %v27
  %v222 = vunpack.c.l.b16 %v28
  %v223 = vunpack.c.l.b16 %v29
  %v224 = vunpack.c.l.b16 %v30
  %v225 = vunpack.c.l.b16 %v31
  %v226 = vunpack.c.l.b16 %v32
  %v227 = vunpack.c.l.b16 %v33
  %v228 = vunpack.c.l.b16 %v34
  %v229 = vunpack.c.l.b16 %v35
  %v230 = vunpack.c.l.b16 %v36
  %v231 = vunpack.c.l.b16 %v37
  %v232 = vunpack.c.l.b16 %v38
  %v233 = vunpack.c.l.b16 %v39
  %v234 = vunpack.c.l.b16 %v40
  %v235 = vunpack.c.l.b16 %v41
  %v236 = vunpack.c.l.b16 %v42
  %v237 = vunpack.c.l.b16 %v43
  %v238 = vunpack.c.l.b16 %v44
  %v239 = vunpack.c.l.b16 %v45
  %v240 = vunpack.c.l.b16 %v46
  %v241 = vunpack.c.l.b16 %v47
  %v242 = vunpack.c.l.b16 %v48
  %v243 = vunpack.c.l.b16 %v49
  %v244 = vunpack.c.l.b16 %v50
  %v245 = vunpack.c.l.b16 %v51
  %v246 = vunpack.c.l.b16 %v52
  %v247 = vunpack.c.l.b16 %v53
  %v248 = vunpack.c.l.b16 %v54
  %v249 = vunpack.c.l.b16 %v55
  %v250 = vunpack.c.l.b16 %v56
  %v251 = vunpack.c.l.b16 %v57
  %v252 = vunpack.c.l.b16 %v58
  %v253 = vunpack.c.l.b16 %v59
  %v254 = vunpack.c.l.b16 %v60
  %v255 = vunpack.c.l.b16 %v61
  %v256 = vunpack.c.l.b16 %v62
  %v257 = vunpack.c.l.b16 %v63
  %v258 = vunpack.c.l.b16 %v64
  %v259 = vunpack.c.l.b16 %v65
  %v260 = vunpack.c.l.b16 %v66
  %v261 = vunpack.c.l.b16 %v67
  %v262 = vunpack.c.l.b16 %v68
  %v263 = vunpack.c.l.b16 %v69
  %v264 = vunpack.c.l.b16 %v70
  %v265 = vunpack.c.l.b16 %v71
  %v266 = vunpack.c.l.b16 %v72
  %v267 = vunpack.c.l.b16 %v73
  %v268 = vunpack.c.l.b16 %v74
  %v269 = vunpack.c.l.b16 %v75
  %v270 = vunpack.c.l.b16 %v76
  %v271 = vunpack.c.l.b16 %v77
  %v272 = vunpack.c.l.b16 %v78
  %v273 = vunpack.c.l.b16 %v79
  %v274 = vunpack.c.l.b16 %v80
  %v275 = vunpack.c.l.b16 %v81
  %v276 = vunpack.c.l.b16 %v82
  %v277 = vunpack.c.l.b16 %v83
  %v278 = vunpack.c.l.b16 %v84
  %v279 = vunpack.c.l.b16 %v85
  %v280 = vunpack.c.l.b16 %v86
  %v281 = vunpack.c.l.b16 %v87
  %v282 = vunpack.c.l.b16 %v88
  %v283 = vunpack.c.l.b16 %v89
  %v284 = vunpack.c.l.b16 %v90
  %v285 = vunpack.c.l.b16 %v91
  %v286 = vunpack.c.l.b16 %v92
  %v287 = vunpack.c.l.b16 %v93
  %v288 = vunpack.c.l.b16 %v94
  %v289 = vunpack.c.l.b16 %v95
  %v290 = vpack.c.b16 %v219, %v218
  %v291 = vpack.c.b16 %v221, %v220
  %v292 = vpack.c.b16 %v223, %v222
  %v293 = vpack.c.b16 %v225, %v224
  %v294 = vpack.c.b16 %v227, %v226
  %v295 = vpack.c.b16 %v229, %v228
  %v296 = vpack.c.b16 %v231, %v230
  %v297 = vpack.c.b16 %v233, %v232
  %v298 = vpack.c.b16 %v235, %v234
  %v299 = vpack.c.b16 %v237, %v236
  %v300 = vpack.c.b16 %v239, %v238
  %v301 = vpack.c.b16 %v241, %v240
  %v302 = vpack.c.b16 %v243, %v242
  %v303 = vpack.c.b16 %v245, %v244
  %v304 = vpack.c.b16 %v247, %v246
  %v305 = vpack.c.b16 %v249, %v248
  %v306 = vpack.c.b16 %v251, %v250
  %v307 = vpack.c.b16 %v253, %v252
  %v308 = vpack.c.b16 %v255, %v254
  %v309 = vpack.c.b16 %v257, %v256
  %v310 = vpack.c.b16 %v259, %v258
  %v311 = vpack.c.b16 %v261, %v260
  %v312 = vpack.c.b16 %v263, %v262
  %v313 = vpack.c.b16 %v265, %v264
  %v314 = vpack.c.b16 %v267, %v266
  %v315 = vpack.c.b16 %v269, %v268
  %v316 = vpack.c.b16 %v271, %v270
  %v317 = vpack.c.b16 %v273, %v272
  %v318 = vpack.c.b16 %v275, %v274
  %v319 = vpack.c.b16 %v277, %v276
  %v320 = vpack.c.b16 %v279, %v278
  %v321 = vpack.c.b16 %v281, %v280
  %v322 = vpack.c.b16 %v283, %v282
  %v323 = vpack.c.b16 %v285, %v284
  %v324 = vpack.c.b16 %v287, %v286
  %v325 = vpack.c.b16 %v289, %v288
  %vm362 = vcmask 523264
  %v364 = vsel %vm362, %v132, 0
  %v367 = vsel %vm362, %v137, 0
  %369 = vmatpush.bf16.msra.mxu0 %v297
  %370 = vmatpush.bf16.msra.mxu0 %v296
  %371 = vmatpush.bf16.msra.mxu0 %v295
  %372 = vmatpush.bf16.msra.mxu0 %v294
  %373 = vmatpush.bf16.msra.mxu0 %v293
  %374 = vmatpush.bf16.msra.mxu0 %v292
  %375 = vmatpush.bf16.msra.mxu0 %v291
  %376 = vmatpush.bf16.msra.mxu0 %v290
  %377 = vmatmul.bf16.gmra.mxu0 %v128
  %v378 = vpop.f32.mrf.mxu0
  %v379 = vadd.f32 0.0, %v378
  %v380 = vpop.f32.mrf.mxu0
  %v381 = vadd.f32 0.0, %v380
  %382 = vmatmul.bf16.gmra.mxu0 %v133
  %v383 = vpop.f32.mrf.mxu0
  %v384 = vadd.f32 0.0, %v383
  %v385 = vpop.f32.mrf.mxu0
  %v386 = vadd.f32 0.0, %v385
  %387 = vdwg.mxu0
  %388 = vmatpush.bf16.msra.mxu0 %v305
  %389 = vmatpush.bf16.msra.mxu0 %v304
  %390 = vmatpush.bf16.msra.mxu0 %v303
  %391 = vmatpush.bf16.msra.mxu0 %v302
  %392 = vmatpush.bf16.msra.mxu0 %v301
  %393 = vmatpush.bf16.msra.mxu0 %v300
  %394 = vmatpush.bf16.msra.mxu0 %v299
  %395 = vmatpush.bf16.msra.mxu0 %v298
  %396 = vmatmul.bf16.gmra.mxu0 %v129
  %v397 = vpop.f32.mrf.mxu0
  %v398 = vadd.f32 %v379, %v397
  %v399 = vpop.f32.mrf.mxu0
  %v400 = vadd.f32 %v381, %v399
  %401 = vmatmul.bf16.gmra.mxu0 %v134
  %v402 = vpop.f32.mrf.mxu0
  %v403 = vadd.f32 %v384, %v402
  %v404 = vpop.f32.mrf.mxu0
  %v405 = vadd.f32 %v386, %v404
  %406 = vdwg.mxu0
  %407 = vmatpush.bf16.msra.mxu0 %v313
  %408 = vmatpush.bf16.msra.mxu0 %v312
  %409 = vmatpush.bf16.msra.mxu0 %v311
  %410 = vmatpush.bf16.msra.mxu0 %v310
  %411 = vmatpush.bf16.msra.mxu0 %v309
  %412 = vmatpush.bf16.msra.mxu0 %v308
  %413 = vmatpush.bf16.msra.mxu0 %v307
  %414 = vmatpush.bf16.msra.mxu0 %v306
  %415 = vmatmul.bf16.gmra.mxu0 %v130
  %v416 = vpop.f32.mrf.mxu0
  %v417 = vadd.f32 %v398, %v416
  %v418 = vpop.f32.mrf.mxu0
  %v419 = vadd.f32 %v400, %v418
  %420 = vmatmul.bf16.gmra.mxu0 %v135
  %v421 = vpop.f32.mrf.mxu0
  %v422 = vadd.f32 %v403, %v421
  %v423 = vpop.f32.mrf.mxu0
  %v424 = vadd.f32 %v405, %v423
  %425 = vdwg.mxu0
  %426 = vmatpush.bf16.msra.mxu0 %v321
  %427 = vmatpush.bf16.msra.mxu0 %v320
  %428 = vmatpush.bf16.msra.mxu0 %v319
  %429 = vmatpush.bf16.msra.mxu0 %v318
  %430 = vmatpush.bf16.msra.mxu0 %v317
  %431 = vmatpush.bf16.msra.mxu0 %v316
  %432 = vmatpush.bf16.msra.mxu0 %v315
  %433 = vmatpush.bf16.msra.mxu0 %v314
  %434 = vmatmul.bf16.gmra.mxu0 %v131
  %v435 = vpop.f32.mrf.mxu0
  %v436 = vadd.f32 %v417, %v435
  %v437 = vpop.f32.mrf.mxu0
  %v438 = vadd.f32 %v419, %v437
  %439 = vmatmul.bf16.gmra.mxu0 %v136
  %v440 = vpop.f32.mrf.mxu0
  %v441 = vadd.f32 %v422, %v440
  %v442 = vpop.f32.mrf.mxu0
  %v443 = vadd.f32 %v424, %v442
  %444 = vdwg.mxu0
  %445 = vmatpush.bf16.msra.mxu0 0
  %446 = vmatpush.bf16.msra.mxu0 0
  %447 = vmatpush.bf16.msra.mxu0 0
  %448 = vmatpush.bf16.msra.mxu0 0
  %449 = vmatpush.bf16.msra.mxu0 %v325
  %450 = vmatpush.bf16.msra.mxu0 %v324
  %451 = vmatpush.bf16.msra.mxu0 %v323
  %452 = vmatpush.bf16.msra.mxu0 %v322
  %453 = vmatmul.bf16.gmra.mxu0 %v364
  %v454 = vpop.f32.mrf.mxu0
  %v455 = vadd.f32 %v436, %v454
  %v456 = vpop.f32.mrf.mxu0
  %v457 = vadd.f32 %v438, %v456
  %458 = vmatmul.bf16.gmra.mxu0 %v367
  %v459 = vpop.f32.mrf.mxu0
  %v460 = vadd.f32 %v441, %v459
  %v461 = vpop.f32.mrf.mxu0
  %v462 = vadd.f32 %v443, %v461
  %463 = vdwg.mxu0
  %v464 = vpack.c.bf16 %v455, %v455
  %v465 = vpack.c.bf16 %v457, %v457
  %v466 = vpack.c.bf16 %v460, %v460
  %v467 = vpack.c.bf16 %v462, %v462
  %468 = vst [vmem:[%s2] sm:$0xf] %v464
  %469 = vst [vmem:[%s2 + $0x4] sm:$0xf] %v465
  %470 = vst [vmem:[%s2 + $0x8] sm:$0xf] %v466
  %471 = vst [vmem:[%s2 + $0xc] sm:$0xf] %v467
  // Predicated region
  $region10: #{aeresnet_forward.72} parent=0 // pred_check
    _
  $region11: #{aeresnet_forward.72} parent=0 // pred_check_branch
    %473 = sbr.rel (0) target = $region13
  $region12: #{aeresnet_forward.72} parent=0 // pred_region
    _
  $region13: #{aeresnet_forward.72} parent=0 // pred_fallthru
    _
  // Predicated region
  $region14: #{aeresnet_forward.72} parent=0 // pred_check
    _
  $region15: #{aeresnet_forward.72} parent=0 // pred_check_branch
    %475 = sbr.rel (0) target = $region17
  $region16: #{aeresnet_forward.72} parent=0 // pred_region
    _
  $region17: #{aeresnet_forward.72} parent=0 // pred_fallthru
    _

// kernel: aeresnet_forward.73
$region0: #{aeresnet_forward.73}
  #allocation0 [shape = 'u32[]', space=smem, size = 0x4, offset = 0x4, fixed_abs, tag = 'smem constant byte address 0x4 - core index']
  #allocation1 [shape = 'u32[72,128]{1,0:T(1,128)}', space=vmem, size = 0x9000, scoped, tag = 'internal scratch']
  %s0 = inlined_call_operand.vmem [shape: bf16[16,576], index: 0, kind: input, shape index: {}]
  %s1 = inlined_call_operand.vmem [shape: bf16[576,128], index: 1, kind: input, shape index: {}]
  %s2 = inlined_call_operand.vmem [shape: bf16[16,128], index: 2, kind: output, shape index: {}]
  %s3 = sld [smem:[#allocation0]]
  $region18: #{aeresnet_forward.73} parent=0
    _
  %s5 = ssub.s32 1, %s3
  %s6 = scalar_select 0, %s5, %s3
  // Predicated region
  $region2: #{aeresnet_forward.73} parent=0 // pred_check
    _
  $region3: #{aeresnet_forward.73} parent=0 // pred_check_branch
    %8 = sbr.rel (0) target = $region5
  $region4: #{aeresnet_forward.73} parent=0 // pred_region
    _
  $region5: #{aeresnet_forward.73} parent=0 // pred_fallthru
    _
  // Predicated region
  $region6: #{aeresnet_forward.73} parent=0 // pred_check
    _
  $region7: #{aeresnet_forward.73} parent=0 // pred_check_branch
    %10 = sbr.rel (0) target = $region9
  $region8: #{aeresnet_forward.73} parent=0 // pred_region
    _
  $region9: #{aeresnet_forward.73} parent=0 // pred_fallthru
    _
  %v12 = vld [vmem:[%s0] sm:$0xff]
  %v13 = vld [vmem:[%s0 + $0x8] sm:$0xff]
  %v14 = vld [vmem:[%s0 + $0x10] sm:$0xf]
  %v15 = vld [vmem:[%s0 + $0x14] sm:$0xff]
  %v16 = vld [vmem:[%s0 + $0x1c] sm:$0xff]
  %v17 = vld [vmem:[%s0 + $0x24] sm:$0xf]
  %v18 = vld [vmem:[%s1] sm:$0xf]
  %v19 = vld [vmem:[%s1 + $0x4] sm:$0xf]
  %v20 = vld [vmem:[%s1 + $0x8] sm:$0xf]
  %v21 = vld [vmem:[%s1 + $0xc] sm:$0xf]
  %v22 = vld [vmem:[%s1 + $0x10] sm:$0xf]
  %v23 = vld [vmem:[%s1 + $0x14] sm:$0xf]
  %v24 = vld [vmem:[%s1 + $0x18] sm:$0xf]
  %v25 = vld [vmem:[%s1 + $0x1c] sm:$0xf]
  %v26 = vld [vmem:[%s1 + $0x20] sm:$0xf]
  %v27 = vld [vmem:[%s1 + $0x24] sm:$0xf]
  %v28 = vld [vmem:[%s1 + $0x28] sm:$0xf]
  %v29 = vld [vmem:[%s1 + $0x2c] sm:$0xf]
  %v30 = vld [vmem:[%s1 + $0x30] sm:$0xf]
  %v31 = vld [vmem:[%s1 + $0x34] sm:$0xf]
  %v32 = vld [vmem:[%s1 + $0x38] sm:$0xf]
  %v33 = vld [vmem:[%s1 + $0x3c] sm:$0xf]
  %v34 = vld [vmem:[%s1 + $0x40] sm:$0xf]
  %v35 = vld [vmem:[%s1 + $0x44] sm:$0xf]
  %v36 = vld [vmem:[%s1 + $0x48] sm:$0xf]
  %v37 = vld [vmem:[%s1 + $0x4c] sm:$0xf]
  %v38 = vld [vmem:[%s1 + $0x50] sm:$0xf]
  %v39 = vld [vmem:[%s1 + $0x54] sm:$0xf]
  %v40 = vld [vmem:[%s1 + $0x58] sm:$0xf]
  %v41 = vld [vmem:[%s1 + $0x5c] sm:$0xf]
  %v42 = vld [vmem:[%s1 + $0x60] sm:$0xf]
  %v43 = vld [vmem:[%s1 + $0x64] sm:$0xf]
  %v44 = vld [vmem:[%s1 + $0x68] sm:$0xf]
  %v45 = vld [vmem:[%s1 + $0x6c] sm:$0xf]
  %v46 = vld [vmem:[%s1 + $0x70] sm:$0xf]
  %v47 = vld [vmem:[%s1 + $0x74] sm:$0xf]
  %v48 = vld [vmem:[%s1 + $0x78] sm:$0xf]
  %v49 = vld [vmem:[%s1 + $0x7c] sm:$0xf]
  %v50 = vld [vmem:[%s1 + $0x80] sm:$0xf]
  %v51 = vld [vmem:[%s1 + $0x84] sm:$0xf]
  %v52 = vld [vmem:[%s1 + $0x88] sm:$0xf]
  %v53 = vld [vmem:[%s1 + $0x8c] sm:$0xf]
  %v54 = vld [vmem:[%s1 + $0x90] sm:$0xf]
  %v55 = vld [vmem:[%s1 + $0x94] sm:$0xf]
  %v56 = vld [vmem:[%s1 + $0x98] sm:$0xf]
  %v57 = vld [vmem:[%s1 + $0x9c] sm:$0xf]
  %v58 = vld [vmem:[%s1 + $0xa0] sm:$0xf]
  %v59 = vld [vmem:[%s1 + $0xa4] sm:$0xf]
  %v60 = vld [vmem:[%s1 + $0xa8] sm:$0xf]
  %v61 = vld [vmem:[%s1 + $0xac] sm:$0xf]
  %v62 = vld [vmem:[%s1 + $0xb0] sm:$0xf]
  %v63 = vld [vmem:[%s1 + $0xb4] sm:$0xf]
  %v64 = vld [vmem:[%s1 + $0xb8] sm:$0xf]
  %v65 = vld [vmem:[%s1 + $0xbc] sm:$0xf]
  %v66 = vld [vmem:[%s1 + $0xc0] sm:$0xf]
  %v67 = vld [vmem:[%s1 + $0xc4] sm:$0xf]
  %v68 = vld [vmem:[%s1 + $0xc8] sm:$0xf]
  %v69 = vld [vmem:[%s1 + $0xcc] sm:$0xf]
  %v70 = vld [vmem:[%s1 + $0xd0] sm:$0xf]
  %v71 = vld [vmem:[%s1 + $0xd4] sm:$0xf]
  %v72 = vld [vmem:[%s1 + $0xd8] sm:$0xf]
  %v73 = vld [vmem:[%s1 + $0xdc] sm:$0xf]
  %v74 = vld [vmem:[%s1 + $0xe0] sm:$0xf]
  %v75 = vld [vmem:[%s1 + $0xe4] sm:$0xf]
  %v76 = vld [vmem:[%s1 + $0xe8] sm:$0xf]
  %v77 = vld [vmem:[%s1 + $0xec] sm:$0xf]
  %v78 = vld [vmem:[%s1 + $0xf0] sm:$0xf]
  %v79 = vld [vmem:[%s1 + $0xf4] sm:$0xf]
  %v80 = vld [vmem:[%s1 + $0xf8] sm:$0xf]
  %v81 = vld [vmem:[%s1 + $0xfc] sm:$0xf]
  %v82 = vld [vmem:[%s1 + $0x100] sm:$0xf]
  %v83 = vld [vmem:[%s1 + $0x104] sm:$0xf]
  %v84 = vld [vmem:[%s1 + $0x108] sm:$0xf]
  %v85 = vld [vmem:[%s1 + $0x10c] sm:$0xf]
  %v86 = vld [vmem:[%s1 + $0x110] sm:$0xf]
  %v87 = vld [vmem:[%s1 + $0x114] sm:$0xf]
  %v88 = vld [vmem:[%s1 + $0x118] sm:$0xf]
  %v89 = vld [vmem:[%s1 + $0x11c] sm:$0xf]
  %v96 = vunpack.c.l.b16 %v12
  %v97 = vunpack.c.h.b16 %v12
  %v98 = vunpack.c.l.b16 %v13
  %v99 = vunpack.c.h.b16 %v13
  %v100 = vunpack.c.l.b16 %v14
  %v101 = vunpack.c.l.b16 %v15
  %v102 = vunpack.c.h.b16 %v15
  %v103 = vunpack.c.l.b16 %v16
  %v104 = vunpack.c.h.b16 %v16
  %v105 = vunpack.c.l.b16 %v17
  %v106 = vpack.c.b16 %v101, %v96
  %v107 = vpack.c.b16 %v102, %v97
  %v108 = vpack.c.b16 %v103, %v98
  %v109 = vpack.c.b16 %v104, %v99
  %v110 = vpack.c.b16 %v105, %v100
  %v187 = vunpack.c.l.b16 %v18
  %v188 = vunpack.c.l.b16 %v19
  %v189 = vunpack.c.l.b16 %v20
  %v190 = vunpack.c.l.b16 %v21
  %v191 = vunpack.c.l.b16 %v22
  %v192 = vunpack.c.l.b16 %v23
  %v193 = vunpack.c.l.b16 %v24
  %v194 = vunpack.c.l.b16 %v25
  %v195 = vunpack.c.l.b16 %v26
  %v196 = vunpack.c.l.b16 %v27
  %v197 = vunpack.c.l.b16 %v28
  %v198 = vunpack.c.l.b16 %v29
  %v199 = vunpack.c.l.b16 %v30
  %v200 = vunpack.c.l.b16 %v31
  %v201 = vunpack.c.l.b16 %v32
  %v202 = vunpack.c.l.b16 %v33
  %v203 = vunpack.c.l.b16 %v34
  %v204 = vunpack.c.l.b16 %v35
  %v205 = vunpack.c.l.b16 %v36
  %v206 = vunpack.c.l.b16 %v37
  %v207 = vunpack.c.l.b16 %v38
  %v208 = vunpack.c.l.b16 %v39
  %v209 = vunpack.c.l.b16 %v40
  %v210 = vunpack.c.l.b16 %v41
  %v211 = vunpack.c.l.b16 %v42
  %v212 = vunpack.c.l.b16 %v43
  %v213 = vunpack.c.l.b16 %v44
  %v214 = vunpack.c.l.b16 %v45
  %v215 = vunpack.c.l.b16 %v46
  %v216 = vunpack.c.l.b16 %v47
  %v217 = vunpack.c.l.b16 %v48
  %v218 = vunpack.c.l.b16 %v49
  %v219 = vunpack.c.l.b16 %v50
  %v220 = vunpack.c.l.b16 %v51
  %v221 = vunpack.c.l.b16 %v52
  %v222 = vunpack.c.l.b16 %v53
  %v223 = vunpack.c.l.b16 %v54
  %v224 = vunpack.c.l.b16 %v55
  %v225 = vunpack.c.l.b16 %v56
  %v226 = vunpack.c.l.b16 %v57
  %v227 = vunpack.c.l.b16 %v58
  %v228 = vunpack.c.l.b16 %v59
  %v229 = vunpack.c.l.b16 %v60
  %v230 = vunpack.c.l.b16 %v61
  %v231 = vunpack.c.l.b16 %v62
  %v232 = vunpack.c.l.b16 %v63
  %v233 = vunpack.c.l.b16 %v64
  %v234 = vunpack.c.l.b16 %v65
  %v235 = vunpack.c.l.b16 %v66
  %v236 = vunpack.c.l.b16 %v67
  %v237 = vunpack.c.l.b16 %v68
  %v238 = vunpack.c.l.b16 %v69
  %v239 = vunpack.c.l.b16 %v70
  %v240 = vunpack.c.l.b16 %v71
  %v241 = vunpack.c.l.b16 %v72
  %v242 = vunpack.c.l.b16 %v73
  %v243 = vunpack.c.l.b16 %v74
  %v244 = vunpack.c.l.b16 %v75
  %v245 = vunpack.c.l.b16 %v76
  %v246 = vunpack.c.l.b16 %v77
  %v247 = vunpack.c.l.b16 %v78
  %v248 = vunpack.c.l.b16 %v79
  %v249 = vunpack.c.l.b16 %v80
  %v250 = vunpack.c.l.b16 %v81
  %v251 = vunpack.c.l.b16 %v82
  %v252 = vunpack.c.l.b16 %v83
  %v253 = vunpack.c.l.b16 %v84
  %v254 = vunpack.c.l.b16 %v85
  %v255 = vunpack.c.l.b16 %v86
  %v256 = vunpack.c.l.b16 %v87
  %v257 = vunpack.c.l.b16 %v88
  %v258 = vunpack.c.l.b16 %v89
  %v259 = vpack.c.b16 %v188, %v187
  %v260 = vpack.c.b16 %v190, %v189
  %v261 = vpack.c.b16 %v192, %v191
  %v262 = vpack.c.b16 %v194, %v193
  %v263 = vpack.c.b16 %v196, %v195
  %v264 = vpack.c.b16 %v198, %v197
  %v265 = vpack.c.b16 %v200, %v199
  %v266 = vpack.c.b16 %v202, %v201
  %v267 = vpack.c.b16 %v204, %v203
  %v268 = vpack.c.b16 %v206, %v205
  %v269 = vpack.c.b16 %v208, %v207
  %v270 = vpack.c.b16 %v210, %v209
  %v271 = vpack.c.b16 %v212, %v211
  %v272 = vpack.c.b16 %v214, %v213
  %v273 = vpack.c.b16 %v216, %v215
  %v274 = vpack.c.b16 %v218, %v217
  %v275 = vpack.c.b16 %v220, %v219
  %v276 = vpack.c.b16 %v222, %v221
  %v277 = vpack.c.b16 %v224, %v223
  %v278 = vpack.c.b16 %v226, %v225
  %v279 = vpack.c.b16 %v228, %v227
  %v280 = vpack.c.b16 %v230, %v229
  %v281 = vpack.c.b16 %v232, %v231
  %v282 = vpack.c.b16 %v234, %v233
  %v283 = vpack.c.b16 %v236, %v235
  %v284 = vpack.c.b16 %v238, %v237
  %v285 = vpack.c.b16 %v240, %v239
  %v286 = vpack.c.b16 %v242, %v241
  %v287 = vpack.c.b16 %v244, %v243
  %v288 = vpack.c.b16 %v246, %v245
  %v289 = vpack.c.b16 %v248, %v247
  %v290 = vpack.c.b16 %v250, %v249
  %v291 = vpack.c.b16 %v252, %v251
  %v292 = vpack.c.b16 %v254, %v253
  %v293 = vpack.c.b16 %v256, %v255
  %v294 = vpack.c.b16 %v258, %v257
  %vm331 = vcmask 523264
  %v333 = vsel %vm331, %v110, 0
  %335 = vmatpush.bf16.msra.mxu0 %v266
  %336 = vmatpush.bf16.msra.mxu0 %v265
  %337 = vmatpush.bf16.msra.mxu0 %v264
  %338 = vmatpush.bf16.msra.mxu0 %v263
  %339 = vmatpush.bf16.msra.mxu0 %v262
  %340 = vmatpush.bf16.msra.mxu0 %v261
  %341 = vmatpush.bf16.msra.mxu0 %v260
  %342 = vmatpush.bf16.msra.mxu0 %v259
  %343 = vmatmul.bf16.gmra.mxu0 %v106
  %v344 = vpop.f32.mrf.mxu0
  %v345 = vadd.f32 0.0, %v344
  %v346 = vpop.f32.mrf.mxu0
  %v347 = vadd.f32 0.0, %v346
  %348 = vdwg.mxu0
  %349 = vmatpush.bf16.msra.mxu0 %v274
  %350 = vmatpush.bf16.msra.mxu0 %v273
  %351 = vmatpush.bf16.msra.mxu0 %v272
  %352 = vmatpush.bf16.msra.mxu0 %v271
  %353 = vmatpush.bf16.msra.mxu0 %v270
  %354 = vmatpush.bf16.msra.mxu0 %v269
  %355 = vmatpush.bf16.msra.mxu0 %v268
  %356 = vmatpush.bf16.msra.mxu0 %v267
  %357 = vmatmul.bf16.gmra.mxu0 %v107
  %v358 = vpop.f32.mrf.mxu0
  %v359 = vadd.f32 %v345, %v358
  %v360 = vpop.f32.mrf.mxu0
  %v361 = vadd.f32 %v347, %v360
  %362 = vdwg.mxu0
  %363 = vmatpush.bf16.msra.mxu0 %v282
  %364 = vmatpush.bf16.msra.mxu0 %v281
  %365 = vmatpush.bf16.msra.mxu0 %v280
  %366 = vmatpush.bf16.msra.mxu0 %v279
  %367 = vmatpush.bf16.msra.mxu0 %v278
  %368 = vmatpush.bf16.msra.mxu0 %v277
  %369 = vmatpush.bf16.msra.mxu0 %v276
  %370 = vmatpush.bf16.msra.mxu0 %v275
  %371 = vmatmul.bf16.gmra.mxu0 %v108
  %v372 = vpop.f32.mrf.mxu0
  %v373 = vadd.f32 %v359, %v372
  %v374 = vpop.f32.mrf.mxu0
  %v375 = vadd.f32 %v361, %v374
  %376 = vdwg.mxu0
  %377 = vmatpush.bf16.msra.mxu0 %v290
  %378 = vmatpush.bf16.msra.mxu0 %v289
  %379 = vmatpush.bf16.msra.mxu0 %v288
  %380 = vmatpush.bf16.msra.mxu0 %v287
  %381 = vmatpush.bf16.msra.mxu0 %v286
  %382 = vmatpush.bf16.msra.mxu0 %v285
  %383 = vmatpush.bf16.msra.mxu0 %v284
  %384 = vmatpush.bf16.msra.mxu0 %v283
  %385 = vmatmul.bf16.gmra.mxu0 %v109
  %v386 = vpop.f32.mrf.mxu0
  %v387 = vadd.f32 %v373, %v386
  %v388 = vpop.f32.mrf.mxu0
  %v389 = vadd.f32 %v375, %v388
  %390 = vdwg.mxu0
  %391 = vmatpush.bf16.msra.mxu0 0
  %392 = vmatpush.bf16.msra.mxu0 0
  %393 = vmatpush.bf16.msra.mxu0 0
  %394 = vmatpush.bf16.msra.mxu0 0
  %395 = vmatpush.bf16.msra.mxu0 %v294
  %396 = vmatpush.bf16.msra.mxu0 %v293
  %397 = vmatpush.bf16.msra.mxu0 %v292
  %398 = vmatpush.bf16.msra.mxu0 %v291
  %399 = vmatmul.bf16.gmra.mxu0 %v333
  %v400 = vpop.f32.mrf.mxu0
  %v401 = vadd.f32 %v387, %v400
  %v402 = vpop.f32.mrf.mxu0
  %v403 = vadd.f32 %v389, %v402
  %404 = vdwg.mxu0
  %v405 = vpack.c.bf16 %v401, %v401
  %v406 = vpack.c.bf16 %v403, %v403
  %407 = vst [vmem:[%s2] sm:$0xf] %v405
  %408 = vst [vmem:[%s2 + $0x4] sm:$0xf] %v406
  // Predicated region
  $region10: #{aeresnet_forward.73} parent=0 // pred_check
    _
  $region11: #{aeresnet_forward.73} parent=0 // pred_check_branch
    %410 = sbr.rel (0) target = $region13
  $region12: #{aeresnet_forward.73} parent=0 // pred_region
    _
  $region13: #{aeresnet_forward.73} parent=0 // pred_fallthru
    _
  // Predicated region
  $region14: #{aeresnet_forward.73} parent=0 // pred_check
    _
  $region15: #{aeresnet_forward.73} parent=0 // pred_check_branch
    %412 = sbr.rel (0) target = $region17
  $region16: #{aeresnet_forward.73} parent=0 // pred_region
    _
  $region17: #{aeresnet_forward.73} parent=0 // pred_fallthru
    _

// kernel: aeresnet_forward.75
$region0: #{aeresnet_forward.75}
  #allocation0 [shape = 'u32[]', space=smem, size = 0x4, offset = 0x4, fixed_abs, tag = 'smem constant byte address 0x4 - core index']
  #allocation1 [shape = 'u32[72,128]{1,0:T(1,128)}', space=vmem, size = 0x9000, scoped, tag = 'internal scratch']
  %s0 = inlined_call_operand.vmem [shape: bf16[16,256], index: 0, kind: input, shape index: {}]
  %s1 = inlined_call_operand.vmem [shape: bf16[256,256], index: 1, kind: input, shape index: {}]
  %s2 = inlined_call_operand.vmem [shape: bf16[16,256], index: 2, kind: output, shape index: {}]
  %s3 = sld [smem:[#allocation0]]
  $region18: #{aeresnet_forward.75} parent=0
    _
  %s5 = ssub.s32 1, %s3
  %s6 = scalar_select 0, %s5, %s3
  // Predicated region
  $region2: #{aeresnet_forward.75} parent=0 // pred_check
    _
  $region3: #{aeresnet_forward.75} parent=0 // pred_check_branch
    %8 = sbr.rel (0) target = $region5
  $region4: #{aeresnet_forward.75} parent=0 // pred_region
    _
  $region5: #{aeresnet_forward.75} parent=0 // pred_fallthru
    _
  // Predicated region
  $region6: #{aeresnet_forward.75} parent=0 // pred_check
    _
  $region7: #{aeresnet_forward.75} parent=0 // pred_check_branch
    %10 = sbr.rel (0) target = $region9
  $region8: #{aeresnet_forward.75} parent=0 // pred_region
    _
  $region9: #{aeresnet_forward.75} parent=0 // pred_fallthru
    _
  %v11 = vld [vmem:[%s0] sm:$0xff]
  %v12 = vld [vmem:[%s0 + $0x8] sm:$0xff]
  %v13 = vld [vmem:[%s1] sm:$0xff]
  %v14 = vld [vmem:[%s1 + $0x8] sm:$0xff]
  %v15 = vld [vmem:[%s1 + $0x10] sm:$0xff]
  %v16 = vld [vmem:[%s1 + $0x18] sm:$0xff]
  %v17 = vld [vmem:[%s1 + $0x20] sm:$0xff]
  %v18 = vld [vmem:[%s1 + $0x28] sm:$0xff]
  %v19 = vld [vmem:[%s1 + $0x30] sm:$0xff]
  %v20 = vld [vmem:[%s1 + $0x38] sm:$0xff]
  %v21 = vld [vmem:[%s1 + $0x40] sm:$0xff]
  %v22 = vld [vmem:[%s1 + $0x48] sm:$0xff]
  %v23 = vld [vmem:[%s1 + $0x50] sm:$0xff]
  %v24 = vld [vmem:[%s1 + $0x58] sm:$0xff]
  %v25 = vld [vmem:[%s1 + $0x60] sm:$0xff]
  %v26 = vld [vmem:[%s1 + $0x68] sm:$0xff]
  %v27 = vld [vmem:[%s1 + $0x70] sm:$0xff]
  %v28 = vld [vmem:[%s1 + $0x78] sm:$0xff]
  %v29 = vld [vmem:[%s1 + $0x80] sm:$0xff]
  %v30 = vld [vmem:[%s1 + $0x88] sm:$0xff]
  %v31 = vld [vmem:[%s1 + $0x90] sm:$0xff]
  %v32 = vld [vmem:[%s1 + $0x98] sm:$0xff]
  %v33 = vld [vmem:[%s1 + $0xa0] sm:$0xff]
  %v34 = vld [vmem:[%s1 + $0xa8] sm:$0xff]
  %v35 = vld [vmem:[%s1 + $0xb0] sm:$0xff]
  %v36 = vld [vmem:[%s1 + $0xb8] sm:$0xff]
  %v37 = vld [vmem:[%s1 + $0xc0] sm:$0xff]
  %v38 = vld [vmem:[%s1 + $0xc8] sm:$0xff]
  %v39 = vld [vmem:[%s1 + $0xd0] sm:$0xff]
  %v40 = vld [vmem:[%s1 + $0xd8] sm:$0xff]
  %v41 = vld [vmem:[%s1 + $0xe0] sm:$0xff]
  %v42 = vld [vmem:[%s1 + $0xe8] sm:$0xff]
  %v43 = vld [vmem:[%s1 + $0xf0] sm:$0xff]
  %v44 = vld [vmem:[%s1 + $0xf8] sm:$0xff]
  %v47 = vunpack.c.l.b16 %v11
  %v48 = vunpack.c.h.b16 %v11
  %v49 = vunpack.c.l.b16 %v12
  %v50 = vunpack.c.h.b16 %v12
  %v51 = vpack.c.b16 %v49, %v47
  %v52 = vpack.c.b16 %v50, %v48
  %v87 = vunpack.c.l.b16 %v13
  %v88 = vunpack.c.h.b16 %v13
  %v89 = vunpack.c.l.b16 %v14
  %v90 = vunpack.c.h.b16 %v14
  %v91 = vunpack.c.l.b16 %v15
  %v92 = vunpack.c.h.b16 %v15
  %v93 = vunpack.c.l.b16 %v16
  %v94 = vunpack.c.h.b16 %v16
  %v95 = vunpack.c.l.b16 %v17
  %v96 = vunpack.c.h.b16 %v17
  %v97 = vunpack.c.l.b16 %v18
  %v98 = vunpack.c.h.b16 %v18
  %v99 = vunpack.c.l.b16 %v19
  %v100 = vunpack.c.h.b16 %v19
  %v101 = vunpack.c.l.b16 %v20
  %v102 = vunpack.c.h.b16 %v20
  %v103 = vunpack.c.l.b16 %v21
  %v104 = vunpack.c.h.b16 %v21
  %v105 = vunpack.c.l.b16 %v22
  %v106 = vunpack.c.h.b16 %v22
  %v107 = vunpack.c.l.b16 %v23
  %v108 = vunpack.c.h.b16 %v23
  %v109 = vunpack.c.l.b16 %v24
  %v110 = vunpack.c.h.b16 %v24
  %v111 = vunpack.c.l.b16 %v25
  %v112 = vunpack.c.h.b16 %v25
  %v113 = vunpack.c.l.b16 %v26
  %v114 = vunpack.c.h.b16 %v26
  %v115 = vunpack.c.l.b16 %v27
  %v116 = vunpack.c.h.b16 %v27
  %v117 = vunpack.c.l.b16 %v28
  %v118 = vunpack.c.h.b16 %v28
  %v119 = vunpack.c.l.b16 %v29
  %v120 = vunpack.c.h.b16 %v29
  %v121 = vunpack.c.l.b16 %v30
  %v122 = vunpack.c.h.b16 %v30
  %v123 = vunpack.c.l.b16 %v31
  %v124 = vunpack.c.h.b16 %v31
  %v125 = vunpack.c.l.b16 %v32
  %v126 = vunpack.c.h.b16 %v32
  %v127 = vunpack.c.l.b16 %v33
  %v128 = vunpack.c.h.b16 %v33
  %v129 = vunpack.c.l.b16 %v34
  %v130 = vunpack.c.h.b16 %v34
  %v131 = vunpack.c.l.b16 %v35
  %v132 = vunpack.c.h.b16 %v35
  %v133 = vunpack.c.l.b16 %v36
  %v134 = vunpack.c.h.b16 %v36
  %v135 = vunpack.c.l.b16 %v37
  %v136 = vunpack.c.h.b16 %v37
  %v137 = vunpack.c.l.b16 %v38
  %v138 = vunpack.c.h.b16 %v38
  %v139 = vunpack.c.l.b16 %v39
  %v140 = vunpack.c.h.b16 %v39
  %v141 = vunpack.c.l.b16 %v40
  %v142 = vunpack.c.h.b16 %v40
  %v143 = vunpack.c.l.b16 %v41
  %v144 = vunpack.c.h.b16 %v41
  %v145 = vunpack.c.l.b16 %v42
  %v146 = vunpack.c.h.b16 %v42
  %v147 = vunpack.c.l.b16 %v43
  %v148 = vunpack.c.h.b16 %v43
  %v149 = vunpack.c.l.b16 %v44
  %v150 = vunpack.c.h.b16 %v44
  %v151 = vpack.c.b16 %v89, %v87
  %v152 = vpack.c.b16 %v90, %v88
  %v153 = vpack.c.b16 %v93, %v91
  %v154 = vpack.c.b16 %v94, %v92
  %v155 = vpack.c.b16 %v97, %v95
  %v156 = vpack.c.b16 %v98, %v96
  %v157 = vpack.c.b16 %v101, %v99
  %v158 = vpack.c.b16 %v102, %v100
  %v159 = vpack.c.b16 %v105, %v103
  %v160 = vpack.c.b16 %v106, %v104
  %v161 = vpack.c.b16 %v109, %v107
  %v162 = vpack.c.b16 %v110, %v108
  %v163 = vpack.c.b16 %v113, %v111
  %v164 = vpack.c.b16 %v114, %v112
  %v165 = vpack.c.b16 %v117, %v115
  %v166 = vpack.c.b16 %v118, %v116
  %v167 = vpack.c.b16 %v121, %v119
  %v168 = vpack.c.b16 %v122, %v120
  %v169 = vpack.c.b16 %v125, %v123
  %v170 = vpack.c.b16 %v126, %v124
  %v171 = vpack.c.b16 %v129, %v127
  %v172 = vpack.c.b16 %v130, %v128
  %v173 = vpack.c.b16 %v133, %v131
  %v174 = vpack.c.b16 %v134, %v132
  %v175 = vpack.c.b16 %v137, %v135
  %v176 = vpack.c.b16 %v138, %v136
  %v177 = vpack.c.b16 %v141, %v139
  %v178 = vpack.c.b16 %v142, %v140
  %v179 = vpack.c.b16 %v145, %v143
  %v180 = vpack.c.b16 %v146, %v144
  %v181 = vpack.c.b16 %v149, %v147
  %v182 = vpack.c.b16 %v150, %v148
  %215 = vmatpush.bf16.msra.mxu0 %v165
  %216 = vmatpush.bf16.msra.mxu0 %v163
  %217 = vmatpush.bf16.msra.mxu0 %v161
  %218 = vmatpush.bf16.msra.mxu0 %v159
  %219 = vmatpush.bf16.msra.mxu0 %v157
  %220 = vmatpush.bf16.msra.mxu0 %v155
  %221 = vmatpush.bf16.msra.mxu0 %v153
  %222 = vmatpush.bf16.msra.mxu0 %v151
  %223 = vmatmul.bf16.gmra.mxu0 %v51
  %v224 = vpop.f32.mrf.mxu0
  %v225 = vadd.f32 0.0, %v224
  %v226 = vpop.f32.mrf.mxu0
  %v227 = vadd.f32 0.0, %v226
  %228 = vdwg.mxu0
  %229 = vmatpush.bf16.msra.mxu0 %v181
  %230 = vmatpush.bf16.msra.mxu0 %v179
  %231 = vmatpush.bf16.msra.mxu0 %v177
  %232 = vmatpush.bf16.msra.mxu0 %v175
  %233 = vmatpush.bf16.msra.mxu0 %v173
  %234 = vmatpush.bf16.msra.mxu0 %v171
  %235 = vmatpush.bf16.msra.mxu0 %v169
  %236 = vmatpush.bf16.msra.mxu0 %v167
  %237 = vmatmul.bf16.gmra.mxu0 %v52
  %v238 = vpop.f32.mrf.mxu0
  %v239 = vadd.f32 %v225, %v238
  %v240 = vpop.f32.mrf.mxu0
  %v241 = vadd.f32 %v227, %v240
  %242 = vdwg.mxu0
  %243 = vmatpush.bf16.msra.mxu0 %v166
  %244 = vmatpush.bf16.msra.mxu0 %v164
  %245 = vmatpush.bf16.msra.mxu0 %v162
  %246 = vmatpush.bf16.msra.mxu0 %v160
  %247 = vmatpush.bf16.msra.mxu0 %v158
  %248 = vmatpush.bf16.msra.mxu0 %v156
  %249 = vmatpush.bf16.msra.mxu0 %v154
  %250 = vmatpush.bf16.msra.mxu0 %v152
  %251 = vmatmul.bf16.gmra.mxu0 %v51
  %v252 = vpop.f32.mrf.mxu0
  %v253 = vadd.f32 0.0, %v252
  %v254 = vpop.f32.mrf.mxu0
  %v255 = vadd.f32 0.0, %v254
  %256 = vdwg.mxu0
  %257 = vmatpush.bf16.msra.mxu0 %v182
  %258 = vmatpush.bf16.msra.mxu0 %v180
  %259 = vmatpush.bf16.msra.mxu0 %v178
  %260 = vmatpush.bf16.msra.mxu0 %v176
  %261 = vmatpush.bf16.msra.mxu0 %v174
  %262 = vmatpush.bf16.msra.mxu0 %v172
  %263 = vmatpush.bf16.msra.mxu0 %v170
  %264 = vmatpush.bf16.msra.mxu0 %v168
  %265 = vmatmul.bf16.gmra.mxu0 %v52
  %v266 = vpop.f32.mrf.mxu0
  %v267 = vadd.f32 %v253, %v266
  %v268 = vpop.f32.mrf.mxu0
  %v269 = vadd.f32 %v255, %v268
  %270 = vdwg.mxu0
  %v271 = vpack.c.bf16 %v267, %v239
  %v272 = vpack.c.bf16 %v269, %v241
  %273 = vst [vmem:[%s2] sm:$0xff] %v271
  %274 = vst [vmem:[%s2 + $0x8] sm:$0xff] %v272
  // Predicated region
  $region10: #{aeresnet_forward.75} parent=0 // pred_check
    _
  $region11: #{aeresnet_forward.75} parent=0 // pred_check_branch
    %276 = sbr.rel (0) target = $region13
  $region12: #{aeresnet_forward.75} parent=0 // pred_region
    _
  $region13: #{aeresnet_forward.75} parent=0 // pred_fallthru
    _
  // Predicated region
  $region14: #{aeresnet_forward.75} parent=0 // pred_check
    _
  $region15: #{aeresnet_forward.75} parent=0 // pred_check_branch
    %278 = sbr.rel (0) target = $region17
  $region16: #{aeresnet_forward.75} parent=0 // pred_region
    _
  $region17: #{aeresnet_forward.75} parent=0 // pred_fallthru
    _

// kernel: aeresnet_forward.83
$region0: #{aeresnet_forward.83}
  #allocation0 [shape = 'u32[]', space=smem, size = 0x4, offset = 0x4, fixed_abs, tag = 'smem constant byte address 0x4 - core index']
  #allocation1 [shape = 'u32[72,128]{1,0:T(1,128)}', space=vmem, size = 0x9000, scoped, tag = 'internal scratch']
  %s0 = inlined_call_operand.vmem [shape: bf16[16,128], index: 0, kind: input, shape index: {}]
  %s1 = inlined_call_operand.vmem [shape: bf16[128,128], index: 1, kind: input, shape index: {}]
  %s2 = inlined_call_operand.vmem [shape: f32[16,128], index: 2, kind: output, shape index: {}]
  %s3 = sld [smem:[#allocation0]]
  $region18: #{aeresnet_forward.83} parent=0
    _
  %s5 = ssub.s32 1, %s3
  %s6 = scalar_select 0, %s5, %s3
  // Predicated region
  $region2: #{aeresnet_forward.83} parent=0 // pred_check
    _
  $region3: #{aeresnet_forward.83} parent=0 // pred_check_branch
    %8 = sbr.rel (0) target = $region5
  $region4: #{aeresnet_forward.83} parent=0 // pred_region
    _
  $region5: #{aeresnet_forward.83} parent=0 // pred_fallthru
    _
  // Predicated region
  $region6: #{aeresnet_forward.83} parent=0 // pred_check
    _
  $region7: #{aeresnet_forward.83} parent=0 // pred_check_branch
    %10 = sbr.rel (0) target = $region9
  $region8: #{aeresnet_forward.83} parent=0 // pred_region
    _
  $region9: #{aeresnet_forward.83} parent=0 // pred_fallthru
    _
  %v11 = vld [vmem:[%s0] sm:$0xf]
  %v12 = vld [vmem:[%s0 + $0x4] sm:$0xf]
  %v13 = vld [vmem:[%s1] sm:$0xf]
  %v14 = vld [vmem:[%s1 + $0x4] sm:$0xf]
  %v15 = vld [vmem:[%s1 + $0x8] sm:$0xf]
  %v16 = vld [vmem:[%s1 + $0xc] sm:$0xf]
  %v17 = vld [vmem:[%s1 + $0x10] sm:$0xf]
  %v18 = vld [vmem:[%s1 + $0x14] sm:$0xf]
  %v19 = vld [vmem:[%s1 + $0x18] sm:$0xf]
  %v20 = vld [vmem:[%s1 + $0x1c] sm:$0xf]
  %v21 = vld [vmem:[%s1 + $0x20] sm:$0xf]
  %v22 = vld [vmem:[%s1 + $0x24] sm:$0xf]
  %v23 = vld [vmem:[%s1 + $0x28] sm:$0xf]
  %v24 = vld [vmem:[%s1 + $0x2c] sm:$0xf]
  %v25 = vld [vmem:[%s1 + $0x30] sm:$0xf]
  %v26 = vld [vmem:[%s1 + $0x34] sm:$0xf]
  %v27 = vld [vmem:[%s1 + $0x38] sm:$0xf]
  %v28 = vld [vmem:[%s1 + $0x3c] sm:$0xf]
  %v31 = vunpack.c.l.b16 %v11
  %v32 = vunpack.c.l.b16 %v12
  %v33 = vpack.c.b16 %v32, %v31
  %v51 = vunpack.c.l.b16 %v13
  %v52 = vunpack.c.l.b16 %v14
  %v53 = vunpack.c.l.b16 %v15
  %v54 = vunpack.c.l.b16 %v16
  %v55 = vunpack.c.l.b16 %v17
  %v56 = vunpack.c.l.b16 %v18
  %v57 = vunpack.c.l.b16 %v19
  %v58 = vunpack.c.l.b16 %v20
  %v59 = vunpack.c.l.b16 %v21
  %v60 = vunpack.c.l.b16 %v22
  %v61 = vunpack.c.l.b16 %v23
  %v62 = vunpack.c.l.b16 %v24
  %v63 = vunpack.c.l.b16 %v25
  %v64 = vunpack.c.l.b16 %v26
  %v65 = vunpack.c.l.b16 %v27
  %v66 = vunpack.c.l.b16 %v28
  %v67 = vpack.c.b16 %v52, %v51
  %v68 = vpack.c.b16 %v54, %v53
  %v69 = vpack.c.b16 %v56, %v55
  %v70 = vpack.c.b16 %v58, %v57
  %v71 = vpack.c.b16 %v60, %v59
  %v72 = vpack.c.b16 %v62, %v61
  %v73 = vpack.c.b16 %v64, %v63
  %v74 = vpack.c.b16 %v66, %v65
  %83 = vmatpush.bf16.msra.mxu0 %v74
  %84 = vmatpush.bf16.msra.mxu0 %v73
  %85 = vmatpush.bf16.msra.mxu0 %v72
  %86 = vmatpush.bf16.msra.mxu0 %v71
  %87 = vmatpush.bf16.msra.mxu0 %v70
  %88 = vmatpush.bf16.msra.mxu0 %v69
  %89 = vmatpush.bf16.msra.mxu0 %v68
  %90 = vmatpush.bf16.msra.mxu0 %v67
  %91 = vmatmul.bf16.gmra.mxu0 %v33
  %v92 = vpop.f32.mrf.mxu0
  %v93 = vadd.f32 0.0, %v92
  %v94 = vpop.f32.mrf.mxu0
  %v95 = vadd.f32 0.0, %v94
  %96 = vdwg.mxu0
  %97 = vst [vmem:[%s2] sm:$0xff] %v93
  %98 = vst [vmem:[%s2 + $0x8] sm:$0xff] %v95
  // Predicated region
  $region10: #{aeresnet_forward.83} parent=0 // pred_check
    _
  $region11: #{aeresnet_forward.83} parent=0 // pred_check_branch
    %100 = sbr.rel (0) target = $region13
  $region12: #{aeresnet_forward.83} parent=0 // pred_region
    _
  $region13: #{aeresnet_forward.83} parent=0 // pred_fallthru
    _
  // Predicated region
  $region14: #{aeresnet_forward.83} parent=0 // pred_check
    _
  $region15: #{aeresnet_forward.83} parent=0 // pred_check_branch
    %102 = sbr.rel (0) target = $region17
  $region16: #{aeresnet_forward.83} parent=0 // pred_region
    _
  $region17: #{aeresnet_forward.83} parent=0 // pred_fallthru
    _

// kernel: aeresnet_forward.82
$region0: #{aeresnet_forward.82}
  #allocation0 [shape = 'u32[]', space=smem, size = 0x4, offset = 0x4, fixed_abs, tag = 'smem constant byte address 0x4 - core index']
  #allocation1 [shape = 'u32[72,128]{1,0:T(1,128)}', space=vmem, size = 0x9000, scoped, tag = 'internal scratch']
  %s0 = inlined_call_operand.vmem [shape: bf16[16,1152], index: 0, kind: input, shape index: {}]
  %s1 = inlined_call_operand.vmem [shape: bf16[1152,128], index: 1, kind: input, shape index: {}]
  %s2 = inlined_call_operand.vmem [shape: bf16[16,128], index: 2, kind: output, shape index: {}]
  %s3 = sld [smem:[#allocation0]]
  $region18: #{aeresnet_forward.82} parent=0
    _
  %s5 = ssub.s32 1, %s3
  %s6 = scalar_select 0, %s5, %s3
  // Predicated region
  $region2: #{aeresnet_forward.82} parent=0 // pred_check
    _
  $region3: #{aeresnet_forward.82} parent=0 // pred_check_branch
    %8 = sbr.rel (0) target = $region5
  $region4: #{aeresnet_forward.82} parent=0 // pred_region
    _
  $region5: #{aeresnet_forward.82} parent=0 // pred_fallthru
    _
  // Predicated region
  $region6: #{aeresnet_forward.82} parent=0 // pred_check
    _
  $region7: #{aeresnet_forward.82} parent=0 // pred_check_branch
    %10 = sbr.rel (0) target = $region9
  $region8: #{aeresnet_forward.82} parent=0 // pred_region
    _
  $region9: #{aeresnet_forward.82} parent=0 // pred_fallthru
    _
  %v11 = vld [vmem:[%s0] sm:$0xff]
  %v12 = vld [vmem:[%s0 + $0x8] sm:$0xff]
  %v13 = vld [vmem:[%s0 + $0x10] sm:$0xff]
  %v14 = vld [vmem:[%s0 + $0x18] sm:$0xff]
  %v15 = vld [vmem:[%s0 + $0x20] sm:$0xf]
  %v16 = vld [vmem:[%s0 + $0x24] sm:$0xff]
  %v17 = vld [vmem:[%s0 + $0x2c] sm:$0xff]
  %v18 = vld [vmem:[%s0 + $0x34] sm:$0xff]
  %v19 = vld [vmem:[%s0 + $0x3c] sm:$0xff]
  %v20 = vld [vmem:[%s0 + $0x44] sm:$0xf]
  %v21 = vld [vmem:[%s1] sm:$0xf]
  %v22 = vld [vmem:[%s1 + $0x4] sm:$0xf]
  %v23 = vld [vmem:[%s1 + $0x8] sm:$0xf]
  %v24 = vld [vmem:[%s1 + $0xc] sm:$0xf]
  %v25 = vld [vmem:[%s1 + $0x10] sm:$0xf]
  %v26 = vld [vmem:[%s1 + $0x14] sm:$0xf]
  %v27 = vld [vmem:[%s1 + $0x18] sm:$0xf]
  %v28 = vld [vmem:[%s1 + $0x1c] sm:$0xf]
  %v29 = vld [vmem:[%s1 + $0x20] sm:$0xf]
  %v30 = vld [vmem:[%s1 + $0x24] sm:$0xf]
  %v31 = vld [vmem:[%s1 + $0x28] sm:$0xf]
  %v32 = vld [vmem:[%s1 + $0x2c] sm:$0xf]
  %v33 = vld [vmem:[%s1 + $0x30] sm:$0xf]
  %v34 = vld [vmem:[%s1 + $0x34] sm:$0xf]
  %v35 = vld [vmem:[%s1 + $0x38] sm:$0xf]
  %v36 = vld [vmem:[%s1 + $0x3c] sm:$0xf]
  %v37 = vld [vmem:[%s1 + $0x40] sm:$0xf]
  %v38 = vld [vmem:[%s1 + $0x44] sm:$0xf]
  %v39 = vld [vmem:[%s1 + $0x48] sm:$0xf]
  %v40 = vld [vmem:[%s1 + $0x4c] sm:$0xf]
  %v41 = vld [vmem:[%s1 + $0x50] sm:$0xf]
  %v42 = vld [vmem:[%s1 + $0x54] sm:$0xf]
  %v43 = vld [vmem:[%s1 + $0x58] sm:$0xf]
  %v44 = vld [vmem:[%s1 + $0x5c] sm:$0xf]
  %v45 = vld [vmem:[%s1 + $0x60] sm:$0xf]
  %v46 = vld [vmem:[%s1 + $0x64] sm:$0xf]
  %v47 = vld [vmem:[%s1 + $0x68] sm:$0xf]
  %v48 = vld [vmem:[%s1 + $0x6c] sm:$0xf]
  %v49 = vld [vmem:[%s1 + $0x70] sm:$0xf]
  %v50 = vld [vmem:[%s1 + $0x74] sm:$0xf]
  %v51 = vld [vmem:[%s1 + $0x78] sm:$0xf]
  %v52 = vld [vmem:[%s1 + $0x7c] sm:$0xf]
  %v53 = vld [vmem:[%s1 + $0x80] sm:$0xf]
  %v54 = vld [vmem:[%s1 + $0x84] sm:$0xf]
  %v55 = vld [vmem:[%s1 + $0x88] sm:$0xf]
  %v56 = vld [vmem:[%s1 + $0x8c] sm:$0xf]
  %v57 = vld [vmem:[%s1 + $0x90] sm:$0xf]
  %v58 = vld [vmem:[%s1 + $0x94] sm:$0xf]
  %v59 = vld [vmem:[%s1 + $0x98] sm:$0xf]
  %v60 = vld [vmem:[%s1 + $0x9c] sm:$0xf]
  %v61 = vld [vmem:[%s1 + $0xa0] sm:$0xf]
  %v62 = vld [vmem:[%s1 + $0xa4] sm:$0xf]
  %v63 = vld [vmem:[%s1 + $0xa8] sm:$0xf]
  %v64 = vld [vmem:[%s1 + $0xac] sm:$0xf]
  %v65 = vld [vmem:[%s1 + $0xb0] sm:$0xf]
  %v66 = vld [vmem:[%s1 + $0xb4] sm:$0xf]
  %v67 = vld [vmem:[%s1 + $0xb8] sm:$0xf]
  %v68 = vld [vmem:[%s1 + $0xbc] sm:$0xf]
  %v69 = vld [vmem:[%s1 + $0xc0] sm:$0xf]
  %v70 = vld [vmem:[%s1 + $0xc4] sm:$0xf]
  %v71 = vld [vmem:[%s1 + $0xc8] sm:$0xf]
  %v72 = vld [vmem:[%s1 + $0xcc] sm:$0xf]
  %v73 = vld [vmem:[%s1 + $0xd0] sm:$0xf]
  %v74 = vld [vmem:[%s1 + $0xd4] sm:$0xf]
  %v75 = vld [vmem:[%s1 + $0xd8] sm:$0xf]
  %v76 = vld [vmem:[%s1 + $0xdc] sm:$0xf]
  %v77 = vld [vmem:[%s1 + $0xe0] sm:$0xf]
  %v78 = vld [vmem:[%s1 + $0xe4] sm:$0xf]
  %v79 = vld [vmem:[%s1 + $0xe8] sm:$0xf]
  %v80 = vld [vmem:[%s1 + $0xec] sm:$0xf]
  %v81 = vld [vmem:[%s1 + $0xf0] sm:$0xf]
  %v82 = vld [vmem:[%s1 + $0xf4] sm:$0xf]
  %v83 = vld [vmem:[%s1 + $0xf8] sm:$0xf]
  %v84 = vld [vmem:[%s1 + $0xfc] sm:$0xf]
  %v85 = vld [vmem:[%s1 + $0x100] sm:$0xf]
  %v86 = vld [vmem:[%s1 + $0x104] sm:$0xf]
  %v87 = vld [vmem:[%s1 + $0x108] sm:$0xf]
  %v88 = vld [vmem:[%s1 + $0x10c] sm:$0xf]
  %v89 = vld [vmem:[%s1 + $0x110] sm:$0xf]
  %v90 = vld [vmem:[%s1 + $0x114] sm:$0xf]
  %v91 = vld [vmem:[%s1 + $0x118] sm:$0xf]
  %v92 = vld [vmem:[%s1 + $0x11c] sm:$0xf]
  %v93 = vld [vmem:[%s1 + $0x120] sm:$0xf]
  %v94 = vld [vmem:[%s1 + $0x124] sm:$0xf]
  %v95 = vld [vmem:[%s1 + $0x128] sm:$0xf]
  %v96 = vld [vmem:[%s1 + $0x12c] sm:$0xf]
  %v97 = vld [vmem:[%s1 + $0x130] sm:$0xf]
  %v98 = vld [vmem:[%s1 + $0x134] sm:$0xf]
  %v99 = vld [vmem:[%s1 + $0x138] sm:$0xf]
  %v100 = vld [vmem:[%s1 + $0x13c] sm:$0xf]
  %v101 = vld [vmem:[%s1 + $0x140] sm:$0xf]
  %v102 = vld [vmem:[%s1 + $0x144] sm:$0xf]
  %v103 = vld [vmem:[%s1 + $0x148] sm:$0xf]
  %v104 = vld [vmem:[%s1 + $0x14c] sm:$0xf]
  %v105 = vld [vmem:[%s1 + $0x150] sm:$0xf]
  %v106 = vld [vmem:[%s1 + $0x154] sm:$0xf]
  %v107 = vld [vmem:[%s1 + $0x158] sm:$0xf]
  %v108 = vld [vmem:[%s1 + $0x15c] sm:$0xf]
  %v109 = vld [vmem:[%s1 + $0x160] sm:$0xf]
  %v110 = vld [vmem:[%s1 + $0x164] sm:$0xf]
  %v111 = vld [vmem:[%s1 + $0x168] sm:$0xf]
  %v112 = vld [vmem:[%s1 + $0x16c] sm:$0xf]
  %v113 = vld [vmem:[%s1 + $0x170] sm:$0xf]
  %v114 = vld [vmem:[%s1 + $0x174] sm:$0xf]
  %v115 = vld [vmem:[%s1 + $0x178] sm:$0xf]
  %v116 = vld [vmem:[%s1 + $0x17c] sm:$0xf]
  %v117 = vld [vmem:[%s1 + $0x180] sm:$0xf]
  %v118 = vld [vmem:[%s1 + $0x184] sm:$0xf]
  %v119 = vld [vmem:[%s1 + $0x188] sm:$0xf]
  %v120 = vld [vmem:[%s1 + $0x18c] sm:$0xf]
  %v121 = vld [vmem:[%s1 + $0x190] sm:$0xf]
  %v122 = vld [vmem:[%s1 + $0x194] sm:$0xf]
  %v123 = vld [vmem:[%s1 + $0x198] sm:$0xf]
  %v124 = vld [vmem:[%s1 + $0x19c] sm:$0xf]
  %v125 = vld [vmem:[%s1 + $0x1a0] sm:$0xf]
  %v126 = vld [vmem:[%s1 + $0x1a4] sm:$0xf]
  %v127 = vld [vmem:[%s1 + $0x1a8] sm:$0xf]
  %v128 = vld [vmem:[%s1 + $0x1ac] sm:$0xf]
  %v129 = vld [vmem:[%s1 + $0x1b0] sm:$0xf]
  %v130 = vld [vmem:[%s1 + $0x1b4] sm:$0xf]
  %v131 = vld [vmem:[%s1 + $0x1b8] sm:$0xf]
  %v132 = vld [vmem:[%s1 + $0x1bc] sm:$0xf]
  %v133 = vld [vmem:[%s1 + $0x1c0] sm:$0xf]
  %v134 = vld [vmem:[%s1 + $0x1c4] sm:$0xf]
  %v135 = vld [vmem:[%s1 + $0x1c8] sm:$0xf]
  %v136 = vld [vmem:[%s1 + $0x1cc] sm:$0xf]
  %v137 = vld [vmem:[%s1 + $0x1d0] sm:$0xf]
  %v138 = vld [vmem:[%s1 + $0x1d4] sm:$0xf]
  %v139 = vld [vmem:[%s1 + $0x1d8] sm:$0xf]
  %v140 = vld [vmem:[%s1 + $0x1dc] sm:$0xf]
  %v141 = vld [vmem:[%s1 + $0x1e0] sm:$0xf]
  %v142 = vld [vmem:[%s1 + $0x1e4] sm:$0xf]
  %v143 = vld [vmem:[%s1 + $0x1e8] sm:$0xf]
  %v144 = vld [vmem:[%s1 + $0x1ec] sm:$0xf]
  %v145 = vld [vmem:[%s1 + $0x1f0] sm:$0xf]
  %v146 = vld [vmem:[%s1 + $0x1f4] sm:$0xf]
  %v147 = vld [vmem:[%s1 + $0x1f8] sm:$0xf]
  %v148 = vld [vmem:[%s1 + $0x1fc] sm:$0xf]
  %v149 = vld [vmem:[%s1 + $0x200] sm:$0xf]
  %v150 = vld [vmem:[%s1 + $0x204] sm:$0xf]
  %v151 = vld [vmem:[%s1 + $0x208] sm:$0xf]
  %v152 = vld [vmem:[%s1 + $0x20c] sm:$0xf]
  %v153 = vld [vmem:[%s1 + $0x210] sm:$0xf]
  %v154 = vld [vmem:[%s1 + $0x214] sm:$0xf]
  %v155 = vld [vmem:[%s1 + $0x218] sm:$0xf]
  %v156 = vld [vmem:[%s1 + $0x21c] sm:$0xf]
  %v157 = vld [vmem:[%s1 + $0x220] sm:$0xf]
  %v158 = vld [vmem:[%s1 + $0x224] sm:$0xf]
  %v159 = vld [vmem:[%s1 + $0x228] sm:$0xf]
  %v160 = vld [vmem:[%s1 + $0x22c] sm:$0xf]
  %v161 = vld [vmem:[%s1 + $0x230] sm:$0xf]
  %v162 = vld [vmem:[%s1 + $0x234] sm:$0xf]
  %v163 = vld [vmem:[%s1 + $0x238] sm:$0xf]
  %v164 = vld [vmem:[%s1 + $0x23c] sm:$0xf]
  %v175 = vunpack.c.l.b16 %v11
  %v176 = vunpack.c.h.b16 %v11
  %v177 = vunpack.c.l.b16 %v12
  %v178 = vunpack.c.h.b16 %v12
  %v179 = vunpack.c.l.b16 %v13
  %v180 = vunpack.c.h.b16 %v13
  %v181 = vunpack.c.l.b16 %v14
  %v182 = vunpack.c.h.b16 %v14
  %v183 = vunpack.c.l.b16 %v15
  %v184 = vunpack.c.l.b16 %v16
  %v185 = vunpack.c.h.b16 %v16
  %v186 = vunpack.c.l.b16 %v17
  %v187 = vunpack.c.h.b16 %v17
  %v188 = vunpack.c.l.b16 %v18
  %v189 = vunpack.c.h.b16 %v18
  %v190 = vunpack.c.l.b16 %v19
  %v191 = vunpack.c.h.b16 %v19
  %v192 = vunpack.c.l.b16 %v20
  %v193 = vpack.c.b16 %v184, %v175
  %v194 = vpack.c.b16 %v185, %v176
  %v195 = vpack.c.b16 %v186, %v177
  %v196 = vpack.c.b16 %v187, %v178
  %v197 = vpack.c.b16 %v188, %v179
  %v198 = vpack.c.b16 %v189, %v180
  %v199 = vpack.c.b16 %v190, %v181
  %v200 = vpack.c.b16 %v191, %v182
  %v201 = vpack.c.b16 %v192, %v183
  %v355 = vunpack.c.l.b16 %v21
  %v356 = vunpack.c.l.b16 %v22
  %v357 = vunpack.c.l.b16 %v23
  %v358 = vunpack.c.l.b16 %v24
  %v359 = vunpack.c.l.b16 %v25
  %v360 = vunpack.c.l.b16 %v26
  %v361 = vunpack.c.l.b16 %v27
  %v362 = vunpack.c.l.b16 %v28
  %v363 = vunpack.c.l.b16 %v29
  %v364 = vunpack.c.l.b16 %v30
  %v365 = vunpack.c.l.b16 %v31
  %v366 = vunpack.c.l.b16 %v32
  %v367 = vunpack.c.l.b16 %v33
  %v368 = vunpack.c.l.b16 %v34
  %v369 = vunpack.c.l.b16 %v35
  %v370 = vunpack.c.l.b16 %v36
  %v371 = vunpack.c.l.b16 %v37
  %v372 = vunpack.c.l.b16 %v38
  %v373 = vunpack.c.l.b16 %v39
  %v374 = vunpack.c.l.b16 %v40
  %v375 = vunpack.c.l.b16 %v41
  %v376 = vunpack.c.l.b16 %v42
  %v377 = vunpack.c.l.b16 %v43
  %v378 = vunpack.c.l.b16 %v44
  %v379 = vunpack.c.l.b16 %v45
  %v380 = vunpack.c.l.b16 %v46
  %v381 = vunpack.c.l.b16 %v47
  %v382 = vunpack.c.l.b16 %v48
  %v383 = vunpack.c.l.b16 %v49
  %v384 = vunpack.c.l.b16 %v50
  %v385 = vunpack.c.l.b16 %v51
  %v386 = vunpack.c.l.b16 %v52
  %v387 = vunpack.c.l.b16 %v53
  %v388 = vunpack.c.l.b16 %v54
  %v389 = vunpack.c.l.b16 %v55
  %v390 = vunpack.c.l.b16 %v56
  %v391 = vunpack.c.l.b16 %v57
  %v392 = vunpack.c.l.b16 %v58
  %v393 = vunpack.c.l.b16 %v59
  %v394 = vunpack.c.l.b16 %v60
  %v395 = vunpack.c.l.b16 %v61
  %v396 = vunpack.c.l.b16 %v62
  %v397 = vunpack.c.l.b16 %v63
  %v398 = vunpack.c.l.b16 %v64
  %v399 = vunpack.c.l.b16 %v65
  %v400 = vunpack.c.l.b16 %v66
  %v401 = vunpack.c.l.b16 %v67
  %v402 = vunpack.c.l.b16 %v68
  %v403 = vunpack.c.l.b16 %v69
  %v404 = vunpack.c.l.b16 %v70
  %v405 = vunpack.c.l.b16 %v71
  %v406 = vunpack.c.l.b16 %v72
  %v407 = vunpack.c.l.b16 %v73
  %v408 = vunpack.c.l.b16 %v74
  %v409 = vunpack.c.l.b16 %v75
  %v410 = vunpack.c.l.b16 %v76
  %v411 = vunpack.c.l.b16 %v77
  %v412 = vunpack.c.l.b16 %v78
  %v413 = vunpack.c.l.b16 %v79
  %v414 = vunpack.c.l.b16 %v80
  %v415 = vunpack.c.l.b16 %v81
  %v416 = vunpack.c.l.b16 %v82
  %v417 = vunpack.c.l.b16 %v83
  %v418 = vunpack.c.l.b16 %v84
  %v419 = vunpack.c.l.b16 %v85
  %v420 = vunpack.c.l.b16 %v86
  %v421 = vunpack.c.l.b16 %v87
  %v422 = vunpack.c.l.b16 %v88
  %v423 = vunpack.c.l.b16 %v89
  %v424 = vunpack.c.l.b16 %v90
  %v425 = vunpack.c.l.b16 %v91
  %v426 = vunpack.c.l.b16 %v92
  %v427 = vunpack.c.l.b16 %v93
  %v428 = vunpack.c.l.b16 %v94
  %v429 = vunpack.c.l.b16 %v95
  %v430 = vunpack.c.l.b16 %v96
  %v431 = vunpack.c.l.b16 %v97
  %v432 = vunpack.c.l.b16 %v98
  %v433 = vunpack.c.l.b16 %v99
  %v434 = vunpack.c.l.b16 %v100
  %v435 = vunpack.c.l.b16 %v101
  %v436 = vunpack.c.l.b16 %v102
  %v437 = vunpack.c.l.b16 %v103
  %v438 = vunpack.c.l.b16 %v104
  %v439 = vunpack.c.l.b16 %v105
  %v440 = vunpack.c.l.b16 %v106
  %v441 = vunpack.c.l.b16 %v107
  %v442 = vunpack.c.l.b16 %v108
  %v443 = vunpack.c.l.b16 %v109
  %v444 = vunpack.c.l.b16 %v110
  %v445 = vunpack.c.l.b16 %v111
  %v446 = vunpack.c.l.b16 %v112
  %v447 = vunpack.c.l.b16 %v113
  %v448 = vunpack.c.l.b16 %v114
  %v449 = vunpack.c.l.b16 %v115
  %v450 = vunpack.c.l.b16 %v116
  %v451 = vunpack.c.l.b16 %v117
  %v452 = vunpack.c.l.b16 %v118
  %v453 = vunpack.c.l.b16 %v119
  %v454 = vunpack.c.l.b16 %v120
  %v455 = vunpack.c.l.b16 %v121
  %v456 = vunpack.c.l.b16 %v122
  %v457 = vunpack.c.l.b16 %v123
  %v458 = vunpack.c.l.b16 %v124
  %v459 = vunpack.c.l.b16 %v125
  %v460 = vunpack.c.l.b16 %v126
  %v461 = vunpack.c.l.b16 %v127
  %v462 = vunpack.c.l.b16 %v128
  %v463 = vunpack.c.l.b16 %v129
  %v464 = vunpack.c.l.b16 %v130
  %v465 = vunpack.c.l.b16 %v131
  %v466 = vunpack.c.l.b16 %v132
  %v467 = vunpack.c.l.b16 %v133
  %v468 = vunpack.c.l.b16 %v134
  %v469 = vunpack.c.l.b16 %v135
  %v470 = vunpack.c.l.b16 %v136
  %v471 = vunpack.c.l.b16 %v137
  %v472 = vunpack.c.l.b16 %v138
  %v473 = vunpack.c.l.b16 %v139
  %v474 = vunpack.c.l.b16 %v140
  %v475 = vunpack.c.l.b16 %v141
  %v476 = vunpack.c.l.b16 %v142
  %v477 = vunpack.c.l.b16 %v143
  %v478 = vunpack.c.l.b16 %v144
  %v479 = vunpack.c.l.b16 %v145
  %v480 = vunpack.c.l.b16 %v146
  %v481 = vunpack.c.l.b16 %v147
  %v482 = vunpack.c.l.b16 %v148
  %v483 = vunpack.c.l.b16 %v149
  %v484 = vunpack.c.l.b16 %v150
  %v485 = vunpack.c.l.b16 %v151
  %v486 = vunpack.c.l.b16 %v152
  %v487 = vunpack.c.l.b16 %v153
  %v488 = vunpack.c.l.b16 %v154
  %v489 = vunpack.c.l.b16 %v155
  %v490 = vunpack.c.l.b16 %v156
  %v491 = vunpack.c.l.b16 %v157
  %v492 = vunpack.c.l.b16 %v158
  %v493 = vunpack.c.l.b16 %v159
  %v494 = vunpack.c.l.b16 %v160
  %v495 = vunpack.c.l.b16 %v161
  %v496 = vunpack.c.l.b16 %v162
  %v497 = vunpack.c.l.b16 %v163
  %v498 = vunpack.c.l.b16 %v164
  %v499 = vpack.c.b16 %v356, %v355
  %v500 = vpack.c.b16 %v358, %v357
  %v501 = vpack.c.b16 %v360, %v359
  %v502 = vpack.c.b16 %v362, %v361
  %v503 = vpack.c.b16 %v364, %v363
  %v504 = vpack.c.b16 %v366, %v365
  %v505 = vpack.c.b16 %v368, %v367
  %v506 = vpack.c.b16 %v370, %v369
  %v507 = vpack.c.b16 %v372, %v371
  %v508 = vpack.c.b16 %v374, %v373
  %v509 = vpack.c.b16 %v376, %v375
  %v510 = vpack.c.b16 %v378, %v377
  %v511 = vpack.c.b16 %v380, %v379
  %v512 = vpack.c.b16 %v382, %v381
  %v513 = vpack.c.b16 %v384, %v383
  %v514 = vpack.c.b16 %v386, %v385
  %v515 = vpack.c.b16 %v388, %v387
  %v516 = vpack.c.b16 %v390, %v389
  %v517 = vpack.c.b16 %v392, %v391
  %v518 = vpack.c.b16 %v394, %v393
  %v519 = vpack.c.b16 %v396, %v395
  %v520 = vpack.c.b16 %v398, %v397
  %v521 = vpack.c.b16 %v400, %v399
  %v522 = vpack.c.b16 %v402, %v401
  %v523 = vpack.c.b16 %v404, %v403
  %v524 = vpack.c.b16 %v406, %v405
  %v525 = vpack.c.b16 %v408, %v407
  %v526 = vpack.c.b16 %v410, %v409
  %v527 = vpack.c.b16 %v412, %v411
  %v528 = vpack.c.b16 %v414, %v413
  %v529 = vpack.c.b16 %v416, %v415
  %v530 = vpack.c.b16 %v418, %v417
  %v531 = vpack.c.b16 %v420, %v419
  %v532 = vpack.c.b16 %v422, %v421
  %v533 = vpack.c.b16 %v424, %v423
  %v534 = vpack.c.b16 %v426, %v425
  %v535 = vpack.c.b16 %v428, %v427
  %v536 = vpack.c.b16 %v430, %v429
  %v537 = vpack.c.b16 %v432, %v431
  %v538 = vpack.c.b16 %v434, %v433
  %v539 = vpack.c.b16 %v436, %v435
  %v540 = vpack.c.b16 %v438, %v437
  %v541 = vpack.c.b16 %v440, %v439
  %v542 = vpack.c.b16 %v442, %v441
  %v543 = vpack.c.b16 %v444, %v443
  %v544 = vpack.c.b16 %v446, %v445
  %v545 = vpack.c.b16 %v448, %v447
  %v546 = vpack.c.b16 %v450, %v449
  %v547 = vpack.c.b16 %v452, %v451
  %v548 = vpack.c.b16 %v454, %v453
  %v549 = vpack.c.b16 %v456, %v455
  %v550 = vpack.c.b16 %v458, %v457
  %v551 = vpack.c.b16 %v460, %v459
  %v552 = vpack.c.b16 %v462, %v461
  %v553 = vpack.c.b16 %v464, %v463
  %v554 = vpack.c.b16 %v466, %v465
  %v555 = vpack.c.b16 %v468, %v467
  %v556 = vpack.c.b16 %v470, %v469
  %v557 = vpack.c.b16 %v472, %v471
  %v558 = vpack.c.b16 %v474, %v473
  %v559 = vpack.c.b16 %v476, %v475
  %v560 = vpack.c.b16 %v478, %v477
  %v561 = vpack.c.b16 %v480, %v479
  %v562 = vpack.c.b16 %v482, %v481
  %v563 = vpack.c.b16 %v484, %v483
  %v564 = vpack.c.b16 %v486, %v485
  %v565 = vpack.c.b16 %v488, %v487
  %v566 = vpack.c.b16 %v490, %v489
  %v567 = vpack.c.b16 %v492, %v491
  %v568 = vpack.c.b16 %v494, %v493
  %v569 = vpack.c.b16 %v496, %v495
  %v570 = vpack.c.b16 %v498, %v497
  %643 = vmatpush.bf16.msra.mxu0 %v506
  %644 = vmatpush.bf16.msra.mxu0 %v505
  %645 = vmatpush.bf16.msra.mxu0 %v504
  %646 = vmatpush.bf16.msra.mxu0 %v503
  %647 = vmatpush.bf16.msra.mxu0 %v502
  %648 = vmatpush.bf16.msra.mxu0 %v501
  %649 = vmatpush.bf16.msra.mxu0 %v500
  %650 = vmatpush.bf16.msra.mxu0 %v499
  %651 = vmatmul.bf16.gmra.mxu0 %v193
  %v652 = vpop.f32.mrf.mxu0
  %v653 = vadd.f32 0.0, %v652
  %v654 = vpop.f32.mrf.mxu0
  %v655 = vadd.f32 0.0, %v654
  %656 = vdwg.mxu0
  %657 = vmatpush.bf16.msra.mxu0 %v514
  %658 = vmatpush.bf16.msra.mxu0 %v513
  %659 = vmatpush.bf16.msra.mxu0 %v512
  %660 = vmatpush.bf16.msra.mxu0 %v511
  %661 = vmatpush.bf16.msra.mxu0 %v510
  %662 = vmatpush.bf16.msra.mxu0 %v509
  %663 = vmatpush.bf16.msra.mxu0 %v508
  %664 = vmatpush.bf16.msra.mxu0 %v507
  %665 = vmatmul.bf16.gmra.mxu0 %v194
  %v666 = vpop.f32.mrf.mxu0
  %v667 = vadd.f32 %v653, %v666
  %v668 = vpop.f32.mrf.mxu0
  %v669 = vadd.f32 %v655, %v668
  %670 = vdwg.mxu0
  %671 = vmatpush.bf16.msra.mxu0 %v522
  %672 = vmatpush.bf16.msra.mxu0 %v521
  %673 = vmatpush.bf16.msra.mxu0 %v520
  %674 = vmatpush.bf16.msra.mxu0 %v519
  %675 = vmatpush.bf16.msra.mxu0 %v518
  %676 = vmatpush.bf16.msra.mxu0 %v517
  %677 = vmatpush.bf16.msra.mxu0 %v516
  %678 = vmatpush.bf16.msra.mxu0 %v515
  %679 = vmatmul.bf16.gmra.mxu0 %v195
  %v680 = vpop.f32.mrf.mxu0
  %v681 = vadd.f32 %v667, %v680
  %v682 = vpop.f32.mrf.mxu0
  %v683 = vadd.f32 %v669, %v682
  %684 = vdwg.mxu0
  %685 = vmatpush.bf16.msra.mxu0 %v530
  %686 = vmatpush.bf16.msra.mxu0 %v529
  %687 = vmatpush.bf16.msra.mxu0 %v528
  %688 = vmatpush.bf16.msra.mxu0 %v527
  %689 = vmatpush.bf16.msra.mxu0 %v526
  %690 = vmatpush.bf16.msra.mxu0 %v525
  %691 = vmatpush.bf16.msra.mxu0 %v524
  %692 = vmatpush.bf16.msra.mxu0 %v523
  %693 = vmatmul.bf16.gmra.mxu0 %v196
  %v694 = vpop.f32.mrf.mxu0
  %v695 = vadd.f32 %v681, %v694
  %v696 = vpop.f32.mrf.mxu0
  %v697 = vadd.f32 %v683, %v696
  %698 = vdwg.mxu0
  %699 = vmatpush.bf16.msra.mxu0 %v538
  %700 = vmatpush.bf16.msra.mxu0 %v537
  %701 = vmatpush.bf16.msra.mxu0 %v536
  %702 = vmatpush.bf16.msra.mxu0 %v535
  %703 = vmatpush.bf16.msra.mxu0 %v534
  %704 = vmatpush.bf16.msra.mxu0 %v533
  %705 = vmatpush.bf16.msra.mxu0 %v532
  %706 = vmatpush.bf16.msra.mxu0 %v531
  %707 = vmatmul.bf16.gmra.mxu0 %v197
  %v708 = vpop.f32.mrf.mxu0
  %v709 = vadd.f32 %v695, %v708
  %v710 = vpop.f32.mrf.mxu0
  %v711 = vadd.f32 %v697, %v710
  %712 = vdwg.mxu0
  %713 = vmatpush.bf16.msra.mxu0 %v546
  %714 = vmatpush.bf16.msra.mxu0 %v545
  %715 = vmatpush.bf16.msra.mxu0 %v544
  %716 = vmatpush.bf16.msra.mxu0 %v543
  %717 = vmatpush.bf16.msra.mxu0 %v542
  %718 = vmatpush.bf16.msra.mxu0 %v541
  %719 = vmatpush.bf16.msra.mxu0 %v540
  %720 = vmatpush.bf16.msra.mxu0 %v539
  %721 = vmatmul.bf16.gmra.mxu0 %v198
  %v722 = vpop.f32.mrf.mxu0
  %v723 = vadd.f32 %v709, %v722
  %v724 = vpop.f32.mrf.mxu0
  %v725 = vadd.f32 %v711, %v724
  %726 = vdwg.mxu0
  %727 = vmatpush.bf16.msra.mxu0 %v554
  %728 = vmatpush.bf16.msra.mxu0 %v553
  %729 = vmatpush.bf16.msra.mxu0 %v552
  %730 = vmatpush.bf16.msra.mxu0 %v551
  %731 = vmatpush.bf16.msra.mxu0 %v550
  %732 = vmatpush.bf16.msra.mxu0 %v549
  %733 = vmatpush.bf16.msra.mxu0 %v548
  %734 = vmatpush.bf16.msra.mxu0 %v547
  %735 = vmatmul.bf16.gmra.mxu0 %v199
  %v736 = vpop.f32.mrf.mxu0
  %v737 = vadd.f32 %v723, %v736
  %v738 = vpop.f32.mrf.mxu0
  %v739 = vadd.f32 %v725, %v738
  %740 = vdwg.mxu0
  %741 = vmatpush.bf16.msra.mxu0 %v562
  %742 = vmatpush.bf16.msra.mxu0 %v561
  %743 = vmatpush.bf16.msra.mxu0 %v560
  %744 = vmatpush.bf16.msra.mxu0 %v559
  %745 = vmatpush.bf16.msra.mxu0 %v558
  %746 = vmatpush.bf16.msra.mxu0 %v557
  %747 = vmatpush.bf16.msra.mxu0 %v556
  %748 = vmatpush.bf16.msra.mxu0 %v555
  %749 = vmatmul.bf16.gmra.mxu0 %v200
  %v750 = vpop.f32.mrf.mxu0
  %v751 = vadd.f32 %v737, %v750
  %v752 = vpop.f32.mrf.mxu0
  %v753 = vadd.f32 %v739, %v752
  %754 = vdwg.mxu0
  %755 = vmatpush.bf16.msra.mxu0 %v570
  %756 = vmatpush.bf16.msra.mxu0 %v569
  %757 = vmatpush.bf16.msra.mxu0 %v568
  %758 = vmatpush.bf16.msra.mxu0 %v567
  %759 = vmatpush.bf16.msra.mxu0 %v566
  %760 = vmatpush.bf16.msra.mxu0 %v565
  %761 = vmatpush.bf16.msra.mxu0 %v564
  %762 = vmatpush.bf16.msra.mxu0 %v563
  %763 = vmatmul.bf16.gmra.mxu0 %v201
  %v764 = vpop.f32.mrf.mxu0
  %v765 = vadd.f32 %v751, %v764
  %v766 = vpop.f32.mrf.mxu0
  %v767 = vadd.f32 %v753, %v766
  %768 = vdwg.mxu0
  %v769 = vpack.c.bf16 %v765, %v765
  %v770 = vpack.c.bf16 %v767, %v767
  %771 = vst [vmem:[%s2] sm:$0xf] %v769
  %772 = vst [vmem:[%s2 + $0x4] sm:$0xf] %v770
  // Predicated region
  $region10: #{aeresnet_forward.82} parent=0 // pred_check
    _
  $region11: #{aeresnet_forward.82} parent=0 // pred_check_branch
    %774 = sbr.rel (0) target = $region13
  $region12: #{aeresnet_forward.82} parent=0 // pred_region
    _
  $region13: #{aeresnet_forward.82} parent=0 // pred_fallthru
    _
  // Predicated region
  $region14: #{aeresnet_forward.82} parent=0 // pred_check
    _
  $region15: #{aeresnet_forward.82} parent=0 // pred_check_branch
    %776 = sbr.rel (0) target = $region17
  $region16: #{aeresnet_forward.82} parent=0 // pred_region
    _
  $region17: #{aeresnet_forward.82} parent=0 // pred_fallthru
    _

</llo_original>
